<compile_context>
chip_gen: v7x
topology: tpu7x:2x2x1
jax: 0.10.0
libtpu: 0.0.40
codegen_flags: <defaults>
</compile_context>

<pallas_src>
import math

import jax
import jax.numpy as jnp
from jax.experimental import pallas as pl
from jax.experimental.pallas import tpu as pltpu

BN_EPS = 1e-5
MAX_TN = 256                      # output-channel tile (matches 256-wide MXU on v6e/v7x)
VMEM_LIMIT = 32 * 1024 * 1024     # explicit scoped-VMEM budget (safe for v7x 64 MiB physical)


def _round_up(v, m):
    return ((v + m - 1) // m) * m


# ------------------------------------------------------------------ kernels

def _make_conv_kernel(n_phase, taps, cin, mp, act, has_res):
    """Direct convolution: sum over k*k taps of (Mp, Cin)@(Cin, TN) MXU dots
    with f32 accumulation, + folded-BN affine (+ leaky_relu 0.1) (+ residual),
    one bf16 store per output block."""

    def kernel(*refs):
        x_refs = refs[:n_phase]
        w_ref, s_ref, b_ref = refs[n_phase:n_phase + 3]
        r_ref = refs[n_phase + 3] if has_res else None
        o_ref = refs[-1]

        acc = None
        for t, (ph, off) in enumerate(taps):
            xt = x_refs[ph][0, off:off + mp, :]            # (Mp, Cin)  bf16
            wt = w_ref[t * cin:(t + 1) * cin, :]           # (Cin, TN)  bf16
            d = jnp.dot(xt, wt, preferred_element_type=jnp.float32)
            acc = d if acc is None else acc + d

        y = acc * s_ref[...] + b_ref[...]                  # f32 epilogue
        if act:
            y = jnp.where(y > 0, y, 0.1 * y)               # F.leaky_relu(x, 0.1)
        if has_res:
            y = y + r_ref[0].astype(jnp.float32)
        o_ref[0] = y.astype(o_ref.dtype)

    return kernel


def _head_kernel(x_ref, w_ref, b_ref, o_ref):
    """Global average pool fused with the 1x1 classifier conv (+ bias)."""
    pooled = jnp.mean(x_ref[...].astype(jnp.float32), axis=1)        # (B, C)
    logits = jnp.dot(pooled.astype(jnp.bfloat16), w_ref[...],
                     preferred_element_type=jnp.float32)             # (B, ncls)
    o_ref[...] = logits + b_ref[...]


# ------------------------------------------------------------- conv wrapper

def conv_bn_act(x, p, stride=1, residual=None):
    """x: (B, H, W, Cin) bf16 NHWC.  Conv (k in {1,3}, stride in {1,2},
    padding (k-1)//2, bias=False) + folded BN + leaky_relu(0.1) [+ residual]
    as a single pallas_call.  No im2col: taps are shifted contiguous slices
    of the row-flattened padded input, accumulated in-kernel."""
    k, cin_p, cout = p["k"], p["cin_p"], p["cout"]
    B, H, W, Cin = x.shape
    if Cin < cin_p:                                   # only conv1 (Cin=3 -> 16)
        x = jnp.pad(x, ((0, 0), (0, 0), (0, 0), (0, cin_p - Cin)))

    if k == 1:
        Ho, Wo, Wp = H, W, W
        phases = [x.reshape(B, H * W, cin_p)]
        taps = [(0, 0)]
    else:                                             # k == 3, pad = 1
        Wp = W + 2
        Ho = (H - 1) // stride + 1
        Wo = (W - 1) // stride + 1
        # 1 zero row/col of conv padding each side + 2 extra zero rows at the
        # bottom so every in-kernel tap slice stays in bounds.
        xp = jnp.pad(x, ((0, 0), (1, 2), (1, 1), (0, 0)))
        xf = xp.reshape(B, (H + 3) * Wp, cin_p)
        if stride == 1:
            phases = [xf]
        else:                                         # stride 2: row-parity phases
            phases = [xf[:, 0::2, :], xf[:, 1::2, :]]
        taps = []
        for kh in range(3):
            for kw in range(3):
                d = kh * Wp + kw
                taps.append((d % stride, d // stride))

    mp = Ho * Wp                                      # rows computed per image
    for ph, off in taps:
        assert off + mp <= phases[ph].shape[1], (off, mp, phases[ph].shape)

    tn = cout if cout <= MAX_TN else MAX_TN
    grid = (cout // tn, B)                            # (channel tiles, batch) - both parallel

    args = list(phases) + [p["w"], p["scale"], p["bias"]]
    in_specs = [pl.BlockSpec((1, a.shape[1], cin_p), lambda n, b: (b, 0, 0))
                for a in phases]
    in_specs += [
        pl.BlockSpec((k * k * cin_p, tn), lambda n, b: (0, n)),
        pl.BlockSpec((1, tn), lambda n, b: (0, n)),
        pl.BlockSpec((1, tn), lambda n, b: (0, n)),
    ]
    has_res = residual is not None
    if has_res:
        if Wp > Wo:                                   # lay residual on the padded-width grid
            residual = jnp.pad(residual, ((0, 0), (0, 0), (0, Wp - Wo), (0, 0)))
        args.append(residual.reshape(B, mp, cout))
        in_specs.append(pl.BlockSpec((1, mp, tn), lambda n, b: (b, 0, n)))

    out = pl.pallas_call(
        _make_conv_kernel(len(phases), taps, cin_p, mp, True, has_res),
        grid=grid,
        in_specs=in_specs,
        out_specs=pl.BlockSpec((1, mp, tn), lambda n, b: (b, 0, n)),
        out_shape=jax.ShapeDtypeStruct((B, mp, cout), jnp.bfloat16),
        compiler_params=pltpu.CompilerParams(
            dimension_semantics=("parallel", "parallel"),
            vmem_limit_bytes=VMEM_LIMIT),
    )(*args)

    out = out.reshape(B, Ho, Wp, cout)
    if Wp > Wo:
        out = out[:, :, :Wo, :]                       # drop padded-width garbage columns
    return out


def avgpool_classifier(x, w, b):
    """nn.AvgPool2d over the full spatial extent + nn.Conv2d(1024, ncls, 1),
    fused into one VMEM-resident kernel."""
    # TODO(synk): tile the spatial axis with an accumulator if H*W*C ever
    # exceeds VMEM (not needed at these sizes).
    B, H, W, C = x.shape
    ncls = w.shape[1]
    x3 = x.reshape(B, H * W, C)
    vmem = pl.BlockSpec(memory_space=pltpu.MemorySpace.VMEM)
    return pl.pallas_call(
        _head_kernel,
        in_specs=[vmem, vmem, vmem],
        out_specs=vmem,
        out_shape=jax.ShapeDtypeStruct((B, ncls), jnp.float32),
        compiler_params=pltpu.CompilerParams(vmem_limit_bytes=VMEM_LIMIT),
    )(x3, w, b)


# ------------------------------------------------------------------- params

def init_basic_conv(key, cin, cout, k):
    # Conv2d weight ~ N(0, sqrt(2 / (k*k*out_channels))), bias=False.
    n = k * k * cout
    w = jax.random.normal(key, (cout, cin, k, k), jnp.float32) * math.sqrt(2.0 / n)
    # BatchNorm2d folded (inference stats): gamma=1, beta=0, mean=0, var=1.
    gamma = jnp.ones((cout,), jnp.float32)
    beta = jnp.zeros((cout,), jnp.float32)
    mean = jnp.zeros((cout,), jnp.float32)
    var = jnp.ones((cout,), jnp.float32)
    scale = gamma / jnp.sqrt(var + BN_EPS)
    bias = beta - mean * scale
    # (kh, kw, cin) x cout weight matrix; cin zero-padded to a sublane-friendly
    # multiple; cast to bf16 once here (no per-call pad/cast of constants).
    cin_p = _round_up(cin, 16)
    w4 = jnp.transpose(w, (2, 3, 1, 0))                 # (k, k, cin, cout)
    w4 = jnp.pad(w4, ((0, 0), (0, 0), (0, cin_p - cin), (0, 0)))
    return {
        "w": w4.reshape(k * k * cin_p, cout).astype(jnp.bfloat16),
        "scale": scale.reshape(1, cout),
        "bias": bias.reshape(1, cout),
        "k": k, "cin_p": cin_p, "cout": cout,
    }


def init_layer(key, planes, blocks, stride=2):
    keys = jax.random.split(key, 2 * blocks + 1)
    layer = []
    for b in range(blocks):
        ds = None
        if b == 0 and stride != 1:
            ds = init_basic_conv(keys[0], planes // 2, planes, 3)
        layer.append({
            "downsample": ds,
            "conv1x1": init_basic_conv(keys[1 + 2 * b], planes, planes // 2, 1),
            "conv3x3": init_basic_conv(keys[2 + 2 * b], planes // 2, planes, 3),
        })
    return layer


def init_darknet53(key, layers, input_size, num_classes):
    ks = jax.random.split(key, 8)
    params = {
        "conv1": init_basic_conv(ks[0], 3, 32, 3),
        "layer1": init_layer(ks[1], 64, layers[0]),
        "layer2": init_layer(ks[2], 128, layers[1]),
        "layer3": init_layer(ks[3], 256, layers[2]),
        "layer4": init_layer(ks[4], 512, layers[3]),
        "layer5": init_layer(ks[5], 1024, layers[4]),
    }
    # classifier = nn.Conv2d(1024, num_classes, 1): weight N(0, sqrt(2/n)) with
    # n = 1*1*num_classes; bias uses PyTorch's default uniform init.
    n = 1 * 1 * num_classes
    cls_w = jax.random.normal(ks[6], (num_classes, 1024, 1, 1), jnp.float32) * math.sqrt(2.0 / n)
    bound = 1.0 / math.sqrt(1024)
    cls_b = jax.random.uniform(ks[7], (num_classes,), jnp.float32, -bound, bound)
    params["cls_w"] = jnp.transpose(cls_w, (2, 3, 1, 0)).reshape(1024, num_classes).astype(jnp.bfloat16)
    params["cls_b"] = cls_b.reshape(1, num_classes)
    params["num_classes"] = num_classes
    return params


# ------------------------------------------------------------------ forward

def bottleneck(x, p):
    if p["downsample"] is not None:
        x = conv_bn_act(x, p["downsample"], stride=2)
    residual = x
    out = conv_bn_act(x, p["conv1x1"])
    # residual add fused into the 3x3 conv kernel epilogue
    out = conv_bn_act(out, p["conv3x3"], residual=residual)
    return out


def darknet53_forward(params, x_nchw):
    x = jnp.transpose(x_nchw, (0, 2, 3, 1)).astype(jnp.bfloat16)   # NCHW -> NHWC bf16
    x = conv_bn_act(x, params["conv1"])
    for name in ("layer1", "layer2", "layer3", "layer4", "layer5"):
        for blk in params[name]:
            x = bottleneck(x, blk)
    logits = avgpool_classifier(x, params["cls_w"], params["cls_b"])  # (B, ncls) f32
    B = logits.shape[0]
    # back to NCHW with spatial 1x1, matching the PyTorch classifier output
    return logits.reshape(B, params["num_classes"], 1, 1)


if __name__ == "__main__":
    key = jax.random.PRNGKey(0)
    pkey, xkey = jax.random.split(key)

    # Small-but-faithful config: 5 stages (each downsamples by 2), so the
    # avgpool kernel_size = input_size / 2**5 is a global pool, exactly as in
    # the PyTorch module.
    layers = [1, 1, 1, 1, 1]
    input_size = 32
    num_classes = 16
    batch = 2

    params = init_darknet53(pkey, layers, input_size, num_classes)
    x = jax.random.normal(xkey, (batch, 3, input_size, input_size), jnp.float32)

    out = darknet53_forward(params, x)
    out = jax.block_until_ready(out)
    assert out.shape == (batch, num_classes, 1, 1), out.shape
    assert out.dtype == jnp.float32
    print("KERNEL_OK")
</pallas_src>

<mosaic_0001>
module attributes {stable_mosaic.version = 11 : i64} {
  func.func @kernel(%arg0: i32, %arg1: i32, %arg2: memref<1x1190x16xbf16, #tpu.memory_space<vmem>>, %arg3: memref<144x32xbf16, #tpu.memory_space<vmem>>, %arg4: memref<1x32xf32, #tpu.memory_space<vmem>>, %arg5: memref<1x32xf32, #tpu.memory_space<vmem>>, %arg6: memref<1x1088x32xbf16, #tpu.memory_space<vmem>>) attributes {dimension_semantics = [#tpu.dimension_semantics<parallel>, #tpu.dimension_semantics<parallel>], iteration_bounds = array<i64: 1, 2>, scalar_prefetch = 0 : i64, scratch_operands = 0 : i64, tpu.core_type = #tpu.core_type<tc>, window_params = [{transform_indices = @transform_0, window_bounds = array<i64: 1, 1190, 16>}, {transform_indices = @transform_1, window_bounds = array<i64: 144, 32>}, {transform_indices = @transform_2, window_bounds = array<i64: 1, 32>}, {transform_indices = @transform_3, window_bounds = array<i64: 1, 32>}, {transform_indices = @transform_4, window_bounds = array<i64: 1, 1088, 32>}]} {
    %c0 = arith.constant 0 : index
    %c0_0 = arith.constant 0 : index
    %c0_1 = arith.constant 0 : index
    %0 = vector.load %arg2[%c0, %c0_0, %c0_1] : memref<1x1190x16xbf16, #tpu.memory_space<vmem>>, vector<1x1088x16xbf16>
    %1 = vector.shape_cast %0 : vector<1x1088x16xbf16> to vector<1088x16xbf16>
    %c0_2 = arith.constant 0 : index
    %c0_3 = arith.constant 0 : index
    %2 = vector.load %arg3[%c0_2, %c0_3] : memref<144x32xbf16, #tpu.memory_space<vmem>>, vector<16x32xbf16>
    %cst = arith.constant dense<0.000000e+00> : vector<1088x32xf32>
    %3 = tpu.matmul %1, %2, %cst {dimension_numbers = #tpu.dot_dimension_numbers<[1], [0], [0], [1], [0, 0, 1, 1], [], []>} : vector<1088x16xbf16>, vector<16x32xbf16>, vector<1088x32xf32> -> vector<1088x32xf32>
    %c0_4 = arith.constant 0 : index
    %c1 = arith.constant 1 : index
    %c0_5 = arith.constant 0 : index
    %4 = vector.load %arg2[%c0_4, %c1, %c0_5] : memref<1x1190x16xbf16, #tpu.memory_space<vmem>>, vector<1x1088x16xbf16>
    %5 = vector.shape_cast %4 : vector<1x1088x16xbf16> to vector<1088x16xbf16>
    %c16 = arith.constant 16 : index
    %c0_6 = arith.constant 0 : index
    %6 = vector.load %arg3[%c16, %c0_6] : memref<144x32xbf16, #tpu.memory_space<vmem>>, vector<16x32xbf16>
    %cst_7 = arith.constant dense<0.000000e+00> : vector<1088x32xf32>
    %7 = tpu.matmul %5, %6, %cst_7 {dimension_numbers = #tpu.dot_dimension_numbers<[1], [0], [0], [1], [0, 0, 1, 1], [], []>} : vector<1088x16xbf16>, vector<16x32xbf16>, vector<1088x32xf32> -> vector<1088x32xf32>
    %8 = arith.addf %3, %7 : vector<1088x32xf32>
    %c0_8 = arith.constant 0 : index
    %c2 = arith.constant 2 : index
    %c0_9 = arith.constant 0 : index
    %9 = vector.load %arg2[%c0_8, %c2, %c0_9] : memref<1x1190x16xbf16, #tpu.memory_space<vmem>>, vector<1x1088x16xbf16>
    %10 = vector.shape_cast %9 : vector<1x1088x16xbf16> to vector<1088x16xbf16>
    %c32 = arith.constant 32 : index
    %c0_10 = arith.constant 0 : index
    %11 = vector.load %arg3[%c32, %c0_10] : memref<144x32xbf16, #tpu.memory_space<vmem>>, vector<16x32xbf16>
    %cst_11 = arith.constant dense<0.000000e+00> : vector<1088x32xf32>
    %12 = tpu.matmul %10, %11, %cst_11 {dimension_numbers = #tpu.dot_dimension_numbers<[1], [0], [0], [1], [0, 0, 1, 1], [], []>} : vector<1088x16xbf16>, vector<16x32xbf16>, vector<1088x32xf32> -> vector<1088x32xf32>
    %13 = arith.addf %8, %12 : vector<1088x32xf32>
    %c0_12 = arith.constant 0 : index
    %c34 = arith.constant 34 : index
    %c0_13 = arith.constant 0 : index
    %14 = vector.load %arg2[%c0_12, %c34, %c0_13] : memref<1x1190x16xbf16, #tpu.memory_space<vmem>>, vector<1x1088x16xbf16>
    %15 = vector.shape_cast %14 : vector<1x1088x16xbf16> to vector<1088x16xbf16>
    %c48 = arith.constant 48 : index
    %c0_14 = arith.constant 0 : index
    %16 = vector.load %arg3[%c48, %c0_14] : memref<144x32xbf16, #tpu.memory_space<vmem>>, vector<16x32xbf16>
    %cst_15 = arith.constant dense<0.000000e+00> : vector<1088x32xf32>
    %17 = tpu.matmul %15, %16, %cst_15 {dimension_numbers = #tpu.dot_dimension_numbers<[1], [0], [0], [1], [0, 0, 1, 1], [], []>} : vector<1088x16xbf16>, vector<16x32xbf16>, vector<1088x32xf32> -> vector<1088x32xf32>
    %18 = arith.addf %13, %17 : vector<1088x32xf32>
    %c0_16 = arith.constant 0 : index
    %c35 = arith.constant 35 : index
    %c0_17 = arith.constant 0 : index
    %19 = vector.load %arg2[%c0_16, %c35, %c0_17] : memref<1x1190x16xbf16, #tpu.memory_space<vmem>>, vector<1x1088x16xbf16>
    %20 = vector.shape_cast %19 : vector<1x1088x16xbf16> to vector<1088x16xbf16>
    %c64 = arith.constant 64 : index
    %c0_18 = arith.constant 0 : index
    %21 = vector.load %arg3[%c64, %c0_18] : memref<144x32xbf16, #tpu.memory_space<vmem>>, vector<16x32xbf16>
    %cst_19 = arith.constant dense<0.000000e+00> : vector<1088x32xf32>
    %22 = tpu.matmul %20, %21, %cst_19 {dimension_numbers = #tpu.dot_dimension_numbers<[1], [0], [0], [1], [0, 0, 1, 1], [], []>} : vector<1088x16xbf16>, vector<16x32xbf16>, vector<1088x32xf32> -> vector<1088x32xf32>
    %23 = arith.addf %18, %22 : vector<1088x32xf32>
    %c0_20 = arith.constant 0 : index
    %c36 = arith.constant 36 : index
    %c0_21 = arith.constant 0 : index
    %24 = vector.load %arg2[%c0_20, %c36, %c0_21] : memref<1x1190x16xbf16, #tpu.memory_space<vmem>>, vector<1x1088x16xbf16>
    %25 = vector.shape_cast %24 : vector<1x1088x16xbf16> to vector<1088x16xbf16>
    %c80 = arith.constant 80 : index
    %c0_22 = arith.constant 0 : index
    %26 = vector.load %arg3[%c80, %c0_22] : memref<144x32xbf16, #tpu.memory_space<vmem>>, vector<16x32xbf16>
    %cst_23 = arith.constant dense<0.000000e+00> : vector<1088x32xf32>
    %27 = tpu.matmul %25, %26, %cst_23 {dimension_numbers = #tpu.dot_dimension_numbers<[1], [0], [0], [1], [0, 0, 1, 1], [], []>} : vector<1088x16xbf16>, vector<16x32xbf16>, vector<1088x32xf32> -> vector<1088x32xf32>
    %28 = arith.addf %23, %27 : vector<1088x32xf32>
    %c0_24 = arith.constant 0 : index
    %c68 = arith.constant 68 : index
    %c0_25 = arith.constant 0 : index
    %29 = vector.load %arg2[%c0_24, %c68, %c0_25] : memref<1x1190x16xbf16, #tpu.memory_space<vmem>>, vector<1x1088x16xbf16>
    %30 = vector.shape_cast %29 : vector<1x1088x16xbf16> to vector<1088x16xbf16>
    %c96 = arith.constant 96 : index
    %c0_26 = arith.constant 0 : index
    %31 = vector.load %arg3[%c96, %c0_26] : memref<144x32xbf16, #tpu.memory_space<vmem>>, vector<16x32xbf16>
    %cst_27 = arith.constant dense<0.000000e+00> : vector<1088x32xf32>
    %32 = tpu.matmul %30, %31, %cst_27 {dimension_numbers = #tpu.dot_dimension_numbers<[1], [0], [0], [1], [0, 0, 1, 1], [], []>} : vector<1088x16xbf16>, vector<16x32xbf16>, vector<1088x32xf32> -> vector<1088x32xf32>
    %33 = arith.addf %28, %32 : vector<1088x32xf32>
    %c0_28 = arith.constant 0 : index
    %c69 = arith.constant 69 : index
    %c0_29 = arith.constant 0 : index
    %34 = vector.load %arg2[%c0_28, %c69, %c0_29] : memref<1x1190x16xbf16, #tpu.memory_space<vmem>>, vector<1x1088x16xbf16>
    %35 = vector.shape_cast %34 : vector<1x1088x16xbf16> to vector<1088x16xbf16>
    %c112 = arith.constant 112 : index
    %c0_30 = arith.constant 0 : index
    %36 = vector.load %arg3[%c112, %c0_30] : memref<144x32xbf16, #tpu.memory_space<vmem>>, vector<16x32xbf16>
    %cst_31 = arith.constant dense<0.000000e+00> : vector<1088x32xf32>
    %37 = tpu.matmul %35, %36, %cst_31 {dimension_numbers = #tpu.dot_dimension_numbers<[1], [0], [0], [1], [0, 0, 1, 1], [], []>} : vector<1088x16xbf16>, vector<16x32xbf16>, vector<1088x32xf32> -> vector<1088x32xf32>
    %38 = arith.addf %33, %37 : vector<1088x32xf32>
    %c0_32 = arith.constant 0 : index
    %c70 = arith.constant 70 : index
    %c0_33 = arith.constant 0 : index
    %39 = vector.load %arg2[%c0_32, %c70, %c0_33] : memref<1x1190x16xbf16, #tpu.memory_space<vmem>>, vector<1x1088x16xbf16>
    %40 = vector.shape_cast %39 : vector<1x1088x16xbf16> to vector<1088x16xbf16>
    %c128 = arith.constant 128 : index
    %c0_34 = arith.constant 0 : index
    %41 = vector.load %arg3[%c128, %c0_34] : memref<144x32xbf16, #tpu.memory_space<vmem>>, vector<16x32xbf16>
    %cst_35 = arith.constant dense<0.000000e+00> : vector<1088x32xf32>
    %42 = tpu.matmul %40, %41, %cst_35 {dimension_numbers = #tpu.dot_dimension_numbers<[1], [0], [0], [1], [0, 0, 1, 1], [], []>} : vector<1088x16xbf16>, vector<16x32xbf16>, vector<1088x32xf32> -> vector<1088x32xf32>
    %43 = arith.addf %38, %42 : vector<1088x32xf32>
    %c0_36 = arith.constant 0 : index
    %c0_37 = arith.constant 0 : index
    %44 = vector.load %arg4[%c0_36, %c0_37] : memref<1x32xf32, #tpu.memory_space<vmem>>, vector<1x32xf32>
    %45 = vector.broadcast %44 : vector<1x32xf32> to vector<1088x32xf32>
    %46 = arith.mulf %43, %45 : vector<1088x32xf32>
    %c0_38 = arith.constant 0 : index
    %c0_39 = arith.constant 0 : index
    %47 = vector.load %arg5[%c0_38, %c0_39] : memref<1x32xf32, #tpu.memory_space<vmem>>, vector<1x32xf32>
    %48 = vector.broadcast %47 : vector<1x32xf32> to vector<1088x32xf32>
    %49 = arith.addf %46, %48 : vector<1088x32xf32>
    %cst_40 = arith.constant 0.000000e+00 : f32
    %50 = vector.broadcast %cst_40 : f32 to vector<1088x32xf32>
    %51 = arith.cmpf ogt, %49, %50 : vector<1088x32xf32>
    %cst_41 = arith.constant 1.000000e-01 : f32
    %52 = vector.broadcast %cst_41 : f32 to vector<1088x32xf32>
    %53 = arith.mulf %52, %49 : vector<1088x32xf32>
    %54 = arith.select %51, %49, %53 : vector<1088x32xi1>, vector<1088x32xf32>
    %55 = arith.truncf %54 : vector<1088x32xf32> to vector<1088x32xbf16>
    %c0_42 = arith.constant 0 : index
    %c0_43 = arith.constant 0 : index
    %c0_44 = arith.constant 0 : index
    %56 = vector.load %arg6[%c0_42, %c0_43, %c0_44] : memref<1x1088x32xbf16, #tpu.memory_space<vmem>>, vector<1x1088x32xbf16>
    %57 = vector.shape_cast %56 : vector<1x1088x32xbf16> to vector<1088x32xbf16>
    %58 = vector.shape_cast %55 : vector<1088x32xbf16> to vector<1x1088x32xbf16>
    tpu.vector_store %arg6[%c0_42, %c0_43, %c0_44], %58 {strides = array<i32>} : memref<1x1088x32xbf16, #tpu.memory_space<vmem>>, vector<1x1088x32xbf16>,
    return
  }
  func.func @transform_0(%arg0: i32, %arg1: i32) -> (i32, i32, i32) {
    %c0_i32 = arith.constant 0 : i32
    %c0_i32_0 = arith.constant 0 : i32
    %c0_i32_1 = arith.constant 0 : i32
    return %arg1, %c0_i32, %c0_i32_0 : i32, i32, i32
  }
  func.func @transform_1(%arg0: i32, %arg1: i32) -> (i32, i32) {
    %c0_i32 = arith.constant 0 : i32
    %c0_i32_0 = arith.constant 0 : i32
    return %c0_i32, %arg0 : i32, i32
  }
  func.func @transform_2(%arg0: i32, %arg1: i32) -> (i32, i32) {
    %c0_i32 = arith.constant 0 : i32
    %c0_i32_0 = arith.constant 0 : i32
    return %c0_i32, %arg0 : i32, i32
  }
  func.func @transform_3(%arg0: i32, %arg1: i32) -> (i32, i32) {
    %c0_i32 = arith.constant 0 : i32
    %c0_i32_0 = arith.constant 0 : i32
    return %c0_i32, %arg0 : i32, i32
  }
  func.func @transform_4(%arg0: i32, %arg1: i32) -> (i32, i32, i32) {
    %c0_i32 = arith.constant 0 : i32
    %c0_i32_0 = arith.constant 0 : i32
    return %arg1, %c0_i32, %arg0 : i32, i32, i32
  }
}

</mosaic_0001>

<llo_original>
// kernel: tpu_custom_call.1
$region0: #{tpu_custom_call.1}
  #allocation0 [shape = 'u32[]', space=smem, size = 0x4, offset = 0x4, fixed_abs, tag = 'smem constant byte address 0x4 - core index']
  #allocation1 [shape = 'u32[144,128]{1,0:T(1,128)}', space=vmem, size = 0x12000, scoped, tag = 'internal scratch']
  %s0 = inlined_call_operand.vmem [shape: bf16[2,1190,16], index: 0, kind: input, shape index: {}]
  %s1 = inlined_call_operand.vmem [shape: bf16[144,32], index: 1, kind: input, shape index: {}]
  %s2 = inlined_call_operand.vmem [shape: f32[1,32], index: 2, kind: input, shape index: {}]
  %s3 = inlined_call_operand.vmem [shape: f32[1,32], index: 3, kind: input, shape index: {}]
  %s4 = inlined_call_operand.vmem [shape: bf16[2,1088,32], index: 4, kind: output, shape index: {}]
  %s5 = sld [smem:[#allocation0]]
  $region49: #{tpu_custom_call.1} parent=0
    _
  %s7 = ssub.s32 1, %s5
  %s8 = scalar_select 0, %s7, %s5
  loop: start=0, step=1, limit=4
  $region2: #{tpu_custom_call.1} parent=0 // loop_pre_header
    _
  $region3: #{tpu_custom_call.1} parent=0 // loop_header
    %s10 = sphi 0, %s14
    %p11 = scmp.ge.s32.totalorder %s10, 4
    %s17 = sphi 0, %s29
    %s18 = sphi 0, %s25
    %s19 = sphi 0, %s17
    %s20 = sphi 0, %s18
    %s21 = sphi 0, %s19
    %s22 = sphi 0, %s20
    %s32 = sphi 0, %s34
    %s35 = sphi 0, %s32
    %s36 = sphi 0, %s35
    %s52 = sphi 0, %s36
    %s58 = sphi 0, %s60
    %s61 = sphi 0, %s58
    %s62 = sphi 0, %s61
    %s78 = sphi 0, %s62
    %s84 = sphi 0, %s86
    %s87 = sphi 0, %s84
    %s88 = sphi 0, %s87
    %s104 = sphi 0, %s88
    %s110 = sphi 0, %s112
    %s113 = sphi 0, %s110
    %s114 = sphi 0, %s113
    %s130 = sphi 0, %s114
    %s138 = sphi 0, %s140
    %s141 = sphi 0, %s138
    %s142 = sphi 0, %s141
    %s158 = sphi 0, %s142
  $region4: #{tpu_custom_call.1} parent=0 // loop_header_branch
    %13 = sbr.rel (%p11) target = $region8
  $region5: #{tpu_custom_call.1} parent=0 // loop_body
    %s15 = ssub.s32 %s10, 1
    %s16 = ssub.s32 %s10, 2
    %s23 = sadd.s32 1, %s18
    %p24 = scmp.ge.s32.totalorder %s23, 2
    %s25 = scalar_select %p24, 0, %s23
    %s26 = sadd.s32 1, %s17
    %s27 = scalar_select %p24, %s26, %s17
    %p28 = scmp.ge.s32.totalorder %s27, 1
    %s29 = scalar_select %p28, 0, %s27
    %s30 = ssub.s32 %s18, %s25
    %p31 = scmp.eq.s32.totalorder %s30, 0
    %s33 = sadd.s32 %s32, 1
    %s34 = scalar_select %p31, %s32, %s33
    %p37 = pneg %p31
    %p38 = scmp.eq.s32.totalorder %s10, 1
    %p39 = por %p37, %p38
    %p40 = scmp.ne.s32.totalorder %s32, %s35
    %p41 = scmp.eq.s32.totalorder %s10, 0
    %p42 = por %p40, %p41
    %p43 = scmp.ne.s32.totalorder %s32, %s35
    %p44 = scmp.eq.s32.totalorder %s15, 1
    %p45 = por %p43, %p44
    %p46 = scmp.ne.s32.totalorder %s35, %s36
    %p47 = scmp.eq.s32.totalorder %s15, 0
    %p48 = por %p46, %p47
    %p49 = scmp.ne.s32.totalorder %s35, %s36
    %p50 = scmp.eq.s32.totalorder %s16, 1
    %p51 = por %p49, %p50
    %p53 = scmp.ne.s32.totalorder %s36, %s52
    %p54 = scmp.eq.s32.totalorder %s16, 0
    %p55 = por %p53, %p54
    %s56 = ssub.s32 %s17, %s29
    %p57 = scmp.eq.s32.totalorder %s56, 0
    %s59 = sadd.s32 %s58, 1
    %s60 = scalar_select %p57, %s58, %s59
    %p63 = pneg %p57
    %p64 = scmp.eq.s32.totalorder %s10, 1
    %p65 = por %p63, %p64
    %p66 = scmp.ne.s32.totalorder %s58, %s61
    %p67 = scmp.eq.s32.totalorder %s10, 0
    %p68 = por %p66, %p67
    %p69 = scmp.ne.s32.totalorder %s58, %s61
    %p70 = scmp.eq.s32.totalorder %s15, 1
    %p71 = por %p69, %p70
    %p72 = scmp.ne.s32.totalorder %s61, %s62
    %p73 = scmp.eq.s32.totalorder %s15, 0
    %p74 = por %p72, %p73
    %p75 = scmp.ne.s32.totalorder %s61, %s62
    %p76 = scmp.eq.s32.totalorder %s16, 1
    %p77 = por %p75, %p76
    %p79 = scmp.ne.s32.totalorder %s62, %s78
    %p80 = scmp.eq.s32.totalorder %s16, 0
    %p81 = por %p79, %p80
    %s82 = ssub.s32 %s17, %s29
    %p83 = scmp.eq.s32.totalorder %s82, 0
    %s85 = sadd.s32 %s84, 1
    %s86 = scalar_select %p83, %s84, %s85
    %p89 = pneg %p83
    %p90 = scmp.eq.s32.totalorder %s10, 1
    %p91 = por %p89, %p90
    %p92 = scmp.ne.s32.totalorder %s84, %s87
    %p93 = scmp.eq.s32.totalorder %s10, 0
    %p94 = por %p92, %p93
    %p95 = scmp.ne.s32.totalorder %s84, %s87
    %p96 = scmp.eq.s32.totalorder %s15, 1
    %p97 = por %p95, %p96
    %p98 = scmp.ne.s32.totalorder %s87, %s88
    %p99 = scmp.eq.s32.totalorder %s15, 0
    %p100 = por %p98, %p99
    %p101 = scmp.ne.s32.totalorder %s87, %s88
    %p102 = scmp.eq.s32.totalorder %s16, 1
    %p103 = por %p101, %p102
    %p105 = scmp.ne.s32.totalorder %s88, %s104
    %p106 = scmp.eq.s32.totalorder %s16, 0
    %p107 = por %p105, %p106
    %s108 = ssub.s32 %s17, %s29
    %p109 = scmp.eq.s32.totalorder %s108, 0
    %s111 = sadd.s32 %s110, 1
    %s112 = scalar_select %p109, %s110, %s111
    %p115 = pneg %p109
    %p116 = scmp.eq.s32.totalorder %s10, 1
    %p117 = por %p115, %p116
    %p118 = scmp.ne.s32.totalorder %s110, %s113
    %p119 = scmp.eq.s32.totalorder %s10, 0
    %p120 = por %p118, %p119
    %p121 = scmp.ne.s32.totalorder %s110, %s113
    %p122 = scmp.eq.s32.totalorder %s15, 1
    %p123 = por %p121, %p122
    %p124 = scmp.ne.s32.totalorder %s113, %s114
    %p125 = scmp.eq.s32.totalorder %s15, 0
    %p126 = por %p124, %p125
    %p127 = scmp.ne.s32.totalorder %s113, %s114
    %p128 = scmp.eq.s32.totalorder %s16, 1
    %p129 = por %p127, %p128
    %p131 = scmp.ne.s32.totalorder %s114, %s130
    %p132 = scmp.eq.s32.totalorder %s16, 0
    %p133 = por %p131, %p132
    %s134 = ssub.s32 %s18, %s25
    %s135 = ssub.s32 %s17, %s29
    %s136 = sor.u32 %s134, %s135
    %p137 = scmp.eq.s32.totalorder %s136, 0
    %s139 = sadd.s32 %s138, 1
    %s140 = scalar_select %p137, %s138, %s139
    %p143 = pneg %p137
    %p144 = scmp.eq.s32.totalorder %s10, 1
    %p145 = por %p143, %p144
    %p146 = scmp.ne.s32.totalorder %s138, %s141
    %p147 = scmp.eq.s32.totalorder %s10, 0
    %p148 = por %p146, %p147
    %p149 = scmp.ne.s32.totalorder %s138, %s141
    %p150 = scmp.eq.s32.totalorder %s15, 1
    %p151 = por %p149, %p150
    %p152 = scmp.ne.s32.totalorder %s141, %s142
    %p153 = scmp.eq.s32.totalorder %s15, 0
    %p154 = por %p152, %p153
    %p155 = scmp.ne.s32.totalorder %s141, %s142
    %p156 = scmp.eq.s32.totalorder %s16, 1
    %p157 = por %p155, %p156
    %p159 = scmp.ne.s32.totalorder %s142, %s158
    %p160 = scmp.eq.s32.totalorder %s16, 0
    %p161 = por %p159, %p160
    %p162 = scmp.le.s32.totalorder 1, %s10
    %p163 = scmp.lt.s32.totalorder %s10, 3
    %p164 = pnand %p162, %p163
    %p165 = pneg %p164
    // Predicated region
    $region9: #{tpu_custom_call.1} parent=5 // pred_check
      _
    $region10: #{tpu_custom_call.1} parent=5 // pred_check_branch
      %167 = sbr.rel (%p164) target = $region12
    $region11: #{tpu_custom_call.1} parent=5 // pred_region
      %s168 = ssub.s32 %s10, 1
      // Predicated region
      $region13: #{tpu_custom_call.1} parent=11 // pred_check
        %p169 = pneg %p74
      $region14: #{tpu_custom_call.1} parent=11 // pred_check_branch
        %171 = sbr.rel (%p169) target = $region16
      $region15: #{tpu_custom_call.1} parent=11 // pred_region
        %p172 = scmp.lt.s32.totalorder %s19, 0
        %s173 = scalar_select %p172, %s19, 0
        %s174 = smul.addr %s173, 4
        %s175 = scalar_lea.vmem %s1, %s174
      $region16: #{tpu_custom_call.1} parent=11 // pred_fallthru
        _
      // Predicated region
      $region17: #{tpu_custom_call.1} parent=11 // pred_check
        %p176 = pneg %p100
      $region18: #{tpu_custom_call.1} parent=11 // pred_check_branch
        %178 = sbr.rel (%p176) target = $region20
      $region19: #{tpu_custom_call.1} parent=11 // pred_region
        %p179 = scmp.lt.s32.totalorder %s19, 0
        %s180 = scalar_select %p179, %s19, 0
        %s181 = scalar_lea.vmem %s2, %s180
      $region20: #{tpu_custom_call.1} parent=11 // pred_fallthru
        _
      // Predicated region
      $region21: #{tpu_custom_call.1} parent=11 // pred_check
        %p182 = pneg %p126
      $region22: #{tpu_custom_call.1} parent=11 // pred_check_branch
        %184 = sbr.rel (%p182) target = $region24
      $region23: #{tpu_custom_call.1} parent=11 // pred_region
        %p185 = scmp.lt.s32.totalorder %s19, 0
        %s186 = scalar_select %p185, %s19, 0
        %s187 = scalar_lea.vmem %s3, %s186
      $region24: #{tpu_custom_call.1} parent=11 // pred_fallthru
        _
    $region12: #{tpu_custom_call.1} parent=5 // pred_fallthru
      _
    %p188 = scmp.lt.s32.totalorder %s10, 2
    // Predicated region
    $region25: #{tpu_custom_call.1} parent=5 // pred_check
      %p189 = pneg %p188
    $region26: #{tpu_custom_call.1} parent=5 // pred_check_branch
      %191 = sbr.rel (%p189) target = $region28
    $region27: #{tpu_custom_call.1} parent=5 // pred_region
      // Predicated region
      $region29: #{tpu_custom_call.1} parent=27 // pred_check
        %p192 = pneg %p42
      $region30: #{tpu_custom_call.1} parent=27 // pred_check_branch
        %194 = sbr.rel (%p192) target = $region32
      $region31: #{tpu_custom_call.1} parent=27 // pred_region
        %p195 = scmp.lt.s32.totalorder %s18, 1
        %s196 = scalar_select %p195, %s18, 1
        %s197 = smul.addr %s196, 149
        %s198 = smul.addr %s197, 4
        %s199 = scalar_lea.vmem %s0, %s198
      $region32: #{tpu_custom_call.1} parent=27 // pred_fallthru
        _
    $region28: #{tpu_custom_call.1} parent=5 // pred_fallthru
      _
    %p200 = scmp.le.s32.totalorder 1, %s10
    %p201 = scmp.lt.s32.totalorder %s10, 3
    %p202 = pnand %p200, %p201
    %p203 = pneg %p202
    // Predicated region
    $region33: #{tpu_custom_call.1} parent=5 // pred_check
      _
    $region34: #{tpu_custom_call.1} parent=5 // pred_check_branch
      %205 = sbr.rel (%p202) target = $region36
    $region35: #{tpu_custom_call.1} parent=5 // pred_region
      %s206 = ssub.s32 %s10, 1
      %p207 = scmp.lt.s32.totalorder %s20, 1
      %s208 = scalar_select %p207, %s20, 1
      %s209 = smul.addr %s208, 149
      %s210 = smul.addr %s209, 4
      %s211 = scalar_lea.vmem %s0, %s210
      %p212 = pneg %p48
      %p213 = pneg %p45
      %p214 = scmp.lt.s32.totalorder %s19, 0
      %s215 = scalar_select %p214, %s19, 0
      %s216 = smul.addr %s215, 4
      %s217 = scalar_lea.vmem %s1, %s216
      %p218 = pneg %p74
      %p219 = pneg %p71
      %p220 = scmp.lt.s32.totalorder %s19, 0
      %s221 = scalar_select %p220, %s19, 0
      %s222 = scalar_lea.vmem %s2, %s221
      %p223 = pneg %p100
      %p224 = pneg %p97
      %p225 = scmp.lt.s32.totalorder %s19, 0
      %s226 = scalar_select %p225, %s19, 0
      %s227 = scalar_lea.vmem %s3, %s226
      %p228 = pneg %p126
      %p229 = pneg %p123
      %p230 = pneg %p154
      %p231 = pneg %p151
      %p232 = scmp.lt.s32.totalorder %s20, 1
      %s233 = scalar_select %p232, %s20, 1
      %p234 = scmp.lt.s32.totalorder %s19, 0
      %s235 = scalar_select %p234, %s19, 0
      %s236 = smul.addr %s233, 136
      %s237 = sadd.s32 %s235, %s236
      %s238 = smul.addr %s237, 4
      %s239 = scalar_lea.vmem %s4, %s238
      %p240 = scmp.lt.s32.totalorder %s20, 1
      %s241 = scalar_select %p240, %s20, 1
      %s242 = smul.addr %s241, 149
      %s243 = smul.addr %s242, 4
      %s244 = scalar_lea.vmem %s0, %s243
      %p245 = scmp.lt.s32.totalorder %s19, 0
      %s246 = scalar_select %p245, %s19, 0
      %s247 = smul.addr %s246, 4
      %s248 = scalar_lea.vmem %s1, %s247
      %p249 = scmp.lt.s32.totalorder %s19, 0
      %s250 = scalar_select %p249, %s19, 0
      %s251 = scalar_lea.vmem %s2, %s250
      %p252 = scmp.lt.s32.totalorder %s19, 0
      %s253 = scalar_select %p252, %s19, 0
      %s254 = scalar_lea.vmem %s3, %s253
      %p255 = scmp.lt.s32.totalorder %s20, 1
      %s256 = scalar_select %p255, %s20, 1
      %p257 = scmp.lt.s32.totalorder %s19, 0
      %s258 = scalar_select %p257, %s19, 0
      %s259 = smul.addr %s256, 136
      %s260 = sadd.s32 %s258, %s259
      %s261 = smul.addr %s260, 4
      %s262 = scalar_lea.vmem %s4, %s261
      %v264 = vld [vmem:[%s244] sm:$0xf]
      %v265 = vld [vmem:[%s244 + $0x4] sm:$0xf]
      %v266 = vld [vmem:[%s244 + $0x8] sm:$0xf]
      %v267 = vld [vmem:[%s244 + $0xc] sm:$0xf]
      %v268 = vld [vmem:[%s244 + $0x10] sm:$0xf]
      %v269 = vld [vmem:[%s244 + $0x14] sm:$0xf]
      %v270 = vld [vmem:[%s244 + $0x18] sm:$0xf]
      %v271 = vld [vmem:[%s244 + $0x1c] sm:$0xf]
      %v272 = vld [vmem:[%s244 + $0x20] sm:$0xf]
      %v273 = vld [vmem:[%s244 + $0x24] sm:$0xf]
      %v274 = vld [vmem:[%s244 + $0x28] sm:$0xf]
      %v275 = vld [vmem:[%s244 + $0x2c] sm:$0xf]
      %v276 = vld [vmem:[%s244 + $0x30] sm:$0xf]
      %v277 = vld [vmem:[%s244 + $0x34] sm:$0xf]
      %v278 = vld [vmem:[%s244 + $0x38] sm:$0xf]
      %v279 = vld [vmem:[%s244 + $0x3c] sm:$0xf]
      %v280 = vld [vmem:[%s244 + $0x40] sm:$0xf]
      %v281 = vld [vmem:[%s244 + $0x44] sm:$0xf]
      %v282 = vld [vmem:[%s244 + $0x48] sm:$0xf]
      %v283 = vld [vmem:[%s244 + $0x4c] sm:$0xf]
      %v284 = vld [vmem:[%s244 + $0x50] sm:$0xf]
      %v285 = vld [vmem:[%s244 + $0x54] sm:$0xf]
      %v286 = vld [vmem:[%s244 + $0x58] sm:$0xf]
      %v287 = vld [vmem:[%s244 + $0x5c] sm:$0xf]
      %v288 = vld [vmem:[%s244 + $0x60] sm:$0xf]
      %v289 = vld [vmem:[%s244 + $0x64] sm:$0xf]
      %v290 = vld [vmem:[%s244 + $0x68] sm:$0xf]
      %v291 = vld [vmem:[%s244 + $0x6c] sm:$0xf]
      %v292 = vld [vmem:[%s244 + $0x70] sm:$0xf]
      %v293 = vld [vmem:[%s244 + $0x74] sm:$0xf]
      %v294 = vld [vmem:[%s244 + $0x78] sm:$0xf]
      %v295 = vld [vmem:[%s244 + $0x7c] sm:$0xf]
      %v296 = vld [vmem:[%s244 + $0x80] sm:$0xf]
      %v297 = vld [vmem:[%s244 + $0x84] sm:$0xf]
      %v298 = vld [vmem:[%s244 + $0x88] sm:$0xf]
      %v299 = vld [vmem:[%s244 + $0x8c] sm:$0xf]
      %v300 = vld [vmem:[%s244 + $0x90] sm:$0xf]
      %v301 = vld [vmem:[%s244 + $0x94] sm:$0xf]
      %v302 = vld [vmem:[%s244 + $0x98] sm:$0xf]
      %v303 = vld [vmem:[%s244 + $0x9c] sm:$0xf]
      %v304 = vld [vmem:[%s244 + $0xa0] sm:$0xf]
      %v305 = vld [vmem:[%s244 + $0xa4] sm:$0xf]
      %v306 = vld [vmem:[%s244 + $0xa8] sm:$0xf]
      %v307 = vld [vmem:[%s244 + $0xac] sm:$0xf]
      %v308 = vld [vmem:[%s244 + $0xb0] sm:$0xf]
      %v309 = vld [vmem:[%s244 + $0xb4] sm:$0xf]
      %v310 = vld [vmem:[%s244 + $0xb8] sm:$0xf]
      %v311 = vld [vmem:[%s244 + $0xbc] sm:$0xf]
      %v312 = vld [vmem:[%s244 + $0xc0] sm:$0xf]
      %v313 = vld [vmem:[%s244 + $0xc4] sm:$0xf]
      %v314 = vld [vmem:[%s244 + $0xc8] sm:$0xf]
      %v315 = vld [vmem:[%s244 + $0xcc] sm:$0xf]
      %v316 = vld [vmem:[%s244 + $0xd0] sm:$0xf]
      %v317 = vld [vmem:[%s244 + $0xd4] sm:$0xf]
      %v318 = vld [vmem:[%s244 + $0xd8] sm:$0xf]
      %v319 = vld [vmem:[%s244 + $0xdc] sm:$0xf]
      %v320 = vld [vmem:[%s244 + $0xe0] sm:$0xf]
      %v321 = vld [vmem:[%s244 + $0xe4] sm:$0xf]
      %v322 = vld [vmem:[%s244 + $0xe8] sm:$0xf]
      %v323 = vld [vmem:[%s244 + $0xec] sm:$0xf]
      %v324 = vld [vmem:[%s244 + $0xf0] sm:$0xf]
      %v325 = vld [vmem:[%s244 + $0xf4] sm:$0xf]
      %v326 = vld [vmem:[%s244 + $0xf8] sm:$0xf]
      %v327 = vld [vmem:[%s244 + $0xfc] sm:$0xf]
      %v328 = vld [vmem:[%s244 + $0x100] sm:$0xf]
      %v329 = vld [vmem:[%s244 + $0x104] sm:$0xf]
      %v330 = vld [vmem:[%s244 + $0x108] sm:$0xf]
      %v331 = vld [vmem:[%s244 + $0x10c] sm:$0xf]
      %v332 = vld [vmem:[%s244 + $0x110] sm:$0xf]
      %v333 = vld [vmem:[%s244 + $0x114] sm:$0xf]
      %v334 = vld [vmem:[%s244 + $0x118] sm:$0xf]
      %v335 = vld [vmem:[%s244 + $0x11c] sm:$0xf]
      %v336 = vld [vmem:[%s244 + $0x120] sm:$0xf]
      %v337 = vld [vmem:[%s244 + $0x124] sm:$0xf]
      %v338 = vld [vmem:[%s244 + $0x128] sm:$0xf]
      %v339 = vld [vmem:[%s244 + $0x12c] sm:$0xf]
      %v340 = vld [vmem:[%s244 + $0x130] sm:$0xf]
      %v341 = vld [vmem:[%s244 + $0x134] sm:$0xf]
      %v342 = vld [vmem:[%s244 + $0x138] sm:$0xf]
      %v343 = vld [vmem:[%s244 + $0x13c] sm:$0xf]
      %v344 = vld [vmem:[%s244 + $0x140] sm:$0xf]
      %v345 = vld [vmem:[%s244 + $0x144] sm:$0xf]
      %v346 = vld [vmem:[%s244 + $0x148] sm:$0xf]
      %v347 = vld [vmem:[%s244 + $0x14c] sm:$0xf]
      %v348 = vld [vmem:[%s244 + $0x150] sm:$0xf]
      %v349 = vld [vmem:[%s244 + $0x154] sm:$0xf]
      %v350 = vld [vmem:[%s244 + $0x158] sm:$0xf]
      %v351 = vld [vmem:[%s244 + $0x15c] sm:$0xf]
      %v352 = vld [vmem:[%s244 + $0x160] sm:$0xf]
      %v353 = vld [vmem:[%s244 + $0x164] sm:$0xf]
      %v354 = vld [vmem:[%s244 + $0x168] sm:$0xf]
      %v355 = vld [vmem:[%s244 + $0x16c] sm:$0xf]
      %v356 = vld [vmem:[%s244 + $0x170] sm:$0xf]
      %v357 = vld [vmem:[%s244 + $0x174] sm:$0xf]
      %v358 = vld [vmem:[%s244 + $0x178] sm:$0xf]
      %v359 = vld [vmem:[%s244 + $0x17c] sm:$0xf]
      %v360 = vld [vmem:[%s244 + $0x180] sm:$0xf]
      %v361 = vld [vmem:[%s244 + $0x184] sm:$0xf]
      %v362 = vld [vmem:[%s244 + $0x188] sm:$0xf]
      %v363 = vld [vmem:[%s244 + $0x18c] sm:$0xf]
      %v364 = vld [vmem:[%s244 + $0x190] sm:$0xf]
      %v365 = vld [vmem:[%s244 + $0x194] sm:$0xf]
      %v366 = vld [vmem:[%s244 + $0x198] sm:$0xf]
      %v367 = vld [vmem:[%s244 + $0x19c] sm:$0xf]
      %v368 = vld [vmem:[%s244 + $0x1a0] sm:$0xf]
      %v369 = vld [vmem:[%s244 + $0x1a4] sm:$0xf]
      %v370 = vld [vmem:[%s244 + $0x1a8] sm:$0xf]
      %v371 = vld [vmem:[%s244 + $0x1ac] sm:$0xf]
      %v372 = vld [vmem:[%s244 + $0x1b0] sm:$0xf]
      %v373 = vld [vmem:[%s244 + $0x1b4] sm:$0xf]
      %v374 = vld [vmem:[%s244 + $0x1b8] sm:$0xf]
      %v375 = vld [vmem:[%s244 + $0x1bc] sm:$0xf]
      %v376 = vld [vmem:[%s244 + $0x1c0] sm:$0xf]
      %v377 = vld [vmem:[%s244 + $0x1c4] sm:$0xf]
      %v378 = vld [vmem:[%s244 + $0x1c8] sm:$0xf]
      %v379 = vld [vmem:[%s244 + $0x1cc] sm:$0xf]
      %v380 = vld [vmem:[%s244 + $0x1d0] sm:$0xf]
      %v381 = vld [vmem:[%s244 + $0x1d4] sm:$0xf]
      %v382 = vld [vmem:[%s244 + $0x1d8] sm:$0xf]
      %v383 = vld [vmem:[%s244 + $0x1dc] sm:$0xf]
      %v384 = vld [vmem:[%s244 + $0x1e0] sm:$0xf]
      %v385 = vld [vmem:[%s244 + $0x1e4] sm:$0xf]
      %v386 = vld [vmem:[%s244 + $0x1e8] sm:$0xf]
      %v387 = vld [vmem:[%s244 + $0x1ec] sm:$0xf]
      %v388 = vld [vmem:[%s244 + $0x1f0] sm:$0xf]
      %v389 = vld [vmem:[%s244 + $0x1f4] sm:$0xf]
      %v390 = vld [vmem:[%s244 + $0x1f8] sm:$0xf]
      %v391 = vld [vmem:[%s244 + $0x1fc] sm:$0xf]
      %v392 = vld [vmem:[%s244 + $0x200] sm:$0xf]
      %v393 = vld [vmem:[%s244 + $0x204] sm:$0xf]
      %v394 = vld [vmem:[%s244 + $0x208] sm:$0xf]
      %v395 = vld [vmem:[%s244 + $0x20c] sm:$0xf]
      %v396 = vld [vmem:[%s244 + $0x210] sm:$0xf]
      %v397 = vld [vmem:[%s244 + $0x214] sm:$0xf]
      %v398 = vld [vmem:[%s244 + $0x218] sm:$0xf]
      %v399 = vld [vmem:[%s244 + $0x21c] sm:$0xf]
      %v400 = vld [vmem:[%s248] sm:$0xf]
      %v401 = vld [vmem:[%s248 + $0x4] sm:$0xf]
      %v402 = vld [vmem:[%s244 + $0x220] sm:$0x1]
      %v403 = vld [vmem:[%s248 + $0x8] sm:$0xf]
      %v404 = vld [vmem:[%s248 + $0xc] sm:$0xf]
      %v542 = vunpack.c.l.b16 %v264
      %v543 = vunpack.c.l.b16 %v265
      %v544 = vunpack.c.l.b16 %v266
      %v545 = vunpack.c.l.b16 %v267
      %v546 = vunpack.c.l.b16 %v268
      %v547 = vunpack.c.l.b16 %v269
      %v548 = vunpack.c.l.b16 %v270
      %v549 = vunpack.c.l.b16 %v271
      %v550 = vunpack.c.l.b16 %v272
      %v551 = vunpack.c.l.b16 %v273
      %v552 = vunpack.c.l.b16 %v274
      %v553 = vunpack.c.l.b16 %v275
      %v554 = vunpack.c.l.b16 %v276
      %v555 = vunpack.c.l.b16 %v277
      %v556 = vunpack.c.l.b16 %v278
      %v557 = vunpack.c.l.b16 %v279
      %v558 = vunpack.c.l.b16 %v280
      %v559 = vunpack.c.l.b16 %v281
      %v560 = vunpack.c.l.b16 %v282
      %v561 = vunpack.c.l.b16 %v283
      %v562 = vunpack.c.l.b16 %v284
      %v563 = vunpack.c.l.b16 %v285
      %v564 = vunpack.c.l.b16 %v286
      %v565 = vunpack.c.l.b16 %v287
      %v566 = vunpack.c.l.b16 %v288
      %v567 = vunpack.c.l.b16 %v289
      %v568 = vunpack.c.l.b16 %v290
      %v569 = vunpack.c.l.b16 %v291
      %v570 = vunpack.c.l.b16 %v292
      %v571 = vunpack.c.l.b16 %v293
      %v572 = vunpack.c.l.b16 %v294
      %v573 = vunpack.c.l.b16 %v295
      %v574 = vunpack.c.l.b16 %v296
      %v575 = vunpack.c.l.b16 %v297
      %v576 = vunpack.c.l.b16 %v298
      %v577 = vunpack.c.l.b16 %v299
      %v578 = vunpack.c.l.b16 %v300
      %v579 = vunpack.c.l.b16 %v301
      %v580 = vunpack.c.l.b16 %v302
      %v581 = vunpack.c.l.b16 %v303
      %v582 = vunpack.c.l.b16 %v304
      %v583 = vunpack.c.l.b16 %v305
      %v584 = vunpack.c.l.b16 %v306
      %v585 = vunpack.c.l.b16 %v307
      %v586 = vunpack.c.l.b16 %v308
      %v587 = vunpack.c.l.b16 %v309
      %v588 = vunpack.c.l.b16 %v310
      %v589 = vunpack.c.l.b16 %v311
      %v590 = vunpack.c.l.b16 %v312
      %v591 = vunpack.c.l.b16 %v313
      %v592 = vunpack.c.l.b16 %v314
      %v593 = vunpack.c.l.b16 %v315
      %v594 = vunpack.c.l.b16 %v316
      %v595 = vunpack.c.l.b16 %v317
      %v596 = vunpack.c.l.b16 %v318
      %v597 = vunpack.c.l.b16 %v319
      %v598 = vunpack.c.l.b16 %v320
      %v599 = vunpack.c.l.b16 %v321
      %v600 = vunpack.c.l.b16 %v322
      %v601 = vunpack.c.l.b16 %v323
      %v602 = vunpack.c.l.b16 %v324
      %v603 = vunpack.c.l.b16 %v325
      %v604 = vunpack.c.l.b16 %v326
      %v605 = vunpack.c.l.b16 %v327
      %v606 = vunpack.c.l.b16 %v328
      %v607 = vunpack.c.l.b16 %v329
      %v608 = vunpack.c.l.b16 %v330
      %v609 = vunpack.c.l.b16 %v331
      %v610 = vunpack.c.l.b16 %v332
      %v611 = vunpack.c.l.b16 %v333
      %v612 = vunpack.c.l.b16 %v334
      %v613 = vunpack.c.l.b16 %v335
      %v614 = vunpack.c.l.b16 %v336
      %v615 = vunpack.c.l.b16 %v337
      %v616 = vunpack.c.l.b16 %v338
      %v617 = vunpack.c.l.b16 %v339
      %v618 = vunpack.c.l.b16 %v340
      %v619 = vunpack.c.l.b16 %v341
      %v620 = vunpack.c.l.b16 %v342
      %v621 = vunpack.c.l.b16 %v343
      %v622 = vunpack.c.l.b16 %v344
      %v623 = vunpack.c.l.b16 %v345
      %v624 = vunpack.c.l.b16 %v346
      %v625 = vunpack.c.l.b16 %v347
      %v626 = vunpack.c.l.b16 %v348
      %v627 = vunpack.c.l.b16 %v349
      %v628 = vunpack.c.l.b16 %v350
      %v629 = vunpack.c.l.b16 %v351
      %v630 = vunpack.c.l.b16 %v352
      %v631 = vunpack.c.l.b16 %v353
      %v632 = vunpack.c.l.b16 %v354
      %v633 = vunpack.c.l.b16 %v355
      %v634 = vunpack.c.l.b16 %v356
      %v635 = vunpack.c.l.b16 %v357
      %v636 = vunpack.c.l.b16 %v358
      %v637 = vunpack.c.l.b16 %v359
      %v638 = vunpack.c.l.b16 %v360
      %v639 = vunpack.c.l.b16 %v361
      %v640 = vunpack.c.l.b16 %v362
      %v641 = vunpack.c.l.b16 %v363
      %v642 = vunpack.c.l.b16 %v364
      %v643 = vunpack.c.l.b16 %v365
      %v644 = vunpack.c.l.b16 %v366
      %v645 = vunpack.c.l.b16 %v367
      %v646 = vunpack.c.l.b16 %v368
      %v647 = vunpack.c.l.b16 %v369
      %v648 = vunpack.c.l.b16 %v370
      %v649 = vunpack.c.l.b16 %v371
      %v650 = vunpack.c.l.b16 %v372
      %v651 = vunpack.c.l.b16 %v373
      %v652 = vunpack.c.l.b16 %v374
      %v653 = vunpack.c.l.b16 %v375
      %v654 = vunpack.c.l.b16 %v376
      %v655 = vunpack.c.l.b16 %v377
      %v656 = vunpack.c.l.b16 %v378
      %v657 = vunpack.c.l.b16 %v379
      %v658 = vunpack.c.l.b16 %v380
      %v659 = vunpack.c.l.b16 %v381
      %v660 = vunpack.c.l.b16 %v382
      %v661 = vunpack.c.l.b16 %v383
      %v662 = vunpack.c.l.b16 %v384
      %v663 = vunpack.c.l.b16 %v385
      %v664 = vunpack.c.l.b16 %v386
      %v665 = vunpack.c.l.b16 %v387
      %v666 = vunpack.c.l.b16 %v388
      %v667 = vunpack.c.l.b16 %v389
      %v668 = vunpack.c.l.b16 %v390
      %v669 = vunpack.c.l.b16 %v391
      %v670 = vunpack.c.l.b16 %v392
      %v671 = vunpack.c.l.b16 %v393
      %v672 = vunpack.c.l.b16 %v394
      %v673 = vunpack.c.l.b16 %v395
      %v674 = vunpack.c.l.b16 %v396
      %v675 = vunpack.c.l.b16 %v397
      %v676 = vunpack.c.l.b16 %v398
      %v677 = vunpack.c.l.b16 %v399
      %v678 = vunpack.c.l.b16 %v402
      %v679 = vpack.c.b16 %v543, %v542
      %v680 = vpack.c.b16 %v545, %v544
      %v681 = vpack.c.b16 %v547, %v546
      %v682 = vpack.c.b16 %v549, %v548
      %v683 = vpack.c.b16 %v551, %v550
      %v684 = vpack.c.b16 %v553, %v552
      %v685 = vpack.c.b16 %v555, %v554
      %v686 = vpack.c.b16 %v557, %v556
      %v687 = vpack.c.b16 %v559, %v558
      %v688 = vpack.c.b16 %v561, %v560
      %v689 = vpack.c.b16 %v563, %v562
      %v690 = vpack.c.b16 %v565, %v564
      %v691 = vpack.c.b16 %v567, %v566
      %v692 = vpack.c.b16 %v569, %v568
      %v693 = vpack.c.b16 %v571, %v570
      %v694 = vpack.c.b16 %v573, %v572
      %v695 = vpack.c.b16 %v575, %v574
      %v696 = vpack.c.b16 %v577, %v576
      %v697 = vpack.c.b16 %v579, %v578
      %v698 = vpack.c.b16 %v581, %v580
      %v699 = vpack.c.b16 %v583, %v582
      %v700 = vpack.c.b16 %v585, %v584
      %v701 = vpack.c.b16 %v587, %v586
      %v702 = vpack.c.b16 %v589, %v588
      %v703 = vpack.c.b16 %v591, %v590
      %v704 = vpack.c.b16 %v593, %v592
      %v705 = vpack.c.b16 %v595, %v594
      %v706 = vpack.c.b16 %v597, %v596
      %v707 = vpack.c.b16 %v599, %v598
      %v708 = vpack.c.b16 %v601, %v600
      %v709 = vpack.c.b16 %v603, %v602
      %v710 = vpack.c.b16 %v605, %v604
      %v711 = vpack.c.b16 %v607, %v606
      %v712 = vpack.c.b16 %v609, %v608
      %v713 = vpack.c.b16 %v611, %v610
      %v714 = vpack.c.b16 %v613, %v612
      %v715 = vpack.c.b16 %v615, %v614
      %v716 = vpack.c.b16 %v617, %v616
      %v717 = vpack.c.b16 %v619, %v618
      %v718 = vpack.c.b16 %v621, %v620
      %v719 = vpack.c.b16 %v623, %v622
      %v720 = vpack.c.b16 %v625, %v624
      %v721 = vpack.c.b16 %v627, %v626
      %v722 = vpack.c.b16 %v629, %v628
      %v723 = vpack.c.b16 %v631, %v630
      %v724 = vpack.c.b16 %v633, %v632
      %v725 = vpack.c.b16 %v635, %v634
      %v726 = vpack.c.b16 %v637, %v636
      %v727 = vpack.c.b16 %v639, %v638
      %v728 = vpack.c.b16 %v641, %v640
      %v729 = vpack.c.b16 %v643, %v642
      %v730 = vpack.c.b16 %v645, %v644
      %v731 = vpack.c.b16 %v647, %v646
      %v732 = vpack.c.b16 %v649, %v648
      %v733 = vpack.c.b16 %v651, %v650
      %v734 = vpack.c.b16 %v653, %v652
      %v735 = vpack.c.b16 %v655, %v654
      %v736 = vpack.c.b16 %v657, %v656
      %v737 = vpack.c.b16 %v659, %v658
      %v738 = vpack.c.b16 %v661, %v660
      %v739 = vpack.c.b16 %v663, %v662
      %v740 = vpack.c.b16 %v665, %v664
      %v741 = vpack.c.b16 %v667, %v666
      %v742 = vpack.c.b16 %v669, %v668
      %v743 = vpack.c.b16 %v671, %v670
      %v744 = vpack.c.b16 %v673, %v672
      %v745 = vpack.c.b16 %v675, %v674
      %v746 = vpack.c.b16 %v677, %v676
      %v747 = vpack.c.b16 %v678, %v678
      %vm748 = vsmask.f32 7424
      %v750 = vshrl.u32 %v679, 16
      %v752 = vshll.u32 %v679, 16
      %v754 = vrot.slane %v752, 1
      %v755 = vor.u32 %v750, %v754
      %v757 = vshll.u32 %v680, 16
      %v759 = vrot.slane %v757, 1
      %v760 = vsel %vm748, %v755, %v759
      %v761 = vshrl.u32 %v680, 16
      %v763 = vor.u32 %v761, %v759
      %v765 = vshll.u32 %v681, 16
      %v767 = vrot.slane %v765, 1
      %v768 = vsel %vm748, %v763, %v767
      %v769 = vshrl.u32 %v681, 16
      %v771 = vor.u32 %v769, %v767
      %v773 = vshll.u32 %v682, 16
      %v775 = vrot.slane %v773, 1
      %v776 = vsel %vm748, %v771, %v775
      %v777 = vshrl.u32 %v682, 16
      %v779 = vor.u32 %v777, %v775
      %v781 = vshll.u32 %v683, 16
      %v783 = vrot.slane %v781, 1
      %v784 = vsel %vm748, %v779, %v783
      %v785 = vshrl.u32 %v683, 16
      %v787 = vor.u32 %v785, %v783
      %v789 = vshll.u32 %v684, 16
      %v791 = vrot.slane %v789, 1
      %v792 = vsel %vm748, %v787, %v791
      %v793 = vshrl.u32 %v684, 16
      %v795 = vor.u32 %v793, %v791
      %v797 = vshll.u32 %v685, 16
      %v799 = vrot.slane %v797, 1
      %v800 = vsel %vm748, %v795, %v799
      %v801 = vshrl.u32 %v685, 16
      %v803 = vor.u32 %v801, %v799
      %v805 = vshll.u32 %v686, 16
      %v807 = vrot.slane %v805, 1
      %v808 = vsel %vm748, %v803, %v807
      %v809 = vshrl.u32 %v686, 16
      %v811 = vor.u32 %v809, %v807
      %v813 = vshll.u32 %v687, 16
      %v815 = vrot.slane %v813, 1
      %v816 = vsel %vm748, %v811, %v815
      %v817 = vshrl.u32 %v687, 16
      %v819 = vor.u32 %v817, %v815
      %v821 = vshll.u32 %v688, 16
      %v823 = vrot.slane %v821, 1
      %v824 = vsel %vm748, %v819, %v823
      %v825 = vshrl.u32 %v688, 16
      %v827 = vor.u32 %v825, %v823
      %v829 = vshll.u32 %v689, 16
      %v831 = vrot.slane %v829, 1
      %v832 = vsel %vm748, %v827, %v831
      %v833 = vshrl.u32 %v689, 16
      %v835 = vor.u32 %v833, %v831
      %v837 = vshll.u32 %v690, 16
      %v839 = vrot.slane %v837, 1
      %v840 = vsel %vm748, %v835, %v839
      %v841 = vshrl.u32 %v690, 16
      %v843 = vor.u32 %v841, %v839
      %v845 = vshll.u32 %v691, 16
      %v847 = vrot.slane %v845, 1
      %v848 = vsel %vm748, %v843, %v847
      %v849 = vshrl.u32 %v691, 16
      %v851 = vor.u32 %v849, %v847
      %v853 = vshll.u32 %v692, 16
      %v855 = vrot.slane %v853, 1
      %v856 = vsel %vm748, %v851, %v855
      %v857 = vshrl.u32 %v692, 16
      %v859 = vor.u32 %v857, %v855
      %v861 = vshll.u32 %v693, 16
      %v863 = vrot.slane %v861, 1
      %v864 = vsel %vm748, %v859, %v863
      %v865 = vshrl.u32 %v693, 16
      %v867 = vor.u32 %v865, %v863
      %v869 = vshll.u32 %v694, 16
      %v871 = vrot.slane %v869, 1
      %v872 = vsel %vm748, %v867, %v871
      %v873 = vshrl.u32 %v694, 16
      %v875 = vor.u32 %v873, %v871
      %v877 = vshll.u32 %v695, 16
      %v879 = vrot.slane %v877, 1
      %v880 = vsel %vm748, %v875, %v879
      %v881 = vshrl.u32 %v695, 16
      %v883 = vor.u32 %v881, %v879
      %v885 = vshll.u32 %v696, 16
      %v887 = vrot.slane %v885, 1
      %v888 = vsel %vm748, %v883, %v887
      %v889 = vshrl.u32 %v696, 16
      %v891 = vor.u32 %v889, %v887
      %v893 = vshll.u32 %v697, 16
      %v895 = vrot.slane %v893, 1
      %v896 = vsel %vm748, %v891, %v895
      %v897 = vshrl.u32 %v697, 16
      %v899 = vor.u32 %v897, %v895
      %v901 = vshll.u32 %v698, 16
      %v903 = vrot.slane %v901, 1
      %v904 = vsel %vm748, %v899, %v903
      %v905 = vshrl.u32 %v698, 16
      %v907 = vor.u32 %v905, %v903
      %v909 = vshll.u32 %v699, 16
      %v911 = vrot.slane %v909, 1
      %v912 = vsel %vm748, %v907, %v911
      %v913 = vshrl.u32 %v699, 16
      %v915 = vor.u32 %v913, %v911
      %v917 = vshll.u32 %v700, 16
      %v919 = vrot.slane %v917, 1
      %v920 = vsel %vm748, %v915, %v919
      %v921 = vshrl.u32 %v700, 16
      %v923 = vor.u32 %v921, %v919
      %v925 = vshll.u32 %v701, 16
      %v927 = vrot.slane %v925, 1
      %v928 = vsel %vm748, %v923, %v927
      %v929 = vshrl.u32 %v701, 16
      %v931 = vor.u32 %v929, %v927
      %v933 = vshll.u32 %v702, 16
      %v935 = vrot.slane %v933, 1
      %v936 = vsel %vm748, %v931, %v935
      %v937 = vshrl.u32 %v702, 16
      %v939 = vor.u32 %v937, %v935
      %v941 = vshll.u32 %v703, 16
      %v943 = vrot.slane %v941, 1
      %v944 = vsel %vm748, %v939, %v943
      %v945 = vshrl.u32 %v703, 16
      %v947 = vor.u32 %v945, %v943
      %v949 = vshll.u32 %v704, 16
      %v951 = vrot.slane %v949, 1
      %v952 = vsel %vm748, %v947, %v951
      %v953 = vshrl.u32 %v704, 16
      %v955 = vor.u32 %v953, %v951
      %v957 = vshll.u32 %v705, 16
      %v959 = vrot.slane %v957, 1
      %v960 = vsel %vm748, %v955, %v959
      %v961 = vshrl.u32 %v705, 16
      %v963 = vor.u32 %v961, %v959
      %v965 = vshll.u32 %v706, 16
      %v967 = vrot.slane %v965, 1
      %v968 = vsel %vm748, %v963, %v967
      %v969 = vshrl.u32 %v706, 16
      %v971 = vor.u32 %v969, %v967
      %v973 = vshll.u32 %v707, 16
      %v975 = vrot.slane %v973, 1
      %v976 = vsel %vm748, %v971, %v975
      %v977 = vshrl.u32 %v707, 16
      %v979 = vor.u32 %v977, %v975
      %v981 = vshll.u32 %v708, 16
      %v983 = vrot.slane %v981, 1
      %v984 = vsel %vm748, %v979, %v983
      %v985 = vshrl.u32 %v708, 16
      %v987 = vor.u32 %v985, %v983
      %v989 = vshll.u32 %v709, 16
      %v991 = vrot.slane %v989, 1
      %v992 = vsel %vm748, %v987, %v991
      %v993 = vshrl.u32 %v709, 16
      %v995 = vor.u32 %v993, %v991
      %v997 = vshll.u32 %v710, 16
      %v999 = vrot.slane %v997, 1
      %v1000 = vsel %vm748, %v995, %v999
      %v1001 = vshrl.u32 %v710, 16
      %v1003 = vor.u32 %v1001, %v999
      %v1005 = vshll.u32 %v711, 16
      %v1007 = vrot.slane %v1005, 1
      %v1008 = vsel %vm748, %v1003, %v1007
      %v1009 = vshrl.u32 %v711, 16
      %v1011 = vor.u32 %v1009, %v1007
      %v1013 = vshll.u32 %v712, 16
      %v1015 = vrot.slane %v1013, 1
      %v1016 = vsel %vm748, %v1011, %v1015
      %v1017 = vshrl.u32 %v712, 16
      %v1019 = vor.u32 %v1017, %v1015
      %v1021 = vshll.u32 %v713, 16
      %v1023 = vrot.slane %v1021, 1
      %v1024 = vsel %vm748, %v1019, %v1023
      %v1025 = vshrl.u32 %v713, 16
      %v1027 = vor.u32 %v1025, %v1023
      %v1029 = vshll.u32 %v714, 16
      %v1031 = vrot.slane %v1029, 1
      %v1032 = vsel %vm748, %v1027, %v1031
      %v1033 = vshrl.u32 %v714, 16
      %v1035 = vor.u32 %v1033, %v1031
      %v1037 = vshll.u32 %v715, 16
      %v1039 = vrot.slane %v1037, 1
      %v1040 = vsel %vm748, %v1035, %v1039
      %v1041 = vshrl.u32 %v715, 16
      %v1043 = vor.u32 %v1041, %v1039
      %v1045 = vshll.u32 %v716, 16
      %v1047 = vrot.slane %v1045, 1
      %v1048 = vsel %vm748, %v1043, %v1047
      %v1049 = vshrl.u32 %v716, 16
      %v1051 = vor.u32 %v1049, %v1047
      %v1053 = vshll.u32 %v717, 16
      %v1055 = vrot.slane %v1053, 1
      %v1056 = vsel %vm748, %v1051, %v1055
      %v1057 = vshrl.u32 %v717, 16
      %v1059 = vor.u32 %v1057, %v1055
      %v1061 = vshll.u32 %v718, 16
      %v1063 = vrot.slane %v1061, 1
      %v1064 = vsel %vm748, %v1059, %v1063
      %v1065 = vshrl.u32 %v718, 16
      %v1067 = vor.u32 %v1065, %v1063
      %v1069 = vshll.u32 %v719, 16
      %v1071 = vrot.slane %v1069, 1
      %v1072 = vsel %vm748, %v1067, %v1071
      %v1073 = vshrl.u32 %v719, 16
      %v1075 = vor.u32 %v1073, %v1071
      %v1077 = vshll.u32 %v720, 16
      %v1079 = vrot.slane %v1077, 1
      %v1080 = vsel %vm748, %v1075, %v1079
      %v1081 = vshrl.u32 %v720, 16
      %v1083 = vor.u32 %v1081, %v1079
      %v1085 = vshll.u32 %v721, 16
      %v1087 = vrot.slane %v1085, 1
      %v1088 = vsel %vm748, %v1083, %v1087
      %v1089 = vshrl.u32 %v721, 16
      %v1091 = vor.u32 %v1089, %v1087
      %v1093 = vshll.u32 %v722, 16
      %v1095 = vrot.slane %v1093, 1
      %v1096 = vsel %vm748, %v1091, %v1095
      %v1097 = vshrl.u32 %v722, 16
      %v1099 = vor.u32 %v1097, %v1095
      %v1101 = vshll.u32 %v723, 16
      %v1103 = vrot.slane %v1101, 1
      %v1104 = vsel %vm748, %v1099, %v1103
      %v1105 = vshrl.u32 %v723, 16
      %v1107 = vor.u32 %v1105, %v1103
      %v1109 = vshll.u32 %v724, 16
      %v1111 = vrot.slane %v1109, 1
      %v1112 = vsel %vm748, %v1107, %v1111
      %v1113 = vshrl.u32 %v724, 16
      %v1115 = vor.u32 %v1113, %v1111
      %v1117 = vshll.u32 %v725, 16
      %v1119 = vrot.slane %v1117, 1
      %v1120 = vsel %vm748, %v1115, %v1119
      %v1121 = vshrl.u32 %v725, 16
      %v1123 = vor.u32 %v1121, %v1119
      %v1125 = vshll.u32 %v726, 16
      %v1127 = vrot.slane %v1125, 1
      %v1128 = vsel %vm748, %v1123, %v1127
      %v1129 = vshrl.u32 %v726, 16
      %v1131 = vor.u32 %v1129, %v1127
      %v1133 = vshll.u32 %v727, 16
      %v1135 = vrot.slane %v1133, 1
      %v1136 = vsel %vm748, %v1131, %v1135
      %v1137 = vshrl.u32 %v727, 16
      %v1139 = vor.u32 %v1137, %v1135
      %v1141 = vshll.u32 %v728, 16
      %v1143 = vrot.slane %v1141, 1
      %v1144 = vsel %vm748, %v1139, %v1143
      %v1145 = vshrl.u32 %v728, 16
      %v1147 = vor.u32 %v1145, %v1143
      %v1149 = vshll.u32 %v729, 16
      %v1151 = vrot.slane %v1149, 1
      %v1152 = vsel %vm748, %v1147, %v1151
      %v1153 = vshrl.u32 %v729, 16
      %v1155 = vor.u32 %v1153, %v1151
      %v1157 = vshll.u32 %v730, 16
      %v1159 = vrot.slane %v1157, 1
      %v1160 = vsel %vm748, %v1155, %v1159
      %v1161 = vshrl.u32 %v730, 16
      %v1163 = vor.u32 %v1161, %v1159
      %v1165 = vshll.u32 %v731, 16
      %v1167 = vrot.slane %v1165, 1
      %v1168 = vsel %vm748, %v1163, %v1167
      %v1169 = vshrl.u32 %v731, 16
      %v1171 = vor.u32 %v1169, %v1167
      %v1173 = vshll.u32 %v732, 16
      %v1175 = vrot.slane %v1173, 1
      %v1176 = vsel %vm748, %v1171, %v1175
      %v1177 = vshrl.u32 %v732, 16
      %v1179 = vor.u32 %v1177, %v1175
      %v1181 = vshll.u32 %v733, 16
      %v1183 = vrot.slane %v1181, 1
      %v1184 = vsel %vm748, %v1179, %v1183
      %v1185 = vshrl.u32 %v733, 16
      %v1187 = vor.u32 %v1185, %v1183
      %v1189 = vshll.u32 %v734, 16
      %v1191 = vrot.slane %v1189, 1
      %v1192 = vsel %vm748, %v1187, %v1191
      %v1193 = vshrl.u32 %v734, 16
      %v1195 = vor.u32 %v1193, %v1191
      %v1197 = vshll.u32 %v735, 16
      %v1199 = vrot.slane %v1197, 1
      %v1200 = vsel %vm748, %v1195, %v1199
      %v1201 = vshrl.u32 %v735, 16
      %v1203 = vor.u32 %v1201, %v1199
      %v1205 = vshll.u32 %v736, 16
      %v1207 = vrot.slane %v1205, 1
      %v1208 = vsel %vm748, %v1203, %v1207
      %v1209 = vshrl.u32 %v736, 16
      %v1211 = vor.u32 %v1209, %v1207
      %v1213 = vshll.u32 %v737, 16
      %v1215 = vrot.slane %v1213, 1
      %v1216 = vsel %vm748, %v1211, %v1215
      %v1217 = vshrl.u32 %v737, 16
      %v1219 = vor.u32 %v1217, %v1215
      %v1221 = vshll.u32 %v738, 16
      %v1223 = vrot.slane %v1221, 1
      %v1224 = vsel %vm748, %v1219, %v1223
      %v1225 = vshrl.u32 %v738, 16
      %v1227 = vor.u32 %v1225, %v1223
      %v1229 = vshll.u32 %v739, 16
      %v1231 = vrot.slane %v1229, 1
      %v1232 = vsel %vm748, %v1227, %v1231
      %v1233 = vshrl.u32 %v739, 16
      %v1235 = vor.u32 %v1233, %v1231
      %v1237 = vshll.u32 %v740, 16
      %v1239 = vrot.slane %v1237, 1
      %v1240 = vsel %vm748, %v1235, %v1239
      %v1241 = vshrl.u32 %v740, 16
      %v1243 = vor.u32 %v1241, %v1239
      %v1245 = vshll.u32 %v741, 16
      %v1247 = vrot.slane %v1245, 1
      %v1248 = vsel %vm748, %v1243, %v1247
      %v1249 = vshrl.u32 %v741, 16
      %v1251 = vor.u32 %v1249, %v1247
      %v1253 = vshll.u32 %v742, 16
      %v1255 = vrot.slane %v1253, 1
      %v1256 = vsel %vm748, %v1251, %v1255
      %v1257 = vshrl.u32 %v742, 16
      %v1259 = vor.u32 %v1257, %v1255
      %v1261 = vshll.u32 %v743, 16
      %v1263 = vrot.slane %v1261, 1
      %v1264 = vsel %vm748, %v1259, %v1263
      %v1265 = vshrl.u32 %v743, 16
      %v1267 = vor.u32 %v1265, %v1263
      %v1269 = vshll.u32 %v744, 16
      %v1271 = vrot.slane %v1269, 1
      %v1272 = vsel %vm748, %v1267, %v1271
      %v1273 = vshrl.u32 %v744, 16
      %v1275 = vor.u32 %v1273, %v1271
      %v1277 = vshll.u32 %v745, 16
      %v1279 = vrot.slane %v1277, 1
      %v1280 = vsel %vm748, %v1275, %v1279
      %v1281 = vshrl.u32 %v745, 16
      %v1283 = vor.u32 %v1281, %v1279
      %v1285 = vshll.u32 %v746, 16
      %v1287 = vrot.slane %v1285, 1
      %v1288 = vsel %vm748, %v1283, %v1287
      %v1289 = vshrl.u32 %v746, 16
      %v1291 = vor.u32 %v1289, %v1287
      %v1293 = vshll.u32 %v747, 16
      %v1295 = vrot.slane %v1293, 1
      %v1296 = vsel %vm748, %v1291, %v1295
      %v1299 = vunpack.c.l.b16 %v403
      %v1300 = vunpack.c.l.b16 %v404
      %v1301 = vpack.c.b16 %v1300, %v1299
      %vm1303 = vcmask 130048
      %v1305 = vsel %vm1303, %v760, 0
      %v1308 = vsel %vm1303, %v768, 0
      %v1311 = vsel %vm1303, %v776, 0
      %v1314 = vsel %vm1303, %v784, 0
      %v1317 = vsel %vm1303, %v792, 0
      %v1320 = vsel %vm1303, %v800, 0
      %v1323 = vsel %vm1303, %v808, 0
      %v1326 = vsel %vm1303, %v816, 0
      %v1329 = vsel %vm1303, %v824, 0
      %v1332 = vsel %vm1303, %v832, 0
      %v1335 = vsel %vm1303, %v840, 0
      %v1338 = vsel %vm1303, %v848, 0
      %v1341 = vsel %vm1303, %v856, 0
      %v1344 = vsel %vm1303, %v864, 0
      %v1347 = vsel %vm1303, %v872, 0
      %v1350 = vsel %vm1303, %v880, 0
      %v1353 = vsel %vm1303, %v888, 0
      %v1356 = vsel %vm1303, %v896, 0
      %v1359 = vsel %vm1303, %v904, 0
      %v1362 = vsel %vm1303, %v912, 0
      %v1365 = vsel %vm1303, %v920, 0
      %v1368 = vsel %vm1303, %v928, 0
      %v1371 = vsel %vm1303, %v936, 0
      %v1374 = vsel %vm1303, %v944, 0
      %v1377 = vsel %vm1303, %v952, 0
      %v1380 = vsel %vm1303, %v960, 0
      %v1383 = vsel %vm1303, %v968, 0
      %v1386 = vsel %vm1303, %v976, 0
      %v1389 = vsel %vm1303, %v984, 0
      %v1392 = vsel %vm1303, %v992, 0
      %v1395 = vsel %vm1303, %v1000, 0
      %v1398 = vsel %vm1303, %v1008, 0
      %v1401 = vsel %vm1303, %v1016, 0
      %v1404 = vsel %vm1303, %v1024, 0
      %v1407 = vsel %vm1303, %v1032, 0
      %v1410 = vsel %vm1303, %v1040, 0
      %v1413 = vsel %vm1303, %v1048, 0
      %v1416 = vsel %vm1303, %v1056, 0
      %v1419 = vsel %vm1303, %v1064, 0
      %v1422 = vsel %vm1303, %v1072, 0
      %v1425 = vsel %vm1303, %v1080, 0
      %v1428 = vsel %vm1303, %v1088, 0
      %v1431 = vsel %vm1303, %v1096, 0
      %v1434 = vsel %vm1303, %v1104, 0
      %v1437 = vsel %vm1303, %v1112, 0
      %v1440 = vsel %vm1303, %v1120, 0
      %v1443 = vsel %vm1303, %v1128, 0
      %v1446 = vsel %vm1303, %v1136, 0
      %v1449 = vsel %vm1303, %v1144, 0
      %v1452 = vsel %vm1303, %v1152, 0
      %v1455 = vsel %vm1303, %v1160, 0
      %v1458 = vsel %vm1303, %v1168, 0
      %v1461 = vsel %vm1303, %v1176, 0
      %v1464 = vsel %vm1303, %v1184, 0
      %v1467 = vsel %vm1303, %v1192, 0
      %v1470 = vsel %vm1303, %v1200, 0
      %v1473 = vsel %vm1303, %v1208, 0
      %v1476 = vsel %vm1303, %v1216, 0
      %v1479 = vsel %vm1303, %v1224, 0
      %v1482 = vsel %vm1303, %v1232, 0
      %v1485 = vsel %vm1303, %v1240, 0
      %v1488 = vsel %vm1303, %v1248, 0
      %v1491 = vsel %vm1303, %v1256, 0
      %v1494 = vsel %vm1303, %v1264, 0
      %v1497 = vsel %vm1303, %v1272, 0
      %v1500 = vsel %vm1303, %v1280, 0
      %v1503 = vsel %vm1303, %v1288, 0
      %v1506 = vsel %vm1303, %v1296, 0
      %1508 = vmatprep.subr.bf16.mxu0 0
      %1509 = vmatpush1.bf16.msra.mxu0 %v1301
      %1510 = vmatprep.subr.bf16.mxu0 0
      %1511 = vmatpush1.bf16.msra.mxu0 0
      %1512 = vmatprep.subr.bf16.mxu0 0
      %1513 = vmatpush1.bf16.msra.mxu0 0
      %1514 = vmatprep.subr.bf16.mxu0 0
      %1515 = vmatpush1.bf16.msra.mxu0 0
      %1516 = vmatprep.subr.bf16.mxu0 0
      %1517 = vmatpush1.bf16.msra.mxu0 0
      %1518 = vmatprep.subr.bf16.mxu0 0
      %1519 = vmatpush1.bf16.msra.mxu0 0
      %1520 = vmatprep.subr.bf16.mxu0 0
      %1521 = vmatpush1.bf16.msra.mxu0 0
      %1522 = vmatprep.subr.bf16.mxu0 0
      %1523 = vmatpush1.bf16.msra.mxu0 0
      %1524 = vmatprep.subr.bf16.mxu0 0
      %1525 = vmatpush1.bf16.msra.mxu0 0
      %1526 = vmatprep.subr.bf16.mxu0 0
      %1527 = vmatpush1.bf16.msra.mxu0 0
      %1528 = vmatprep.subr.bf16.mxu0 0
      %1529 = vmatpush1.bf16.msra.mxu0 0
      %1530 = vmatprep.subr.bf16.mxu0 0
      %1531 = vmatpush1.bf16.msra.mxu0 0
      %1532 = vmatprep.subr.bf16.mxu0 0
      %1533 = vmatpush1.bf16.msra.mxu0 0
      %1534 = vmatprep.subr.bf16.mxu0 0
      %1535 = vmatpush1.bf16.msra.mxu0 0
      %1536 = vmatprep.subr.bf16.mxu0 0
      %1537 = vmatpush1.bf16.msra.mxu0 0
      %1538 = vmatprep.subr.bf16.mxu0 0
      %1539 = vmatpush1.bf16.msra.mxu0 0
      %1540 = vmatprep.mubr.bf16.mxu0 0
      %1541 = vmatmul.mubr.bf16.gmra.mrb[0].mxu0 %v1305
      %v1542 = vpop.f32.mrb[0].mxu0
      %v1543 = vadd.f32 0.0, %v1542
      %v1544 = vpop.f32.mrb[0].mxu0
      %v1545 = vpop.f32.mrb[0].mxu0
      %v1546 = vadd.f32 0.0, %v1545
      %v1547 = vpop.f32.mrb[0].mxu0
      %1548 = vmatprep.mubr.bf16.mxu0 0
      %1549 = vmatmul.mubr.bf16.gmra.mrb[0].mxu0 %v1308
      %v1550 = vpop.f32.mrb[0].mxu0
      %v1551 = vadd.f32 0.0, %v1550
      %v1552 = vpop.f32.mrb[0].mxu0
      %v1553 = vpop.f32.mrb[0].mxu0
      %v1554 = vadd.f32 0.0, %v1553
      %v1555 = vpop.f32.mrb[0].mxu0
      %1556 = vmatprep.mubr.bf16.mxu0 0
      %1557 = vmatmul.mubr.bf16.gmra.mrb[0].mxu0 %v1311
      %v1558 = vpop.f32.mrb[0].mxu0
      %v1559 = vadd.f32 0.0, %v1558
      %v1560 = vpop.f32.mrb[0].mxu0
      %v1561 = vpop.f32.mrb[0].mxu0
      %v1562 = vadd.f32 0.0, %v1561
      %v1563 = vpop.f32.mrb[0].mxu0
      %1564 = vmatprep.mubr.bf16.mxu0 0
      %1565 = vmatmul.mubr.bf16.gmra.mrb[0].mxu0 %v1314
      %v1566 = vpop.f32.mrb[0].mxu0
      %v1567 = vadd.f32 0.0, %v1566
      %v1568 = vpop.f32.mrb[0].mxu0
      %v1569 = vpop.f32.mrb[0].mxu0
      %v1570 = vadd.f32 0.0, %v1569
      %v1571 = vpop.f32.mrb[0].mxu0
      %1572 = vmatprep.mubr.bf16.mxu0 0
      %1573 = vmatmul.mubr.bf16.gmra.mrb[0].mxu0 %v1317
      %v1574 = vpop.f32.mrb[0].mxu0
      %v1575 = vadd.f32 0.0, %v1574
      %v1576 = vpop.f32.mrb[0].mxu0
      %v1577 = vpop.f32.mrb[0].mxu0
      %v1578 = vadd.f32 0.0, %v1577
      %v1579 = vpop.f32.mrb[0].mxu0
      %1580 = vmatprep.mubr.bf16.mxu0 0
      %1581 = vmatmul.mubr.bf16.gmra.mrb[0].mxu0 %v1320
      %v1582 = vpop.f32.mrb[0].mxu0
      %v1583 = vadd.f32 0.0, %v1582
      %v1584 = vpop.f32.mrb[0].mxu0
      %v1585 = vpop.f32.mrb[0].mxu0
      %v1586 = vadd.f32 0.0, %v1585
      %v1587 = vpop.f32.mrb[0].mxu0
      %1588 = vmatprep.mubr.bf16.mxu0 0
      %1589 = vmatmul.mubr.bf16.gmra.mrb[0].mxu0 %v1323
      %v1590 = vpop.f32.mrb[0].mxu0
      %v1591 = vadd.f32 0.0, %v1590
      %v1592 = vpop.f32.mrb[0].mxu0
      %v1593 = vpop.f32.mrb[0].mxu0
      %v1594 = vadd.f32 0.0, %v1593
      %v1595 = vpop.f32.mrb[0].mxu0
      %1596 = vmatprep.mubr.bf16.mxu0 0
      %1597 = vmatmul.mubr.bf16.gmra.mrb[0].mxu0 %v1326
      %v1598 = vpop.f32.mrb[0].mxu0
      %v1599 = vadd.f32 0.0, %v1598
      %v1600 = vpop.f32.mrb[0].mxu0
      %v1601 = vpop.f32.mrb[0].mxu0
      %v1602 = vadd.f32 0.0, %v1601
      %v1603 = vpop.f32.mrb[0].mxu0
      %1604 = vmatprep.mubr.bf16.mxu0 0
      %1605 = vmatmul.mubr.bf16.gmra.mrb[0].mxu0 %v1329
      %v1606 = vpop.f32.mrb[0].mxu0
      %v1607 = vadd.f32 0.0, %v1606
      %v1608 = vpop.f32.mrb[0].mxu0
      %v1609 = vpop.f32.mrb[0].mxu0
      %v1610 = vadd.f32 0.0, %v1609
      %v1611 = vpop.f32.mrb[0].mxu0
      %1612 = vmatprep.mubr.bf16.mxu0 0
      %1613 = vmatmul.mubr.bf16.gmra.mrb[0].mxu0 %v1332
      %v1614 = vpop.f32.mrb[0].mxu0
      %v1615 = vadd.f32 0.0, %v1614
      %v1616 = vpop.f32.mrb[0].mxu0
      %v1617 = vpop.f32.mrb[0].mxu0
      %v1618 = vadd.f32 0.0, %v1617
      %v1619 = vpop.f32.mrb[0].mxu0
      %1620 = vmatprep.mubr.bf16.mxu0 0
      %1621 = vmatmul.mubr.bf16.gmra.mrb[0].mxu0 %v1335
      %v1622 = vpop.f32.mrb[0].mxu0
      %v1623 = vadd.f32 0.0, %v1622
      %v1624 = vpop.f32.mrb[0].mxu0
      %v1625 = vpop.f32.mrb[0].mxu0
      %v1626 = vadd.f32 0.0, %v1625
      %v1627 = vpop.f32.mrb[0].mxu0
      %1628 = vmatprep.mubr.bf16.mxu0 0
      %1629 = vmatmul.mubr.bf16.gmra.mrb[0].mxu0 %v1338
      %v1630 = vpop.f32.mrb[0].mxu0
      %v1631 = vadd.f32 0.0, %v1630
      %v1632 = vpop.f32.mrb[0].mxu0
      %v1633 = vpop.f32.mrb[0].mxu0
      %v1634 = vadd.f32 0.0, %v1633
      %v1635 = vpop.f32.mrb[0].mxu0
      %1636 = vmatprep.mubr.bf16.mxu0 0
      %1637 = vmatmul.mubr.bf16.gmra.mrb[0].mxu0 %v1341
      %v1638 = vpop.f32.mrb[0].mxu0
      %v1639 = vadd.f32 0.0, %v1638
      %v1640 = vpop.f32.mrb[0].mxu0
      %v1641 = vpop.f32.mrb[0].mxu0
      %v1642 = vadd.f32 0.0, %v1641
      %v1643 = vpop.f32.mrb[0].mxu0
      %1644 = vmatprep.mubr.bf16.mxu0 0
      %1645 = vmatmul.mubr.bf16.gmra.mrb[0].mxu0 %v1344
      %v1646 = vpop.f32.mrb[0].mxu0
      %v1647 = vadd.f32 0.0, %v1646
      %v1648 = vpop.f32.mrb[0].mxu0
      %v1649 = vpop.f32.mrb[0].mxu0
      %v1650 = vadd.f32 0.0, %v1649
      %v1651 = vpop.f32.mrb[0].mxu0
      %1652 = vmatprep.mubr.bf16.mxu0 0
      %1653 = vmatmul.mubr.bf16.gmra.mrb[0].mxu0 %v1347
      %v1654 = vpop.f32.mrb[0].mxu0
      %v1655 = vadd.f32 0.0, %v1654
      %v1656 = vpop.f32.mrb[0].mxu0
      %v1657 = vpop.f32.mrb[0].mxu0
      %v1658 = vadd.f32 0.0, %v1657
      %v1659 = vpop.f32.mrb[0].mxu0
      %1660 = vmatprep.mubr.bf16.mxu0 0
      %1661 = vmatmul.mubr.bf16.gmra.mrb[0].mxu0 %v1350
      %v1662 = vpop.f32.mrb[0].mxu0
      %v1663 = vadd.f32 0.0, %v1662
      %v1664 = vpop.f32.mrb[0].mxu0
      %v1665 = vpop.f32.mrb[0].mxu0
      %v1666 = vadd.f32 0.0, %v1665
      %v1667 = vpop.f32.mrb[0].mxu0
      %1668 = vmatprep.mubr.bf16.mxu0 0
      %1669 = vmatmul.mubr.bf16.gmra.mrb[0].mxu0 %v1353
      %v1670 = vpop.f32.mrb[0].mxu0
      %v1671 = vadd.f32 0.0, %v1670
      %v1672 = vpop.f32.mrb[0].mxu0
      %v1673 = vpop.f32.mrb[0].mxu0
      %v1674 = vadd.f32 0.0, %v1673
      %v1675 = vpop.f32.mrb[0].mxu0
      %1676 = vmatprep.mubr.bf16.mxu0 0
      %1677 = vmatmul.mubr.bf16.gmra.mrb[0].mxu0 %v1356
      %v1678 = vpop.f32.mrb[0].mxu0
      %v1679 = vadd.f32 0.0, %v1678
      %v1680 = vpop.f32.mrb[0].mxu0
      %v1681 = vpop.f32.mrb[0].mxu0
      %v1682 = vadd.f32 0.0, %v1681
      %v1683 = vpop.f32.mrb[0].mxu0
      %1684 = vmatprep.mubr.bf16.mxu0 0
      %1685 = vmatmul.mubr.bf16.gmra.mrb[0].mxu0 %v1359
      %v1686 = vpop.f32.mrb[0].mxu0
      %v1687 = vadd.f32 0.0, %v1686
      %v1688 = vpop.f32.mrb[0].mxu0
      %v1689 = vpop.f32.mrb[0].mxu0
      %v1690 = vadd.f32 0.0, %v1689
      %v1691 = vpop.f32.mrb[0].mxu0
      %1692 = vmatprep.mubr.bf16.mxu0 0
      %1693 = vmatmul.mubr.bf16.gmra.mrb[0].mxu0 %v1362
      %v1694 = vpop.f32.mrb[0].mxu0
      %v1695 = vadd.f32 0.0, %v1694
      %v1696 = vpop.f32.mrb[0].mxu0
      %v1697 = vpop.f32.mrb[0].mxu0
      %v1698 = vadd.f32 0.0, %v1697
      %v1699 = vpop.f32.mrb[0].mxu0
      %1700 = vmatprep.mubr.bf16.mxu0 0
      %1701 = vmatmul.mubr.bf16.gmra.mrb[0].mxu0 %v1365
      %v1702 = vpop.f32.mrb[0].mxu0
      %v1703 = vadd.f32 0.0, %v1702
      %v1704 = vpop.f32.mrb[0].mxu0
      %v1705 = vpop.f32.mrb[0].mxu0
      %v1706 = vadd.f32 0.0, %v1705
      %v1707 = vpop.f32.mrb[0].mxu0
      %1708 = vmatprep.mubr.bf16.mxu0 0
      %1709 = vmatmul.mubr.bf16.gmra.mrb[0].mxu0 %v1368
      %v1710 = vpop.f32.mrb[0].mxu0
      %v1711 = vadd.f32 0.0, %v1710
      %v1712 = vpop.f32.mrb[0].mxu0
      %v1713 = vpop.f32.mrb[0].mxu0
      %v1714 = vadd.f32 0.0, %v1713
      %v1715 = vpop.f32.mrb[0].mxu0
      %1716 = vmatprep.mubr.bf16.mxu0 0
      %1717 = vmatmul.mubr.bf16.gmra.mrb[0].mxu0 %v1371
      %v1718 = vpop.f32.mrb[0].mxu0
      %v1719 = vadd.f32 0.0, %v1718
      %v1720 = vpop.f32.mrb[0].mxu0
      %v1721 = vpop.f32.mrb[0].mxu0
      %v1722 = vadd.f32 0.0, %v1721
      %v1723 = vpop.f32.mrb[0].mxu0
      %1724 = vmatprep.mubr.bf16.mxu0 0
      %1725 = vmatmul.mubr.bf16.gmra.mrb[0].mxu0 %v1374
      %v1726 = vpop.f32.mrb[0].mxu0
      %v1727 = vadd.f32 0.0, %v1726
      %v1728 = vpop.f32.mrb[0].mxu0
      %v1729 = vpop.f32.mrb[0].mxu0
      %v1730 = vadd.f32 0.0, %v1729
      %v1731 = vpop.f32.mrb[0].mxu0
      %1732 = vmatprep.mubr.bf16.mxu0 0
      %1733 = vmatmul.mubr.bf16.gmra.mrb[0].mxu0 %v1377
      %v1734 = vpop.f32.mrb[0].mxu0
      %v1735 = vadd.f32 0.0, %v1734
      %v1736 = vpop.f32.mrb[0].mxu0
      %v1737 = vpop.f32.mrb[0].mxu0
      %v1738 = vadd.f32 0.0, %v1737
      %v1739 = vpop.f32.mrb[0].mxu0
      %1740 = vmatprep.mubr.bf16.mxu0 0
      %1741 = vmatmul.mubr.bf16.gmra.mrb[0].mxu0 %v1380
      %v1742 = vpop.f32.mrb[0].mxu0
      %v1743 = vadd.f32 0.0, %v1742
      %v1744 = vpop.f32.mrb[0].mxu0
      %v1745 = vpop.f32.mrb[0].mxu0
      %v1746 = vadd.f32 0.0, %v1745
      %v1747 = vpop.f32.mrb[0].mxu0
      %1748 = vmatprep.mubr.bf16.mxu0 0
      %1749 = vmatmul.mubr.bf16.gmra.mrb[0].mxu0 %v1383
      %v1750 = vpop.f32.mrb[0].mxu0
      %v1751 = vadd.f32 0.0, %v1750
      %v1752 = vpop.f32.mrb[0].mxu0
      %v1753 = vpop.f32.mrb[0].mxu0
      %v1754 = vadd.f32 0.0, %v1753
      %v1755 = vpop.f32.mrb[0].mxu0
      %1756 = vmatprep.mubr.bf16.mxu0 0
      %1757 = vmatmul.mubr.bf16.gmra.mrb[0].mxu0 %v1386
      %v1758 = vpop.f32.mrb[0].mxu0
      %v1759 = vadd.f32 0.0, %v1758
      %v1760 = vpop.f32.mrb[0].mxu0
      %v1761 = vpop.f32.mrb[0].mxu0
      %v1762 = vadd.f32 0.0, %v1761
      %v1763 = vpop.f32.mrb[0].mxu0
      %1764 = vmatprep.mubr.bf16.mxu0 0
      %1765 = vmatmul.mubr.bf16.gmra.mrb[0].mxu0 %v1389
      %v1766 = vpop.f32.mrb[0].mxu0
      %v1767 = vadd.f32 0.0, %v1766
      %v1768 = vpop.f32.mrb[0].mxu0
      %v1769 = vpop.f32.mrb[0].mxu0
      %v1770 = vadd.f32 0.0, %v1769
      %v1771 = vpop.f32.mrb[0].mxu0
      %1772 = vmatprep.mubr.bf16.mxu0 0
      %1773 = vmatmul.mubr.bf16.gmra.mrb[0].mxu0 %v1392
      %v1774 = vpop.f32.mrb[0].mxu0
      %v1775 = vadd.f32 0.0, %v1774
      %v1776 = vpop.f32.mrb[0].mxu0
      %v1777 = vpop.f32.mrb[0].mxu0
      %v1778 = vadd.f32 0.0, %v1777
      %v1779 = vpop.f32.mrb[0].mxu0
      %1780 = vmatprep.mubr.bf16.mxu0 0
      %1781 = vmatmul.mubr.bf16.gmra.mrb[0].mxu0 %v1395
      %v1782 = vpop.f32.mrb[0].mxu0
      %v1783 = vadd.f32 0.0, %v1782
      %v1784 = vpop.f32.mrb[0].mxu0
      %v1785 = vpop.f32.mrb[0].mxu0
      %v1786 = vadd.f32 0.0, %v1785
      %v1787 = vpop.f32.mrb[0].mxu0
      %1788 = vmatprep.mubr.bf16.mxu0 0
      %1789 = vmatmul.mubr.bf16.gmra.mrb[0].mxu0 %v1398
      %v1790 = vpop.f32.mrb[0].mxu0
      %v1791 = vadd.f32 0.0, %v1790
      %v1792 = vpop.f32.mrb[0].mxu0
      %v1793 = vpop.f32.mrb[0].mxu0
      %v1794 = vadd.f32 0.0, %v1793
      %v1795 = vpop.f32.mrb[0].mxu0
      %1796 = vmatprep.mubr.bf16.mxu0 0
      %1797 = vmatmul.mubr.bf16.gmra.mrb[0].mxu0 %v1401
      %v1798 = vpop.f32.mrb[0].mxu0
      %v1799 = vadd.f32 0.0, %v1798
      %v1800 = vpop.f32.mrb[0].mxu0
      %v1801 = vpop.f32.mrb[0].mxu0
      %v1802 = vadd.f32 0.0, %v1801
      %v1803 = vpop.f32.mrb[0].mxu0
      %1804 = vmatprep.mubr.bf16.mxu0 0
      %1805 = vmatmul.mubr.bf16.gmra.mrb[0].mxu0 %v1404
      %v1806 = vpop.f32.mrb[0].mxu0
      %v1807 = vadd.f32 0.0, %v1806
      %v1808 = vpop.f32.mrb[0].mxu0
      %v1809 = vpop.f32.mrb[0].mxu0
      %v1810 = vadd.f32 0.0, %v1809
      %v1811 = vpop.f32.mrb[0].mxu0
      %1812 = vmatprep.mubr.bf16.mxu0 0
      %1813 = vmatmul.mubr.bf16.gmra.mrb[0].mxu0 %v1407
      %v1814 = vpop.f32.mrb[0].mxu0
      %v1815 = vadd.f32 0.0, %v1814
      %v1816 = vpop.f32.mrb[0].mxu0
      %v1817 = vpop.f32.mrb[0].mxu0
      %v1818 = vadd.f32 0.0, %v1817
      %v1819 = vpop.f32.mrb[0].mxu0
      %1820 = vmatprep.mubr.bf16.mxu0 0
      %1821 = vmatmul.mubr.bf16.gmra.mrb[0].mxu0 %v1410
      %v1822 = vpop.f32.mrb[0].mxu0
      %v1823 = vadd.f32 0.0, %v1822
      %v1824 = vpop.f32.mrb[0].mxu0
      %v1825 = vpop.f32.mrb[0].mxu0
      %v1826 = vadd.f32 0.0, %v1825
      %v1827 = vpop.f32.mrb[0].mxu0
      %1828 = vmatprep.mubr.bf16.mxu0 0
      %1829 = vmatmul.mubr.bf16.gmra.mrb[0].mxu0 %v1413
      %v1830 = vpop.f32.mrb[0].mxu0
      %v1831 = vadd.f32 0.0, %v1830
      %v1832 = vpop.f32.mrb[0].mxu0
      %v1833 = vpop.f32.mrb[0].mxu0
      %v1834 = vadd.f32 0.0, %v1833
      %v1835 = vpop.f32.mrb[0].mxu0
      %1836 = vmatprep.mubr.bf16.mxu0 0
      %1837 = vmatmul.mubr.bf16.gmra.mrb[0].mxu0 %v1416
      %v1838 = vpop.f32.mrb[0].mxu0
      %v1839 = vadd.f32 0.0, %v1838
      %v1840 = vpop.f32.mrb[0].mxu0
      %v1841 = vpop.f32.mrb[0].mxu0
      %v1842 = vadd.f32 0.0, %v1841
      %v1843 = vpop.f32.mrb[0].mxu0
      %1844 = vmatprep.mubr.bf16.mxu0 0
      %1845 = vmatmul.mubr.bf16.gmra.mrb[0].mxu0 %v1419
      %v1846 = vpop.f32.mrb[0].mxu0
      %v1847 = vadd.f32 0.0, %v1846
      %v1848 = vpop.f32.mrb[0].mxu0
      %v1849 = vpop.f32.mrb[0].mxu0
      %v1850 = vadd.f32 0.0, %v1849
      %v1851 = vpop.f32.mrb[0].mxu0
      %1852 = vmatprep.mubr.bf16.mxu0 0
      %1853 = vmatmul.mubr.bf16.gmra.mrb[0].mxu0 %v1422
      %v1854 = vpop.f32.mrb[0].mxu0
      %v1855 = vadd.f32 0.0, %v1854
      %v1856 = vpop.f32.mrb[0].mxu0
      %v1857 = vpop.f32.mrb[0].mxu0
      %v1858 = vadd.f32 0.0, %v1857
      %v1859 = vpop.f32.mrb[0].mxu0
      %1860 = vmatprep.mubr.bf16.mxu0 0
      %1861 = vmatmul.mubr.bf16.gmra.mrb[0].mxu0 %v1425
      %v1862 = vpop.f32.mrb[0].mxu0
      %v1863 = vadd.f32 0.0, %v1862
      %v1864 = vpop.f32.mrb[0].mxu0
      %v1865 = vpop.f32.mrb[0].mxu0
      %v1866 = vadd.f32 0.0, %v1865
      %v1867 = vpop.f32.mrb[0].mxu0
      %1868 = vmatprep.mubr.bf16.mxu0 0
      %1869 = vmatmul.mubr.bf16.gmra.mrb[0].mxu0 %v1428
      %v1870 = vpop.f32.mrb[0].mxu0
      %v1871 = vadd.f32 0.0, %v1870
      %v1872 = vpop.f32.mrb[0].mxu0
      %v1873 = vpop.f32.mrb[0].mxu0
      %v1874 = vadd.f32 0.0, %v1873
      %v1875 = vpop.f32.mrb[0].mxu0
      %1876 = vmatprep.mubr.bf16.mxu0 0
      %1877 = vmatmul.mubr.bf16.gmra.mrb[0].mxu0 %v1431
      %v1878 = vpop.f32.mrb[0].mxu0
      %v1879 = vadd.f32 0.0, %v1878
      %v1880 = vpop.f32.mrb[0].mxu0
      %v1881 = vpop.f32.mrb[0].mxu0
      %v1882 = vadd.f32 0.0, %v1881
      %v1883 = vpop.f32.mrb[0].mxu0
      %1884 = vmatprep.mubr.bf16.mxu0 0
      %1885 = vmatmul.mubr.bf16.gmra.mrb[0].mxu0 %v1434
      %v1886 = vpop.f32.mrb[0].mxu0
      %v1887 = vadd.f32 0.0, %v1886
      %v1888 = vpop.f32.mrb[0].mxu0
      %v1889 = vpop.f32.mrb[0].mxu0
      %v1890 = vadd.f32 0.0, %v1889
      %v1891 = vpop.f32.mrb[0].mxu0
      %1892 = vmatprep.mubr.bf16.mxu0 0
      %1893 = vmatmul.mubr.bf16.gmra.mrb[0].mxu0 %v1437
      %v1894 = vpop.f32.mrb[0].mxu0
      %v1895 = vadd.f32 0.0, %v1894
      %v1896 = vpop.f32.mrb[0].mxu0
      %v1897 = vpop.f32.mrb[0].mxu0
      %v1898 = vadd.f32 0.0, %v1897
      %v1899 = vpop.f32.mrb[0].mxu0
      %1900 = vmatprep.mubr.bf16.mxu0 0
      %1901 = vmatmul.mubr.bf16.gmra.mrb[0].mxu0 %v1440
      %v1902 = vpop.f32.mrb[0].mxu0
      %v1903 = vadd.f32 0.0, %v1902
      %v1904 = vpop.f32.mrb[0].mxu0
      %v1905 = vpop.f32.mrb[0].mxu0
      %v1906 = vadd.f32 0.0, %v1905
      %v1907 = vpop.f32.mrb[0].mxu0
      %1908 = vmatprep.mubr.bf16.mxu0 0
      %1909 = vmatmul.mubr.bf16.gmra.mrb[0].mxu0 %v1443
      %v1910 = vpop.f32.mrb[0].mxu0
      %v1911 = vadd.f32 0.0, %v1910
      %v1912 = vpop.f32.mrb[0].mxu0
      %v1913 = vpop.f32.mrb[0].mxu0
      %v1914 = vadd.f32 0.0, %v1913
      %v1915 = vpop.f32.mrb[0].mxu0
      %1916 = vmatprep.mubr.bf16.mxu0 0
      %1917 = vmatmul.mubr.bf16.gmra.mrb[0].mxu0 %v1446
      %v1918 = vpop.f32.mrb[0].mxu0
      %v1919 = vadd.f32 0.0, %v1918
      %v1920 = vpop.f32.mrb[0].mxu0
      %v1921 = vpop.f32.mrb[0].mxu0
      %v1922 = vadd.f32 0.0, %v1921
      %v1923 = vpop.f32.mrb[0].mxu0
      %1924 = vmatprep.mubr.bf16.mxu0 0
      %1925 = vmatmul.mubr.bf16.gmra.mrb[0].mxu0 %v1449
      %v1926 = vpop.f32.mrb[0].mxu0
      %v1927 = vadd.f32 0.0, %v1926
      %v1928 = vpop.f32.mrb[0].mxu0
      %v1929 = vpop.f32.mrb[0].mxu0
      %v1930 = vadd.f32 0.0, %v1929
      %v1931 = vpop.f32.mrb[0].mxu0
      %1932 = vmatprep.mubr.bf16.mxu0 0
      %1933 = vmatmul.mubr.bf16.gmra.mrb[0].mxu0 %v1452
      %v1934 = vpop.f32.mrb[0].mxu0
      %v1935 = vadd.f32 0.0, %v1934
      %v1936 = vpop.f32.mrb[0].mxu0
      %v1937 = vpop.f32.mrb[0].mxu0
      %v1938 = vadd.f32 0.0, %v1937
      %v1939 = vpop.f32.mrb[0].mxu0
      %1940 = vmatprep.mubr.bf16.mxu0 0
      %1941 = vmatmul.mubr.bf16.gmra.mrb[0].mxu0 %v1455
      %v1942 = vpop.f32.mrb[0].mxu0
      %v1943 = vadd.f32 0.0, %v1942
      %v1944 = vpop.f32.mrb[0].mxu0
      %v1945 = vpop.f32.mrb[0].mxu0
      %v1946 = vadd.f32 0.0, %v1945
      %v1947 = vpop.f32.mrb[0].mxu0
      %1948 = vmatprep.mubr.bf16.mxu0 0
      %1949 = vmatmul.mubr.bf16.gmra.mrb[0].mxu0 %v1458
      %v1950 = vpop.f32.mrb[0].mxu0
      %v1951 = vadd.f32 0.0, %v1950
      %v1952 = vpop.f32.mrb[0].mxu0
      %v1953 = vpop.f32.mrb[0].mxu0
      %v1954 = vadd.f32 0.0, %v1953
      %v1955 = vpop.f32.mrb[0].mxu0
      %1956 = vmatprep.mubr.bf16.mxu0 0
      %1957 = vmatmul.mubr.bf16.gmra.mrb[0].mxu0 %v1461
      %v1958 = vpop.f32.mrb[0].mxu0
      %v1959 = vadd.f32 0.0, %v1958
      %v1960 = vpop.f32.mrb[0].mxu0
      %v1961 = vpop.f32.mrb[0].mxu0
      %v1962 = vadd.f32 0.0, %v1961
      %v1963 = vpop.f32.mrb[0].mxu0
      %1964 = vmatprep.mubr.bf16.mxu0 0
      %1965 = vmatmul.mubr.bf16.gmra.mrb[0].mxu0 %v1464
      %v1966 = vpop.f32.mrb[0].mxu0
      %v1967 = vadd.f32 0.0, %v1966
      %v1968 = vpop.f32.mrb[0].mxu0
      %v1969 = vpop.f32.mrb[0].mxu0
      %v1970 = vadd.f32 0.0, %v1969
      %v1971 = vpop.f32.mrb[0].mxu0
      %1972 = vmatprep.mubr.bf16.mxu0 0
      %1973 = vmatmul.mubr.bf16.gmra.mrb[0].mxu0 %v1467
      %v1974 = vpop.f32.mrb[0].mxu0
      %v1975 = vadd.f32 0.0, %v1974
      %v1976 = vpop.f32.mrb[0].mxu0
      %v1977 = vpop.f32.mrb[0].mxu0
      %v1978 = vadd.f32 0.0, %v1977
      %v1979 = vpop.f32.mrb[0].mxu0
      %1980 = vmatprep.mubr.bf16.mxu0 0
      %1981 = vmatmul.mubr.bf16.gmra.mrb[0].mxu0 %v1470
      %v1982 = vpop.f32.mrb[0].mxu0
      %v1983 = vadd.f32 0.0, %v1982
      %v1984 = vpop.f32.mrb[0].mxu0
      %v1985 = vpop.f32.mrb[0].mxu0
      %v1986 = vadd.f32 0.0, %v1985
      %v1987 = vpop.f32.mrb[0].mxu0
      %1988 = vmatprep.mubr.bf16.mxu0 0
      %1989 = vmatmul.mubr.bf16.gmra.mrb[0].mxu0 %v1473
      %v1990 = vpop.f32.mrb[0].mxu0
      %v1991 = vadd.f32 0.0, %v1990
      %v1992 = vpop.f32.mrb[0].mxu0
      %v1993 = vpop.f32.mrb[0].mxu0
      %v1994 = vadd.f32 0.0, %v1993
      %v1995 = vpop.f32.mrb[0].mxu0
      %1996 = vmatprep.mubr.bf16.mxu0 0
      %1997 = vmatmul.mubr.bf16.gmra.mrb[0].mxu0 %v1476
      %v1998 = vpop.f32.mrb[0].mxu0
      %v1999 = vadd.f32 0.0, %v1998
      %v2000 = vpop.f32.mrb[0].mxu0
      %v2001 = vpop.f32.mrb[0].mxu0
      %v2002 = vadd.f32 0.0, %v2001
      %v2003 = vpop.f32.mrb[0].mxu0
      %2004 = vmatprep.mubr.bf16.mxu0 0
      %2005 = vmatmul.mubr.bf16.gmra.mrb[0].mxu0 %v1479
      %v2006 = vpop.f32.mrb[0].mxu0
      %v2007 = vadd.f32 0.0, %v2006
      %v2008 = vpop.f32.mrb[0].mxu0
      %v2009 = vpop.f32.mrb[0].mxu0
      %v2010 = vadd.f32 0.0, %v2009
      %v2011 = vpop.f32.mrb[0].mxu0
      %2012 = vmatprep.mubr.bf16.mxu0 0
      %2013 = vmatmul.mubr.bf16.gmra.mrb[0].mxu0 %v1482
      %v2014 = vpop.f32.mrb[0].mxu0
      %v2015 = vadd.f32 0.0, %v2014
      %v2016 = vpop.f32.mrb[0].mxu0
      %v2017 = vpop.f32.mrb[0].mxu0
      %v2018 = vadd.f32 0.0, %v2017
      %v2019 = vpop.f32.mrb[0].mxu0
      %2020 = vmatprep.mubr.bf16.mxu0 0
      %2021 = vmatmul.mubr.bf16.gmra.mrb[0].mxu0 %v1485
      %v2022 = vpop.f32.mrb[0].mxu0
      %v2023 = vadd.f32 0.0, %v2022
      %v2024 = vpop.f32.mrb[0].mxu0
      %v2025 = vpop.f32.mrb[0].mxu0
      %v2026 = vadd.f32 0.0, %v2025
      %v2027 = vpop.f32.mrb[0].mxu0
      %2028 = vmatprep.mubr.bf16.mxu0 0
      %2029 = vmatmul.mubr.bf16.gmra.mrb[0].mxu0 %v1488
      %v2030 = vpop.f32.mrb[0].mxu0
      %v2031 = vadd.f32 0.0, %v2030
      %v2032 = vpop.f32.mrb[0].mxu0
      %v2033 = vpop.f32.mrb[0].mxu0
      %v2034 = vadd.f32 0.0, %v2033
      %v2035 = vpop.f32.mrb[0].mxu0
      %2036 = vmatprep.mubr.bf16.mxu0 0
      %2037 = vmatmul.mubr.bf16.gmra.mrb[0].mxu0 %v1491
      %v2038 = vpop.f32.mrb[0].mxu0
      %v2039 = vadd.f32 0.0, %v2038
      %v2040 = vpop.f32.mrb[0].mxu0
      %v2041 = vpop.f32.mrb[0].mxu0
      %v2042 = vadd.f32 0.0, %v2041
      %v2043 = vpop.f32.mrb[0].mxu0
      %2044 = vmatprep.mubr.bf16.mxu0 0
      %2045 = vmatmul.mubr.bf16.gmra.mrb[0].mxu0 %v1494
      %v2046 = vpop.f32.mrb[0].mxu0
      %v2047 = vadd.f32 0.0, %v2046
      %v2048 = vpop.f32.mrb[0].mxu0
      %v2049 = vpop.f32.mrb[0].mxu0
      %v2050 = vadd.f32 0.0, %v2049
      %v2051 = vpop.f32.mrb[0].mxu0
      %2052 = vmatprep.mubr.bf16.mxu0 0
      %2053 = vmatmul.mubr.bf16.gmra.mrb[0].mxu0 %v1497
      %v2054 = vpop.f32.mrb[0].mxu0
      %v2055 = vadd.f32 0.0, %v2054
      %v2056 = vpop.f32.mrb[0].mxu0
      %v2057 = vpop.f32.mrb[0].mxu0
      %v2058 = vadd.f32 0.0, %v2057
      %v2059 = vpop.f32.mrb[0].mxu0
      %2060 = vmatprep.mubr.bf16.mxu0 0
      %2061 = vmatmul.mubr.bf16.gmra.mrb[0].mxu0 %v1500
      %v2062 = vpop.f32.mrb[0].mxu0
      %v2063 = vadd.f32 0.0, %v2062
      %v2064 = vpop.f32.mrb[0].mxu0
      %v2065 = vpop.f32.mrb[0].mxu0
      %v2066 = vadd.f32 0.0, %v2065
      %v2067 = vpop.f32.mrb[0].mxu0
      %2068 = vmatprep.mubr.bf16.mxu0 0
      %2069 = vmatmul.mubr.bf16.gmra.mrb[0].mxu0 %v1503
      %v2070 = vpop.f32.mrb[0].mxu0
      %v2071 = vadd.f32 0.0, %v2070
      %v2072 = vpop.f32.mrb[0].mxu0
      %v2073 = vpop.f32.mrb[0].mxu0
      %v2074 = vadd.f32 0.0, %v2073
      %v2075 = vpop.f32.mrb[0].mxu0
      %2076 = vmatprep.mubr.bf16.mxu0 0
      %2077 = vmatmul.mubr.bf16.gmra.mrb[0].mxu0 %v1506
      %v2078 = vpop.f32.mrb[0].mxu0
      %v2079 = vadd.f32 0.0, %v2078
      %v2080 = vpop.f32.mrb[0].mxu0
      %v2081 = vpop.f32.mrb[0].mxu0
      %v2082 = vadd.f32 0.0, %v2081
      %v2083 = vpop.f32.mrb[0].mxu0
      %2084 = vdwg.mxu0
      %v2087 = vunpack.c.l.b16 %v400
      %v2088 = vunpack.c.l.b16 %v401
      %v2089 = vpack.c.b16 %v2088, %v2087
      %v2091 = vsel %vm1303, %v679, 0
      %v2093 = vsel %vm1303, %v680, 0
      %v2095 = vsel %vm1303, %v681, 0
      %v2097 = vsel %vm1303, %v682, 0
      %v2099 = vsel %vm1303, %v683, 0
      %v2101 = vsel %vm1303, %v684, 0
      %v2103 = vsel %vm1303, %v685, 0
      %v2105 = vsel %vm1303, %v686, 0
      %v2107 = vsel %vm1303, %v687, 0
      %v2109 = vsel %vm1303, %v688, 0
      %v2111 = vsel %vm1303, %v689, 0
      %v2113 = vsel %vm1303, %v690, 0
      %v2115 = vsel %vm1303, %v691, 0
      %v2117 = vsel %vm1303, %v692, 0
      %v2119 = vsel %vm1303, %v693, 0
      %v2121 = vsel %vm1303, %v694, 0
      %v2123 = vsel %vm1303, %v695, 0
      %v2125 = vsel %vm1303, %v696, 0
      %v2127 = vsel %vm1303, %v697, 0
      %v2129 = vsel %vm1303, %v698, 0
      %v2131 = vsel %vm1303, %v699, 0
      %v2133 = vsel %vm1303, %v700, 0
      %v2135 = vsel %vm1303, %v701, 0
      %v2137 = vsel %vm1303, %v702, 0
      %v2139 = vsel %vm1303, %v703, 0
      %v2141 = vsel %vm1303, %v704, 0
      %v2143 = vsel %vm1303, %v705, 0
      %v2145 = vsel %vm1303, %v706, 0
      %v2147 = vsel %vm1303, %v707, 0
      %v2149 = vsel %vm1303, %v708, 0
      %v2151 = vsel %vm1303, %v709, 0
      %v2153 = vsel %vm1303, %v710, 0
      %v2155 = vsel %vm1303, %v711, 0
      %v2157 = vsel %vm1303, %v712, 0
      %v2159 = vsel %vm1303, %v713, 0
      %v2161 = vsel %vm1303, %v714, 0
      %v2163 = vsel %vm1303, %v715, 0
      %v2165 = vsel %vm1303, %v716, 0
      %v2167 = vsel %vm1303, %v717, 0
      %v2169 = vsel %vm1303, %v718, 0
      %v2171 = vsel %vm1303, %v719, 0
      %v2173 = vsel %vm1303, %v720, 0
      %v2175 = vsel %vm1303, %v721, 0
      %v2177 = vsel %vm1303, %v722, 0
      %v2179 = vsel %vm1303, %v723, 0
      %v2181 = vsel %vm1303, %v724, 0
      %v2183 = vsel %vm1303, %v725, 0
      %v2185 = vsel %vm1303, %v726, 0
      %v2187 = vsel %vm1303, %v727, 0
      %v2189 = vsel %vm1303, %v728, 0
      %v2191 = vsel %vm1303, %v729, 0
      %v2193 = vsel %vm1303, %v730, 0
      %v2195 = vsel %vm1303, %v731, 0
      %v2197 = vsel %vm1303, %v732, 0
      %v2199 = vsel %vm1303, %v733, 0
      %v2201 = vsel %vm1303, %v734, 0
      %v2203 = vsel %vm1303, %v735, 0
      %v2205 = vsel %vm1303, %v736, 0
      %v2207 = vsel %vm1303, %v737, 0
      %v2209 = vsel %vm1303, %v738, 0
      %v2211 = vsel %vm1303, %v739, 0
      %v2213 = vsel %vm1303, %v740, 0
      %v2215 = vsel %vm1303, %v741, 0
      %v2217 = vsel %vm1303, %v742, 0
      %v2219 = vsel %vm1303, %v743, 0
      %v2221 = vsel %vm1303, %v744, 0
      %v2223 = vsel %vm1303, %v745, 0
      %v2225 = vsel %vm1303, %v746, 0
      %2227 = vmatprep.subr.bf16.mxu0 0
      %2228 = vmatpush1.bf16.msra.mxu0 %v2089
      %2229 = vmatprep.subr.bf16.mxu0 0
      %2230 = vmatpush1.bf16.msra.mxu0 0
      %2231 = vmatprep.subr.bf16.mxu0 0
      %2232 = vmatpush1.bf16.msra.mxu0 0
      %2233 = vmatprep.subr.bf16.mxu0 0
      %2234 = vmatpush1.bf16.msra.mxu0 0
      %2235 = vmatprep.subr.bf16.mxu0 0
      %2236 = vmatpush1.bf16.msra.mxu0 0
      %2237 = vmatprep.subr.bf16.mxu0 0
      %2238 = vmatpush1.bf16.msra.mxu0 0
      %2239 = vmatprep.subr.bf16.mxu0 0
      %2240 = vmatpush1.bf16.msra.mxu0 0
      %2241 = vmatprep.subr.bf16.mxu0 0
      %2242 = vmatpush1.bf16.msra.mxu0 0
      %2243 = vmatprep.subr.bf16.mxu0 0
      %2244 = vmatpush1.bf16.msra.mxu0 0
      %2245 = vmatprep.subr.bf16.mxu0 0
      %2246 = vmatpush1.bf16.msra.mxu0 0
      %2247 = vmatprep.subr.bf16.mxu0 0
      %2248 = vmatpush1.bf16.msra.mxu0 0
      %2249 = vmatprep.subr.bf16.mxu0 0
      %2250 = vmatpush1.bf16.msra.mxu0 0
      %2251 = vmatprep.subr.bf16.mxu0 0
      %2252 = vmatpush1.bf16.msra.mxu0 0
      %2253 = vmatprep.subr.bf16.mxu0 0
      %2254 = vmatpush1.bf16.msra.mxu0 0
      %2255 = vmatprep.subr.bf16.mxu0 0
      %2256 = vmatpush1.bf16.msra.mxu0 0
      %2257 = vmatprep.subr.bf16.mxu0 0
      %2258 = vmatpush1.bf16.msra.mxu0 0
      %2259 = vmatprep.mubr.bf16.mxu0 0
      %2260 = vmatmul.mubr.bf16.gmra.mrb[0].mxu0 %v2091
      %v2261 = vpop.f32.mrb[0].mxu0
      %v2262 = vadd.f32 %v1543, %v2261
      %v2263 = vpop.f32.mrb[0].mxu0
      %v2264 = vpop.f32.mrb[0].mxu0
      %v2265 = vadd.f32 %v1546, %v2264
      %v2266 = vpop.f32.mrb[0].mxu0
      %2267 = vmatprep.mubr.bf16.mxu0 0
      %2268 = vmatmul.mubr.bf16.gmra.mrb[0].mxu0 %v2093
      %v2269 = vpop.f32.mrb[0].mxu0
      %v2270 = vadd.f32 %v1551, %v2269
      %v2271 = vpop.f32.mrb[0].mxu0
      %v2272 = vpop.f32.mrb[0].mxu0
      %v2273 = vadd.f32 %v1554, %v2272
      %v2274 = vpop.f32.mrb[0].mxu0
      %2275 = vmatprep.mubr.bf16.mxu0 0
      %2276 = vmatmul.mubr.bf16.gmra.mrb[0].mxu0 %v2095
      %v2277 = vpop.f32.mrb[0].mxu0
      %v2278 = vadd.f32 %v1559, %v2277
      %v2279 = vpop.f32.mrb[0].mxu0
      %v2280 = vpop.f32.mrb[0].mxu0
      %v2281 = vadd.f32 %v1562, %v2280
      %v2282 = vpop.f32.mrb[0].mxu0
      %2283 = vmatprep.mubr.bf16.mxu0 0
      %2284 = vmatmul.mubr.bf16.gmra.mrb[0].mxu0 %v2097
      %v2285 = vpop.f32.mrb[0].mxu0
      %v2286 = vadd.f32 %v1567, %v2285
      %v2287 = vpop.f32.mrb[0].mxu0
      %v2288 = vpop.f32.mrb[0].mxu0
      %v2289 = vadd.f32 %v1570, %v2288
      %v2290 = vpop.f32.mrb[0].mxu0
      %2291 = vmatprep.mubr.bf16.mxu0 0
      %2292 = vmatmul.mubr.bf16.gmra.mrb[0].mxu0 %v2099
      %v2293 = vpop.f32.mrb[0].mxu0
      %v2294 = vadd.f32 %v1575, %v2293
      %v2295 = vpop.f32.mrb[0].mxu0
      %v2296 = vpop.f32.mrb[0].mxu0
      %v2297 = vadd.f32 %v1578, %v2296
      %v2298 = vpop.f32.mrb[0].mxu0
      %2299 = vmatprep.mubr.bf16.mxu0 0
      %2300 = vmatmul.mubr.bf16.gmra.mrb[0].mxu0 %v2101
      %v2301 = vpop.f32.mrb[0].mxu0
      %v2302 = vadd.f32 %v1583, %v2301
      %v2303 = vpop.f32.mrb[0].mxu0
      %v2304 = vpop.f32.mrb[0].mxu0
      %v2305 = vadd.f32 %v1586, %v2304
      %v2306 = vpop.f32.mrb[0].mxu0
      %2307 = vmatprep.mubr.bf16.mxu0 0
      %2308 = vmatmul.mubr.bf16.gmra.mrb[0].mxu0 %v2103
      %v2309 = vpop.f32.mrb[0].mxu0
      %v2310 = vadd.f32 %v1591, %v2309
      %v2311 = vpop.f32.mrb[0].mxu0
      %v2312 = vpop.f32.mrb[0].mxu0
      %v2313 = vadd.f32 %v1594, %v2312
      %v2314 = vpop.f32.mrb[0].mxu0
      %2315 = vmatprep.mubr.bf16.mxu0 0
      %2316 = vmatmul.mubr.bf16.gmra.mrb[0].mxu0 %v2105
      %v2317 = vpop.f32.mrb[0].mxu0
      %v2318 = vadd.f32 %v1599, %v2317
      %v2319 = vpop.f32.mrb[0].mxu0
      %v2320 = vpop.f32.mrb[0].mxu0
      %v2321 = vadd.f32 %v1602, %v2320
      %v2322 = vpop.f32.mrb[0].mxu0
      %2323 = vmatprep.mubr.bf16.mxu0 0
      %2324 = vmatmul.mubr.bf16.gmra.mrb[0].mxu0 %v2107
      %v2325 = vpop.f32.mrb[0].mxu0
      %v2326 = vadd.f32 %v1607, %v2325
      %v2327 = vpop.f32.mrb[0].mxu0
      %v2328 = vpop.f32.mrb[0].mxu0
      %v2329 = vadd.f32 %v1610, %v2328
      %v2330 = vpop.f32.mrb[0].mxu0
      %2331 = vmatprep.mubr.bf16.mxu0 0
      %2332 = vmatmul.mubr.bf16.gmra.mrb[0].mxu0 %v2109
      %v2333 = vpop.f32.mrb[0].mxu0
      %v2334 = vadd.f32 %v1615, %v2333
      %v2335 = vpop.f32.mrb[0].mxu0
      %v2336 = vpop.f32.mrb[0].mxu0
      %v2337 = vadd.f32 %v1618, %v2336
      %v2338 = vpop.f32.mrb[0].mxu0
      %2339 = vmatprep.mubr.bf16.mxu0 0
      %2340 = vmatmul.mubr.bf16.gmra.mrb[0].mxu0 %v2111
      %v2341 = vpop.f32.mrb[0].mxu0
      %v2342 = vadd.f32 %v1623, %v2341
      %v2343 = vpop.f32.mrb[0].mxu0
      %v2344 = vpop.f32.mrb[0].mxu0
      %v2345 = vadd.f32 %v1626, %v2344
      %v2346 = vpop.f32.mrb[0].mxu0
      %2347 = vmatprep.mubr.bf16.mxu0 0
      %2348 = vmatmul.mubr.bf16.gmra.mrb[0].mxu0 %v2113
      %v2349 = vpop.f32.mrb[0].mxu0
      %v2350 = vadd.f32 %v1631, %v2349
      %v2351 = vpop.f32.mrb[0].mxu0
      %v2352 = vpop.f32.mrb[0].mxu0
      %v2353 = vadd.f32 %v1634, %v2352
      %v2354 = vpop.f32.mrb[0].mxu0
      %2355 = vmatprep.mubr.bf16.mxu0 0
      %2356 = vmatmul.mubr.bf16.gmra.mrb[0].mxu0 %v2115
      %v2357 = vpop.f32.mrb[0].mxu0
      %v2358 = vadd.f32 %v1639, %v2357
      %v2359 = vpop.f32.mrb[0].mxu0
      %v2360 = vpop.f32.mrb[0].mxu0
      %v2361 = vadd.f32 %v1642, %v2360
      %v2362 = vpop.f32.mrb[0].mxu0
      %2363 = vmatprep.mubr.bf16.mxu0 0
      %2364 = vmatmul.mubr.bf16.gmra.mrb[0].mxu0 %v2117
      %v2365 = vpop.f32.mrb[0].mxu0
      %v2366 = vadd.f32 %v1647, %v2365
      %v2367 = vpop.f32.mrb[0].mxu0
      %v2368 = vpop.f32.mrb[0].mxu0
      %v2369 = vadd.f32 %v1650, %v2368
      %v2370 = vpop.f32.mrb[0].mxu0
      %2371 = vmatprep.mubr.bf16.mxu0 0
      %2372 = vmatmul.mubr.bf16.gmra.mrb[0].mxu0 %v2119
      %v2373 = vpop.f32.mrb[0].mxu0
      %v2374 = vadd.f32 %v1655, %v2373
      %v2375 = vpop.f32.mrb[0].mxu0
      %v2376 = vpop.f32.mrb[0].mxu0
      %v2377 = vadd.f32 %v1658, %v2376
      %v2378 = vpop.f32.mrb[0].mxu0
      %2379 = vmatprep.mubr.bf16.mxu0 0
      %2380 = vmatmul.mubr.bf16.gmra.mrb[0].mxu0 %v2121
      %v2381 = vpop.f32.mrb[0].mxu0
      %v2382 = vadd.f32 %v1663, %v2381
      %v2383 = vpop.f32.mrb[0].mxu0
      %v2384 = vpop.f32.mrb[0].mxu0
      %v2385 = vadd.f32 %v1666, %v2384
      %v2386 = vpop.f32.mrb[0].mxu0
      %2387 = vmatprep.mubr.bf16.mxu0 0
      %2388 = vmatmul.mubr.bf16.gmra.mrb[0].mxu0 %v2123
      %v2389 = vpop.f32.mrb[0].mxu0
      %v2390 = vadd.f32 %v1671, %v2389
      %v2391 = vpop.f32.mrb[0].mxu0
      %v2392 = vpop.f32.mrb[0].mxu0
      %v2393 = vadd.f32 %v1674, %v2392
      %v2394 = vpop.f32.mrb[0].mxu0
      %2395 = vmatprep.mubr.bf16.mxu0 0
      %2396 = vmatmul.mubr.bf16.gmra.mrb[0].mxu0 %v2125
      %v2397 = vpop.f32.mrb[0].mxu0
      %v2398 = vadd.f32 %v1679, %v2397
      %v2399 = vpop.f32.mrb[0].mxu0
      %v2400 = vpop.f32.mrb[0].mxu0
      %v2401 = vadd.f32 %v1682, %v2400
      %v2402 = vpop.f32.mrb[0].mxu0
      %2403 = vmatprep.mubr.bf16.mxu0 0
      %2404 = vmatmul.mubr.bf16.gmra.mrb[0].mxu0 %v2127
      %v2405 = vpop.f32.mrb[0].mxu0
      %v2406 = vadd.f32 %v1687, %v2405
      %v2407 = vpop.f32.mrb[0].mxu0
      %v2408 = vpop.f32.mrb[0].mxu0
      %v2409 = vadd.f32 %v1690, %v2408
      %v2410 = vpop.f32.mrb[0].mxu0
      %2411 = vmatprep.mubr.bf16.mxu0 0
      %2412 = vmatmul.mubr.bf16.gmra.mrb[0].mxu0 %v2129
      %v2413 = vpop.f32.mrb[0].mxu0
      %v2414 = vadd.f32 %v1695, %v2413
      %v2415 = vpop.f32.mrb[0].mxu0
      %v2416 = vpop.f32.mrb[0].mxu0
      %v2417 = vadd.f32 %v1698, %v2416
      %v2418 = vpop.f32.mrb[0].mxu0
      %2419 = vmatprep.mubr.bf16.mxu0 0
      %2420 = vmatmul.mubr.bf16.gmra.mrb[0].mxu0 %v2131
      %v2421 = vpop.f32.mrb[0].mxu0
      %v2422 = vadd.f32 %v1703, %v2421
      %v2423 = vpop.f32.mrb[0].mxu0
      %v2424 = vpop.f32.mrb[0].mxu0
      %v2425 = vadd.f32 %v1706, %v2424
      %v2426 = vpop.f32.mrb[0].mxu0
      %2427 = vmatprep.mubr.bf16.mxu0 0
      %2428 = vmatmul.mubr.bf16.gmra.mrb[0].mxu0 %v2133
      %v2429 = vpop.f32.mrb[0].mxu0
      %v2430 = vadd.f32 %v1711, %v2429
      %v2431 = vpop.f32.mrb[0].mxu0
      %v2432 = vpop.f32.mrb[0].mxu0
      %v2433 = vadd.f32 %v1714, %v2432
      %v2434 = vpop.f32.mrb[0].mxu0
      %2435 = vmatprep.mubr.bf16.mxu0 0
      %2436 = vmatmul.mubr.bf16.gmra.mrb[0].mxu0 %v2135
      %v2437 = vpop.f32.mrb[0].mxu0
      %v2438 = vadd.f32 %v1719, %v2437
      %v2439 = vpop.f32.mrb[0].mxu0
      %v2440 = vpop.f32.mrb[0].mxu0
      %v2441 = vadd.f32 %v1722, %v2440
      %v2442 = vpop.f32.mrb[0].mxu0
      %2443 = vmatprep.mubr.bf16.mxu0 0
      %2444 = vmatmul.mubr.bf16.gmra.mrb[0].mxu0 %v2137
      %v2445 = vpop.f32.mrb[0].mxu0
      %v2446 = vadd.f32 %v1727, %v2445
      %v2447 = vpop.f32.mrb[0].mxu0
      %v2448 = vpop.f32.mrb[0].mxu0
      %v2449 = vadd.f32 %v1730, %v2448
      %v2450 = vpop.f32.mrb[0].mxu0
      %2451 = vmatprep.mubr.bf16.mxu0 0
      %2452 = vmatmul.mubr.bf16.gmra.mrb[0].mxu0 %v2139
      %v2453 = vpop.f32.mrb[0].mxu0
      %v2454 = vadd.f32 %v1735, %v2453
      %v2455 = vpop.f32.mrb[0].mxu0
      %v2456 = vpop.f32.mrb[0].mxu0
      %v2457 = vadd.f32 %v1738, %v2456
      %v2458 = vpop.f32.mrb[0].mxu0
      %2459 = vmatprep.mubr.bf16.mxu0 0
      %2460 = vmatmul.mubr.bf16.gmra.mrb[0].mxu0 %v2141
      %v2461 = vpop.f32.mrb[0].mxu0
      %v2462 = vadd.f32 %v1743, %v2461
      %v2463 = vpop.f32.mrb[0].mxu0
      %v2464 = vpop.f32.mrb[0].mxu0
      %v2465 = vadd.f32 %v1746, %v2464
      %v2466 = vpop.f32.mrb[0].mxu0
      %2467 = vmatprep.mubr.bf16.mxu0 0
      %2468 = vmatmul.mubr.bf16.gmra.mrb[0].mxu0 %v2143
      %v2469 = vpop.f32.mrb[0].mxu0
      %v2470 = vadd.f32 %v1751, %v2469
      %v2471 = vpop.f32.mrb[0].mxu0
      %v2472 = vpop.f32.mrb[0].mxu0
      %v2473 = vadd.f32 %v1754, %v2472
      %v2474 = vpop.f32.mrb[0].mxu0
      %2475 = vmatprep.mubr.bf16.mxu0 0
      %2476 = vmatmul.mubr.bf16.gmra.mrb[0].mxu0 %v2145
      %v2477 = vpop.f32.mrb[0].mxu0
      %v2478 = vadd.f32 %v1759, %v2477
      %v2479 = vpop.f32.mrb[0].mxu0
      %v2480 = vpop.f32.mrb[0].mxu0
      %v2481 = vadd.f32 %v1762, %v2480
      %v2482 = vpop.f32.mrb[0].mxu0
      %2483 = vmatprep.mubr.bf16.mxu0 0
      %2484 = vmatmul.mubr.bf16.gmra.mrb[0].mxu0 %v2147
      %v2485 = vpop.f32.mrb[0].mxu0
      %v2486 = vadd.f32 %v1767, %v2485
      %v2487 = vpop.f32.mrb[0].mxu0
      %v2488 = vpop.f32.mrb[0].mxu0
      %v2489 = vadd.f32 %v1770, %v2488
      %v2490 = vpop.f32.mrb[0].mxu0
      %2491 = vmatprep.mubr.bf16.mxu0 0
      %2492 = vmatmul.mubr.bf16.gmra.mrb[0].mxu0 %v2149
      %v2493 = vpop.f32.mrb[0].mxu0
      %v2494 = vadd.f32 %v1775, %v2493
      %v2495 = vpop.f32.mrb[0].mxu0
      %v2496 = vpop.f32.mrb[0].mxu0
      %v2497 = vadd.f32 %v1778, %v2496
      %v2498 = vpop.f32.mrb[0].mxu0
      %2499 = vmatprep.mubr.bf16.mxu0 0
      %2500 = vmatmul.mubr.bf16.gmra.mrb[0].mxu0 %v2151
      %v2501 = vpop.f32.mrb[0].mxu0
      %v2502 = vadd.f32 %v1783, %v2501
      %v2503 = vpop.f32.mrb[0].mxu0
      %v2504 = vpop.f32.mrb[0].mxu0
      %v2505 = vadd.f32 %v1786, %v2504
      %v2506 = vpop.f32.mrb[0].mxu0
      %2507 = vmatprep.mubr.bf16.mxu0 0
      %2508 = vmatmul.mubr.bf16.gmra.mrb[0].mxu0 %v2153
      %v2509 = vpop.f32.mrb[0].mxu0
      %v2510 = vadd.f32 %v1791, %v2509
      %v2511 = vpop.f32.mrb[0].mxu0
      %v2512 = vpop.f32.mrb[0].mxu0
      %v2513 = vadd.f32 %v1794, %v2512
      %v2514 = vpop.f32.mrb[0].mxu0
      %2515 = vmatprep.mubr.bf16.mxu0 0
      %2516 = vmatmul.mubr.bf16.gmra.mrb[0].mxu0 %v2155
      %v2517 = vpop.f32.mrb[0].mxu0
      %v2518 = vadd.f32 %v1799, %v2517
      %v2519 = vpop.f32.mrb[0].mxu0
      %v2520 = vpop.f32.mrb[0].mxu0
      %v2521 = vadd.f32 %v1802, %v2520
      %v2522 = vpop.f32.mrb[0].mxu0
      %2523 = vmatprep.mubr.bf16.mxu0 0
      %2524 = vmatmul.mubr.bf16.gmra.mrb[0].mxu0 %v2157
      %v2525 = vpop.f32.mrb[0].mxu0
      %v2526 = vadd.f32 %v1807, %v2525
      %v2527 = vpop.f32.mrb[0].mxu0
      %v2528 = vpop.f32.mrb[0].mxu0
      %v2529 = vadd.f32 %v1810, %v2528
      %v2530 = vpop.f32.mrb[0].mxu0
      %2531 = vmatprep.mubr.bf16.mxu0 0
      %2532 = vmatmul.mubr.bf16.gmra.mrb[0].mxu0 %v2159
      %v2533 = vpop.f32.mrb[0].mxu0
      %v2534 = vadd.f32 %v1815, %v2533
      %v2535 = vpop.f32.mrb[0].mxu0
      %v2536 = vpop.f32.mrb[0].mxu0
      %v2537 = vadd.f32 %v1818, %v2536
      %v2538 = vpop.f32.mrb[0].mxu0
      %2539 = vmatprep.mubr.bf16.mxu0 0
      %2540 = vmatmul.mubr.bf16.gmra.mrb[0].mxu0 %v2161
      %v2541 = vpop.f32.mrb[0].mxu0
      %v2542 = vadd.f32 %v1823, %v2541
      %v2543 = vpop.f32.mrb[0].mxu0
      %v2544 = vpop.f32.mrb[0].mxu0
      %v2545 = vadd.f32 %v1826, %v2544
      %v2546 = vpop.f32.mrb[0].mxu0
      %2547 = vmatprep.mubr.bf16.mxu0 0
      %2548 = vmatmul.mubr.bf16.gmra.mrb[0].mxu0 %v2163
      %v2549 = vpop.f32.mrb[0].mxu0
      %v2550 = vadd.f32 %v1831, %v2549
      %v2551 = vpop.f32.mrb[0].mxu0
      %v2552 = vpop.f32.mrb[0].mxu0
      %v2553 = vadd.f32 %v1834, %v2552
      %v2554 = vpop.f32.mrb[0].mxu0
      %2555 = vmatprep.mubr.bf16.mxu0 0
      %2556 = vmatmul.mubr.bf16.gmra.mrb[0].mxu0 %v2165
      %v2557 = vpop.f32.mrb[0].mxu0
      %v2558 = vadd.f32 %v1839, %v2557
      %v2559 = vpop.f32.mrb[0].mxu0
      %v2560 = vpop.f32.mrb[0].mxu0
      %v2561 = vadd.f32 %v1842, %v2560
      %v2562 = vpop.f32.mrb[0].mxu0
      %2563 = vmatprep.mubr.bf16.mxu0 0
      %2564 = vmatmul.mubr.bf16.gmra.mrb[0].mxu0 %v2167
      %v2565 = vpop.f32.mrb[0].mxu0
      %v2566 = vadd.f32 %v1847, %v2565
      %v2567 = vpop.f32.mrb[0].mxu0
      %v2568 = vpop.f32.mrb[0].mxu0
      %v2569 = vadd.f32 %v1850, %v2568
      %v2570 = vpop.f32.mrb[0].mxu0
      %2571 = vmatprep.mubr.bf16.mxu0 0
      %2572 = vmatmul.mubr.bf16.gmra.mrb[0].mxu0 %v2169
      %v2573 = vpop.f32.mrb[0].mxu0
      %v2574 = vadd.f32 %v1855, %v2573
      %v2575 = vpop.f32.mrb[0].mxu0
      %v2576 = vpop.f32.mrb[0].mxu0
      %v2577 = vadd.f32 %v1858, %v2576
      %v2578 = vpop.f32.mrb[0].mxu0
      %2579 = vmatprep.mubr.bf16.mxu0 0
      %2580 = vmatmul.mubr.bf16.gmra.mrb[0].mxu0 %v2171
      %v2581 = vpop.f32.mrb[0].mxu0
      %v2582 = vadd.f32 %v1863, %v2581
      %v2583 = vpop.f32.mrb[0].mxu0
      %v2584 = vpop.f32.mrb[0].mxu0
      %v2585 = vadd.f32 %v1866, %v2584
      %v2586 = vpop.f32.mrb[0].mxu0
      %2587 = vmatprep.mubr.bf16.mxu0 0
      %2588 = vmatmul.mubr.bf16.gmra.mrb[0].mxu0 %v2173
      %v2589 = vpop.f32.mrb[0].mxu0
      %v2590 = vadd.f32 %v1871, %v2589
      %v2591 = vpop.f32.mrb[0].mxu0
      %v2592 = vpop.f32.mrb[0].mxu0
      %v2593 = vadd.f32 %v1874, %v2592
      %v2594 = vpop.f32.mrb[0].mxu0
      %2595 = vmatprep.mubr.bf16.mxu0 0
      %2596 = vmatmul.mubr.bf16.gmra.mrb[0].mxu0 %v2175
      %v2597 = vpop.f32.mrb[0].mxu0
      %v2598 = vadd.f32 %v1879, %v2597
      %v2599 = vpop.f32.mrb[0].mxu0
      %v2600 = vpop.f32.mrb[0].mxu0
      %v2601 = vadd.f32 %v1882, %v2600
      %v2602 = vpop.f32.mrb[0].mxu0
      %2603 = vmatprep.mubr.bf16.mxu0 0
      %2604 = vmatmul.mubr.bf16.gmra.mrb[0].mxu0 %v2177
      %v2605 = vpop.f32.mrb[0].mxu0
      %v2606 = vadd.f32 %v1887, %v2605
      %v2607 = vpop.f32.mrb[0].mxu0
      %v2608 = vpop.f32.mrb[0].mxu0
      %v2609 = vadd.f32 %v1890, %v2608
      %v2610 = vpop.f32.mrb[0].mxu0
      %2611 = vmatprep.mubr.bf16.mxu0 0
      %2612 = vmatmul.mubr.bf16.gmra.mrb[0].mxu0 %v2179
      %v2613 = vpop.f32.mrb[0].mxu0
      %v2614 = vadd.f32 %v1895, %v2613
      %v2615 = vpop.f32.mrb[0].mxu0
      %v2616 = vpop.f32.mrb[0].mxu0
      %v2617 = vadd.f32 %v1898, %v2616
      %v2618 = vpop.f32.mrb[0].mxu0
      %2619 = vmatprep.mubr.bf16.mxu0 0
      %2620 = vmatmul.mubr.bf16.gmra.mrb[0].mxu0 %v2181
      %v2621 = vpop.f32.mrb[0].mxu0
      %v2622 = vadd.f32 %v1903, %v2621
      %v2623 = vpop.f32.mrb[0].mxu0
      %v2624 = vpop.f32.mrb[0].mxu0
      %v2625 = vadd.f32 %v1906, %v2624
      %v2626 = vpop.f32.mrb[0].mxu0
      %2627 = vmatprep.mubr.bf16.mxu0 0
      %2628 = vmatmul.mubr.bf16.gmra.mrb[0].mxu0 %v2183
      %v2629 = vpop.f32.mrb[0].mxu0
      %v2630 = vadd.f32 %v1911, %v2629
      %v2631 = vpop.f32.mrb[0].mxu0
      %v2632 = vpop.f32.mrb[0].mxu0
      %v2633 = vadd.f32 %v1914, %v2632
      %v2634 = vpop.f32.mrb[0].mxu0
      %2635 = vmatprep.mubr.bf16.mxu0 0
      %2636 = vmatmul.mubr.bf16.gmra.mrb[0].mxu0 %v2185
      %v2637 = vpop.f32.mrb[0].mxu0
      %v2638 = vadd.f32 %v1919, %v2637
      %v2639 = vpop.f32.mrb[0].mxu0
      %v2640 = vpop.f32.mrb[0].mxu0
      %v2641 = vadd.f32 %v1922, %v2640
      %v2642 = vpop.f32.mrb[0].mxu0
      %2643 = vmatprep.mubr.bf16.mxu0 0
      %2644 = vmatmul.mubr.bf16.gmra.mrb[0].mxu0 %v2187
      %v2645 = vpop.f32.mrb[0].mxu0
      %v2646 = vadd.f32 %v1927, %v2645
      %v2647 = vpop.f32.mrb[0].mxu0
      %v2648 = vpop.f32.mrb[0].mxu0
      %v2649 = vadd.f32 %v1930, %v2648
      %v2650 = vpop.f32.mrb[0].mxu0
      %2651 = vmatprep.mubr.bf16.mxu0 0
      %2652 = vmatmul.mubr.bf16.gmra.mrb[0].mxu0 %v2189
      %v2653 = vpop.f32.mrb[0].mxu0
      %v2654 = vadd.f32 %v1935, %v2653
      %v2655 = vpop.f32.mrb[0].mxu0
      %v2656 = vpop.f32.mrb[0].mxu0
      %v2657 = vadd.f32 %v1938, %v2656
      %v2658 = vpop.f32.mrb[0].mxu0
      %2659 = vmatprep.mubr.bf16.mxu0 0
      %2660 = vmatmul.mubr.bf16.gmra.mrb[0].mxu0 %v2191
      %v2661 = vpop.f32.mrb[0].mxu0
      %v2662 = vadd.f32 %v1943, %v2661
      %v2663 = vpop.f32.mrb[0].mxu0
      %v2664 = vpop.f32.mrb[0].mxu0
      %v2665 = vadd.f32 %v1946, %v2664
      %v2666 = vpop.f32.mrb[0].mxu0
      %2667 = vmatprep.mubr.bf16.mxu0 0
      %2668 = vmatmul.mubr.bf16.gmra.mrb[0].mxu0 %v2193
      %v2669 = vpop.f32.mrb[0].mxu0
      %v2670 = vadd.f32 %v1951, %v2669
      %v2671 = vpop.f32.mrb[0].mxu0
      %v2672 = vpop.f32.mrb[0].mxu0
      %v2673 = vadd.f32 %v1954, %v2672
      %v2674 = vpop.f32.mrb[0].mxu0
      %2675 = vmatprep.mubr.bf16.mxu0 0
      %2676 = vmatmul.mubr.bf16.gmra.mrb[0].mxu0 %v2195
      %v2677 = vpop.f32.mrb[0].mxu0
      %v2678 = vadd.f32 %v1959, %v2677
      %v2679 = vpop.f32.mrb[0].mxu0
      %v2680 = vpop.f32.mrb[0].mxu0
      %v2681 = vadd.f32 %v1962, %v2680
      %v2682 = vpop.f32.mrb[0].mxu0
      %2683 = vmatprep.mubr.bf16.mxu0 0
      %2684 = vmatmul.mubr.bf16.gmra.mrb[0].mxu0 %v2197
      %v2685 = vpop.f32.mrb[0].mxu0
      %v2686 = vadd.f32 %v1967, %v2685
      %v2687 = vpop.f32.mrb[0].mxu0
      %v2688 = vpop.f32.mrb[0].mxu0
      %v2689 = vadd.f32 %v1970, %v2688
      %v2690 = vpop.f32.mrb[0].mxu0
      %2691 = vmatprep.mubr.bf16.mxu0 0
      %2692 = vmatmul.mubr.bf16.gmra.mrb[0].mxu0 %v2199
      %v2693 = vpop.f32.mrb[0].mxu0
      %v2694 = vadd.f32 %v1975, %v2693
      %v2695 = vpop.f32.mrb[0].mxu0
      %v2696 = vpop.f32.mrb[0].mxu0
      %v2697 = vadd.f32 %v1978, %v2696
      %v2698 = vpop.f32.mrb[0].mxu0
      %2699 = vmatprep.mubr.bf16.mxu0 0
      %2700 = vmatmul.mubr.bf16.gmra.mrb[0].mxu0 %v2201
      %v2701 = vpop.f32.mrb[0].mxu0
      %v2702 = vadd.f32 %v1983, %v2701
      %v2703 = vpop.f32.mrb[0].mxu0
      %v2704 = vpop.f32.mrb[0].mxu0
      %v2705 = vadd.f32 %v1986, %v2704
      %v2706 = vpop.f32.mrb[0].mxu0
      %2707 = vmatprep.mubr.bf16.mxu0 0
      %2708 = vmatmul.mubr.bf16.gmra.mrb[0].mxu0 %v2203
      %v2709 = vpop.f32.mrb[0].mxu0
      %v2710 = vadd.f32 %v1991, %v2709
      %v2711 = vpop.f32.mrb[0].mxu0
      %v2712 = vpop.f32.mrb[0].mxu0
      %v2713 = vadd.f32 %v1994, %v2712
      %v2714 = vpop.f32.mrb[0].mxu0
      %2715 = vmatprep.mubr.bf16.mxu0 0
      %2716 = vmatmul.mubr.bf16.gmra.mrb[0].mxu0 %v2205
      %v2717 = vpop.f32.mrb[0].mxu0
      %v2718 = vadd.f32 %v1999, %v2717
      %v2719 = vpop.f32.mrb[0].mxu0
      %v2720 = vpop.f32.mrb[0].mxu0
      %v2721 = vadd.f32 %v2002, %v2720
      %v2722 = vpop.f32.mrb[0].mxu0
      %2723 = vmatprep.mubr.bf16.mxu0 0
      %2724 = vmatmul.mubr.bf16.gmra.mrb[0].mxu0 %v2207
      %v2725 = vpop.f32.mrb[0].mxu0
      %v2726 = vadd.f32 %v2007, %v2725
      %v2727 = vpop.f32.mrb[0].mxu0
      %v2728 = vpop.f32.mrb[0].mxu0
      %v2729 = vadd.f32 %v2010, %v2728
      %v2730 = vpop.f32.mrb[0].mxu0
      %2731 = vmatprep.mubr.bf16.mxu0 0
      %2732 = vmatmul.mubr.bf16.gmra.mrb[0].mxu0 %v2209
      %v2733 = vpop.f32.mrb[0].mxu0
      %v2734 = vadd.f32 %v2015, %v2733
      %v2735 = vpop.f32.mrb[0].mxu0
      %v2736 = vpop.f32.mrb[0].mxu0
      %v2737 = vadd.f32 %v2018, %v2736
      %v2738 = vpop.f32.mrb[0].mxu0
      %2739 = vmatprep.mubr.bf16.mxu0 0
      %2740 = vmatmul.mubr.bf16.gmra.mrb[0].mxu0 %v2211
      %v2741 = vpop.f32.mrb[0].mxu0
      %v2742 = vadd.f32 %v2023, %v2741
      %v2743 = vpop.f32.mrb[0].mxu0
      %v2744 = vpop.f32.mrb[0].mxu0
      %v2745 = vadd.f32 %v2026, %v2744
      %v2746 = vpop.f32.mrb[0].mxu0
      %2747 = vmatprep.mubr.bf16.mxu0 0
      %2748 = vmatmul.mubr.bf16.gmra.mrb[0].mxu0 %v2213
      %v2749 = vpop.f32.mrb[0].mxu0
      %v2750 = vadd.f32 %v2031, %v2749
      %v2751 = vpop.f32.mrb[0].mxu0
      %v2752 = vpop.f32.mrb[0].mxu0
      %v2753 = vadd.f32 %v2034, %v2752
      %v2754 = vpop.f32.mrb[0].mxu0
      %2755 = vmatprep.mubr.bf16.mxu0 0
      %2756 = vmatmul.mubr.bf16.gmra.mrb[0].mxu0 %v2215
      %v2757 = vpop.f32.mrb[0].mxu0
      %v2758 = vadd.f32 %v2039, %v2757
      %v2759 = vpop.f32.mrb[0].mxu0
      %v2760 = vpop.f32.mrb[0].mxu0
      %v2761 = vadd.f32 %v2042, %v2760
      %v2762 = vpop.f32.mrb[0].mxu0
      %2763 = vmatprep.mubr.bf16.mxu0 0
      %2764 = vmatmul.mubr.bf16.gmra.mrb[0].mxu0 %v2217
      %v2765 = vpop.f32.mrb[0].mxu0
      %v2766 = vadd.f32 %v2047, %v2765
      %v2767 = vpop.f32.mrb[0].mxu0
      %v2768 = vpop.f32.mrb[0].mxu0
      %v2769 = vadd.f32 %v2050, %v2768
      %v2770 = vpop.f32.mrb[0].mxu0
      %2771 = vmatprep.mubr.bf16.mxu0 0
      %2772 = vmatmul.mubr.bf16.gmra.mrb[0].mxu0 %v2219
      %v2773 = vpop.f32.mrb[0].mxu0
      %v2774 = vadd.f32 %v2055, %v2773
      %v2775 = vpop.f32.mrb[0].mxu0
      %v2776 = vpop.f32.mrb[0].mxu0
      %v2777 = vadd.f32 %v2058, %v2776
      %v2778 = vpop.f32.mrb[0].mxu0
      %2779 = vmatprep.mubr.bf16.mxu0 0
      %2780 = vmatmul.mubr.bf16.gmra.mrb[0].mxu0 %v2221
      %v2781 = vpop.f32.mrb[0].mxu0
      %v2782 = vadd.f32 %v2063, %v2781
      %v2783 = vpop.f32.mrb[0].mxu0
      %v2784 = vpop.f32.mrb[0].mxu0
      %v2785 = vadd.f32 %v2066, %v2784
      %v2786 = vpop.f32.mrb[0].mxu0
      %2787 = vmatprep.mubr.bf16.mxu0 0
      %2788 = vmatmul.mubr.bf16.gmra.mrb[0].mxu0 %v2223
      %v2789 = vpop.f32.mrb[0].mxu0
      %v2790 = vadd.f32 %v2071, %v2789
      %v2791 = vpop.f32.mrb[0].mxu0
      %v2792 = vpop.f32.mrb[0].mxu0
      %v2793 = vadd.f32 %v2074, %v2792
      %v2794 = vpop.f32.mrb[0].mxu0
      %2795 = vmatprep.mubr.bf16.mxu0 0
      %2796 = vmatmul.mubr.bf16.gmra.mrb[0].mxu0 %v2225
      %v2797 = vpop.f32.mrb[0].mxu0
      %v2798 = vadd.f32 %v2079, %v2797
      %v2799 = vpop.f32.mrb[0].mxu0
      %v2800 = vpop.f32.mrb[0].mxu0
      %v2801 = vadd.f32 %v2082, %v2800
      %v2802 = vpop.f32.mrb[0].mxu0
      %2803 = vdwg.mxu0
      %v2804 = vld [vmem:[%s244] sm:$0xe]
      %v2805 = vld [vmem:[%s248 + $0x10] sm:$0xf]
      %v2806 = vld [vmem:[%s248 + $0x14] sm:$0xf]
      %v2808 = vunpack.c.l.b16 %v2804
      %v2809 = vpack.c.b16 %v543, %v2808
      %vm2810 = vcmask 1046528
      %v2811 = vrot.slane %v2809, 1
      %v2812 = vrot.slane %v680, 1
      %v2813 = vsel %vm2810, %v2811, %v2812
      %v2814 = vrot.slane %v681, 1
      %v2815 = vsel %vm2810, %v2812, %v2814
      %v2816 = vrot.slane %v682, 1
      %v2817 = vsel %vm2810, %v2814, %v2816
      %v2818 = vrot.slane %v683, 1
      %v2819 = vsel %vm2810, %v2816, %v2818
      %v2820 = vrot.slane %v684, 1
      %v2821 = vsel %vm2810, %v2818, %v2820
      %v2822 = vrot.slane %v685, 1
      %v2823 = vsel %vm2810, %v2820, %v2822
      %v2824 = vrot.slane %v686, 1
      %v2825 = vsel %vm2810, %v2822, %v2824
      %v2826 = vrot.slane %v687, 1
      %v2827 = vsel %vm2810, %v2824, %v2826
      %v2828 = vrot.slane %v688, 1
      %v2829 = vsel %vm2810, %v2826, %v2828
      %v2830 = vrot.slane %v689, 1
      %v2831 = vsel %vm2810, %v2828, %v2830
      %v2832 = vrot.slane %v690, 1
      %v2833 = vsel %vm2810, %v2830, %v2832
      %v2834 = vrot.slane %v691, 1
      %v2835 = vsel %vm2810, %v2832, %v2834
      %v2836 = vrot.slane %v692, 1
      %v2837 = vsel %vm2810, %v2834, %v2836
      %v2838 = vrot.slane %v693, 1
      %v2839 = vsel %vm2810, %v2836, %v2838
      %v2840 = vrot.slane %v694, 1
      %v2841 = vsel %vm2810, %v2838, %v2840
      %v2842 = vrot.slane %v695, 1
      %v2843 = vsel %vm2810, %v2840, %v2842
      %v2844 = vrot.slane %v696, 1
      %v2845 = vsel %vm2810, %v2842, %v2844
      %v2846 = vrot.slane %v697, 1
      %v2847 = vsel %vm2810, %v2844, %v2846
      %v2848 = vrot.slane %v698, 1
      %v2849 = vsel %vm2810, %v2846, %v2848
      %v2850 = vrot.slane %v699, 1
      %v2851 = vsel %vm2810, %v2848, %v2850
      %v2852 = vrot.slane %v700, 1
      %v2853 = vsel %vm2810, %v2850, %v2852
      %v2854 = vrot.slane %v701, 1
      %v2855 = vsel %vm2810, %v2852, %v2854
      %v2856 = vrot.slane %v702, 1
      %v2857 = vsel %vm2810, %v2854, %v2856
      %v2858 = vrot.slane %v703, 1
      %v2859 = vsel %vm2810, %v2856, %v2858
      %v2860 = vrot.slane %v704, 1
      %v2861 = vsel %vm2810, %v2858, %v2860
      %v2862 = vrot.slane %v705, 1
      %v2863 = vsel %vm2810, %v2860, %v2862
      %v2864 = vrot.slane %v706, 1
      %v2865 = vsel %vm2810, %v2862, %v2864
      %v2866 = vrot.slane %v707, 1
      %v2867 = vsel %vm2810, %v2864, %v2866
      %v2868 = vrot.slane %v708, 1
      %v2869 = vsel %vm2810, %v2866, %v2868
      %v2870 = vrot.slane %v709, 1
      %v2871 = vsel %vm2810, %v2868, %v2870
      %v2872 = vrot.slane %v710, 1
      %v2873 = vsel %vm2810, %v2870, %v2872
      %v2874 = vrot.slane %v711, 1
      %v2875 = vsel %vm2810, %v2872, %v2874
      %v2876 = vrot.slane %v712, 1
      %v2877 = vsel %vm2810, %v2874, %v2876
      %v2878 = vrot.slane %v713, 1
      %v2879 = vsel %vm2810, %v2876, %v2878
      %v2880 = vrot.slane %v714, 1
      %v2881 = vsel %vm2810, %v2878, %v2880
      %v2882 = vrot.slane %v715, 1
      %v2883 = vsel %vm2810, %v2880, %v2882
      %v2884 = vrot.slane %v716, 1
      %v2885 = vsel %vm2810, %v2882, %v2884
      %v2886 = vrot.slane %v717, 1
      %v2887 = vsel %vm2810, %v2884, %v2886
      %v2888 = vrot.slane %v718, 1
      %v2889 = vsel %vm2810, %v2886, %v2888
      %v2890 = vrot.slane %v719, 1
      %v2891 = vsel %vm2810, %v2888, %v2890
      %v2892 = vrot.slane %v720, 1
      %v2893 = vsel %vm2810, %v2890, %v2892
      %v2894 = vrot.slane %v721, 1
      %v2895 = vsel %vm2810, %v2892, %v2894
      %v2896 = vrot.slane %v722, 1
      %v2897 = vsel %vm2810, %v2894, %v2896
      %v2898 = vrot.slane %v723, 1
      %v2899 = vsel %vm2810, %v2896, %v2898
      %v2900 = vrot.slane %v724, 1
      %v2901 = vsel %vm2810, %v2898, %v2900
      %v2902 = vrot.slane %v725, 1
      %v2903 = vsel %vm2810, %v2900, %v2902
      %v2904 = vrot.slane %v726, 1
      %v2905 = vsel %vm2810, %v2902, %v2904
      %v2906 = vrot.slane %v727, 1
      %v2907 = vsel %vm2810, %v2904, %v2906
      %v2908 = vrot.slane %v728, 1
      %v2909 = vsel %vm2810, %v2906, %v2908
      %v2910 = vrot.slane %v729, 1
      %v2911 = vsel %vm2810, %v2908, %v2910
      %v2912 = vrot.slane %v730, 1
      %v2913 = vsel %vm2810, %v2910, %v2912
      %v2914 = vrot.slane %v731, 1
      %v2915 = vsel %vm2810, %v2912, %v2914
      %v2916 = vrot.slane %v732, 1
      %v2917 = vsel %vm2810, %v2914, %v2916
      %v2918 = vrot.slane %v733, 1
      %v2919 = vsel %vm2810, %v2916, %v2918
      %v2920 = vrot.slane %v734, 1
      %v2921 = vsel %vm2810, %v2918, %v2920
      %v2922 = vrot.slane %v735, 1
      %v2923 = vsel %vm2810, %v2920, %v2922
      %v2924 = vrot.slane %v736, 1
      %v2925 = vsel %vm2810, %v2922, %v2924
      %v2926 = vrot.slane %v737, 1
      %v2927 = vsel %vm2810, %v2924, %v2926
      %v2928 = vrot.slane %v738, 1
      %v2929 = vsel %vm2810, %v2926, %v2928
      %v2930 = vrot.slane %v739, 1
      %v2931 = vsel %vm2810, %v2928, %v2930
      %v2932 = vrot.slane %v740, 1
      %v2933 = vsel %vm2810, %v2930, %v2932
      %v2934 = vrot.slane %v741, 1
      %v2935 = vsel %vm2810, %v2932, %v2934
      %v2936 = vrot.slane %v742, 1
      %v2937 = vsel %vm2810, %v2934, %v2936
      %v2938 = vrot.slane %v743, 1
      %v2939 = vsel %vm2810, %v2936, %v2938
      %v2940 = vrot.slane %v744, 1
      %v2941 = vsel %vm2810, %v2938, %v2940
      %v2942 = vrot.slane %v745, 1
      %v2943 = vsel %vm2810, %v2940, %v2942
      %v2944 = vrot.slane %v746, 1
      %v2945 = vsel %vm2810, %v2942, %v2944
      %v2946 = vrot.slane %v747, 1
      %v2947 = vsel %vm2810, %v2944, %v2946
      %v2950 = vunpack.c.l.b16 %v2805
      %v2951 = vunpack.c.l.b16 %v2806
      %v2952 = vpack.c.b16 %v2951, %v2950
      %v2955 = vsel %vm1303, %v2813, 0
      %v2958 = vsel %vm1303, %v2815, 0
      %v2961 = vsel %vm1303, %v2817, 0
      %v2964 = vsel %vm1303, %v2819, 0
      %v2967 = vsel %vm1303, %v2821, 0
      %v2970 = vsel %vm1303, %v2823, 0
      %v2973 = vsel %vm1303, %v2825, 0
      %v2976 = vsel %vm1303, %v2827, 0
      %v2979 = vsel %vm1303, %v2829, 0
      %v2982 = vsel %vm1303, %v2831, 0
      %v2985 = vsel %vm1303, %v2833, 0
      %v2988 = vsel %vm1303, %v2835, 0
      %v2991 = vsel %vm1303, %v2837, 0
      %v2994 = vsel %vm1303, %v2839, 0
      %v2997 = vsel %vm1303, %v2841, 0
      %v3000 = vsel %vm1303, %v2843, 0
      %v3003 = vsel %vm1303, %v2845, 0
      %v3006 = vsel %vm1303, %v2847, 0
      %v3009 = vsel %vm1303, %v2849, 0
      %v3012 = vsel %vm1303, %v2851, 0
      %v3015 = vsel %vm1303, %v2853, 0
      %v3018 = vsel %vm1303, %v2855, 0
      %v3021 = vsel %vm1303, %v2857, 0
      %v3024 = vsel %vm1303, %v2859, 0
      %v3027 = vsel %vm1303, %v2861, 0
      %v3030 = vsel %vm1303, %v2863, 0
      %v3033 = vsel %vm1303, %v2865, 0
      %v3036 = vsel %vm1303, %v2867, 0
      %v3039 = vsel %vm1303, %v2869, 0
      %v3042 = vsel %vm1303, %v2871, 0
      %v3045 = vsel %vm1303, %v2873, 0
      %v3048 = vsel %vm1303, %v2875, 0
      %v3051 = vsel %vm1303, %v2877, 0
      %v3054 = vsel %vm1303, %v2879, 0
      %v3057 = vsel %vm1303, %v2881, 0
      %v3060 = vsel %vm1303, %v2883, 0
      %v3063 = vsel %vm1303, %v2885, 0
      %v3066 = vsel %vm1303, %v2887, 0
      %v3069 = vsel %vm1303, %v2889, 0
      %v3072 = vsel %vm1303, %v2891, 0
      %v3075 = vsel %vm1303, %v2893, 0
      %v3078 = vsel %vm1303, %v2895, 0
      %v3081 = vsel %vm1303, %v2897, 0
      %v3084 = vsel %vm1303, %v2899, 0
      %v3087 = vsel %vm1303, %v2901, 0
      %v3090 = vsel %vm1303, %v2903, 0
      %v3093 = vsel %vm1303, %v2905, 0
      %v3096 = vsel %vm1303, %v2907, 0
      %v3099 = vsel %vm1303, %v2909, 0
      %v3102 = vsel %vm1303, %v2911, 0
      %v3105 = vsel %vm1303, %v2913, 0
      %v3108 = vsel %vm1303, %v2915, 0
      %v3111 = vsel %vm1303, %v2917, 0
      %v3114 = vsel %vm1303, %v2919, 0
      %v3117 = vsel %vm1303, %v2921, 0
      %v3120 = vsel %vm1303, %v2923, 0
      %v3123 = vsel %vm1303, %v2925, 0
      %v3126 = vsel %vm1303, %v2927, 0
      %v3129 = vsel %vm1303, %v2929, 0
      %v3132 = vsel %vm1303, %v2931, 0
      %v3135 = vsel %vm1303, %v2933, 0
      %v3138 = vsel %vm1303, %v2935, 0
      %v3141 = vsel %vm1303, %v2937, 0
      %v3144 = vsel %vm1303, %v2939, 0
      %v3147 = vsel %vm1303, %v2941, 0
      %v3150 = vsel %vm1303, %v2943, 0
      %v3153 = vsel %vm1303, %v2945, 0
      %v3156 = vsel %vm1303, %v2947, 0
      %3158 = vmatprep.subr.bf16.mxu0 0
      %3159 = vmatpush1.bf16.msra.mxu0 %v2952
      %3160 = vmatprep.subr.bf16.mxu0 0
      %3161 = vmatpush1.bf16.msra.mxu0 0
      %3162 = vmatprep.subr.bf16.mxu0 0
      %3163 = vmatpush1.bf16.msra.mxu0 0
      %3164 = vmatprep.subr.bf16.mxu0 0
      %3165 = vmatpush1.bf16.msra.mxu0 0
      %3166 = vmatprep.subr.bf16.mxu0 0
      %3167 = vmatpush1.bf16.msra.mxu0 0
      %3168 = vmatprep.subr.bf16.mxu0 0
      %3169 = vmatpush1.bf16.msra.mxu0 0
      %3170 = vmatprep.subr.bf16.mxu0 0
      %3171 = vmatpush1.bf16.msra.mxu0 0
      %3172 = vmatprep.subr.bf16.mxu0 0
      %3173 = vmatpush1.bf16.msra.mxu0 0
      %3174 = vmatprep.subr.bf16.mxu0 0
      %3175 = vmatpush1.bf16.msra.mxu0 0
      %3176 = vmatprep.subr.bf16.mxu0 0
      %3177 = vmatpush1.bf16.msra.mxu0 0
      %3178 = vmatprep.subr.bf16.mxu0 0
      %3179 = vmatpush1.bf16.msra.mxu0 0
      %3180 = vmatprep.subr.bf16.mxu0 0
      %3181 = vmatpush1.bf16.msra.mxu0 0
      %3182 = vmatprep.subr.bf16.mxu0 0
      %3183 = vmatpush1.bf16.msra.mxu0 0
      %3184 = vmatprep.subr.bf16.mxu0 0
      %3185 = vmatpush1.bf16.msra.mxu0 0
      %3186 = vmatprep.subr.bf16.mxu0 0
      %3187 = vmatpush1.bf16.msra.mxu0 0
      %3188 = vmatprep.subr.bf16.mxu0 0
      %3189 = vmatpush1.bf16.msra.mxu0 0
      %3190 = vmatprep.mubr.bf16.mxu0 0
      %3191 = vmatmul.mubr.bf16.gmra.mrb[0].mxu0 %v2955
      %v3192 = vpop.f32.mrb[0].mxu0
      %v3193 = vadd.f32 0.0, %v3192
      %v3194 = vpop.f32.mrb[0].mxu0
      %v3195 = vpop.f32.mrb[0].mxu0
      %v3196 = vadd.f32 0.0, %v3195
      %v3197 = vpop.f32.mrb[0].mxu0
      %3198 = vmatprep.mubr.bf16.mxu0 0
      %3199 = vmatmul.mubr.bf16.gmra.mrb[0].mxu0 %v2958
      %v3200 = vpop.f32.mrb[0].mxu0
      %v3201 = vadd.f32 0.0, %v3200
      %v3202 = vpop.f32.mrb[0].mxu0
      %v3203 = vpop.f32.mrb[0].mxu0
      %v3204 = vadd.f32 0.0, %v3203
      %v3205 = vpop.f32.mrb[0].mxu0
      %3206 = vmatprep.mubr.bf16.mxu0 0
      %3207 = vmatmul.mubr.bf16.gmra.mrb[0].mxu0 %v2961
      %v3208 = vpop.f32.mrb[0].mxu0
      %v3209 = vadd.f32 0.0, %v3208
      %v3210 = vpop.f32.mrb[0].mxu0
      %v3211 = vpop.f32.mrb[0].mxu0
      %v3212 = vadd.f32 0.0, %v3211
      %v3213 = vpop.f32.mrb[0].mxu0
      %3214 = vmatprep.mubr.bf16.mxu0 0
      %3215 = vmatmul.mubr.bf16.gmra.mrb[0].mxu0 %v2964
      %v3216 = vpop.f32.mrb[0].mxu0
      %v3217 = vadd.f32 0.0, %v3216
      %v3218 = vpop.f32.mrb[0].mxu0
      %v3219 = vpop.f32.mrb[0].mxu0
      %v3220 = vadd.f32 0.0, %v3219
      %v3221 = vpop.f32.mrb[0].mxu0
      %3222 = vmatprep.mubr.bf16.mxu0 0
      %3223 = vmatmul.mubr.bf16.gmra.mrb[0].mxu0 %v2967
      %v3224 = vpop.f32.mrb[0].mxu0
      %v3225 = vadd.f32 0.0, %v3224
      %v3226 = vpop.f32.mrb[0].mxu0
      %v3227 = vpop.f32.mrb[0].mxu0
      %v3228 = vadd.f32 0.0, %v3227
      %v3229 = vpop.f32.mrb[0].mxu0
      %3230 = vmatprep.mubr.bf16.mxu0 0
      %3231 = vmatmul.mubr.bf16.gmra.mrb[0].mxu0 %v2970
      %v3232 = vpop.f32.mrb[0].mxu0
      %v3233 = vadd.f32 0.0, %v3232
      %v3234 = vpop.f32.mrb[0].mxu0
      %v3235 = vpop.f32.mrb[0].mxu0
      %v3236 = vadd.f32 0.0, %v3235
      %v3237 = vpop.f32.mrb[0].mxu0
      %3238 = vmatprep.mubr.bf16.mxu0 0
      %3239 = vmatmul.mubr.bf16.gmra.mrb[0].mxu0 %v2973
      %v3240 = vpop.f32.mrb[0].mxu0
      %v3241 = vadd.f32 0.0, %v3240
      %v3242 = vpop.f32.mrb[0].mxu0
      %v3243 = vpop.f32.mrb[0].mxu0
      %v3244 = vadd.f32 0.0, %v3243
      %v3245 = vpop.f32.mrb[0].mxu0
      %3246 = vmatprep.mubr.bf16.mxu0 0
      %3247 = vmatmul.mubr.bf16.gmra.mrb[0].mxu0 %v2976
      %v3248 = vpop.f32.mrb[0].mxu0
      %v3249 = vadd.f32 0.0, %v3248
      %v3250 = vpop.f32.mrb[0].mxu0
      %v3251 = vpop.f32.mrb[0].mxu0
      %v3252 = vadd.f32 0.0, %v3251
      %v3253 = vpop.f32.mrb[0].mxu0
      %3254 = vmatprep.mubr.bf16.mxu0 0
      %3255 = vmatmul.mubr.bf16.gmra.mrb[0].mxu0 %v2979
      %v3256 = vpop.f32.mrb[0].mxu0
      %v3257 = vadd.f32 0.0, %v3256
      %v3258 = vpop.f32.mrb[0].mxu0
      %v3259 = vpop.f32.mrb[0].mxu0
      %v3260 = vadd.f32 0.0, %v3259
      %v3261 = vpop.f32.mrb[0].mxu0
      %3262 = vmatprep.mubr.bf16.mxu0 0
      %3263 = vmatmul.mubr.bf16.gmra.mrb[0].mxu0 %v2982
      %v3264 = vpop.f32.mrb[0].mxu0
      %v3265 = vadd.f32 0.0, %v3264
      %v3266 = vpop.f32.mrb[0].mxu0
      %v3267 = vpop.f32.mrb[0].mxu0
      %v3268 = vadd.f32 0.0, %v3267
      %v3269 = vpop.f32.mrb[0].mxu0
      %3270 = vmatprep.mubr.bf16.mxu0 0
      %3271 = vmatmul.mubr.bf16.gmra.mrb[0].mxu0 %v2985
      %v3272 = vpop.f32.mrb[0].mxu0
      %v3273 = vadd.f32 0.0, %v3272
      %v3274 = vpop.f32.mrb[0].mxu0
      %v3275 = vpop.f32.mrb[0].mxu0
      %v3276 = vadd.f32 0.0, %v3275
      %v3277 = vpop.f32.mrb[0].mxu0
      %3278 = vmatprep.mubr.bf16.mxu0 0
      %3279 = vmatmul.mubr.bf16.gmra.mrb[0].mxu0 %v2988
      %v3280 = vpop.f32.mrb[0].mxu0
      %v3281 = vadd.f32 0.0, %v3280
      %v3282 = vpop.f32.mrb[0].mxu0
      %v3283 = vpop.f32.mrb[0].mxu0
      %v3284 = vadd.f32 0.0, %v3283
      %v3285 = vpop.f32.mrb[0].mxu0
      %3286 = vmatprep.mubr.bf16.mxu0 0
      %3287 = vmatmul.mubr.bf16.gmra.mrb[0].mxu0 %v2991
      %v3288 = vpop.f32.mrb[0].mxu0
      %v3289 = vadd.f32 0.0, %v3288
      %v3290 = vpop.f32.mrb[0].mxu0
      %v3291 = vpop.f32.mrb[0].mxu0
      %v3292 = vadd.f32 0.0, %v3291
      %v3293 = vpop.f32.mrb[0].mxu0
      %3294 = vmatprep.mubr.bf16.mxu0 0
      %3295 = vmatmul.mubr.bf16.gmra.mrb[0].mxu0 %v2994
      %v3296 = vpop.f32.mrb[0].mxu0
      %v3297 = vadd.f32 0.0, %v3296
      %v3298 = vpop.f32.mrb[0].mxu0
      %v3299 = vpop.f32.mrb[0].mxu0
      %v3300 = vadd.f32 0.0, %v3299
      %v3301 = vpop.f32.mrb[0].mxu0
      %3302 = vmatprep.mubr.bf16.mxu0 0
      %3303 = vmatmul.mubr.bf16.gmra.mrb[0].mxu0 %v2997
      %v3304 = vpop.f32.mrb[0].mxu0
      %v3305 = vadd.f32 0.0, %v3304
      %v3306 = vpop.f32.mrb[0].mxu0
      %v3307 = vpop.f32.mrb[0].mxu0
      %v3308 = vadd.f32 0.0, %v3307
      %v3309 = vpop.f32.mrb[0].mxu0
      %3310 = vmatprep.mubr.bf16.mxu0 0
      %3311 = vmatmul.mubr.bf16.gmra.mrb[0].mxu0 %v3000
      %v3312 = vpop.f32.mrb[0].mxu0
      %v3313 = vadd.f32 0.0, %v3312
      %v3314 = vpop.f32.mrb[0].mxu0
      %v3315 = vpop.f32.mrb[0].mxu0
      %v3316 = vadd.f32 0.0, %v3315
      %v3317 = vpop.f32.mrb[0].mxu0
      %3318 = vmatprep.mubr.bf16.mxu0 0
      %3319 = vmatmul.mubr.bf16.gmra.mrb[0].mxu0 %v3003
      %v3320 = vpop.f32.mrb[0].mxu0
      %v3321 = vadd.f32 0.0, %v3320
      %v3322 = vpop.f32.mrb[0].mxu0
      %v3323 = vpop.f32.mrb[0].mxu0
      %v3324 = vadd.f32 0.0, %v3323
      %v3325 = vpop.f32.mrb[0].mxu0
      %3326 = vmatprep.mubr.bf16.mxu0 0
      %3327 = vmatmul.mubr.bf16.gmra.mrb[0].mxu0 %v3006
      %v3328 = vpop.f32.mrb[0].mxu0
      %v3329 = vadd.f32 0.0, %v3328
      %v3330 = vpop.f32.mrb[0].mxu0
      %v3331 = vpop.f32.mrb[0].mxu0
      %v3332 = vadd.f32 0.0, %v3331
      %v3333 = vpop.f32.mrb[0].mxu0
      %3334 = vmatprep.mubr.bf16.mxu0 0
      %3335 = vmatmul.mubr.bf16.gmra.mrb[0].mxu0 %v3009
      %v3336 = vpop.f32.mrb[0].mxu0
      %v3337 = vadd.f32 0.0, %v3336
      %v3338 = vpop.f32.mrb[0].mxu0
      %v3339 = vpop.f32.mrb[0].mxu0
      %v3340 = vadd.f32 0.0, %v3339
      %v3341 = vpop.f32.mrb[0].mxu0
      %3342 = vmatprep.mubr.bf16.mxu0 0
      %3343 = vmatmul.mubr.bf16.gmra.mrb[0].mxu0 %v3012
      %v3344 = vpop.f32.mrb[0].mxu0
      %v3345 = vadd.f32 0.0, %v3344
      %v3346 = vpop.f32.mrb[0].mxu0
      %v3347 = vpop.f32.mrb[0].mxu0
      %v3348 = vadd.f32 0.0, %v3347
      %v3349 = vpop.f32.mrb[0].mxu0
      %3350 = vmatprep.mubr.bf16.mxu0 0
      %3351 = vmatmul.mubr.bf16.gmra.mrb[0].mxu0 %v3015
      %v3352 = vpop.f32.mrb[0].mxu0
      %v3353 = vadd.f32 0.0, %v3352
      %v3354 = vpop.f32.mrb[0].mxu0
      %v3355 = vpop.f32.mrb[0].mxu0
      %v3356 = vadd.f32 0.0, %v3355
      %v3357 = vpop.f32.mrb[0].mxu0
      %3358 = vmatprep.mubr.bf16.mxu0 0
      %3359 = vmatmul.mubr.bf16.gmra.mrb[0].mxu0 %v3018
      %v3360 = vpop.f32.mrb[0].mxu0
      %v3361 = vadd.f32 0.0, %v3360
      %v3362 = vpop.f32.mrb[0].mxu0
      %v3363 = vpop.f32.mrb[0].mxu0
      %v3364 = vadd.f32 0.0, %v3363
      %v3365 = vpop.f32.mrb[0].mxu0
      %3366 = vmatprep.mubr.bf16.mxu0 0
      %3367 = vmatmul.mubr.bf16.gmra.mrb[0].mxu0 %v3021
      %v3368 = vpop.f32.mrb[0].mxu0
      %v3369 = vadd.f32 0.0, %v3368
      %v3370 = vpop.f32.mrb[0].mxu0
      %v3371 = vpop.f32.mrb[0].mxu0
      %v3372 = vadd.f32 0.0, %v3371
      %v3373 = vpop.f32.mrb[0].mxu0
      %3374 = vmatprep.mubr.bf16.mxu0 0
      %3375 = vmatmul.mubr.bf16.gmra.mrb[0].mxu0 %v3024
      %v3376 = vpop.f32.mrb[0].mxu0
      %v3377 = vadd.f32 0.0, %v3376
      %v3378 = vpop.f32.mrb[0].mxu0
      %v3379 = vpop.f32.mrb[0].mxu0
      %v3380 = vadd.f32 0.0, %v3379
      %v3381 = vpop.f32.mrb[0].mxu0
      %3382 = vmatprep.mubr.bf16.mxu0 0
      %3383 = vmatmul.mubr.bf16.gmra.mrb[0].mxu0 %v3027
      %v3384 = vpop.f32.mrb[0].mxu0
      %v3385 = vadd.f32 0.0, %v3384
      %v3386 = vpop.f32.mrb[0].mxu0
      %v3387 = vpop.f32.mrb[0].mxu0
      %v3388 = vadd.f32 0.0, %v3387
      %v3389 = vpop.f32.mrb[0].mxu0
      %3390 = vmatprep.mubr.bf16.mxu0 0
      %3391 = vmatmul.mubr.bf16.gmra.mrb[0].mxu0 %v3030
      %v3392 = vpop.f32.mrb[0].mxu0
      %v3393 = vadd.f32 0.0, %v3392
      %v3394 = vpop.f32.mrb[0].mxu0
      %v3395 = vpop.f32.mrb[0].mxu0
      %v3396 = vadd.f32 0.0, %v3395
      %v3397 = vpop.f32.mrb[0].mxu0
      %3398 = vmatprep.mubr.bf16.mxu0 0
      %3399 = vmatmul.mubr.bf16.gmra.mrb[0].mxu0 %v3033
      %v3400 = vpop.f32.mrb[0].mxu0
      %v3401 = vadd.f32 0.0, %v3400
      %v3402 = vpop.f32.mrb[0].mxu0
      %v3403 = vpop.f32.mrb[0].mxu0
      %v3404 = vadd.f32 0.0, %v3403
      %v3405 = vpop.f32.mrb[0].mxu0
      %3406 = vmatprep.mubr.bf16.mxu0 0
      %3407 = vmatmul.mubr.bf16.gmra.mrb[0].mxu0 %v3036
      %v3408 = vpop.f32.mrb[0].mxu0
      %v3409 = vadd.f32 0.0, %v3408
      %v3410 = vpop.f32.mrb[0].mxu0
      %v3411 = vpop.f32.mrb[0].mxu0
      %v3412 = vadd.f32 0.0, %v3411
      %v3413 = vpop.f32.mrb[0].mxu0
      %3414 = vmatprep.mubr.bf16.mxu0 0
      %3415 = vmatmul.mubr.bf16.gmra.mrb[0].mxu0 %v3039
      %v3416 = vpop.f32.mrb[0].mxu0
      %v3417 = vadd.f32 0.0, %v3416
      %v3418 = vpop.f32.mrb[0].mxu0
      %v3419 = vpop.f32.mrb[0].mxu0
      %v3420 = vadd.f32 0.0, %v3419
      %v3421 = vpop.f32.mrb[0].mxu0
      %3422 = vmatprep.mubr.bf16.mxu0 0
      %3423 = vmatmul.mubr.bf16.gmra.mrb[0].mxu0 %v3042
      %v3424 = vpop.f32.mrb[0].mxu0
      %v3425 = vadd.f32 0.0, %v3424
      %v3426 = vpop.f32.mrb[0].mxu0
      %v3427 = vpop.f32.mrb[0].mxu0
      %v3428 = vadd.f32 0.0, %v3427
      %v3429 = vpop.f32.mrb[0].mxu0
      %3430 = vmatprep.mubr.bf16.mxu0 0
      %3431 = vmatmul.mubr.bf16.gmra.mrb[0].mxu0 %v3045
      %v3432 = vpop.f32.mrb[0].mxu0
      %v3433 = vadd.f32 0.0, %v3432
      %v3434 = vpop.f32.mrb[0].mxu0
      %v3435 = vpop.f32.mrb[0].mxu0
      %v3436 = vadd.f32 0.0, %v3435
      %v3437 = vpop.f32.mrb[0].mxu0
      %3438 = vmatprep.mubr.bf16.mxu0 0
      %3439 = vmatmul.mubr.bf16.gmra.mrb[0].mxu0 %v3048
      %v3440 = vpop.f32.mrb[0].mxu0
      %v3441 = vadd.f32 0.0, %v3440
      %v3442 = vpop.f32.mrb[0].mxu0
      %v3443 = vpop.f32.mrb[0].mxu0
      %v3444 = vadd.f32 0.0, %v3443
      %v3445 = vpop.f32.mrb[0].mxu0
      %3446 = vmatprep.mubr.bf16.mxu0 0
      %3447 = vmatmul.mubr.bf16.gmra.mrb[0].mxu0 %v3051
      %v3448 = vpop.f32.mrb[0].mxu0
      %v3449 = vadd.f32 0.0, %v3448
      %v3450 = vpop.f32.mrb[0].mxu0
      %v3451 = vpop.f32.mrb[0].mxu0
      %v3452 = vadd.f32 0.0, %v3451
      %v3453 = vpop.f32.mrb[0].mxu0
      %3454 = vmatprep.mubr.bf16.mxu0 0
      %3455 = vmatmul.mubr.bf16.gmra.mrb[0].mxu0 %v3054
      %v3456 = vpop.f32.mrb[0].mxu0
      %v3457 = vadd.f32 0.0, %v3456
      %v3458 = vpop.f32.mrb[0].mxu0
      %v3459 = vpop.f32.mrb[0].mxu0
      %v3460 = vadd.f32 0.0, %v3459
      %v3461 = vpop.f32.mrb[0].mxu0
      %3462 = vmatprep.mubr.bf16.mxu0 0
      %3463 = vmatmul.mubr.bf16.gmra.mrb[0].mxu0 %v3057
      %v3464 = vpop.f32.mrb[0].mxu0
      %v3465 = vadd.f32 0.0, %v3464
      %v3466 = vpop.f32.mrb[0].mxu0
      %v3467 = vpop.f32.mrb[0].mxu0
      %v3468 = vadd.f32 0.0, %v3467
      %v3469 = vpop.f32.mrb[0].mxu0
      %3470 = vmatprep.mubr.bf16.mxu0 0
      %3471 = vmatmul.mubr.bf16.gmra.mrb[0].mxu0 %v3060
      %v3472 = vpop.f32.mrb[0].mxu0
      %v3473 = vadd.f32 0.0, %v3472
      %v3474 = vpop.f32.mrb[0].mxu0
      %v3475 = vpop.f32.mrb[0].mxu0
      %v3476 = vadd.f32 0.0, %v3475
      %v3477 = vpop.f32.mrb[0].mxu0
      %3478 = vmatprep.mubr.bf16.mxu0 0
      %3479 = vmatmul.mubr.bf16.gmra.mrb[0].mxu0 %v3063
      %v3480 = vpop.f32.mrb[0].mxu0
      %v3481 = vadd.f32 0.0, %v3480
      %v3482 = vpop.f32.mrb[0].mxu0
      %v3483 = vpop.f32.mrb[0].mxu0
      %v3484 = vadd.f32 0.0, %v3483
      %v3485 = vpop.f32.mrb[0].mxu0
      %3486 = vmatprep.mubr.bf16.mxu0 0
      %3487 = vmatmul.mubr.bf16.gmra.mrb[0].mxu0 %v3066
      %v3488 = vpop.f32.mrb[0].mxu0
      %v3489 = vadd.f32 0.0, %v3488
      %v3490 = vpop.f32.mrb[0].mxu0
      %v3491 = vpop.f32.mrb[0].mxu0
      %v3492 = vadd.f32 0.0, %v3491
      %v3493 = vpop.f32.mrb[0].mxu0
      %3494 = vmatprep.mubr.bf16.mxu0 0
      %3495 = vmatmul.mubr.bf16.gmra.mrb[0].mxu0 %v3069
      %v3496 = vpop.f32.mrb[0].mxu0
      %v3497 = vadd.f32 0.0, %v3496
      %v3498 = vpop.f32.mrb[0].mxu0
      %v3499 = vpop.f32.mrb[0].mxu0
      %v3500 = vadd.f32 0.0, %v3499
      %v3501 = vpop.f32.mrb[0].mxu0
      %3502 = vmatprep.mubr.bf16.mxu0 0
      %3503 = vmatmul.mubr.bf16.gmra.mrb[0].mxu0 %v3072
      %v3504 = vpop.f32.mrb[0].mxu0
      %v3505 = vadd.f32 0.0, %v3504
      %v3506 = vpop.f32.mrb[0].mxu0
      %v3507 = vpop.f32.mrb[0].mxu0
      %v3508 = vadd.f32 0.0, %v3507
      %v3509 = vpop.f32.mrb[0].mxu0
      %3510 = vmatprep.mubr.bf16.mxu0 0
      %3511 = vmatmul.mubr.bf16.gmra.mrb[0].mxu0 %v3075
      %v3512 = vpop.f32.mrb[0].mxu0
      %v3513 = vadd.f32 0.0, %v3512
      %v3514 = vpop.f32.mrb[0].mxu0
      %v3515 = vpop.f32.mrb[0].mxu0
      %v3516 = vadd.f32 0.0, %v3515
      %v3517 = vpop.f32.mrb[0].mxu0
      %3518 = vmatprep.mubr.bf16.mxu0 0
      %3519 = vmatmul.mubr.bf16.gmra.mrb[0].mxu0 %v3078
      %v3520 = vpop.f32.mrb[0].mxu0
      %v3521 = vadd.f32 0.0, %v3520
      %v3522 = vpop.f32.mrb[0].mxu0
      %v3523 = vpop.f32.mrb[0].mxu0
      %v3524 = vadd.f32 0.0, %v3523
      %v3525 = vpop.f32.mrb[0].mxu0
      %3526 = vmatprep.mubr.bf16.mxu0 0
      %3527 = vmatmul.mubr.bf16.gmra.mrb[0].mxu0 %v3081
      %v3528 = vpop.f32.mrb[0].mxu0
      %v3529 = vadd.f32 0.0, %v3528
      %v3530 = vpop.f32.mrb[0].mxu0
      %v3531 = vpop.f32.mrb[0].mxu0
      %v3532 = vadd.f32 0.0, %v3531
      %v3533 = vpop.f32.mrb[0].mxu0
      %3534 = vmatprep.mubr.bf16.mxu0 0
      %3535 = vmatmul.mubr.bf16.gmra.mrb[0].mxu0 %v3084
      %v3536 = vpop.f32.mrb[0].mxu0
      %v3537 = vadd.f32 0.0, %v3536
      %v3538 = vpop.f32.mrb[0].mxu0
      %v3539 = vpop.f32.mrb[0].mxu0
      %v3540 = vadd.f32 0.0, %v3539
      %v3541 = vpop.f32.mrb[0].mxu0
      %3542 = vmatprep.mubr.bf16.mxu0 0
      %3543 = vmatmul.mubr.bf16.gmra.mrb[0].mxu0 %v3087
      %v3544 = vpop.f32.mrb[0].mxu0
      %v3545 = vadd.f32 0.0, %v3544
      %v3546 = vpop.f32.mrb[0].mxu0
      %v3547 = vpop.f32.mrb[0].mxu0
      %v3548 = vadd.f32 0.0, %v3547
      %v3549 = vpop.f32.mrb[0].mxu0
      %3550 = vmatprep.mubr.bf16.mxu0 0
      %3551 = vmatmul.mubr.bf16.gmra.mrb[0].mxu0 %v3090
      %v3552 = vpop.f32.mrb[0].mxu0
      %v3553 = vadd.f32 0.0, %v3552
      %v3554 = vpop.f32.mrb[0].mxu0
      %v3555 = vpop.f32.mrb[0].mxu0
      %v3556 = vadd.f32 0.0, %v3555
      %v3557 = vpop.f32.mrb[0].mxu0
      %3558 = vmatprep.mubr.bf16.mxu0 0
      %3559 = vmatmul.mubr.bf16.gmra.mrb[0].mxu0 %v3093
      %v3560 = vpop.f32.mrb[0].mxu0
      %v3561 = vadd.f32 0.0, %v3560
      %v3562 = vpop.f32.mrb[0].mxu0
      %v3563 = vpop.f32.mrb[0].mxu0
      %v3564 = vadd.f32 0.0, %v3563
      %v3565 = vpop.f32.mrb[0].mxu0
      %3566 = vmatprep.mubr.bf16.mxu0 0
      %3567 = vmatmul.mubr.bf16.gmra.mrb[0].mxu0 %v3096
      %v3568 = vpop.f32.mrb[0].mxu0
      %v3569 = vadd.f32 0.0, %v3568
      %v3570 = vpop.f32.mrb[0].mxu0
      %v3571 = vpop.f32.mrb[0].mxu0
      %v3572 = vadd.f32 0.0, %v3571
      %v3573 = vpop.f32.mrb[0].mxu0
      %3574 = vmatprep.mubr.bf16.mxu0 0
      %3575 = vmatmul.mubr.bf16.gmra.mrb[0].mxu0 %v3099
      %v3576 = vpop.f32.mrb[0].mxu0
      %v3577 = vadd.f32 0.0, %v3576
      %v3578 = vpop.f32.mrb[0].mxu0
      %v3579 = vpop.f32.mrb[0].mxu0
      %v3580 = vadd.f32 0.0, %v3579
      %v3581 = vpop.f32.mrb[0].mxu0
      %3582 = vmatprep.mubr.bf16.mxu0 0
      %3583 = vmatmul.mubr.bf16.gmra.mrb[0].mxu0 %v3102
      %v3584 = vpop.f32.mrb[0].mxu0
      %v3585 = vadd.f32 0.0, %v3584
      %v3586 = vpop.f32.mrb[0].mxu0
      %v3587 = vpop.f32.mrb[0].mxu0
      %v3588 = vadd.f32 0.0, %v3587
      %v3589 = vpop.f32.mrb[0].mxu0
      %3590 = vmatprep.mubr.bf16.mxu0 0
      %3591 = vmatmul.mubr.bf16.gmra.mrb[0].mxu0 %v3105
      %v3592 = vpop.f32.mrb[0].mxu0
      %v3593 = vadd.f32 0.0, %v3592
      %v3594 = vpop.f32.mrb[0].mxu0
      %v3595 = vpop.f32.mrb[0].mxu0
      %v3596 = vadd.f32 0.0, %v3595
      %v3597 = vpop.f32.mrb[0].mxu0
      %3598 = vmatprep.mubr.bf16.mxu0 0
      %3599 = vmatmul.mubr.bf16.gmra.mrb[0].mxu0 %v3108
      %v3600 = vpop.f32.mrb[0].mxu0
      %v3601 = vadd.f32 0.0, %v3600
      %v3602 = vpop.f32.mrb[0].mxu0
      %v3603 = vpop.f32.mrb[0].mxu0
      %v3604 = vadd.f32 0.0, %v3603
      %v3605 = vpop.f32.mrb[0].mxu0
      %3606 = vmatprep.mubr.bf16.mxu0 0
      %3607 = vmatmul.mubr.bf16.gmra.mrb[0].mxu0 %v3111
      %v3608 = vpop.f32.mrb[0].mxu0
      %v3609 = vadd.f32 0.0, %v3608
      %v3610 = vpop.f32.mrb[0].mxu0
      %v3611 = vpop.f32.mrb[0].mxu0
      %v3612 = vadd.f32 0.0, %v3611
      %v3613 = vpop.f32.mrb[0].mxu0
      %3614 = vmatprep.mubr.bf16.mxu0 0
      %3615 = vmatmul.mubr.bf16.gmra.mrb[0].mxu0 %v3114
      %v3616 = vpop.f32.mrb[0].mxu0
      %v3617 = vadd.f32 0.0, %v3616
      %v3618 = vpop.f32.mrb[0].mxu0
      %v3619 = vpop.f32.mrb[0].mxu0
      %v3620 = vadd.f32 0.0, %v3619
      %v3621 = vpop.f32.mrb[0].mxu0
      %3622 = vmatprep.mubr.bf16.mxu0 0
      %3623 = vmatmul.mubr.bf16.gmra.mrb[0].mxu0 %v3117
      %v3624 = vpop.f32.mrb[0].mxu0
      %v3625 = vadd.f32 0.0, %v3624
      %v3626 = vpop.f32.mrb[0].mxu0
      %v3627 = vpop.f32.mrb[0].mxu0
      %v3628 = vadd.f32 0.0, %v3627
      %v3629 = vpop.f32.mrb[0].mxu0
      %3630 = vmatprep.mubr.bf16.mxu0 0
      %3631 = vmatmul.mubr.bf16.gmra.mrb[0].mxu0 %v3120
      %v3632 = vpop.f32.mrb[0].mxu0
      %v3633 = vadd.f32 0.0, %v3632
      %v3634 = vpop.f32.mrb[0].mxu0
      %v3635 = vpop.f32.mrb[0].mxu0
      %v3636 = vadd.f32 0.0, %v3635
      %v3637 = vpop.f32.mrb[0].mxu0
      %3638 = vmatprep.mubr.bf16.mxu0 0
      %3639 = vmatmul.mubr.bf16.gmra.mrb[0].mxu0 %v3123
      %v3640 = vpop.f32.mrb[0].mxu0
      %v3641 = vadd.f32 0.0, %v3640
      %v3642 = vpop.f32.mrb[0].mxu0
      %v3643 = vpop.f32.mrb[0].mxu0
      %v3644 = vadd.f32 0.0, %v3643
      %v3645 = vpop.f32.mrb[0].mxu0
      %3646 = vmatprep.mubr.bf16.mxu0 0
      %3647 = vmatmul.mubr.bf16.gmra.mrb[0].mxu0 %v3126
      %v3648 = vpop.f32.mrb[0].mxu0
      %v3649 = vadd.f32 0.0, %v3648
      %v3650 = vpop.f32.mrb[0].mxu0
      %v3651 = vpop.f32.mrb[0].mxu0
      %v3652 = vadd.f32 0.0, %v3651
      %v3653 = vpop.f32.mrb[0].mxu0
      %3654 = vmatprep.mubr.bf16.mxu0 0
      %3655 = vmatmul.mubr.bf16.gmra.mrb[0].mxu0 %v3129
      %v3656 = vpop.f32.mrb[0].mxu0
      %v3657 = vadd.f32 0.0, %v3656
      %v3658 = vpop.f32.mrb[0].mxu0
      %v3659 = vpop.f32.mrb[0].mxu0
      %v3660 = vadd.f32 0.0, %v3659
      %v3661 = vpop.f32.mrb[0].mxu0
      %3662 = vmatprep.mubr.bf16.mxu0 0
      %3663 = vmatmul.mubr.bf16.gmra.mrb[0].mxu0 %v3132
      %v3664 = vpop.f32.mrb[0].mxu0
      %v3665 = vadd.f32 0.0, %v3664
      %v3666 = vpop.f32.mrb[0].mxu0
      %v3667 = vpop.f32.mrb[0].mxu0
      %v3668 = vadd.f32 0.0, %v3667
      %v3669 = vpop.f32.mrb[0].mxu0
      %3670 = vmatprep.mubr.bf16.mxu0 0
      %3671 = vmatmul.mubr.bf16.gmra.mrb[0].mxu0 %v3135
      %v3672 = vpop.f32.mrb[0].mxu0
      %v3673 = vadd.f32 0.0, %v3672
      %v3674 = vpop.f32.mrb[0].mxu0
      %v3675 = vpop.f32.mrb[0].mxu0
      %v3676 = vadd.f32 0.0, %v3675
      %v3677 = vpop.f32.mrb[0].mxu0
      %3678 = vmatprep.mubr.bf16.mxu0 0
      %3679 = vmatmul.mubr.bf16.gmra.mrb[0].mxu0 %v3138
      %v3680 = vpop.f32.mrb[0].mxu0
      %v3681 = vadd.f32 0.0, %v3680
      %v3682 = vpop.f32.mrb[0].mxu0
      %v3683 = vpop.f32.mrb[0].mxu0
      %v3684 = vadd.f32 0.0, %v3683
      %v3685 = vpop.f32.mrb[0].mxu0
      %3686 = vmatprep.mubr.bf16.mxu0 0
      %3687 = vmatmul.mubr.bf16.gmra.mrb[0].mxu0 %v3141
      %v3688 = vpop.f32.mrb[0].mxu0
      %v3689 = vadd.f32 0.0, %v3688
      %v3690 = vpop.f32.mrb[0].mxu0
      %v3691 = vpop.f32.mrb[0].mxu0
      %v3692 = vadd.f32 0.0, %v3691
      %v3693 = vpop.f32.mrb[0].mxu0
      %3694 = vmatprep.mubr.bf16.mxu0 0
      %3695 = vmatmul.mubr.bf16.gmra.mrb[0].mxu0 %v3144
      %v3696 = vpop.f32.mrb[0].mxu0
      %v3697 = vadd.f32 0.0, %v3696
      %v3698 = vpop.f32.mrb[0].mxu0
      %v3699 = vpop.f32.mrb[0].mxu0
      %v3700 = vadd.f32 0.0, %v3699
      %v3701 = vpop.f32.mrb[0].mxu0
      %3702 = vmatprep.mubr.bf16.mxu0 0
      %3703 = vmatmul.mubr.bf16.gmra.mrb[0].mxu0 %v3147
      %v3704 = vpop.f32.mrb[0].mxu0
      %v3705 = vadd.f32 0.0, %v3704
      %v3706 = vpop.f32.mrb[0].mxu0
      %v3707 = vpop.f32.mrb[0].mxu0
      %v3708 = vadd.f32 0.0, %v3707
      %v3709 = vpop.f32.mrb[0].mxu0
      %3710 = vmatprep.mubr.bf16.mxu0 0
      %3711 = vmatmul.mubr.bf16.gmra.mrb[0].mxu0 %v3150
      %v3712 = vpop.f32.mrb[0].mxu0
      %v3713 = vadd.f32 0.0, %v3712
      %v3714 = vpop.f32.mrb[0].mxu0
      %v3715 = vpop.f32.mrb[0].mxu0
      %v3716 = vadd.f32 0.0, %v3715
      %v3717 = vpop.f32.mrb[0].mxu0
      %3718 = vmatprep.mubr.bf16.mxu0 0
      %3719 = vmatmul.mubr.bf16.gmra.mrb[0].mxu0 %v3153
      %v3720 = vpop.f32.mrb[0].mxu0
      %v3721 = vadd.f32 0.0, %v3720
      %v3722 = vpop.f32.mrb[0].mxu0
      %v3723 = vpop.f32.mrb[0].mxu0
      %v3724 = vadd.f32 0.0, %v3723
      %v3725 = vpop.f32.mrb[0].mxu0
      %3726 = vmatprep.mubr.bf16.mxu0 0
      %3727 = vmatmul.mubr.bf16.gmra.mrb[0].mxu0 %v3156
      %v3728 = vpop.f32.mrb[0].mxu0
      %v3729 = vadd.f32 0.0, %v3728
      %v3730 = vpop.f32.mrb[0].mxu0
      %v3731 = vpop.f32.mrb[0].mxu0
      %v3732 = vadd.f32 0.0, %v3731
      %v3733 = vpop.f32.mrb[0].mxu0
      %3734 = vdwg.mxu0
      %v3735 = vadd.f32 %v2262, %v3193
      %v3736 = vadd.f32 %v2265, %v3196
      %v3737 = vadd.f32 %v2270, %v3201
      %v3738 = vadd.f32 %v2273, %v3204
      %v3739 = vadd.f32 %v2278, %v3209
      %v3740 = vadd.f32 %v2281, %v3212
      %v3741 = vadd.f32 %v2286, %v3217
      %v3742 = vadd.f32 %v2289, %v3220
      %v3743 = vadd.f32 %v2294, %v3225
      %v3744 = vadd.f32 %v2297, %v3228
      %v3745 = vadd.f32 %v2302, %v3233
      %v3746 = vadd.f32 %v2305, %v3236
      %v3747 = vadd.f32 %v2310, %v3241
      %v3748 = vadd.f32 %v2313, %v3244
      %v3749 = vadd.f32 %v2318, %v3249
      %v3750 = vadd.f32 %v2321, %v3252
      %v3751 = vadd.f32 %v2326, %v3257
      %v3752 = vadd.f32 %v2329, %v3260
      %v3753 = vadd.f32 %v2334, %v3265
      %v3754 = vadd.f32 %v2337, %v3268
      %v3755 = vadd.f32 %v2342, %v3273
      %v3756 = vadd.f32 %v2345, %v3276
      %v3757 = vadd.f32 %v2350, %v3281
      %v3758 = vadd.f32 %v2353, %v3284
      %v3759 = vadd.f32 %v2358, %v3289
      %v3760 = vadd.f32 %v2361, %v3292
      %v3761 = vadd.f32 %v2366, %v3297
      %v3762 = vadd.f32 %v2369, %v3300
      %v3763 = vadd.f32 %v2374, %v3305
      %v3764 = vadd.f32 %v2377, %v3308
      %v3765 = vadd.f32 %v2382, %v3313
      %v3766 = vadd.f32 %v2385, %v3316
      %v3767 = vadd.f32 %v2390, %v3321
      %v3768 = vadd.f32 %v2393, %v3324
      %v3769 = vadd.f32 %v2398, %v3329
      %v3770 = vadd.f32 %v2401, %v3332
      %v3771 = vadd.f32 %v2406, %v3337
      %v3772 = vadd.f32 %v2409, %v3340
      %v3773 = vadd.f32 %v2414, %v3345
      %v3774 = vadd.f32 %v2417, %v3348
      %v3775 = vadd.f32 %v2422, %v3353
      %v3776 = vadd.f32 %v2425, %v3356
      %v3777 = vadd.f32 %v2430, %v3361
      %v3778 = vadd.f32 %v2433, %v3364
      %v3779 = vadd.f32 %v2438, %v3369
      %v3780 = vadd.f32 %v2441, %v3372
      %v3781 = vadd.f32 %v2446, %v3377
      %v3782 = vadd.f32 %v2449, %v3380
      %v3783 = vadd.f32 %v2454, %v3385
      %v3784 = vadd.f32 %v2457, %v3388
      %v3785 = vadd.f32 %v2462, %v3393
      %v3786 = vadd.f32 %v2465, %v3396
      %v3787 = vadd.f32 %v2470, %v3401
      %v3788 = vadd.f32 %v2473, %v3404
      %v3789 = vadd.f32 %v2478, %v3409
      %v3790 = vadd.f32 %v2481, %v3412
      %v3791 = vadd.f32 %v2486, %v3417
      %v3792 = vadd.f32 %v2489, %v3420
      %v3793 = vadd.f32 %v2494, %v3425
      %v3794 = vadd.f32 %v2497, %v3428
      %v3795 = vadd.f32 %v2502, %v3433
      %v3796 = vadd.f32 %v2505, %v3436
      %v3797 = vadd.f32 %v2510, %v3441
      %v3798 = vadd.f32 %v2513, %v3444
      %v3799 = vadd.f32 %v2518, %v3449
      %v3800 = vadd.f32 %v2521, %v3452
      %v3801 = vadd.f32 %v2526, %v3457
      %v3802 = vadd.f32 %v2529, %v3460
      %v3803 = vadd.f32 %v2534, %v3465
      %v3804 = vadd.f32 %v2537, %v3468
      %v3805 = vadd.f32 %v2542, %v3473
      %v3806 = vadd.f32 %v2545, %v3476
      %v3807 = vadd.f32 %v2550, %v3481
      %v3808 = vadd.f32 %v2553, %v3484
      %v3809 = vadd.f32 %v2558, %v3489
      %v3810 = vadd.f32 %v2561, %v3492
      %v3811 = vadd.f32 %v2566, %v3497
      %v3812 = vadd.f32 %v2569, %v3500
      %v3813 = vadd.f32 %v2574, %v3505
      %v3814 = vadd.f32 %v2577, %v3508
      %v3815 = vadd.f32 %v2582, %v3513
      %v3816 = vadd.f32 %v2585, %v3516
      %v3817 = vadd.f32 %v2590, %v3521
      %v3818 = vadd.f32 %v2593, %v3524
      %v3819 = vadd.f32 %v2598, %v3529
      %v3820 = vadd.f32 %v2601, %v3532
      %v3821 = vadd.f32 %v2606, %v3537
      %v3822 = vadd.f32 %v2609, %v3540
      %v3823 = vadd.f32 %v2614, %v3545
      %v3824 = vadd.f32 %v2617, %v3548
      %v3825 = vadd.f32 %v2622, %v3553
      %v3826 = vadd.f32 %v2625, %v3556
      %v3827 = vadd.f32 %v2630, %v3561
      %v3828 = vadd.f32 %v2633, %v3564
      %v3829 = vadd.f32 %v2638, %v3569
      %v3830 = vadd.f32 %v2641, %v3572
      %v3831 = vadd.f32 %v2646, %v3577
      %v3832 = vadd.f32 %v2649, %v3580
      %v3833 = vadd.f32 %v2654, %v3585
      %v3834 = vadd.f32 %v2657, %v3588
      %v3835 = vadd.f32 %v2662, %v3593
      %v3836 = vadd.f32 %v2665, %v3596
      %v3837 = vadd.f32 %v2670, %v3601
      %v3838 = vadd.f32 %v2673, %v3604
      %v3839 = vadd.f32 %v2678, %v3609
      %v3840 = vadd.f32 %v2681, %v3612
      %v3841 = vadd.f32 %v2686, %v3617
      %v3842 = vadd.f32 %v2689, %v3620
      %v3843 = vadd.f32 %v2694, %v3625
      %v3844 = vadd.f32 %v2697, %v3628
      %v3845 = vadd.f32 %v2702, %v3633
      %v3846 = vadd.f32 %v2705, %v3636
      %v3847 = vadd.f32 %v2710, %v3641
      %v3848 = vadd.f32 %v2713, %v3644
      %v3849 = vadd.f32 %v2718, %v3649
      %v3850 = vadd.f32 %v2721, %v3652
      %v3851 = vadd.f32 %v2726, %v3657
      %v3852 = vadd.f32 %v2729, %v3660
      %v3853 = vadd.f32 %v2734, %v3665
      %v3854 = vadd.f32 %v2737, %v3668
      %v3855 = vadd.f32 %v2742, %v3673
      %v3856 = vadd.f32 %v2745, %v3676
      %v3857 = vadd.f32 %v2750, %v3681
      %v3858 = vadd.f32 %v2753, %v3684
      %v3859 = vadd.f32 %v2758, %v3689
      %v3860 = vadd.f32 %v2761, %v3692
      %v3861 = vadd.f32 %v2766, %v3697
      %v3862 = vadd.f32 %v2769, %v3700
      %v3863 = vadd.f32 %v2774, %v3705
      %v3864 = vadd.f32 %v2777, %v3708
      %v3865 = vadd.f32 %v2782, %v3713
      %v3866 = vadd.f32 %v2785, %v3716
      %v3867 = vadd.f32 %v2790, %v3721
      %v3868 = vadd.f32 %v2793, %v3724
      %v3869 = vadd.f32 %v2798, %v3729
      %v3870 = vadd.f32 %v2801, %v3732
      %v3871 = vld [vmem:[%s244 + $0x10] sm:$0xe]
      %v3872 = vld [vmem:[%s244 + $0x14] sm:$0xf]
      %v3873 = vld [vmem:[%s244 + $0x18] sm:$0xf]
      %v3874 = vld [vmem:[%s244 + $0x1c] sm:$0xf]
      %v3875 = vld [vmem:[%s244 + $0x20] sm:$0xf]
      %v3876 = vld [vmem:[%s244 + $0x24] sm:$0xf]
      %v3877 = vld [vmem:[%s244 + $0x28] sm:$0xf]
      %v3878 = vld [vmem:[%s244 + $0x2c] sm:$0xf]
      %v3879 = vld [vmem:[%s244 + $0x30] sm:$0xf]
      %v3880 = vld [vmem:[%s244 + $0x34] sm:$0xf]
      %v3881 = vld [vmem:[%s244 + $0x38] sm:$0xf]
      %v3882 = vld [vmem:[%s244 + $0x3c] sm:$0xf]
      %v3883 = vld [vmem:[%s244 + $0x40] sm:$0xf]
      %v3884 = vld [vmem:[%s244 + $0x44] sm:$0xf]
      %v3885 = vld [vmem:[%s244 + $0x48] sm:$0xf]
      %v3886 = vld [vmem:[%s244 + $0x4c] sm:$0xf]
      %v3887 = vld [vmem:[%s244 + $0x50] sm:$0xf]
      %v3888 = vld [vmem:[%s244 + $0x54] sm:$0xf]
      %v3889 = vld [vmem:[%s244 + $0x58] sm:$0xf]
      %v3890 = vld [vmem:[%s244 + $0x5c] sm:$0xf]
      %v3891 = vld [vmem:[%s244 + $0x60] sm:$0xf]
      %v3892 = vld [vmem:[%s244 + $0x64] sm:$0xf]
      %v3893 = vld [vmem:[%s244 + $0x68] sm:$0xf]
      %v3894 = vld [vmem:[%s244 + $0x6c] sm:$0xf]
      %v3895 = vld [vmem:[%s244 + $0x70] sm:$0xf]
      %v3896 = vld [vmem:[%s244 + $0x74] sm:$0xf]
      %v3897 = vld [vmem:[%s244 + $0x78] sm:$0xf]
      %v3898 = vld [vmem:[%s244 + $0x7c] sm:$0xf]
      %v3899 = vld [vmem:[%s244 + $0x80] sm:$0xf]
      %v3900 = vld [vmem:[%s244 + $0x84] sm:$0xf]
      %v3901 = vld [vmem:[%s244 + $0x88] sm:$0xf]
      %v3902 = vld [vmem:[%s244 + $0x8c] sm:$0xf]
      %v3903 = vld [vmem:[%s244 + $0x90] sm:$0xf]
      %v3904 = vld [vmem:[%s244 + $0x94] sm:$0xf]
      %v3905 = vld [vmem:[%s244 + $0x98] sm:$0xf]
      %v3906 = vld [vmem:[%s244 + $0x9c] sm:$0xf]
      %v3907 = vld [vmem:[%s244 + $0xa0] sm:$0xf]
      %v3908 = vld [vmem:[%s244 + $0xa4] sm:$0xf]
      %v3909 = vld [vmem:[%s244 + $0xa8] sm:$0xf]
      %v3910 = vld [vmem:[%s244 + $0xac] sm:$0xf]
      %v3911 = vld [vmem:[%s244 + $0xb0] sm:$0xf]
      %v3912 = vld [vmem:[%s244 + $0xb4] sm:$0xf]
      %v3913 = vld [vmem:[%s244 + $0xb8] sm:$0xf]
      %v3914 = vld [vmem:[%s244 + $0xbc] sm:$0xf]
      %v3915 = vld [vmem:[%s244 + $0xc0] sm:$0xf]
      %v3916 = vld [vmem:[%s244 + $0xc4] sm:$0xf]
      %v3917 = vld [vmem:[%s244 + $0xc8] sm:$0xf]
      %v3918 = vld [vmem:[%s244 + $0xcc] sm:$0xf]
      %v3919 = vld [vmem:[%s244 + $0xd0] sm:$0xf]
      %v3920 = vld [vmem:[%s244 + $0xd4] sm:$0xf]
      %v3921 = vld [vmem:[%s244 + $0xd8] sm:$0xf]
      %v3922 = vld [vmem:[%s244 + $0xdc] sm:$0xf]
      %v3923 = vld [vmem:[%s244 + $0xe0] sm:$0xf]
      %v3924 = vld [vmem:[%s244 + $0xe4] sm:$0xf]
      %v3925 = vld [vmem:[%s244 + $0xe8] sm:$0xf]
      %v3926 = vld [vmem:[%s244 + $0xec] sm:$0xf]
      %v3927 = vld [vmem:[%s244 + $0xf0] sm:$0xf]
      %v3928 = vld [vmem:[%s244 + $0xf4] sm:$0xf]
      %v3929 = vld [vmem:[%s244 + $0xf8] sm:$0xf]
      %v3930 = vld [vmem:[%s244 + $0xfc] sm:$0xf]
      %v3931 = vld [vmem:[%s244 + $0x100] sm:$0xf]
      %v3932 = vld [vmem:[%s244 + $0x104] sm:$0xf]
      %v3933 = vld [vmem:[%s244 + $0x108] sm:$0xf]
      %v3934 = vld [vmem:[%s244 + $0x10c] sm:$0xf]
      %v3935 = vld [vmem:[%s244 + $0x110] sm:$0xf]
      %v3936 = vld [vmem:[%s244 + $0x114] sm:$0xf]
      %v3937 = vld [vmem:[%s244 + $0x118] sm:$0xf]
      %v3938 = vld [vmem:[%s244 + $0x11c] sm:$0xf]
      %v3939 = vld [vmem:[%s244 + $0x120] sm:$0xf]
      %v3940 = vld [vmem:[%s244 + $0x124] sm:$0xf]
      %v3941 = vld [vmem:[%s244 + $0x128] sm:$0xf]
      %v3942 = vld [vmem:[%s244 + $0x12c] sm:$0xf]
      %v3943 = vld [vmem:[%s244 + $0x130] sm:$0xf]
      %v3944 = vld [vmem:[%s244 + $0x134] sm:$0xf]
      %v3945 = vld [vmem:[%s244 + $0x138] sm:$0xf]
      %v3946 = vld [vmem:[%s244 + $0x13c] sm:$0xf]
      %v3947 = vld [vmem:[%s244 + $0x140] sm:$0xf]
      %v3948 = vld [vmem:[%s244 + $0x144] sm:$0xf]
      %v3949 = vld [vmem:[%s244 + $0x148] sm:$0xf]
      %v3950 = vld [vmem:[%s244 + $0x14c] sm:$0xf]
      %v3951 = vld [vmem:[%s244 + $0x150] sm:$0xf]
      %v3952 = vld [vmem:[%s244 + $0x154] sm:$0xf]
      %v3953 = vld [vmem:[%s244 + $0x158] sm:$0xf]
      %v3954 = vld [vmem:[%s244 + $0x15c] sm:$0xf]
      %v3955 = vld [vmem:[%s244 + $0x160] sm:$0xf]
      %v3956 = vld [vmem:[%s244 + $0x164] sm:$0xf]
      %v3957 = vld [vmem:[%s244 + $0x168] sm:$0xf]
      %v3958 = vld [vmem:[%s244 + $0x16c] sm:$0xf]
      %v3959 = vld [vmem:[%s244 + $0x170] sm:$0xf]
      %v3960 = vld [vmem:[%s244 + $0x174] sm:$0xf]
      %v3961 = vld [vmem:[%s244 + $0x178] sm:$0xf]
      %v3962 = vld [vmem:[%s244 + $0x17c] sm:$0xf]
      %v3963 = vld [vmem:[%s244 + $0x180] sm:$0xf]
      %v3964 = vld [vmem:[%s244 + $0x184] sm:$0xf]
      %v3965 = vld [vmem:[%s244 + $0x188] sm:$0xf]
      %v3966 = vld [vmem:[%s244 + $0x18c] sm:$0xf]
      %v3967 = vld [vmem:[%s244 + $0x190] sm:$0xf]
      %v3968 = vld [vmem:[%s244 + $0x194] sm:$0xf]
      %v3969 = vld [vmem:[%s244 + $0x198] sm:$0xf]
      %v3970 = vld [vmem:[%s244 + $0x19c] sm:$0xf]
      %v3971 = vld [vmem:[%s244 + $0x1a0] sm:$0xf]
      %v3972 = vld [vmem:[%s244 + $0x1a4] sm:$0xf]
      %v3973 = vld [vmem:[%s244 + $0x1a8] sm:$0xf]
      %v3974 = vld [vmem:[%s244 + $0x1ac] sm:$0xf]
      %v3975 = vld [vmem:[%s244 + $0x1b0] sm:$0xf]
      %v3976 = vld [vmem:[%s244 + $0x1b4] sm:$0xf]
      %v3977 = vld [vmem:[%s244 + $0x1b8] sm:$0xf]
      %v3978 = vld [vmem:[%s244 + $0x1bc] sm:$0xf]
      %v3979 = vld [vmem:[%s244 + $0x1c0] sm:$0xf]
      %v3980 = vld [vmem:[%s244 + $0x1c4] sm:$0xf]
      %v3981 = vld [vmem:[%s244 + $0x1c8] sm:$0xf]
      %v3982 = vld [vmem:[%s244 + $0x1cc] sm:$0xf]
      %v3983 = vld [vmem:[%s244 + $0x1d0] sm:$0xf]
      %v3984 = vld [vmem:[%s244 + $0x1d4] sm:$0xf]
      %v3985 = vld [vmem:[%s244 + $0x1d8] sm:$0xf]
      %v3986 = vld [vmem:[%s244 + $0x1dc] sm:$0xf]
      %v3987 = vld [vmem:[%s244 + $0x1e0] sm:$0xf]
      %v3988 = vld [vmem:[%s244 + $0x1e4] sm:$0xf]
      %v3989 = vld [vmem:[%s244 + $0x1e8] sm:$0xf]
      %v3990 = vld [vmem:[%s244 + $0x1ec] sm:$0xf]
      %v3991 = vld [vmem:[%s244 + $0x1f0] sm:$0xf]
      %v3992 = vld [vmem:[%s244 + $0x1f4] sm:$0xf]
      %v3993 = vld [vmem:[%s244 + $0x1f8] sm:$0xf]
      %v3994 = vld [vmem:[%s244 + $0x1fc] sm:$0xf]
      %v3995 = vld [vmem:[%s244 + $0x200] sm:$0xf]
      %v3996 = vld [vmem:[%s244 + $0x204] sm:$0xf]
      %v3997 = vld [vmem:[%s244 + $0x208] sm:$0xf]
      %v3998 = vld [vmem:[%s244 + $0x20c] sm:$0xf]
      %v3999 = vld [vmem:[%s244 + $0x210] sm:$0xf]
      %v4000 = vld [vmem:[%s244 + $0x214] sm:$0xf]
      %v4001 = vld [vmem:[%s244 + $0x218] sm:$0xf]
      %v4002 = vld [vmem:[%s244 + $0x21c] sm:$0xf]
      %v4003 = vld [vmem:[%s244 + $0x220] sm:$0xf]
      %v4004 = vld [vmem:[%s244 + $0x224] sm:$0xf]
      %v4005 = vld [vmem:[%s244 + $0x228] sm:$0xf]
      %v4006 = vld [vmem:[%s244 + $0x22c] sm:$0xf]
      %v4007 = vld [vmem:[%s244 + $0x230] sm:$0x1]
      %v4008 = vld [vmem:[%s248 + $0x18] sm:$0xf]
      %v4009 = vld [vmem:[%s248 + $0x1c] sm:$0xf]
      %v4147 = vunpack.c.l.b16 %v3871
      %v4148 = vunpack.c.l.b16 %v3872
      %v4149 = vunpack.c.l.b16 %v3873
      %v4150 = vunpack.c.l.b16 %v3874
      %v4151 = vunpack.c.l.b16 %v3875
      %v4152 = vunpack.c.l.b16 %v3876
      %v4153 = vunpack.c.l.b16 %v3877
      %v4154 = vunpack.c.l.b16 %v3878
      %v4155 = vunpack.c.l.b16 %v3879
      %v4156 = vunpack.c.l.b16 %v3880
      %v4157 = vunpack.c.l.b16 %v3881
      %v4158 = vunpack.c.l.b16 %v3882
      %v4159 = vunpack.c.l.b16 %v3883
      %v4160 = vunpack.c.l.b16 %v3884
      %v4161 = vunpack.c.l.b16 %v3885
      %v4162 = vunpack.c.l.b16 %v3886
      %v4163 = vunpack.c.l.b16 %v3887
      %v4164 = vunpack.c.l.b16 %v3888
      %v4165 = vunpack.c.l.b16 %v3889
      %v4166 = vunpack.c.l.b16 %v3890
      %v4167 = vunpack.c.l.b16 %v3891
      %v4168 = vunpack.c.l.b16 %v3892
      %v4169 = vunpack.c.l.b16 %v3893
      %v4170 = vunpack.c.l.b16 %v3894
      %v4171 = vunpack.c.l.b16 %v3895
      %v4172 = vunpack.c.l.b16 %v3896
      %v4173 = vunpack.c.l.b16 %v3897
      %v4174 = vunpack.c.l.b16 %v3898
      %v4175 = vunpack.c.l.b16 %v3899
      %v4176 = vunpack.c.l.b16 %v3900
      %v4177 = vunpack.c.l.b16 %v3901
      %v4178 = vunpack.c.l.b16 %v3902
      %v4179 = vunpack.c.l.b16 %v3903
      %v4180 = vunpack.c.l.b16 %v3904
      %v4181 = vunpack.c.l.b16 %v3905
      %v4182 = vunpack.c.l.b16 %v3906
      %v4183 = vunpack.c.l.b16 %v3907
      %v4184 = vunpack.c.l.b16 %v3908
      %v4185 = vunpack.c.l.b16 %v3909
      %v4186 = vunpack.c.l.b16 %v3910
      %v4187 = vunpack.c.l.b16 %v3911
      %v4188 = vunpack.c.l.b16 %v3912
      %v4189 = vunpack.c.l.b16 %v3913
      %v4190 = vunpack.c.l.b16 %v3914
      %v4191 = vunpack.c.l.b16 %v3915
      %v4192 = vunpack.c.l.b16 %v3916
      %v4193 = vunpack.c.l.b16 %v3917
      %v4194 = vunpack.c.l.b16 %v3918
      %v4195 = vunpack.c.l.b16 %v3919
      %v4196 = vunpack.c.l.b16 %v3920
      %v4197 = vunpack.c.l.b16 %v3921
      %v4198 = vunpack.c.l.b16 %v3922
      %v4199 = vunpack.c.l.b16 %v3923
      %v4200 = vunpack.c.l.b16 %v3924
      %v4201 = vunpack.c.l.b16 %v3925
      %v4202 = vunpack.c.l.b16 %v3926
      %v4203 = vunpack.c.l.b16 %v3927
      %v4204 = vunpack.c.l.b16 %v3928
      %v4205 = vunpack.c.l.b16 %v3929
      %v4206 = vunpack.c.l.b16 %v3930
      %v4207 = vunpack.c.l.b16 %v3931
      %v4208 = vunpack.c.l.b16 %v3932
      %v4209 = vunpack.c.l.b16 %v3933
      %v4210 = vunpack.c.l.b16 %v3934
      %v4211 = vunpack.c.l.b16 %v3935
      %v4212 = vunpack.c.l.b16 %v3936
      %v4213 = vunpack.c.l.b16 %v3937
      %v4214 = vunpack.c.l.b16 %v3938
      %v4215 = vunpack.c.l.b16 %v3939
      %v4216 = vunpack.c.l.b16 %v3940
      %v4217 = vunpack.c.l.b16 %v3941
      %v4218 = vunpack.c.l.b16 %v3942
      %v4219 = vunpack.c.l.b16 %v3943
      %v4220 = vunpack.c.l.b16 %v3944
      %v4221 = vunpack.c.l.b16 %v3945
      %v4222 = vunpack.c.l.b16 %v3946
      %v4223 = vunpack.c.l.b16 %v3947
      %v4224 = vunpack.c.l.b16 %v3948
      %v4225 = vunpack.c.l.b16 %v3949
      %v4226 = vunpack.c.l.b16 %v3950
      %v4227 = vunpack.c.l.b16 %v3951
      %v4228 = vunpack.c.l.b16 %v3952
      %v4229 = vunpack.c.l.b16 %v3953
      %v4230 = vunpack.c.l.b16 %v3954
      %v4231 = vunpack.c.l.b16 %v3955
      %v4232 = vunpack.c.l.b16 %v3956
      %v4233 = vunpack.c.l.b16 %v3957
      %v4234 = vunpack.c.l.b16 %v3958
      %v4235 = vunpack.c.l.b16 %v3959
      %v4236 = vunpack.c.l.b16 %v3960
      %v4237 = vunpack.c.l.b16 %v3961
      %v4238 = vunpack.c.l.b16 %v3962
      %v4239 = vunpack.c.l.b16 %v3963
      %v4240 = vunpack.c.l.b16 %v3964
      %v4241 = vunpack.c.l.b16 %v3965
      %v4242 = vunpack.c.l.b16 %v3966
      %v4243 = vunpack.c.l.b16 %v3967
      %v4244 = vunpack.c.l.b16 %v3968
      %v4245 = vunpack.c.l.b16 %v3969
      %v4246 = vunpack.c.l.b16 %v3970
      %v4247 = vunpack.c.l.b16 %v3971
      %v4248 = vunpack.c.l.b16 %v3972
      %v4249 = vunpack.c.l.b16 %v3973
      %v4250 = vunpack.c.l.b16 %v3974
      %v4251 = vunpack.c.l.b16 %v3975
      %v4252 = vunpack.c.l.b16 %v3976
      %v4253 = vunpack.c.l.b16 %v3977
      %v4254 = vunpack.c.l.b16 %v3978
      %v4255 = vunpack.c.l.b16 %v3979
      %v4256 = vunpack.c.l.b16 %v3980
      %v4257 = vunpack.c.l.b16 %v3981
      %v4258 = vunpack.c.l.b16 %v3982
      %v4259 = vunpack.c.l.b16 %v3983
      %v4260 = vunpack.c.l.b16 %v3984
      %v4261 = vunpack.c.l.b16 %v3985
      %v4262 = vunpack.c.l.b16 %v3986
      %v4263 = vunpack.c.l.b16 %v3987
      %v4264 = vunpack.c.l.b16 %v3988
      %v4265 = vunpack.c.l.b16 %v3989
      %v4266 = vunpack.c.l.b16 %v3990
      %v4267 = vunpack.c.l.b16 %v3991
      %v4268 = vunpack.c.l.b16 %v3992
      %v4269 = vunpack.c.l.b16 %v3993
      %v4270 = vunpack.c.l.b16 %v3994
      %v4271 = vunpack.c.l.b16 %v3995
      %v4272 = vunpack.c.l.b16 %v3996
      %v4273 = vunpack.c.l.b16 %v3997
      %v4274 = vunpack.c.l.b16 %v3998
      %v4275 = vunpack.c.l.b16 %v3999
      %v4276 = vunpack.c.l.b16 %v4000
      %v4277 = vunpack.c.l.b16 %v4001
      %v4278 = vunpack.c.l.b16 %v4002
      %v4279 = vunpack.c.l.b16 %v4003
      %v4280 = vunpack.c.l.b16 %v4004
      %v4281 = vunpack.c.l.b16 %v4005
      %v4282 = vunpack.c.l.b16 %v4006
      %v4283 = vunpack.c.l.b16 %v4007
      %v4284 = vpack.c.b16 %v4148, %v4147
      %v4285 = vpack.c.b16 %v4150, %v4149
      %v4286 = vpack.c.b16 %v4152, %v4151
      %v4287 = vpack.c.b16 %v4154, %v4153
      %v4288 = vpack.c.b16 %v4156, %v4155
      %v4289 = vpack.c.b16 %v4158, %v4157
      %v4290 = vpack.c.b16 %v4160, %v4159
      %v4291 = vpack.c.b16 %v4162, %v4161
      %v4292 = vpack.c.b16 %v4164, %v4163
      %v4293 = vpack.c.b16 %v4166, %v4165
      %v4294 = vpack.c.b16 %v4168, %v4167
      %v4295 = vpack.c.b16 %v4170, %v4169
      %v4296 = vpack.c.b16 %v4172, %v4171
      %v4297 = vpack.c.b16 %v4174, %v4173
      %v4298 = vpack.c.b16 %v4176, %v4175
      %v4299 = vpack.c.b16 %v4178, %v4177
      %v4300 = vpack.c.b16 %v4180, %v4179
      %v4301 = vpack.c.b16 %v4182, %v4181
      %v4302 = vpack.c.b16 %v4184, %v4183
      %v4303 = vpack.c.b16 %v4186, %v4185
      %v4304 = vpack.c.b16 %v4188, %v4187
      %v4305 = vpack.c.b16 %v4190, %v4189
      %v4306 = vpack.c.b16 %v4192, %v4191
      %v4307 = vpack.c.b16 %v4194, %v4193
      %v4308 = vpack.c.b16 %v4196, %v4195
      %v4309 = vpack.c.b16 %v4198, %v4197
      %v4310 = vpack.c.b16 %v4200, %v4199
      %v4311 = vpack.c.b16 %v4202, %v4201
      %v4312 = vpack.c.b16 %v4204, %v4203
      %v4313 = vpack.c.b16 %v4206, %v4205
      %v4314 = vpack.c.b16 %v4208, %v4207
      %v4315 = vpack.c.b16 %v4210, %v4209
      %v4316 = vpack.c.b16 %v4212, %v4211
      %v4317 = vpack.c.b16 %v4214, %v4213
      %v4318 = vpack.c.b16 %v4216, %v4215
      %v4319 = vpack.c.b16 %v4218, %v4217
      %v4320 = vpack.c.b16 %v4220, %v4219
      %v4321 = vpack.c.b16 %v4222, %v4221
      %v4322 = vpack.c.b16 %v4224, %v4223
      %v4323 = vpack.c.b16 %v4226, %v4225
      %v4324 = vpack.c.b16 %v4228, %v4227
      %v4325 = vpack.c.b16 %v4230, %v4229
      %v4326 = vpack.c.b16 %v4232, %v4231
      %v4327 = vpack.c.b16 %v4234, %v4233
      %v4328 = vpack.c.b16 %v4236, %v4235
      %v4329 = vpack.c.b16 %v4238, %v4237
      %v4330 = vpack.c.b16 %v4240, %v4239
      %v4331 = vpack.c.b16 %v4242, %v4241
      %v4332 = vpack.c.b16 %v4244, %v4243
      %v4333 = vpack.c.b16 %v4246, %v4245
      %v4334 = vpack.c.b16 %v4248, %v4247
      %v4335 = vpack.c.b16 %v4250, %v4249
      %v4336 = vpack.c.b16 %v4252, %v4251
      %v4337 = vpack.c.b16 %v4254, %v4253
      %v4338 = vpack.c.b16 %v4256, %v4255
      %v4339 = vpack.c.b16 %v4258, %v4257
      %v4340 = vpack.c.b16 %v4260, %v4259
      %v4341 = vpack.c.b16 %v4262, %v4261
      %v4342 = vpack.c.b16 %v4264, %v4263
      %v4343 = vpack.c.b16 %v4266, %v4265
      %v4344 = vpack.c.b16 %v4268, %v4267
      %v4345 = vpack.c.b16 %v4270, %v4269
      %v4346 = vpack.c.b16 %v4272, %v4271
      %v4347 = vpack.c.b16 %v4274, %v4273
      %v4348 = vpack.c.b16 %v4276, %v4275
      %v4349 = vpack.c.b16 %v4278, %v4277
      %v4350 = vpack.c.b16 %v4280, %v4279
      %v4351 = vpack.c.b16 %v4282, %v4281
      %v4352 = vpack.c.b16 %v4283, %v4283
      %v4353 = vrot.slane %v4284, 1
      %v4354 = vrot.slane %v4285, 1
      %v4355 = vsel %vm2810, %v4353, %v4354
      %v4356 = vrot.slane %v4286, 1
      %v4357 = vsel %vm2810, %v4354, %v4356
      %v4358 = vrot.slane %v4287, 1
      %v4359 = vsel %vm2810, %v4356, %v4358
      %v4360 = vrot.slane %v4288, 1
      %v4361 = vsel %vm2810, %v4358, %v4360
      %v4362 = vrot.slane %v4289, 1
      %v4363 = vsel %vm2810, %v4360, %v4362
      %v4364 = vrot.slane %v4290, 1
      %v4365 = vsel %vm2810, %v4362, %v4364
      %v4366 = vrot.slane %v4291, 1
      %v4367 = vsel %vm2810, %v4364, %v4366
      %v4368 = vrot.slane %v4292, 1
      %v4369 = vsel %vm2810, %v4366, %v4368
      %v4370 = vrot.slane %v4293, 1
      %v4371 = vsel %vm2810, %v4368, %v4370
      %v4372 = vrot.slane %v4294, 1
      %v4373 = vsel %vm2810, %v4370, %v4372
      %v4374 = vrot.slane %v4295, 1
      %v4375 = vsel %vm2810, %v4372, %v4374
      %v4376 = vrot.slane %v4296, 1
      %v4377 = vsel %vm2810, %v4374, %v4376
      %v4378 = vrot.slane %v4297, 1
      %v4379 = vsel %vm2810, %v4376, %v4378
      %v4380 = vrot.slane %v4298, 1
      %v4381 = vsel %vm2810, %v4378, %v4380
      %v4382 = vrot.slane %v4299, 1
      %v4383 = vsel %vm2810, %v4380, %v4382
      %v4384 = vrot.slane %v4300, 1
      %v4385 = vsel %vm2810, %v4382, %v4384
      %v4386 = vrot.slane %v4301, 1
      %v4387 = vsel %vm2810, %v4384, %v4386
      %v4388 = vrot.slane %v4302, 1
      %v4389 = vsel %vm2810, %v4386, %v4388
      %v4390 = vrot.slane %v4303, 1
      %v4391 = vsel %vm2810, %v4388, %v4390
      %v4392 = vrot.slane %v4304, 1
      %v4393 = vsel %vm2810, %v4390, %v4392
      %v4394 = vrot.slane %v4305, 1
      %v4395 = vsel %vm2810, %v4392, %v4394
      %v4396 = vrot.slane %v4306, 1
      %v4397 = vsel %vm2810, %v4394, %v4396
      %v4398 = vrot.slane %v4307, 1
      %v4399 = vsel %vm2810, %v4396, %v4398
      %v4400 = vrot.slane %v4308, 1
      %v4401 = vsel %vm2810, %v4398, %v4400
      %v4402 = vrot.slane %v4309, 1
      %v4403 = vsel %vm2810, %v4400, %v4402
      %v4404 = vrot.slane %v4310, 1
      %v4405 = vsel %vm2810, %v4402, %v4404
      %v4406 = vrot.slane %v4311, 1
      %v4407 = vsel %vm2810, %v4404, %v4406
      %v4408 = vrot.slane %v4312, 1
      %v4409 = vsel %vm2810, %v4406, %v4408
      %v4410 = vrot.slane %v4313, 1
      %v4411 = vsel %vm2810, %v4408, %v4410
      %v4412 = vrot.slane %v4314, 1
      %v4413 = vsel %vm2810, %v4410, %v4412
      %v4414 = vrot.slane %v4315, 1
      %v4415 = vsel %vm2810, %v4412, %v4414
      %v4416 = vrot.slane %v4316, 1
      %v4417 = vsel %vm2810, %v4414, %v4416
      %v4418 = vrot.slane %v4317, 1
      %v4419 = vsel %vm2810, %v4416, %v4418
      %v4420 = vrot.slane %v4318, 1
      %v4421 = vsel %vm2810, %v4418, %v4420
      %v4422 = vrot.slane %v4319, 1
      %v4423 = vsel %vm2810, %v4420, %v4422
      %v4424 = vrot.slane %v4320, 1
      %v4425 = vsel %vm2810, %v4422, %v4424
      %v4426 = vrot.slane %v4321, 1
      %v4427 = vsel %vm2810, %v4424, %v4426
      %v4428 = vrot.slane %v4322, 1
      %v4429 = vsel %vm2810, %v4426, %v4428
      %v4430 = vrot.slane %v4323, 1
      %v4431 = vsel %vm2810, %v4428, %v4430
      %v4432 = vrot.slane %v4324, 1
      %v4433 = vsel %vm2810, %v4430, %v4432
      %v4434 = vrot.slane %v4325, 1
      %v4435 = vsel %vm2810, %v4432, %v4434
      %v4436 = vrot.slane %v4326, 1
      %v4437 = vsel %vm2810, %v4434, %v4436
      %v4438 = vrot.slane %v4327, 1
      %v4439 = vsel %vm2810, %v4436, %v4438
      %v4440 = vrot.slane %v4328, 1
      %v4441 = vsel %vm2810, %v4438, %v4440
      %v4442 = vrot.slane %v4329, 1
      %v4443 = vsel %vm2810, %v4440, %v4442
      %v4444 = vrot.slane %v4330, 1
      %v4445 = vsel %vm2810, %v4442, %v4444
      %v4446 = vrot.slane %v4331, 1
      %v4447 = vsel %vm2810, %v4444, %v4446
      %v4448 = vrot.slane %v4332, 1
      %v4449 = vsel %vm2810, %v4446, %v4448
      %v4450 = vrot.slane %v4333, 1
      %v4451 = vsel %vm2810, %v4448, %v4450
      %v4452 = vrot.slane %v4334, 1
      %v4453 = vsel %vm2810, %v4450, %v4452
      %v4454 = vrot.slane %v4335, 1
      %v4455 = vsel %vm2810, %v4452, %v4454
      %v4456 = vrot.slane %v4336, 1
      %v4457 = vsel %vm2810, %v4454, %v4456
      %v4458 = vrot.slane %v4337, 1
      %v4459 = vsel %vm2810, %v4456, %v4458
      %v4460 = vrot.slane %v4338, 1
      %v4461 = vsel %vm2810, %v4458, %v4460
      %v4462 = vrot.slane %v4339, 1
      %v4463 = vsel %vm2810, %v4460, %v4462
      %v4464 = vrot.slane %v4340, 1
      %v4465 = vsel %vm2810, %v4462, %v4464
      %v4466 = vrot.slane %v4341, 1
      %v4467 = vsel %vm2810, %v4464, %v4466
      %v4468 = vrot.slane %v4342, 1
      %v4469 = vsel %vm2810, %v4466, %v4468
      %v4470 = vrot.slane %v4343, 1
      %v4471 = vsel %vm2810, %v4468, %v4470
      %v4472 = vrot.slane %v4344, 1
      %v4473 = vsel %vm2810, %v4470, %v4472
      %v4474 = vrot.slane %v4345, 1
      %v4475 = vsel %vm2810, %v4472, %v4474
      %v4476 = vrot.slane %v4346, 1
      %v4477 = vsel %vm2810, %v4474, %v4476
      %v4478 = vrot.slane %v4347, 1
      %v4479 = vsel %vm2810, %v4476, %v4478
      %v4480 = vrot.slane %v4348, 1
      %v4481 = vsel %vm2810, %v4478, %v4480
      %v4482 = vrot.slane %v4349, 1
      %v4483 = vsel %vm2810, %v4480, %v4482
      %v4484 = vrot.slane %v4350, 1
      %v4485 = vsel %vm2810, %v4482, %v4484
      %v4486 = vrot.slane %v4351, 1
      %v4487 = vsel %vm2810, %v4484, %v4486
      %v4488 = vrot.slane %v4352, 1
      %v4489 = vsel %vm2810, %v4486, %v4488
      %v4492 = vunpack.c.l.b16 %v4008
      %v4493 = vunpack.c.l.b16 %v4009
      %v4494 = vpack.c.b16 %v4493, %v4492
      %v4497 = vsel %vm1303, %v4355, 0
      %v4500 = vsel %vm1303, %v4357, 0
      %v4503 = vsel %vm1303, %v4359, 0
      %v4506 = vsel %vm1303, %v4361, 0
      %v4509 = vsel %vm1303, %v4363, 0
      %v4512 = vsel %vm1303, %v4365, 0
      %v4515 = vsel %vm1303, %v4367, 0
      %v4518 = vsel %vm1303, %v4369, 0
      %v4521 = vsel %vm1303, %v4371, 0
      %v4524 = vsel %vm1303, %v4373, 0
      %v4527 = vsel %vm1303, %v4375, 0
      %v4530 = vsel %vm1303, %v4377, 0
      %v4533 = vsel %vm1303, %v4379, 0
      %v4536 = vsel %vm1303, %v4381, 0
      %v4539 = vsel %vm1303, %v4383, 0
      %v4542 = vsel %vm1303, %v4385, 0
      %v4545 = vsel %vm1303, %v4387, 0
      %v4548 = vsel %vm1303, %v4389, 0
      %v4551 = vsel %vm1303, %v4391, 0
      %v4554 = vsel %vm1303, %v4393, 0
      %v4557 = vsel %vm1303, %v4395, 0
      %v4560 = vsel %vm1303, %v4397, 0
      %v4563 = vsel %vm1303, %v4399, 0
      %v4566 = vsel %vm1303, %v4401, 0
      %v4569 = vsel %vm1303, %v4403, 0
      %v4572 = vsel %vm1303, %v4405, 0
      %v4575 = vsel %vm1303, %v4407, 0
      %v4578 = vsel %vm1303, %v4409, 0
      %v4581 = vsel %vm1303, %v4411, 0
      %v4584 = vsel %vm1303, %v4413, 0
      %v4587 = vsel %vm1303, %v4415, 0
      %v4590 = vsel %vm1303, %v4417, 0
      %v4593 = vsel %vm1303, %v4419, 0
      %v4596 = vsel %vm1303, %v4421, 0
      %v4599 = vsel %vm1303, %v4423, 0
      %v4602 = vsel %vm1303, %v4425, 0
      %v4605 = vsel %vm1303, %v4427, 0
      %v4608 = vsel %vm1303, %v4429, 0
      %v4611 = vsel %vm1303, %v4431, 0
      %v4614 = vsel %vm1303, %v4433, 0
      %v4617 = vsel %vm1303, %v4435, 0
      %v4620 = vsel %vm1303, %v4437, 0
      %v4623 = vsel %vm1303, %v4439, 0
      %v4626 = vsel %vm1303, %v4441, 0
      %v4629 = vsel %vm1303, %v4443, 0
      %v4632 = vsel %vm1303, %v4445, 0
      %v4635 = vsel %vm1303, %v4447, 0
      %v4638 = vsel %vm1303, %v4449, 0
      %v4641 = vsel %vm1303, %v4451, 0
      %v4644 = vsel %vm1303, %v4453, 0
      %v4647 = vsel %vm1303, %v4455, 0
      %v4650 = vsel %vm1303, %v4457, 0
      %v4653 = vsel %vm1303, %v4459, 0
      %v4656 = vsel %vm1303, %v4461, 0
      %v4659 = vsel %vm1303, %v4463, 0
      %v4662 = vsel %vm1303, %v4465, 0
      %v4665 = vsel %vm1303, %v4467, 0
      %v4668 = vsel %vm1303, %v4469, 0
      %v4671 = vsel %vm1303, %v4471, 0
      %v4674 = vsel %vm1303, %v4473, 0
      %v4677 = vsel %vm1303, %v4475, 0
      %v4680 = vsel %vm1303, %v4477, 0
      %v4683 = vsel %vm1303, %v4479, 0
      %v4686 = vsel %vm1303, %v4481, 0
      %v4689 = vsel %vm1303, %v4483, 0
      %v4692 = vsel %vm1303, %v4485, 0
      %v4695 = vsel %vm1303, %v4487, 0
      %v4698 = vsel %vm1303, %v4489, 0
      %4700 = vmatprep.subr.bf16.mxu0 0
      %4701 = vmatpush1.bf16.msra.mxu0 %v4494
      %4702 = vmatprep.subr.bf16.mxu0 0
      %4703 = vmatpush1.bf16.msra.mxu0 0
      %4704 = vmatprep.subr.bf16.mxu0 0
      %4705 = vmatpush1.bf16.msra.mxu0 0
      %4706 = vmatprep.subr.bf16.mxu0 0
      %4707 = vmatpush1.bf16.msra.mxu0 0
      %4708 = vmatprep.subr.bf16.mxu0 0
      %4709 = vmatpush1.bf16.msra.mxu0 0
      %4710 = vmatprep.subr.bf16.mxu0 0
      %4711 = vmatpush1.bf16.msra.mxu0 0
      %4712 = vmatprep.subr.bf16.mxu0 0
      %4713 = vmatpush1.bf16.msra.mxu0 0
      %4714 = vmatprep.subr.bf16.mxu0 0
      %4715 = vmatpush1.bf16.msra.mxu0 0
      %4716 = vmatprep.subr.bf16.mxu0 0
      %4717 = vmatpush1.bf16.msra.mxu0 0
      %4718 = vmatprep.subr.bf16.mxu0 0
      %4719 = vmatpush1.bf16.msra.mxu0 0
      %4720 = vmatprep.subr.bf16.mxu0 0
      %4721 = vmatpush1.bf16.msra.mxu0 0
      %4722 = vmatprep.subr.bf16.mxu0 0
      %4723 = vmatpush1.bf16.msra.mxu0 0
      %4724 = vmatprep.subr.bf16.mxu0 0
      %4725 = vmatpush1.bf16.msra.mxu0 0
      %4726 = vmatprep.subr.bf16.mxu0 0
      %4727 = vmatpush1.bf16.msra.mxu0 0
      %4728 = vmatprep.subr.bf16.mxu0 0
      %4729 = vmatpush1.bf16.msra.mxu0 0
      %4730 = vmatprep.subr.bf16.mxu0 0
      %4731 = vmatpush1.bf16.msra.mxu0 0
      %4732 = vmatprep.mubr.bf16.mxu0 0
      %4733 = vmatmul.mubr.bf16.gmra.mrb[0].mxu0 %v4497
      %v4734 = vpop.f32.mrb[0].mxu0
      %v4735 = vadd.f32 0.0, %v4734
      %v4736 = vpop.f32.mrb[0].mxu0
      %v4737 = vpop.f32.mrb[0].mxu0
      %v4738 = vadd.f32 0.0, %v4737
      %v4739 = vpop.f32.mrb[0].mxu0
      %4740 = vmatprep.mubr.bf16.mxu0 0
      %4741 = vmatmul.mubr.bf16.gmra.mrb[0].mxu0 %v4500
      %v4742 = vpop.f32.mrb[0].mxu0
      %v4743 = vadd.f32 0.0, %v4742
      %v4744 = vpop.f32.mrb[0].mxu0
      %v4745 = vpop.f32.mrb[0].mxu0
      %v4746 = vadd.f32 0.0, %v4745
      %v4747 = vpop.f32.mrb[0].mxu0
      %4748 = vmatprep.mubr.bf16.mxu0 0
      %4749 = vmatmul.mubr.bf16.gmra.mrb[0].mxu0 %v4503
      %v4750 = vpop.f32.mrb[0].mxu0
      %v4751 = vadd.f32 0.0, %v4750
      %v4752 = vpop.f32.mrb[0].mxu0
      %v4753 = vpop.f32.mrb[0].mxu0
      %v4754 = vadd.f32 0.0, %v4753
      %v4755 = vpop.f32.mrb[0].mxu0
      %4756 = vmatprep.mubr.bf16.mxu0 0
      %4757 = vmatmul.mubr.bf16.gmra.mrb[0].mxu0 %v4506
      %v4758 = vpop.f32.mrb[0].mxu0
      %v4759 = vadd.f32 0.0, %v4758
      %v4760 = vpop.f32.mrb[0].mxu0
      %v4761 = vpop.f32.mrb[0].mxu0
      %v4762 = vadd.f32 0.0, %v4761
      %v4763 = vpop.f32.mrb[0].mxu0
      %4764 = vmatprep.mubr.bf16.mxu0 0
      %4765 = vmatmul.mubr.bf16.gmra.mrb[0].mxu0 %v4509
      %v4766 = vpop.f32.mrb[0].mxu0
      %v4767 = vadd.f32 0.0, %v4766
      %v4768 = vpop.f32.mrb[0].mxu0
      %v4769 = vpop.f32.mrb[0].mxu0
      %v4770 = vadd.f32 0.0, %v4769
      %v4771 = vpop.f32.mrb[0].mxu0
      %4772 = vmatprep.mubr.bf16.mxu0 0
      %4773 = vmatmul.mubr.bf16.gmra.mrb[0].mxu0 %v4512
      %v4774 = vpop.f32.mrb[0].mxu0
      %v4775 = vadd.f32 0.0, %v4774
      %v4776 = vpop.f32.mrb[0].mxu0
      %v4777 = vpop.f32.mrb[0].mxu0
      %v4778 = vadd.f32 0.0, %v4777
      %v4779 = vpop.f32.mrb[0].mxu0
      %4780 = vmatprep.mubr.bf16.mxu0 0
      %4781 = vmatmul.mubr.bf16.gmra.mrb[0].mxu0 %v4515
      %v4782 = vpop.f32.mrb[0].mxu0
      %v4783 = vadd.f32 0.0, %v4782
      %v4784 = vpop.f32.mrb[0].mxu0
      %v4785 = vpop.f32.mrb[0].mxu0
      %v4786 = vadd.f32 0.0, %v4785
      %v4787 = vpop.f32.mrb[0].mxu0
      %4788 = vmatprep.mubr.bf16.mxu0 0
      %4789 = vmatmul.mubr.bf16.gmra.mrb[0].mxu0 %v4518
      %v4790 = vpop.f32.mrb[0].mxu0
      %v4791 = vadd.f32 0.0, %v4790
      %v4792 = vpop.f32.mrb[0].mxu0
      %v4793 = vpop.f32.mrb[0].mxu0
      %v4794 = vadd.f32 0.0, %v4793
      %v4795 = vpop.f32.mrb[0].mxu0
      %4796 = vmatprep.mubr.bf16.mxu0 0
      %4797 = vmatmul.mubr.bf16.gmra.mrb[0].mxu0 %v4521
      %v4798 = vpop.f32.mrb[0].mxu0
      %v4799 = vadd.f32 0.0, %v4798
      %v4800 = vpop.f32.mrb[0].mxu0
      %v4801 = vpop.f32.mrb[0].mxu0
      %v4802 = vadd.f32 0.0, %v4801
      %v4803 = vpop.f32.mrb[0].mxu0
      %4804 = vmatprep.mubr.bf16.mxu0 0
      %4805 = vmatmul.mubr.bf16.gmra.mrb[0].mxu0 %v4524
      %v4806 = vpop.f32.mrb[0].mxu0
      %v4807 = vadd.f32 0.0, %v4806
      %v4808 = vpop.f32.mrb[0].mxu0
      %v4809 = vpop.f32.mrb[0].mxu0
      %v4810 = vadd.f32 0.0, %v4809
      %v4811 = vpop.f32.mrb[0].mxu0
      %4812 = vmatprep.mubr.bf16.mxu0 0
      %4813 = vmatmul.mubr.bf16.gmra.mrb[0].mxu0 %v4527
      %v4814 = vpop.f32.mrb[0].mxu0
      %v4815 = vadd.f32 0.0, %v4814
      %v4816 = vpop.f32.mrb[0].mxu0
      %v4817 = vpop.f32.mrb[0].mxu0
      %v4818 = vadd.f32 0.0, %v4817
      %v4819 = vpop.f32.mrb[0].mxu0
      %4820 = vmatprep.mubr.bf16.mxu0 0
      %4821 = vmatmul.mubr.bf16.gmra.mrb[0].mxu0 %v4530
      %v4822 = vpop.f32.mrb[0].mxu0
      %v4823 = vadd.f32 0.0, %v4822
      %v4824 = vpop.f32.mrb[0].mxu0
      %v4825 = vpop.f32.mrb[0].mxu0
      %v4826 = vadd.f32 0.0, %v4825
      %v4827 = vpop.f32.mrb[0].mxu0
      %4828 = vmatprep.mubr.bf16.mxu0 0
      %4829 = vmatmul.mubr.bf16.gmra.mrb[0].mxu0 %v4533
      %v4830 = vpop.f32.mrb[0].mxu0
      %v4831 = vadd.f32 0.0, %v4830
      %v4832 = vpop.f32.mrb[0].mxu0
      %v4833 = vpop.f32.mrb[0].mxu0
      %v4834 = vadd.f32 0.0, %v4833
      %v4835 = vpop.f32.mrb[0].mxu0
      %4836 = vmatprep.mubr.bf16.mxu0 0
      %4837 = vmatmul.mubr.bf16.gmra.mrb[0].mxu0 %v4536
      %v4838 = vpop.f32.mrb[0].mxu0
      %v4839 = vadd.f32 0.0, %v4838
      %v4840 = vpop.f32.mrb[0].mxu0
      %v4841 = vpop.f32.mrb[0].mxu0
      %v4842 = vadd.f32 0.0, %v4841
      %v4843 = vpop.f32.mrb[0].mxu0
      %4844 = vmatprep.mubr.bf16.mxu0 0
      %4845 = vmatmul.mubr.bf16.gmra.mrb[0].mxu0 %v4539
      %v4846 = vpop.f32.mrb[0].mxu0
      %v4847 = vadd.f32 0.0, %v4846
      %v4848 = vpop.f32.mrb[0].mxu0
      %v4849 = vpop.f32.mrb[0].mxu0
      %v4850 = vadd.f32 0.0, %v4849
      %v4851 = vpop.f32.mrb[0].mxu0
      %4852 = vmatprep.mubr.bf16.mxu0 0
      %4853 = vmatmul.mubr.bf16.gmra.mrb[0].mxu0 %v4542
      %v4854 = vpop.f32.mrb[0].mxu0
      %v4855 = vadd.f32 0.0, %v4854
      %v4856 = vpop.f32.mrb[0].mxu0
      %v4857 = vpop.f32.mrb[0].mxu0
      %v4858 = vadd.f32 0.0, %v4857
      %v4859 = vpop.f32.mrb[0].mxu0
      %4860 = vmatprep.mubr.bf16.mxu0 0
      %4861 = vmatmul.mubr.bf16.gmra.mrb[0].mxu0 %v4545
      %v4862 = vpop.f32.mrb[0].mxu0
      %v4863 = vadd.f32 0.0, %v4862
      %v4864 = vpop.f32.mrb[0].mxu0
      %v4865 = vpop.f32.mrb[0].mxu0
      %v4866 = vadd.f32 0.0, %v4865
      %v4867 = vpop.f32.mrb[0].mxu0
      %4868 = vmatprep.mubr.bf16.mxu0 0
      %4869 = vmatmul.mubr.bf16.gmra.mrb[0].mxu0 %v4548
      %v4870 = vpop.f32.mrb[0].mxu0
      %v4871 = vadd.f32 0.0, %v4870
      %v4872 = vpop.f32.mrb[0].mxu0
      %v4873 = vpop.f32.mrb[0].mxu0
      %v4874 = vadd.f32 0.0, %v4873
      %v4875 = vpop.f32.mrb[0].mxu0
      %4876 = vmatprep.mubr.bf16.mxu0 0
      %4877 = vmatmul.mubr.bf16.gmra.mrb[0].mxu0 %v4551
      %v4878 = vpop.f32.mrb[0].mxu0
      %v4879 = vadd.f32 0.0, %v4878
      %v4880 = vpop.f32.mrb[0].mxu0
      %v4881 = vpop.f32.mrb[0].mxu0
      %v4882 = vadd.f32 0.0, %v4881
      %v4883 = vpop.f32.mrb[0].mxu0
      %4884 = vmatprep.mubr.bf16.mxu0 0
      %4885 = vmatmul.mubr.bf16.gmra.mrb[0].mxu0 %v4554
      %v4886 = vpop.f32.mrb[0].mxu0
      %v4887 = vadd.f32 0.0, %v4886
      %v4888 = vpop.f32.mrb[0].mxu0
      %v4889 = vpop.f32.mrb[0].mxu0
      %v4890 = vadd.f32 0.0, %v4889
      %v4891 = vpop.f32.mrb[0].mxu0
      %4892 = vmatprep.mubr.bf16.mxu0 0
      %4893 = vmatmul.mubr.bf16.gmra.mrb[0].mxu0 %v4557
      %v4894 = vpop.f32.mrb[0].mxu0
      %v4895 = vadd.f32 0.0, %v4894
      %v4896 = vpop.f32.mrb[0].mxu0
      %v4897 = vpop.f32.mrb[0].mxu0
      %v4898 = vadd.f32 0.0, %v4897
      %v4899 = vpop.f32.mrb[0].mxu0
      %4900 = vmatprep.mubr.bf16.mxu0 0
      %4901 = vmatmul.mubr.bf16.gmra.mrb[0].mxu0 %v4560
      %v4902 = vpop.f32.mrb[0].mxu0
      %v4903 = vadd.f32 0.0, %v4902
      %v4904 = vpop.f32.mrb[0].mxu0
      %v4905 = vpop.f32.mrb[0].mxu0
      %v4906 = vadd.f32 0.0, %v4905
      %v4907 = vpop.f32.mrb[0].mxu0
      %4908 = vmatprep.mubr.bf16.mxu0 0
      %4909 = vmatmul.mubr.bf16.gmra.mrb[0].mxu0 %v4563
      %v4910 = vpop.f32.mrb[0].mxu0
      %v4911 = vadd.f32 0.0, %v4910
      %v4912 = vpop.f32.mrb[0].mxu0
      %v4913 = vpop.f32.mrb[0].mxu0
      %v4914 = vadd.f32 0.0, %v4913
      %v4915 = vpop.f32.mrb[0].mxu0
      %4916 = vmatprep.mubr.bf16.mxu0 0
      %4917 = vmatmul.mubr.bf16.gmra.mrb[0].mxu0 %v4566
      %v4918 = vpop.f32.mrb[0].mxu0
      %v4919 = vadd.f32 0.0, %v4918
      %v4920 = vpop.f32.mrb[0].mxu0
      %v4921 = vpop.f32.mrb[0].mxu0
      %v4922 = vadd.f32 0.0, %v4921
      %v4923 = vpop.f32.mrb[0].mxu0
      %4924 = vmatprep.mubr.bf16.mxu0 0
      %4925 = vmatmul.mubr.bf16.gmra.mrb[0].mxu0 %v4569
      %v4926 = vpop.f32.mrb[0].mxu0
      %v4927 = vadd.f32 0.0, %v4926
      %v4928 = vpop.f32.mrb[0].mxu0
      %v4929 = vpop.f32.mrb[0].mxu0
      %v4930 = vadd.f32 0.0, %v4929
      %v4931 = vpop.f32.mrb[0].mxu0
      %4932 = vmatprep.mubr.bf16.mxu0 0
      %4933 = vmatmul.mubr.bf16.gmra.mrb[0].mxu0 %v4572
      %v4934 = vpop.f32.mrb[0].mxu0
      %v4935 = vadd.f32 0.0, %v4934
      %v4936 = vpop.f32.mrb[0].mxu0
      %v4937 = vpop.f32.mrb[0].mxu0
      %v4938 = vadd.f32 0.0, %v4937
      %v4939 = vpop.f32.mrb[0].mxu0
      %4940 = vmatprep.mubr.bf16.mxu0 0
      %4941 = vmatmul.mubr.bf16.gmra.mrb[0].mxu0 %v4575
      %v4942 = vpop.f32.mrb[0].mxu0
      %v4943 = vadd.f32 0.0, %v4942
      %v4944 = vpop.f32.mrb[0].mxu0
      %v4945 = vpop.f32.mrb[0].mxu0
      %v4946 = vadd.f32 0.0, %v4945
      %v4947 = vpop.f32.mrb[0].mxu0
      %4948 = vmatprep.mubr.bf16.mxu0 0
      %4949 = vmatmul.mubr.bf16.gmra.mrb[0].mxu0 %v4578
      %v4950 = vpop.f32.mrb[0].mxu0
      %v4951 = vadd.f32 0.0, %v4950
      %v4952 = vpop.f32.mrb[0].mxu0
      %v4953 = vpop.f32.mrb[0].mxu0
      %v4954 = vadd.f32 0.0, %v4953
      %v4955 = vpop.f32.mrb[0].mxu0
      %4956 = vmatprep.mubr.bf16.mxu0 0
      %4957 = vmatmul.mubr.bf16.gmra.mrb[0].mxu0 %v4581
      %v4958 = vpop.f32.mrb[0].mxu0
      %v4959 = vadd.f32 0.0, %v4958
      %v4960 = vpop.f32.mrb[0].mxu0
      %v4961 = vpop.f32.mrb[0].mxu0
      %v4962 = vadd.f32 0.0, %v4961
      %v4963 = vpop.f32.mrb[0].mxu0
      %4964 = vmatprep.mubr.bf16.mxu0 0
      %4965 = vmatmul.mubr.bf16.gmra.mrb[0].mxu0 %v4584
      %v4966 = vpop.f32.mrb[0].mxu0
      %v4967 = vadd.f32 0.0, %v4966
      %v4968 = vpop.f32.mrb[0].mxu0
      %v4969 = vpop.f32.mrb[0].mxu0
      %v4970 = vadd.f32 0.0, %v4969
      %v4971 = vpop.f32.mrb[0].mxu0
      %4972 = vmatprep.mubr.bf16.mxu0 0
      %4973 = vmatmul.mubr.bf16.gmra.mrb[0].mxu0 %v4587
      %v4974 = vpop.f32.mrb[0].mxu0
      %v4975 = vadd.f32 0.0, %v4974
      %v4976 = vpop.f32.mrb[0].mxu0
      %v4977 = vpop.f32.mrb[0].mxu0
      %v4978 = vadd.f32 0.0, %v4977
      %v4979 = vpop.f32.mrb[0].mxu0
      %4980 = vmatprep.mubr.bf16.mxu0 0
      %4981 = vmatmul.mubr.bf16.gmra.mrb[0].mxu0 %v4590
      %v4982 = vpop.f32.mrb[0].mxu0
      %v4983 = vadd.f32 0.0, %v4982
      %v4984 = vpop.f32.mrb[0].mxu0
      %v4985 = vpop.f32.mrb[0].mxu0
      %v4986 = vadd.f32 0.0, %v4985
      %v4987 = vpop.f32.mrb[0].mxu0
      %4988 = vmatprep.mubr.bf16.mxu0 0
      %4989 = vmatmul.mubr.bf16.gmra.mrb[0].mxu0 %v4593
      %v4990 = vpop.f32.mrb[0].mxu0
      %v4991 = vadd.f32 0.0, %v4990
      %v4992 = vpop.f32.mrb[0].mxu0
      %v4993 = vpop.f32.mrb[0].mxu0
      %v4994 = vadd.f32 0.0, %v4993
      %v4995 = vpop.f32.mrb[0].mxu0
      %4996 = vmatprep.mubr.bf16.mxu0 0
      %4997 = vmatmul.mubr.bf16.gmra.mrb[0].mxu0 %v4596
      %v4998 = vpop.f32.mrb[0].mxu0
      %v4999 = vadd.f32 0.0, %v4998
      %v5000 = vpop.f32.mrb[0].mxu0
      %v5001 = vpop.f32.mrb[0].mxu0
      %v5002 = vadd.f32 0.0, %v5001
      %v5003 = vpop.f32.mrb[0].mxu0
      %5004 = vmatprep.mubr.bf16.mxu0 0
      %5005 = vmatmul.mubr.bf16.gmra.mrb[0].mxu0 %v4599
      %v5006 = vpop.f32.mrb[0].mxu0
      %v5007 = vadd.f32 0.0, %v5006
      %v5008 = vpop.f32.mrb[0].mxu0
      %v5009 = vpop.f32.mrb[0].mxu0
      %v5010 = vadd.f32 0.0, %v5009
      %v5011 = vpop.f32.mrb[0].mxu0
      %5012 = vmatprep.mubr.bf16.mxu0 0
      %5013 = vmatmul.mubr.bf16.gmra.mrb[0].mxu0 %v4602
      %v5014 = vpop.f32.mrb[0].mxu0
      %v5015 = vadd.f32 0.0, %v5014
      %v5016 = vpop.f32.mrb[0].mxu0
      %v5017 = vpop.f32.mrb[0].mxu0
      %v5018 = vadd.f32 0.0, %v5017
      %v5019 = vpop.f32.mrb[0].mxu0
      %5020 = vmatprep.mubr.bf16.mxu0 0
      %5021 = vmatmul.mubr.bf16.gmra.mrb[0].mxu0 %v4605
      %v5022 = vpop.f32.mrb[0].mxu0
      %v5023 = vadd.f32 0.0, %v5022
      %v5024 = vpop.f32.mrb[0].mxu0
      %v5025 = vpop.f32.mrb[0].mxu0
      %v5026 = vadd.f32 0.0, %v5025
      %v5027 = vpop.f32.mrb[0].mxu0
      %5028 = vmatprep.mubr.bf16.mxu0 0
      %5029 = vmatmul.mubr.bf16.gmra.mrb[0].mxu0 %v4608
      %v5030 = vpop.f32.mrb[0].mxu0
      %v5031 = vadd.f32 0.0, %v5030
      %v5032 = vpop.f32.mrb[0].mxu0
      %v5033 = vpop.f32.mrb[0].mxu0
      %v5034 = vadd.f32 0.0, %v5033
      %v5035 = vpop.f32.mrb[0].mxu0
      %5036 = vmatprep.mubr.bf16.mxu0 0
      %5037 = vmatmul.mubr.bf16.gmra.mrb[0].mxu0 %v4611
      %v5038 = vpop.f32.mrb[0].mxu0
      %v5039 = vadd.f32 0.0, %v5038
      %v5040 = vpop.f32.mrb[0].mxu0
      %v5041 = vpop.f32.mrb[0].mxu0
      %v5042 = vadd.f32 0.0, %v5041
      %v5043 = vpop.f32.mrb[0].mxu0
      %5044 = vmatprep.mubr.bf16.mxu0 0
      %5045 = vmatmul.mubr.bf16.gmra.mrb[0].mxu0 %v4614
      %v5046 = vpop.f32.mrb[0].mxu0
      %v5047 = vadd.f32 0.0, %v5046
      %v5048 = vpop.f32.mrb[0].mxu0
      %v5049 = vpop.f32.mrb[0].mxu0
      %v5050 = vadd.f32 0.0, %v5049
      %v5051 = vpop.f32.mrb[0].mxu0
      %5052 = vmatprep.mubr.bf16.mxu0 0
      %5053 = vmatmul.mubr.bf16.gmra.mrb[0].mxu0 %v4617
      %v5054 = vpop.f32.mrb[0].mxu0
      %v5055 = vadd.f32 0.0, %v5054
      %v5056 = vpop.f32.mrb[0].mxu0
      %v5057 = vpop.f32.mrb[0].mxu0
      %v5058 = vadd.f32 0.0, %v5057
      %v5059 = vpop.f32.mrb[0].mxu0
      %5060 = vmatprep.mubr.bf16.mxu0 0
      %5061 = vmatmul.mubr.bf16.gmra.mrb[0].mxu0 %v4620
      %v5062 = vpop.f32.mrb[0].mxu0
      %v5063 = vadd.f32 0.0, %v5062
      %v5064 = vpop.f32.mrb[0].mxu0
      %v5065 = vpop.f32.mrb[0].mxu0
      %v5066 = vadd.f32 0.0, %v5065
      %v5067 = vpop.f32.mrb[0].mxu0
      %5068 = vmatprep.mubr.bf16.mxu0 0
      %5069 = vmatmul.mubr.bf16.gmra.mrb[0].mxu0 %v4623
      %v5070 = vpop.f32.mrb[0].mxu0
      %v5071 = vadd.f32 0.0, %v5070
      %v5072 = vpop.f32.mrb[0].mxu0
      %v5073 = vpop.f32.mrb[0].mxu0
      %v5074 = vadd.f32 0.0, %v5073
      %v5075 = vpop.f32.mrb[0].mxu0
      %5076 = vmatprep.mubr.bf16.mxu0 0
      %5077 = vmatmul.mubr.bf16.gmra.mrb[0].mxu0 %v4626
      %v5078 = vpop.f32.mrb[0].mxu0
      %v5079 = vadd.f32 0.0, %v5078
      %v5080 = vpop.f32.mrb[0].mxu0
      %v5081 = vpop.f32.mrb[0].mxu0
      %v5082 = vadd.f32 0.0, %v5081
      %v5083 = vpop.f32.mrb[0].mxu0
      %5084 = vmatprep.mubr.bf16.mxu0 0
      %5085 = vmatmul.mubr.bf16.gmra.mrb[0].mxu0 %v4629
      %v5086 = vpop.f32.mrb[0].mxu0
      %v5087 = vadd.f32 0.0, %v5086
      %v5088 = vpop.f32.mrb[0].mxu0
      %v5089 = vpop.f32.mrb[0].mxu0
      %v5090 = vadd.f32 0.0, %v5089
      %v5091 = vpop.f32.mrb[0].mxu0
      %5092 = vmatprep.mubr.bf16.mxu0 0
      %5093 = vmatmul.mubr.bf16.gmra.mrb[0].mxu0 %v4632
      %v5094 = vpop.f32.mrb[0].mxu0
      %v5095 = vadd.f32 0.0, %v5094
      %v5096 = vpop.f32.mrb[0].mxu0
      %v5097 = vpop.f32.mrb[0].mxu0
      %v5098 = vadd.f32 0.0, %v5097
      %v5099 = vpop.f32.mrb[0].mxu0
      %5100 = vmatprep.mubr.bf16.mxu0 0
      %5101 = vmatmul.mubr.bf16.gmra.mrb[0].mxu0 %v4635
      %v5102 = vpop.f32.mrb[0].mxu0
      %v5103 = vadd.f32 0.0, %v5102
      %v5104 = vpop.f32.mrb[0].mxu0
      %v5105 = vpop.f32.mrb[0].mxu0
      %v5106 = vadd.f32 0.0, %v5105
      %v5107 = vpop.f32.mrb[0].mxu0
      %5108 = vmatprep.mubr.bf16.mxu0 0
      %5109 = vmatmul.mubr.bf16.gmra.mrb[0].mxu0 %v4638
      %v5110 = vpop.f32.mrb[0].mxu0
      %v5111 = vadd.f32 0.0, %v5110
      %v5112 = vpop.f32.mrb[0].mxu0
      %v5113 = vpop.f32.mrb[0].mxu0
      %v5114 = vadd.f32 0.0, %v5113
      %v5115 = vpop.f32.mrb[0].mxu0
      %5116 = vmatprep.mubr.bf16.mxu0 0
      %5117 = vmatmul.mubr.bf16.gmra.mrb[0].mxu0 %v4641
      %v5118 = vpop.f32.mrb[0].mxu0
      %v5119 = vadd.f32 0.0, %v5118
      %v5120 = vpop.f32.mrb[0].mxu0
      %v5121 = vpop.f32.mrb[0].mxu0
      %v5122 = vadd.f32 0.0, %v5121
      %v5123 = vpop.f32.mrb[0].mxu0
      %5124 = vmatprep.mubr.bf16.mxu0 0
      %5125 = vmatmul.mubr.bf16.gmra.mrb[0].mxu0 %v4644
      %v5126 = vpop.f32.mrb[0].mxu0
      %v5127 = vadd.f32 0.0, %v5126
      %v5128 = vpop.f32.mrb[0].mxu0
      %v5129 = vpop.f32.mrb[0].mxu0
      %v5130 = vadd.f32 0.0, %v5129
      %v5131 = vpop.f32.mrb[0].mxu0
      %5132 = vmatprep.mubr.bf16.mxu0 0
      %5133 = vmatmul.mubr.bf16.gmra.mrb[0].mxu0 %v4647
      %v5134 = vpop.f32.mrb[0].mxu0
      %v5135 = vadd.f32 0.0, %v5134
      %v5136 = vpop.f32.mrb[0].mxu0
      %v5137 = vpop.f32.mrb[0].mxu0
      %v5138 = vadd.f32 0.0, %v5137
      %v5139 = vpop.f32.mrb[0].mxu0
      %5140 = vmatprep.mubr.bf16.mxu0 0
      %5141 = vmatmul.mubr.bf16.gmra.mrb[0].mxu0 %v4650
      %v5142 = vpop.f32.mrb[0].mxu0
      %v5143 = vadd.f32 0.0, %v5142
      %v5144 = vpop.f32.mrb[0].mxu0
      %v5145 = vpop.f32.mrb[0].mxu0
      %v5146 = vadd.f32 0.0, %v5145
      %v5147 = vpop.f32.mrb[0].mxu0
      %5148 = vmatprep.mubr.bf16.mxu0 0
      %5149 = vmatmul.mubr.bf16.gmra.mrb[0].mxu0 %v4653
      %v5150 = vpop.f32.mrb[0].mxu0
      %v5151 = vadd.f32 0.0, %v5150
      %v5152 = vpop.f32.mrb[0].mxu0
      %v5153 = vpop.f32.mrb[0].mxu0
      %v5154 = vadd.f32 0.0, %v5153
      %v5155 = vpop.f32.mrb[0].mxu0
      %5156 = vmatprep.mubr.bf16.mxu0 0
      %5157 = vmatmul.mubr.bf16.gmra.mrb[0].mxu0 %v4656
      %v5158 = vpop.f32.mrb[0].mxu0
      %v5159 = vadd.f32 0.0, %v5158
      %v5160 = vpop.f32.mrb[0].mxu0
      %v5161 = vpop.f32.mrb[0].mxu0
      %v5162 = vadd.f32 0.0, %v5161
      %v5163 = vpop.f32.mrb[0].mxu0
      %5164 = vmatprep.mubr.bf16.mxu0 0
      %5165 = vmatmul.mubr.bf16.gmra.mrb[0].mxu0 %v4659
      %v5166 = vpop.f32.mrb[0].mxu0
      %v5167 = vadd.f32 0.0, %v5166
      %v5168 = vpop.f32.mrb[0].mxu0
      %v5169 = vpop.f32.mrb[0].mxu0
      %v5170 = vadd.f32 0.0, %v5169
      %v5171 = vpop.f32.mrb[0].mxu0
      %5172 = vmatprep.mubr.bf16.mxu0 0
      %5173 = vmatmul.mubr.bf16.gmra.mrb[0].mxu0 %v4662
      %v5174 = vpop.f32.mrb[0].mxu0
      %v5175 = vadd.f32 0.0, %v5174
      %v5176 = vpop.f32.mrb[0].mxu0
      %v5177 = vpop.f32.mrb[0].mxu0
      %v5178 = vadd.f32 0.0, %v5177
      %v5179 = vpop.f32.mrb[0].mxu0
      %5180 = vmatprep.mubr.bf16.mxu0 0
      %5181 = vmatmul.mubr.bf16.gmra.mrb[0].mxu0 %v4665
      %v5182 = vpop.f32.mrb[0].mxu0
      %v5183 = vadd.f32 0.0, %v5182
      %v5184 = vpop.f32.mrb[0].mxu0
      %v5185 = vpop.f32.mrb[0].mxu0
      %v5186 = vadd.f32 0.0, %v5185
      %v5187 = vpop.f32.mrb[0].mxu0
      %5188 = vmatprep.mubr.bf16.mxu0 0
      %5189 = vmatmul.mubr.bf16.gmra.mrb[0].mxu0 %v4668
      %v5190 = vpop.f32.mrb[0].mxu0
      %v5191 = vadd.f32 0.0, %v5190
      %v5192 = vpop.f32.mrb[0].mxu0
      %v5193 = vpop.f32.mrb[0].mxu0
      %v5194 = vadd.f32 0.0, %v5193
      %v5195 = vpop.f32.mrb[0].mxu0
      %5196 = vmatprep.mubr.bf16.mxu0 0
      %5197 = vmatmul.mubr.bf16.gmra.mrb[0].mxu0 %v4671
      %v5198 = vpop.f32.mrb[0].mxu0
      %v5199 = vadd.f32 0.0, %v5198
      %v5200 = vpop.f32.mrb[0].mxu0
      %v5201 = vpop.f32.mrb[0].mxu0
      %v5202 = vadd.f32 0.0, %v5201
      %v5203 = vpop.f32.mrb[0].mxu0
      %5204 = vmatprep.mubr.bf16.mxu0 0
      %5205 = vmatmul.mubr.bf16.gmra.mrb[0].mxu0 %v4674
      %v5206 = vpop.f32.mrb[0].mxu0
      %v5207 = vadd.f32 0.0, %v5206
      %v5208 = vpop.f32.mrb[0].mxu0
      %v5209 = vpop.f32.mrb[0].mxu0
      %v5210 = vadd.f32 0.0, %v5209
      %v5211 = vpop.f32.mrb[0].mxu0
      %5212 = vmatprep.mubr.bf16.mxu0 0
      %5213 = vmatmul.mubr.bf16.gmra.mrb[0].mxu0 %v4677
      %v5214 = vpop.f32.mrb[0].mxu0
      %v5215 = vadd.f32 0.0, %v5214
      %v5216 = vpop.f32.mrb[0].mxu0
      %v5217 = vpop.f32.mrb[0].mxu0
      %v5218 = vadd.f32 0.0, %v5217
      %v5219 = vpop.f32.mrb[0].mxu0
      %5220 = vmatprep.mubr.bf16.mxu0 0
      %5221 = vmatmul.mubr.bf16.gmra.mrb[0].mxu0 %v4680
      %v5222 = vpop.f32.mrb[0].mxu0
      %v5223 = vadd.f32 0.0, %v5222
      %v5224 = vpop.f32.mrb[0].mxu0
      %v5225 = vpop.f32.mrb[0].mxu0
      %v5226 = vadd.f32 0.0, %v5225
      %v5227 = vpop.f32.mrb[0].mxu0
      %5228 = vmatprep.mubr.bf16.mxu0 0
      %5229 = vmatmul.mubr.bf16.gmra.mrb[0].mxu0 %v4683
      %v5230 = vpop.f32.mrb[0].mxu0
      %v5231 = vadd.f32 0.0, %v5230
      %v5232 = vpop.f32.mrb[0].mxu0
      %v5233 = vpop.f32.mrb[0].mxu0
      %v5234 = vadd.f32 0.0, %v5233
      %v5235 = vpop.f32.mrb[0].mxu0
      %5236 = vmatprep.mubr.bf16.mxu0 0
      %5237 = vmatmul.mubr.bf16.gmra.mrb[0].mxu0 %v4686
      %v5238 = vpop.f32.mrb[0].mxu0
      %v5239 = vadd.f32 0.0, %v5238
      %v5240 = vpop.f32.mrb[0].mxu0
      %v5241 = vpop.f32.mrb[0].mxu0
      %v5242 = vadd.f32 0.0, %v5241
      %v5243 = vpop.f32.mrb[0].mxu0
      %5244 = vmatprep.mubr.bf16.mxu0 0
      %5245 = vmatmul.mubr.bf16.gmra.mrb[0].mxu0 %v4689
      %v5246 = vpop.f32.mrb[0].mxu0
      %v5247 = vadd.f32 0.0, %v5246
      %v5248 = vpop.f32.mrb[0].mxu0
      %v5249 = vpop.f32.mrb[0].mxu0
      %v5250 = vadd.f32 0.0, %v5249
      %v5251 = vpop.f32.mrb[0].mxu0
      %5252 = vmatprep.mubr.bf16.mxu0 0
      %5253 = vmatmul.mubr.bf16.gmra.mrb[0].mxu0 %v4692
      %v5254 = vpop.f32.mrb[0].mxu0
      %v5255 = vadd.f32 0.0, %v5254
      %v5256 = vpop.f32.mrb[0].mxu0
      %v5257 = vpop.f32.mrb[0].mxu0
      %v5258 = vadd.f32 0.0, %v5257
      %v5259 = vpop.f32.mrb[0].mxu0
      %5260 = vmatprep.mubr.bf16.mxu0 0
      %5261 = vmatmul.mubr.bf16.gmra.mrb[0].mxu0 %v4695
      %v5262 = vpop.f32.mrb[0].mxu0
      %v5263 = vadd.f32 0.0, %v5262
      %v5264 = vpop.f32.mrb[0].mxu0
      %v5265 = vpop.f32.mrb[0].mxu0
      %v5266 = vadd.f32 0.0, %v5265
      %v5267 = vpop.f32.mrb[0].mxu0
      %5268 = vmatprep.mubr.bf16.mxu0 0
      %5269 = vmatmul.mubr.bf16.gmra.mrb[0].mxu0 %v4698
      %v5270 = vpop.f32.mrb[0].mxu0
      %v5271 = vadd.f32 0.0, %v5270
      %v5272 = vpop.f32.mrb[0].mxu0
      %v5273 = vpop.f32.mrb[0].mxu0
      %v5274 = vadd.f32 0.0, %v5273
      %v5275 = vpop.f32.mrb[0].mxu0
      %5276 = vdwg.mxu0
      %v5277 = vadd.f32 %v3735, %v4735
      %v5278 = vadd.f32 %v3736, %v4738
      %v5279 = vadd.f32 %v3737, %v4743
      %v5280 = vadd.f32 %v3738, %v4746
      %v5281 = vadd.f32 %v3739, %v4751
      %v5282 = vadd.f32 %v3740, %v4754
      %v5283 = vadd.f32 %v3741, %v4759
      %v5284 = vadd.f32 %v3742, %v4762
      %v5285 = vadd.f32 %v3743, %v4767
      %v5286 = vadd.f32 %v3744, %v4770
      %v5287 = vadd.f32 %v3745, %v4775
      %v5288 = vadd.f32 %v3746, %v4778
      %v5289 = vadd.f32 %v3747, %v4783
      %v5290 = vadd.f32 %v3748, %v4786
      %v5291 = vadd.f32 %v3749, %v4791
      %v5292 = vadd.f32 %v3750, %v4794
      %v5293 = vadd.f32 %v3751, %v4799
      %v5294 = vadd.f32 %v3752, %v4802
      %v5295 = vadd.f32 %v3753, %v4807
      %v5296 = vadd.f32 %v3754, %v4810
      %v5297 = vadd.f32 %v3755, %v4815
      %v5298 = vadd.f32 %v3756, %v4818
      %v5299 = vadd.f32 %v3757, %v4823
      %v5300 = vadd.f32 %v3758, %v4826
      %v5301 = vadd.f32 %v3759, %v4831
      %v5302 = vadd.f32 %v3760, %v4834
      %v5303 = vadd.f32 %v3761, %v4839
      %v5304 = vadd.f32 %v3762, %v4842
      %v5305 = vadd.f32 %v3763, %v4847
      %v5306 = vadd.f32 %v3764, %v4850
      %v5307 = vadd.f32 %v3765, %v4855
      %v5308 = vadd.f32 %v3766, %v4858
      %v5309 = vadd.f32 %v3767, %v4863
      %v5310 = vadd.f32 %v3768, %v4866
      %v5311 = vadd.f32 %v3769, %v4871
      %v5312 = vadd.f32 %v3770, %v4874
      %v5313 = vadd.f32 %v3771, %v4879
      %v5314 = vadd.f32 %v3772, %v4882
      %v5315 = vadd.f32 %v3773, %v4887
      %v5316 = vadd.f32 %v3774, %v4890
      %v5317 = vadd.f32 %v3775, %v4895
      %v5318 = vadd.f32 %v3776, %v4898
      %v5319 = vadd.f32 %v3777, %v4903
      %v5320 = vadd.f32 %v3778, %v4906
      %v5321 = vadd.f32 %v3779, %v4911
      %v5322 = vadd.f32 %v3780, %v4914
      %v5323 = vadd.f32 %v3781, %v4919
      %v5324 = vadd.f32 %v3782, %v4922
      %v5325 = vadd.f32 %v3783, %v4927
      %v5326 = vadd.f32 %v3784, %v4930
      %v5327 = vadd.f32 %v3785, %v4935
      %v5328 = vadd.f32 %v3786, %v4938
      %v5329 = vadd.f32 %v3787, %v4943
      %v5330 = vadd.f32 %v3788, %v4946
      %v5331 = vadd.f32 %v3789, %v4951
      %v5332 = vadd.f32 %v3790, %v4954
      %v5333 = vadd.f32 %v3791, %v4959
      %v5334 = vadd.f32 %v3792, %v4962
      %v5335 = vadd.f32 %v3793, %v4967
      %v5336 = vadd.f32 %v3794, %v4970
      %v5337 = vadd.f32 %v3795, %v4975
      %v5338 = vadd.f32 %v3796, %v4978
      %v5339 = vadd.f32 %v3797, %v4983
      %v5340 = vadd.f32 %v3798, %v4986
      %v5341 = vadd.f32 %v3799, %v4991
      %v5342 = vadd.f32 %v3800, %v4994
      %v5343 = vadd.f32 %v3801, %v4999
      %v5344 = vadd.f32 %v3802, %v5002
      %v5345 = vadd.f32 %v3803, %v5007
      %v5346 = vadd.f32 %v3804, %v5010
      %v5347 = vadd.f32 %v3805, %v5015
      %v5348 = vadd.f32 %v3806, %v5018
      %v5349 = vadd.f32 %v3807, %v5023
      %v5350 = vadd.f32 %v3808, %v5026
      %v5351 = vadd.f32 %v3809, %v5031
      %v5352 = vadd.f32 %v3810, %v5034
      %v5353 = vadd.f32 %v3811, %v5039
      %v5354 = vadd.f32 %v3812, %v5042
      %v5355 = vadd.f32 %v3813, %v5047
      %v5356 = vadd.f32 %v3814, %v5050
      %v5357 = vadd.f32 %v3815, %v5055
      %v5358 = vadd.f32 %v3816, %v5058
      %v5359 = vadd.f32 %v3817, %v5063
      %v5360 = vadd.f32 %v3818, %v5066
      %v5361 = vadd.f32 %v3819, %v5071
      %v5362 = vadd.f32 %v3820, %v5074
      %v5363 = vadd.f32 %v3821, %v5079
      %v5364 = vadd.f32 %v3822, %v5082
      %v5365 = vadd.f32 %v3823, %v5087
      %v5366 = vadd.f32 %v3824, %v5090
      %v5367 = vadd.f32 %v3825, %v5095
      %v5368 = vadd.f32 %v3826, %v5098
      %v5369 = vadd.f32 %v3827, %v5103
      %v5370 = vadd.f32 %v3828, %v5106
      %v5371 = vadd.f32 %v3829, %v5111
      %v5372 = vadd.f32 %v3830, %v5114
      %v5373 = vadd.f32 %v3831, %v5119
      %v5374 = vadd.f32 %v3832, %v5122
      %v5375 = vadd.f32 %v3833, %v5127
      %v5376 = vadd.f32 %v3834, %v5130
      %v5377 = vadd.f32 %v3835, %v5135
      %v5378 = vadd.f32 %v3836, %v5138
      %v5379 = vadd.f32 %v3837, %v5143
      %v5380 = vadd.f32 %v3838, %v5146
      %v5381 = vadd.f32 %v3839, %v5151
      %v5382 = vadd.f32 %v3840, %v5154
      %v5383 = vadd.f32 %v3841, %v5159
      %v5384 = vadd.f32 %v3842, %v5162
      %v5385 = vadd.f32 %v3843, %v5167
      %v5386 = vadd.f32 %v3844, %v5170
      %v5387 = vadd.f32 %v3845, %v5175
      %v5388 = vadd.f32 %v3846, %v5178
      %v5389 = vadd.f32 %v3847, %v5183
      %v5390 = vadd.f32 %v3848, %v5186
      %v5391 = vadd.f32 %v3849, %v5191
      %v5392 = vadd.f32 %v3850, %v5194
      %v5393 = vadd.f32 %v3851, %v5199
      %v5394 = vadd.f32 %v3852, %v5202
      %v5395 = vadd.f32 %v3853, %v5207
      %v5396 = vadd.f32 %v3854, %v5210
      %v5397 = vadd.f32 %v3855, %v5215
      %v5398 = vadd.f32 %v3856, %v5218
      %v5399 = vadd.f32 %v3857, %v5223
      %v5400 = vadd.f32 %v3858, %v5226
      %v5401 = vadd.f32 %v3859, %v5231
      %v5402 = vadd.f32 %v3860, %v5234
      %v5403 = vadd.f32 %v3861, %v5239
      %v5404 = vadd.f32 %v3862, %v5242
      %v5405 = vadd.f32 %v3863, %v5247
      %v5406 = vadd.f32 %v3864, %v5250
      %v5407 = vadd.f32 %v3865, %v5255
      %v5408 = vadd.f32 %v3866, %v5258
      %v5409 = vadd.f32 %v3867, %v5263
      %v5410 = vadd.f32 %v3868, %v5266
      %v5411 = vadd.f32 %v3869, %v5271
      %v5412 = vadd.f32 %v3870, %v5274
      %v5413 = vld [vmem:[%s244 + $0x230] sm:$0x3]
      %v5414 = vld [vmem:[%s248 + $0x20] sm:$0xf]
      %v5415 = vld [vmem:[%s248 + $0x24] sm:$0xf]
      %v5417 = vunpack.c.l.b16 %v5413
      %v5418 = vpack.c.b16 %v5417, %v5417
      %vm5419 = vsmask.f32 6400
      %v5421 = vshrl.u32 %v4284, 16
      %v5423 = vrot.slane %v5421, 1
      %v5424 = vshll.u32 %v4284, 16
      %v5426 = vrot.slane %v5424, 2
      %v5427 = vor.u32 %v5423, %v5426
      %v5429 = vshrl.u32 %v4285, 16
      %v5431 = vrot.slane %v5429, 1
      %v5432 = vshll.u32 %v4285, 16
      %v5434 = vrot.slane %v5432, 2
      %v5435 = vor.u32 %v5431, %v5434
      %v5436 = vsel %vm5419, %v5427, %v5435
      %v5438 = vshrl.u32 %v4286, 16
      %v5440 = vrot.slane %v5438, 1
      %v5441 = vshll.u32 %v4286, 16
      %v5443 = vrot.slane %v5441, 2
      %v5444 = vor.u32 %v5440, %v5443
      %v5445 = vsel %vm5419, %v5435, %v5444
      %v5447 = vshrl.u32 %v4287, 16
      %v5449 = vrot.slane %v5447, 1
      %v5450 = vshll.u32 %v4287, 16
      %v5452 = vrot.slane %v5450, 2
      %v5453 = vor.u32 %v5449, %v5452
      %v5454 = vsel %vm5419, %v5444, %v5453
      %v5456 = vshrl.u32 %v4288, 16
      %v5458 = vrot.slane %v5456, 1
      %v5459 = vshll.u32 %v4288, 16
      %v5461 = vrot.slane %v5459, 2
      %v5462 = vor.u32 %v5458, %v5461
      %v5463 = vsel %vm5419, %v5453, %v5462
      %v5465 = vshrl.u32 %v4289, 16
      %v5467 = vrot.slane %v5465, 1
      %v5468 = vshll.u32 %v4289, 16
      %v5470 = vrot.slane %v5468, 2
      %v5471 = vor.u32 %v5467, %v5470
      %v5472 = vsel %vm5419, %v5462, %v5471
      %v5474 = vshrl.u32 %v4290, 16
      %v5476 = vrot.slane %v5474, 1
      %v5477 = vshll.u32 %v4290, 16
      %v5479 = vrot.slane %v5477, 2
      %v5480 = vor.u32 %v5476, %v5479
      %v5481 = vsel %vm5419, %v5471, %v5480
      %v5483 = vshrl.u32 %v4291, 16
      %v5485 = vrot.slane %v5483, 1
      %v5486 = vshll.u32 %v4291, 16
      %v5488 = vrot.slane %v5486, 2
      %v5489 = vor.u32 %v5485, %v5488
      %v5490 = vsel %vm5419, %v5480, %v5489
      %v5492 = vshrl.u32 %v4292, 16
      %v5494 = vrot.slane %v5492, 1
      %v5495 = vshll.u32 %v4292, 16
      %v5497 = vrot.slane %v5495, 2
      %v5498 = vor.u32 %v5494, %v5497
      %v5499 = vsel %vm5419, %v5489, %v5498
      %v5501 = vshrl.u32 %v4293, 16
      %v5503 = vrot.slane %v5501, 1
      %v5504 = vshll.u32 %v4293, 16
      %v5506 = vrot.slane %v5504, 2
      %v5507 = vor.u32 %v5503, %v5506
      %v5508 = vsel %vm5419, %v5498, %v5507
      %v5510 = vshrl.u32 %v4294, 16
      %v5512 = vrot.slane %v5510, 1
      %v5513 = vshll.u32 %v4294, 16
      %v5515 = vrot.slane %v5513, 2
      %v5516 = vor.u32 %v5512, %v5515
      %v5517 = vsel %vm5419, %v5507, %v5516
      %v5519 = vshrl.u32 %v4295, 16
      %v5521 = vrot.slane %v5519, 1
      %v5522 = vshll.u32 %v4295, 16
      %v5524 = vrot.slane %v5522, 2
      %v5525 = vor.u32 %v5521, %v5524
      %v5526 = vsel %vm5419, %v5516, %v5525
      %v5528 = vshrl.u32 %v4296, 16
      %v5530 = vrot.slane %v5528, 1
      %v5531 = vshll.u32 %v4296, 16
      %v5533 = vrot.slane %v5531, 2
      %v5534 = vor.u32 %v5530, %v5533
      %v5535 = vsel %vm5419, %v5525, %v5534
      %v5537 = vshrl.u32 %v4297, 16
      %v5539 = vrot.slane %v5537, 1
      %v5540 = vshll.u32 %v4297, 16
      %v5542 = vrot.slane %v5540, 2
      %v5543 = vor.u32 %v5539, %v5542
      %v5544 = vsel %vm5419, %v5534, %v5543
      %v5546 = vshrl.u32 %v4298, 16
      %v5548 = vrot.slane %v5546, 1
      %v5549 = vshll.u32 %v4298, 16
      %v5551 = vrot.slane %v5549, 2
      %v5552 = vor.u32 %v5548, %v5551
      %v5553 = vsel %vm5419, %v5543, %v5552
      %v5555 = vshrl.u32 %v4299, 16
      %v5557 = vrot.slane %v5555, 1
      %v5558 = vshll.u32 %v4299, 16
      %v5560 = vrot.slane %v5558, 2
      %v5561 = vor.u32 %v5557, %v5560
      %v5562 = vsel %vm5419, %v5552, %v5561
      %v5564 = vshrl.u32 %v4300, 16
      %v5566 = vrot.slane %v5564, 1
      %v5567 = vshll.u32 %v4300, 16
      %v5569 = vrot.slane %v5567, 2
      %v5570 = vor.u32 %v5566, %v5569
      %v5571 = vsel %vm5419, %v5561, %v5570
      %v5573 = vshrl.u32 %v4301, 16
      %v5575 = vrot.slane %v5573, 1
      %v5576 = vshll.u32 %v4301, 16
      %v5578 = vrot.slane %v5576, 2
      %v5579 = vor.u32 %v5575, %v5578
      %v5580 = vsel %vm5419, %v5570, %v5579
      %v5582 = vshrl.u32 %v4302, 16
      %v5584 = vrot.slane %v5582, 1
      %v5585 = vshll.u32 %v4302, 16
      %v5587 = vrot.slane %v5585, 2
      %v5588 = vor.u32 %v5584, %v5587
      %v5589 = vsel %vm5419, %v5579, %v5588
      %v5591 = vshrl.u32 %v4303, 16
      %v5593 = vrot.slane %v5591, 1
      %v5594 = vshll.u32 %v4303, 16
      %v5596 = vrot.slane %v5594, 2
      %v5597 = vor.u32 %v5593, %v5596
      %v5598 = vsel %vm5419, %v5588, %v5597
      %v5600 = vshrl.u32 %v4304, 16
      %v5602 = vrot.slane %v5600, 1
      %v5603 = vshll.u32 %v4304, 16
      %v5605 = vrot.slane %v5603, 2
      %v5606 = vor.u32 %v5602, %v5605
      %v5607 = vsel %vm5419, %v5597, %v5606
      %v5609 = vshrl.u32 %v4305, 16
      %v5611 = vrot.slane %v5609, 1
      %v5612 = vshll.u32 %v4305, 16
      %v5614 = vrot.slane %v5612, 2
      %v5615 = vor.u32 %v5611, %v5614
      %v5616 = vsel %vm5419, %v5606, %v5615
      %v5618 = vshrl.u32 %v4306, 16
      %v5620 = vrot.slane %v5618, 1
      %v5621 = vshll.u32 %v4306, 16
      %v5623 = vrot.slane %v5621, 2
      %v5624 = vor.u32 %v5620, %v5623
      %v5625 = vsel %vm5419, %v5615, %v5624
      %v5627 = vshrl.u32 %v4307, 16
      %v5629 = vrot.slane %v5627, 1
      %v5630 = vshll.u32 %v4307, 16
      %v5632 = vrot.slane %v5630, 2
      %v5633 = vor.u32 %v5629, %v5632
      %v5634 = vsel %vm5419, %v5624, %v5633
      %v5636 = vshrl.u32 %v4308, 16
      %v5638 = vrot.slane %v5636, 1
      %v5639 = vshll.u32 %v4308, 16
      %v5641 = vrot.slane %v5639, 2
      %v5642 = vor.u32 %v5638, %v5641
      %v5643 = vsel %vm5419, %v5633, %v5642
      %v5645 = vshrl.u32 %v4309, 16
      %v5647 = vrot.slane %v5645, 1
      %v5648 = vshll.u32 %v4309, 16
      %v5650 = vrot.slane %v5648, 2
      %v5651 = vor.u32 %v5647, %v5650
      %v5652 = vsel %vm5419, %v5642, %v5651
      %v5654 = vshrl.u32 %v4310, 16
      %v5656 = vrot.slane %v5654, 1
      %v5657 = vshll.u32 %v4310, 16
      %v5659 = vrot.slane %v5657, 2
      %v5660 = vor.u32 %v5656, %v5659
      %v5661 = vsel %vm5419, %v5651, %v5660
      %v5663 = vshrl.u32 %v4311, 16
      %v5665 = vrot.slane %v5663, 1
      %v5666 = vshll.u32 %v4311, 16
      %v5668 = vrot.slane %v5666, 2
      %v5669 = vor.u32 %v5665, %v5668
      %v5670 = vsel %vm5419, %v5660, %v5669
      %v5672 = vshrl.u32 %v4312, 16
      %v5674 = vrot.slane %v5672, 1
      %v5675 = vshll.u32 %v4312, 16
      %v5677 = vrot.slane %v5675, 2
      %v5678 = vor.u32 %v5674, %v5677
      %v5679 = vsel %vm5419, %v5669, %v5678
      %v5681 = vshrl.u32 %v4313, 16
      %v5683 = vrot.slane %v5681, 1
      %v5684 = vshll.u32 %v4313, 16
      %v5686 = vrot.slane %v5684, 2
      %v5687 = vor.u32 %v5683, %v5686
      %v5688 = vsel %vm5419, %v5678, %v5687
      %v5690 = vshrl.u32 %v4314, 16
      %v5692 = vrot.slane %v5690, 1
      %v5693 = vshll.u32 %v4314, 16
      %v5695 = vrot.slane %v5693, 2
      %v5696 = vor.u32 %v5692, %v5695
      %v5697 = vsel %vm5419, %v5687, %v5696
      %v5699 = vshrl.u32 %v4315, 16
      %v5701 = vrot.slane %v5699, 1
      %v5702 = vshll.u32 %v4315, 16
      %v5704 = vrot.slane %v5702, 2
      %v5705 = vor.u32 %v5701, %v5704
      %v5706 = vsel %vm5419, %v5696, %v5705
      %v5708 = vshrl.u32 %v4316, 16
      %v5710 = vrot.slane %v5708, 1
      %v5711 = vshll.u32 %v4316, 16
      %v5713 = vrot.slane %v5711, 2
      %v5714 = vor.u32 %v5710, %v5713
      %v5715 = vsel %vm5419, %v5705, %v5714
      %v5717 = vshrl.u32 %v4317, 16
      %v5719 = vrot.slane %v5717, 1
      %v5720 = vshll.u32 %v4317, 16
      %v5722 = vrot.slane %v5720, 2
      %v5723 = vor.u32 %v5719, %v5722
      %v5724 = vsel %vm5419, %v5714, %v5723
      %v5726 = vshrl.u32 %v4318, 16
      %v5728 = vrot.slane %v5726, 1
      %v5729 = vshll.u32 %v4318, 16
      %v5731 = vrot.slane %v5729, 2
      %v5732 = vor.u32 %v5728, %v5731
      %v5733 = vsel %vm5419, %v5723, %v5732
      %v5735 = vshrl.u32 %v4319, 16
      %v5737 = vrot.slane %v5735, 1
      %v5738 = vshll.u32 %v4319, 16
      %v5740 = vrot.slane %v5738, 2
      %v5741 = vor.u32 %v5737, %v5740
      %v5742 = vsel %vm5419, %v5732, %v5741
      %v5744 = vshrl.u32 %v4320, 16
      %v5746 = vrot.slane %v5744, 1
      %v5747 = vshll.u32 %v4320, 16
      %v5749 = vrot.slane %v5747, 2
      %v5750 = vor.u32 %v5746, %v5749
      %v5751 = vsel %vm5419, %v5741, %v5750
      %v5753 = vshrl.u32 %v4321, 16
      %v5755 = vrot.slane %v5753, 1
      %v5756 = vshll.u32 %v4321, 16
      %v5758 = vrot.slane %v5756, 2
      %v5759 = vor.u32 %v5755, %v5758
      %v5760 = vsel %vm5419, %v5750, %v5759
      %v5762 = vshrl.u32 %v4322, 16
      %v5764 = vrot.slane %v5762, 1
      %v5765 = vshll.u32 %v4322, 16
      %v5767 = vrot.slane %v5765, 2
      %v5768 = vor.u32 %v5764, %v5767
      %v5769 = vsel %vm5419, %v5759, %v5768
      %v5771 = vshrl.u32 %v4323, 16
      %v5773 = vrot.slane %v5771, 1
      %v5774 = vshll.u32 %v4323, 16
      %v5776 = vrot.slane %v5774, 2
      %v5777 = vor.u32 %v5773, %v5776
      %v5778 = vsel %vm5419, %v5768, %v5777
      %v5780 = vshrl.u32 %v4324, 16
      %v5782 = vrot.slane %v5780, 1
      %v5783 = vshll.u32 %v4324, 16
      %v5785 = vrot.slane %v5783, 2
      %v5786 = vor.u32 %v5782, %v5785
      %v5787 = vsel %vm5419, %v5777, %v5786
      %v5789 = vshrl.u32 %v4325, 16
      %v5791 = vrot.slane %v5789, 1
      %v5792 = vshll.u32 %v4325, 16
      %v5794 = vrot.slane %v5792, 2
      %v5795 = vor.u32 %v5791, %v5794
      %v5796 = vsel %vm5419, %v5786, %v5795
      %v5798 = vshrl.u32 %v4326, 16
      %v5800 = vrot.slane %v5798, 1
      %v5801 = vshll.u32 %v4326, 16
      %v5803 = vrot.slane %v5801, 2
      %v5804 = vor.u32 %v5800, %v5803
      %v5805 = vsel %vm5419, %v5795, %v5804
      %v5807 = vshrl.u32 %v4327, 16
      %v5809 = vrot.slane %v5807, 1
      %v5810 = vshll.u32 %v4327, 16
      %v5812 = vrot.slane %v5810, 2
      %v5813 = vor.u32 %v5809, %v5812
      %v5814 = vsel %vm5419, %v5804, %v5813
      %v5816 = vshrl.u32 %v4328, 16
      %v5818 = vrot.slane %v5816, 1
      %v5819 = vshll.u32 %v4328, 16
      %v5821 = vrot.slane %v5819, 2
      %v5822 = vor.u32 %v5818, %v5821
      %v5823 = vsel %vm5419, %v5813, %v5822
      %v5825 = vshrl.u32 %v4329, 16
      %v5827 = vrot.slane %v5825, 1
      %v5828 = vshll.u32 %v4329, 16
      %v5830 = vrot.slane %v5828, 2
      %v5831 = vor.u32 %v5827, %v5830
      %v5832 = vsel %vm5419, %v5822, %v5831
      %v5834 = vshrl.u32 %v4330, 16
      %v5836 = vrot.slane %v5834, 1
      %v5837 = vshll.u32 %v4330, 16
      %v5839 = vrot.slane %v5837, 2
      %v5840 = vor.u32 %v5836, %v5839
      %v5841 = vsel %vm5419, %v5831, %v5840
      %v5843 = vshrl.u32 %v4331, 16
      %v5845 = vrot.slane %v5843, 1
      %v5846 = vshll.u32 %v4331, 16
      %v5848 = vrot.slane %v5846, 2
      %v5849 = vor.u32 %v5845, %v5848
      %v5850 = vsel %vm5419, %v5840, %v5849
      %v5852 = vshrl.u32 %v4332, 16
      %v5854 = vrot.slane %v5852, 1
      %v5855 = vshll.u32 %v4332, 16
      %v5857 = vrot.slane %v5855, 2
      %v5858 = vor.u32 %v5854, %v5857
      %v5859 = vsel %vm5419, %v5849, %v5858
      %v5861 = vshrl.u32 %v4333, 16
      %v5863 = vrot.slane %v5861, 1
      %v5864 = vshll.u32 %v4333, 16
      %v5866 = vrot.slane %v5864, 2
      %v5867 = vor.u32 %v5863, %v5866
      %v5868 = vsel %vm5419, %v5858, %v5867
      %v5870 = vshrl.u32 %v4334, 16
      %v5872 = vrot.slane %v5870, 1
      %v5873 = vshll.u32 %v4334, 16
      %v5875 = vrot.slane %v5873, 2
      %v5876 = vor.u32 %v5872, %v5875
      %v5877 = vsel %vm5419, %v5867, %v5876
      %v5879 = vshrl.u32 %v4335, 16
      %v5881 = vrot.slane %v5879, 1
      %v5882 = vshll.u32 %v4335, 16
      %v5884 = vrot.slane %v5882, 2
      %v5885 = vor.u32 %v5881, %v5884
      %v5886 = vsel %vm5419, %v5876, %v5885
      %v5888 = vshrl.u32 %v4336, 16
      %v5890 = vrot.slane %v5888, 1
      %v5891 = vshll.u32 %v4336, 16
      %v5893 = vrot.slane %v5891, 2
      %v5894 = vor.u32 %v5890, %v5893
      %v5895 = vsel %vm5419, %v5885, %v5894
      %v5897 = vshrl.u32 %v4337, 16
      %v5899 = vrot.slane %v5897, 1
      %v5900 = vshll.u32 %v4337, 16
      %v5902 = vrot.slane %v5900, 2
      %v5903 = vor.u32 %v5899, %v5902
      %v5904 = vsel %vm5419, %v5894, %v5903
      %v5906 = vshrl.u32 %v4338, 16
      %v5908 = vrot.slane %v5906, 1
      %v5909 = vshll.u32 %v4338, 16
      %v5911 = vrot.slane %v5909, 2
      %v5912 = vor.u32 %v5908, %v5911
      %v5913 = vsel %vm5419, %v5903, %v5912
      %v5915 = vshrl.u32 %v4339, 16
      %v5917 = vrot.slane %v5915, 1
      %v5918 = vshll.u32 %v4339, 16
      %v5920 = vrot.slane %v5918, 2
      %v5921 = vor.u32 %v5917, %v5920
      %v5922 = vsel %vm5419, %v5912, %v5921
      %v5924 = vshrl.u32 %v4340, 16
      %v5926 = vrot.slane %v5924, 1
      %v5927 = vshll.u32 %v4340, 16
      %v5929 = vrot.slane %v5927, 2
      %v5930 = vor.u32 %v5926, %v5929
      %v5931 = vsel %vm5419, %v5921, %v5930
      %v5933 = vshrl.u32 %v4341, 16
      %v5935 = vrot.slane %v5933, 1
      %v5936 = vshll.u32 %v4341, 16
      %v5938 = vrot.slane %v5936, 2
      %v5939 = vor.u32 %v5935, %v5938
      %v5940 = vsel %vm5419, %v5930, %v5939
      %v5942 = vshrl.u32 %v4342, 16
      %v5944 = vrot.slane %v5942, 1
      %v5945 = vshll.u32 %v4342, 16
      %v5947 = vrot.slane %v5945, 2
      %v5948 = vor.u32 %v5944, %v5947
      %v5949 = vsel %vm5419, %v5939, %v5948
      %v5951 = vshrl.u32 %v4343, 16
      %v5953 = vrot.slane %v5951, 1
      %v5954 = vshll.u32 %v4343, 16
      %v5956 = vrot.slane %v5954, 2
      %v5957 = vor.u32 %v5953, %v5956
      %v5958 = vsel %vm5419, %v5948, %v5957
      %v5960 = vshrl.u32 %v4344, 16
      %v5962 = vrot.slane %v5960, 1
      %v5963 = vshll.u32 %v4344, 16
      %v5965 = vrot.slane %v5963, 2
      %v5966 = vor.u32 %v5962, %v5965
      %v5967 = vsel %vm5419, %v5957, %v5966
      %v5969 = vshrl.u32 %v4345, 16
      %v5971 = vrot.slane %v5969, 1
      %v5972 = vshll.u32 %v4345, 16
      %v5974 = vrot.slane %v5972, 2
      %v5975 = vor.u32 %v5971, %v5974
      %v5976 = vsel %vm5419, %v5966, %v5975
      %v5978 = vshrl.u32 %v4346, 16
      %v5980 = vrot.slane %v5978, 1
      %v5981 = vshll.u32 %v4346, 16
      %v5983 = vrot.slane %v5981, 2
      %v5984 = vor.u32 %v5980, %v5983
      %v5985 = vsel %vm5419, %v5975, %v5984
      %v5987 = vshrl.u32 %v4347, 16
      %v5989 = vrot.slane %v5987, 1
      %v5990 = vshll.u32 %v4347, 16
      %v5992 = vrot.slane %v5990, 2
      %v5993 = vor.u32 %v5989, %v5992
      %v5994 = vsel %vm5419, %v5984, %v5993
      %v5996 = vshrl.u32 %v4348, 16
      %v5998 = vrot.slane %v5996, 1
      %v5999 = vshll.u32 %v4348, 16
      %v6001 = vrot.slane %v5999, 2
      %v6002 = vor.u32 %v5998, %v6001
      %v6003 = vsel %vm5419, %v5993, %v6002
      %v6005 = vshrl.u32 %v4349, 16
      %v6007 = vrot.slane %v6005, 1
      %v6008 = vshll.u32 %v4349, 16
      %v6010 = vrot.slane %v6008, 2
      %v6011 = vor.u32 %v6007, %v6010
      %v6012 = vsel %vm5419, %v6002, %v6011
      %v6014 = vshrl.u32 %v4350, 16
      %v6016 = vrot.slane %v6014, 1
      %v6017 = vshll.u32 %v4350, 16
      %v6019 = vrot.slane %v6017, 2
      %v6020 = vor.u32 %v6016, %v6019
      %v6021 = vsel %vm5419, %v6011, %v6020
      %v6023 = vshrl.u32 %v4351, 16
      %v6025 = vrot.slane %v6023, 1
      %v6026 = vshll.u32 %v4351, 16
      %v6028 = vrot.slane %v6026, 2
      %v6029 = vor.u32 %v6025, %v6028
      %v6030 = vsel %vm5419, %v6020, %v6029
      %v6032 = vshrl.u32 %v5418, 16
      %v6034 = vrot.slane %v6032, 1
      %v6035 = vshll.u32 %v5418, 16
      %v6037 = vrot.slane %v6035, 2
      %v6038 = vor.u32 %v6034, %v6037
      %v6039 = vsel %vm5419, %v6029, %v6038
      %v6042 = vunpack.c.l.b16 %v5414
      %v6043 = vunpack.c.l.b16 %v5415
      %v6044 = vpack.c.b16 %v6043, %v6042
      %v6047 = vsel %vm1303, %v5436, 0
      %v6050 = vsel %vm1303, %v5445, 0
      %v6053 = vsel %vm1303, %v5454, 0
      %v6056 = vsel %vm1303, %v5463, 0
      %v6059 = vsel %vm1303, %v5472, 0
      %v6062 = vsel %vm1303, %v5481, 0
      %v6065 = vsel %vm1303, %v5490, 0
      %v6068 = vsel %vm1303, %v5499, 0
      %v6071 = vsel %vm1303, %v5508, 0
      %v6074 = vsel %vm1303, %v5517, 0
      %v6077 = vsel %vm1303, %v5526, 0
      %v6080 = vsel %vm1303, %v5535, 0
      %v6083 = vsel %vm1303, %v5544, 0
      %v6086 = vsel %vm1303, %v5553, 0
      %v6089 = vsel %vm1303, %v5562, 0
      %v6092 = vsel %vm1303, %v5571, 0
      %v6095 = vsel %vm1303, %v5580, 0
      %v6098 = vsel %vm1303, %v5589, 0
      %v6101 = vsel %vm1303, %v5598, 0
      %v6104 = vsel %vm1303, %v5607, 0
      %v6107 = vsel %vm1303, %v5616, 0
      %v6110 = vsel %vm1303, %v5625, 0
      %v6113 = vsel %vm1303, %v5634, 0
      %v6116 = vsel %vm1303, %v5643, 0
      %v6119 = vsel %vm1303, %v5652, 0
      %v6122 = vsel %vm1303, %v5661, 0
      %v6125 = vsel %vm1303, %v5670, 0
      %v6128 = vsel %vm1303, %v5679, 0
      %v6131 = vsel %vm1303, %v5688, 0
      %v6134 = vsel %vm1303, %v5697, 0
      %v6137 = vsel %vm1303, %v5706, 0
      %v6140 = vsel %vm1303, %v5715, 0
      %v6143 = vsel %vm1303, %v5724, 0
      %v6146 = vsel %vm1303, %v5733, 0
      %v6149 = vsel %vm1303, %v5742, 0
      %v6152 = vsel %vm1303, %v5751, 0
      %v6155 = vsel %vm1303, %v5760, 0
      %v6158 = vsel %vm1303, %v5769, 0
      %v6161 = vsel %vm1303, %v5778, 0
      %v6164 = vsel %vm1303, %v5787, 0
      %v6167 = vsel %vm1303, %v5796, 0
      %v6170 = vsel %vm1303, %v5805, 0
      %v6173 = vsel %vm1303, %v5814, 0
      %v6176 = vsel %vm1303, %v5823, 0
      %v6179 = vsel %vm1303, %v5832, 0
      %v6182 = vsel %vm1303, %v5841, 0
      %v6185 = vsel %vm1303, %v5850, 0
      %v6188 = vsel %vm1303, %v5859, 0
      %v6191 = vsel %vm1303, %v5868, 0
      %v6194 = vsel %vm1303, %v5877, 0
      %v6197 = vsel %vm1303, %v5886, 0
      %v6200 = vsel %vm1303, %v5895, 0
      %v6203 = vsel %vm1303, %v5904, 0
      %v6206 = vsel %vm1303, %v5913, 0
      %v6209 = vsel %vm1303, %v5922, 0
      %v6212 = vsel %vm1303, %v5931, 0
      %v6215 = vsel %vm1303, %v5940, 0
      %v6218 = vsel %vm1303, %v5949, 0
      %v6221 = vsel %vm1303, %v5958, 0
      %v6224 = vsel %vm1303, %v5967, 0
      %v6227 = vsel %vm1303, %v5976, 0
      %v6230 = vsel %vm1303, %v5985, 0
      %v6233 = vsel %vm1303, %v5994, 0
      %v6236 = vsel %vm1303, %v6003, 0
      %v6239 = vsel %vm1303, %v6012, 0
      %v6242 = vsel %vm1303, %v6021, 0
      %v6245 = vsel %vm1303, %v6030, 0
      %v6248 = vsel %vm1303, %v6039, 0
      %6250 = vmatprep.subr.bf16.mxu0 0
      %6251 = vmatpush1.bf16.msra.mxu0 %v6044
      %6252 = vmatprep.subr.bf16.mxu0 0
      %6253 = vmatpush1.bf16.msra.mxu0 0
      %6254 = vmatprep.subr.bf16.mxu0 0
      %6255 = vmatpush1.bf16.msra.mxu0 0
      %6256 = vmatprep.subr.bf16.mxu0 0
      %6257 = vmatpush1.bf16.msra.mxu0 0
      %6258 = vmatprep.subr.bf16.mxu0 0
      %6259 = vmatpush1.bf16.msra.mxu0 0
      %6260 = vmatprep.subr.bf16.mxu0 0
      %6261 = vmatpush1.bf16.msra.mxu0 0
      %6262 = vmatprep.subr.bf16.mxu0 0
      %6263 = vmatpush1.bf16.msra.mxu0 0
      %6264 = vmatprep.subr.bf16.mxu0 0
      %6265 = vmatpush1.bf16.msra.mxu0 0
      %6266 = vmatprep.subr.bf16.mxu0 0
      %6267 = vmatpush1.bf16.msra.mxu0 0
      %6268 = vmatprep.subr.bf16.mxu0 0
      %6269 = vmatpush1.bf16.msra.mxu0 0
      %6270 = vmatprep.subr.bf16.mxu0 0
      %6271 = vmatpush1.bf16.msra.mxu0 0
      %6272 = vmatprep.subr.bf16.mxu0 0
      %6273 = vmatpush1.bf16.msra.mxu0 0
      %6274 = vmatprep.subr.bf16.mxu0 0
      %6275 = vmatpush1.bf16.msra.mxu0 0
      %6276 = vmatprep.subr.bf16.mxu0 0
      %6277 = vmatpush1.bf16.msra.mxu0 0
      %6278 = vmatprep.subr.bf16.mxu0 0
      %6279 = vmatpush1.bf16.msra.mxu0 0
      %6280 = vmatprep.subr.bf16.mxu0 0
      %6281 = vmatpush1.bf16.msra.mxu0 0
      %6282 = vmatprep.mubr.bf16.mxu0 0
      %6283 = vmatmul.mubr.bf16.gmra.mrb[0].mxu0 %v6047
      %v6284 = vpop.f32.mrb[0].mxu0
      %v6285 = vadd.f32 0.0, %v6284
      %v6286 = vpop.f32.mrb[0].mxu0
      %v6287 = vpop.f32.mrb[0].mxu0
      %v6288 = vadd.f32 0.0, %v6287
      %v6289 = vpop.f32.mrb[0].mxu0
      %6290 = vmatprep.mubr.bf16.mxu0 0
      %6291 = vmatmul.mubr.bf16.gmra.mrb[0].mxu0 %v6050
      %v6292 = vpop.f32.mrb[0].mxu0
      %v6293 = vadd.f32 0.0, %v6292
      %v6294 = vpop.f32.mrb[0].mxu0
      %v6295 = vpop.f32.mrb[0].mxu0
      %v6296 = vadd.f32 0.0, %v6295
      %v6297 = vpop.f32.mrb[0].mxu0
      %6298 = vmatprep.mubr.bf16.mxu0 0
      %6299 = vmatmul.mubr.bf16.gmra.mrb[0].mxu0 %v6053
      %v6300 = vpop.f32.mrb[0].mxu0
      %v6301 = vadd.f32 0.0, %v6300
      %v6302 = vpop.f32.mrb[0].mxu0
      %v6303 = vpop.f32.mrb[0].mxu0
      %v6304 = vadd.f32 0.0, %v6303
      %v6305 = vpop.f32.mrb[0].mxu0
      %6306 = vmatprep.mubr.bf16.mxu0 0
      %6307 = vmatmul.mubr.bf16.gmra.mrb[0].mxu0 %v6056
      %v6308 = vpop.f32.mrb[0].mxu0
      %v6309 = vadd.f32 0.0, %v6308
      %v6310 = vpop.f32.mrb[0].mxu0
      %v6311 = vpop.f32.mrb[0].mxu0
      %v6312 = vadd.f32 0.0, %v6311
      %v6313 = vpop.f32.mrb[0].mxu0
      %6314 = vmatprep.mubr.bf16.mxu0 0
      %6315 = vmatmul.mubr.bf16.gmra.mrb[0].mxu0 %v6059
      %v6316 = vpop.f32.mrb[0].mxu0
      %v6317 = vadd.f32 0.0, %v6316
      %v6318 = vpop.f32.mrb[0].mxu0
      %v6319 = vpop.f32.mrb[0].mxu0
      %v6320 = vadd.f32 0.0, %v6319
      %v6321 = vpop.f32.mrb[0].mxu0
      %6322 = vmatprep.mubr.bf16.mxu0 0
      %6323 = vmatmul.mubr.bf16.gmra.mrb[0].mxu0 %v6062
      %v6324 = vpop.f32.mrb[0].mxu0
      %v6325 = vadd.f32 0.0, %v6324
      %v6326 = vpop.f32.mrb[0].mxu0
      %v6327 = vpop.f32.mrb[0].mxu0
      %v6328 = vadd.f32 0.0, %v6327
      %v6329 = vpop.f32.mrb[0].mxu0
      %6330 = vmatprep.mubr.bf16.mxu0 0
      %6331 = vmatmul.mubr.bf16.gmra.mrb[0].mxu0 %v6065
      %v6332 = vpop.f32.mrb[0].mxu0
      %v6333 = vadd.f32 0.0, %v6332
      %v6334 = vpop.f32.mrb[0].mxu0
      %v6335 = vpop.f32.mrb[0].mxu0
      %v6336 = vadd.f32 0.0, %v6335
      %v6337 = vpop.f32.mrb[0].mxu0
      %6338 = vmatprep.mubr.bf16.mxu0 0
      %6339 = vmatmul.mubr.bf16.gmra.mrb[0].mxu0 %v6068
      %v6340 = vpop.f32.mrb[0].mxu0
      %v6341 = vadd.f32 0.0, %v6340
      %v6342 = vpop.f32.mrb[0].mxu0
      %v6343 = vpop.f32.mrb[0].mxu0
      %v6344 = vadd.f32 0.0, %v6343
      %v6345 = vpop.f32.mrb[0].mxu0
      %6346 = vmatprep.mubr.bf16.mxu0 0
      %6347 = vmatmul.mubr.bf16.gmra.mrb[0].mxu0 %v6071
      %v6348 = vpop.f32.mrb[0].mxu0
      %v6349 = vadd.f32 0.0, %v6348
      %v6350 = vpop.f32.mrb[0].mxu0
      %v6351 = vpop.f32.mrb[0].mxu0
      %v6352 = vadd.f32 0.0, %v6351
      %v6353 = vpop.f32.mrb[0].mxu0
      %6354 = vmatprep.mubr.bf16.mxu0 0
      %6355 = vmatmul.mubr.bf16.gmra.mrb[0].mxu0 %v6074
      %v6356 = vpop.f32.mrb[0].mxu0
      %v6357 = vadd.f32 0.0, %v6356
      %v6358 = vpop.f32.mrb[0].mxu0
      %v6359 = vpop.f32.mrb[0].mxu0
      %v6360 = vadd.f32 0.0, %v6359
      %v6361 = vpop.f32.mrb[0].mxu0
      %6362 = vmatprep.mubr.bf16.mxu0 0
      %6363 = vmatmul.mubr.bf16.gmra.mrb[0].mxu0 %v6077
      %v6364 = vpop.f32.mrb[0].mxu0
      %v6365 = vadd.f32 0.0, %v6364
      %v6366 = vpop.f32.mrb[0].mxu0
      %v6367 = vpop.f32.mrb[0].mxu0
      %v6368 = vadd.f32 0.0, %v6367
      %v6369 = vpop.f32.mrb[0].mxu0
      %6370 = vmatprep.mubr.bf16.mxu0 0
      %6371 = vmatmul.mubr.bf16.gmra.mrb[0].mxu0 %v6080
      %v6372 = vpop.f32.mrb[0].mxu0
      %v6373 = vadd.f32 0.0, %v6372
      %v6374 = vpop.f32.mrb[0].mxu0
      %v6375 = vpop.f32.mrb[0].mxu0
      %v6376 = vadd.f32 0.0, %v6375
      %v6377 = vpop.f32.mrb[0].mxu0
      %6378 = vmatprep.mubr.bf16.mxu0 0
      %6379 = vmatmul.mubr.bf16.gmra.mrb[0].mxu0 %v6083
      %v6380 = vpop.f32.mrb[0].mxu0
      %v6381 = vadd.f32 0.0, %v6380
      %v6382 = vpop.f32.mrb[0].mxu0
      %v6383 = vpop.f32.mrb[0].mxu0
      %v6384 = vadd.f32 0.0, %v6383
      %v6385 = vpop.f32.mrb[0].mxu0
      %6386 = vmatprep.mubr.bf16.mxu0 0
      %6387 = vmatmul.mubr.bf16.gmra.mrb[0].mxu0 %v6086
      %v6388 = vpop.f32.mrb[0].mxu0
      %v6389 = vadd.f32 0.0, %v6388
      %v6390 = vpop.f32.mrb[0].mxu0
      %v6391 = vpop.f32.mrb[0].mxu0
      %v6392 = vadd.f32 0.0, %v6391
      %v6393 = vpop.f32.mrb[0].mxu0
      %6394 = vmatprep.mubr.bf16.mxu0 0
      %6395 = vmatmul.mubr.bf16.gmra.mrb[0].mxu0 %v6089
      %v6396 = vpop.f32.mrb[0].mxu0
      %v6397 = vadd.f32 0.0, %v6396
      %v6398 = vpop.f32.mrb[0].mxu0
      %v6399 = vpop.f32.mrb[0].mxu0
      %v6400 = vadd.f32 0.0, %v6399
      %v6401 = vpop.f32.mrb[0].mxu0
      %6402 = vmatprep.mubr.bf16.mxu0 0
      %6403 = vmatmul.mubr.bf16.gmra.mrb[0].mxu0 %v6092
      %v6404 = vpop.f32.mrb[0].mxu0
      %v6405 = vadd.f32 0.0, %v6404
      %v6406 = vpop.f32.mrb[0].mxu0
      %v6407 = vpop.f32.mrb[0].mxu0
      %v6408 = vadd.f32 0.0, %v6407
      %v6409 = vpop.f32.mrb[0].mxu0
      %6410 = vmatprep.mubr.bf16.mxu0 0
      %6411 = vmatmul.mubr.bf16.gmra.mrb[0].mxu0 %v6095
      %v6412 = vpop.f32.mrb[0].mxu0
      %v6413 = vadd.f32 0.0, %v6412
      %v6414 = vpop.f32.mrb[0].mxu0
      %v6415 = vpop.f32.mrb[0].mxu0
      %v6416 = vadd.f32 0.0, %v6415
      %v6417 = vpop.f32.mrb[0].mxu0
      %6418 = vmatprep.mubr.bf16.mxu0 0
      %6419 = vmatmul.mubr.bf16.gmra.mrb[0].mxu0 %v6098
      %v6420 = vpop.f32.mrb[0].mxu0
      %v6421 = vadd.f32 0.0, %v6420
      %v6422 = vpop.f32.mrb[0].mxu0
      %v6423 = vpop.f32.mrb[0].mxu0
      %v6424 = vadd.f32 0.0, %v6423
      %v6425 = vpop.f32.mrb[0].mxu0
      %6426 = vmatprep.mubr.bf16.mxu0 0
      %6427 = vmatmul.mubr.bf16.gmra.mrb[0].mxu0 %v6101
      %v6428 = vpop.f32.mrb[0].mxu0
      %v6429 = vadd.f32 0.0, %v6428
      %v6430 = vpop.f32.mrb[0].mxu0
      %v6431 = vpop.f32.mrb[0].mxu0
      %v6432 = vadd.f32 0.0, %v6431
      %v6433 = vpop.f32.mrb[0].mxu0
      %6434 = vmatprep.mubr.bf16.mxu0 0
      %6435 = vmatmul.mubr.bf16.gmra.mrb[0].mxu0 %v6104
      %v6436 = vpop.f32.mrb[0].mxu0
      %v6437 = vadd.f32 0.0, %v6436
      %v6438 = vpop.f32.mrb[0].mxu0
      %v6439 = vpop.f32.mrb[0].mxu0
      %v6440 = vadd.f32 0.0, %v6439
      %v6441 = vpop.f32.mrb[0].mxu0
      %6442 = vmatprep.mubr.bf16.mxu0 0
      %6443 = vmatmul.mubr.bf16.gmra.mrb[0].mxu0 %v6107
      %v6444 = vpop.f32.mrb[0].mxu0
      %v6445 = vadd.f32 0.0, %v6444
      %v6446 = vpop.f32.mrb[0].mxu0
      %v6447 = vpop.f32.mrb[0].mxu0
      %v6448 = vadd.f32 0.0, %v6447
      %v6449 = vpop.f32.mrb[0].mxu0
      %6450 = vmatprep.mubr.bf16.mxu0 0
      %6451 = vmatmul.mubr.bf16.gmra.mrb[0].mxu0 %v6110
      %v6452 = vpop.f32.mrb[0].mxu0
      %v6453 = vadd.f32 0.0, %v6452
      %v6454 = vpop.f32.mrb[0].mxu0
      %v6455 = vpop.f32.mrb[0].mxu0
      %v6456 = vadd.f32 0.0, %v6455
      %v6457 = vpop.f32.mrb[0].mxu0
      %6458 = vmatprep.mubr.bf16.mxu0 0
      %6459 = vmatmul.mubr.bf16.gmra.mrb[0].mxu0 %v6113
      %v6460 = vpop.f32.mrb[0].mxu0
      %v6461 = vadd.f32 0.0, %v6460
      %v6462 = vpop.f32.mrb[0].mxu0
      %v6463 = vpop.f32.mrb[0].mxu0
      %v6464 = vadd.f32 0.0, %v6463
      %v6465 = vpop.f32.mrb[0].mxu0
      %6466 = vmatprep.mubr.bf16.mxu0 0
      %6467 = vmatmul.mubr.bf16.gmra.mrb[0].mxu0 %v6116
      %v6468 = vpop.f32.mrb[0].mxu0
      %v6469 = vadd.f32 0.0, %v6468
      %v6470 = vpop.f32.mrb[0].mxu0
      %v6471 = vpop.f32.mrb[0].mxu0
      %v6472 = vadd.f32 0.0, %v6471
      %v6473 = vpop.f32.mrb[0].mxu0
      %6474 = vmatprep.mubr.bf16.mxu0 0
      %6475 = vmatmul.mubr.bf16.gmra.mrb[0].mxu0 %v6119
      %v6476 = vpop.f32.mrb[0].mxu0
      %v6477 = vadd.f32 0.0, %v6476
      %v6478 = vpop.f32.mrb[0].mxu0
      %v6479 = vpop.f32.mrb[0].mxu0
      %v6480 = vadd.f32 0.0, %v6479
      %v6481 = vpop.f32.mrb[0].mxu0
      %6482 = vmatprep.mubr.bf16.mxu0 0
      %6483 = vmatmul.mubr.bf16.gmra.mrb[0].mxu0 %v6122
      %v6484 = vpop.f32.mrb[0].mxu0
      %v6485 = vadd.f32 0.0, %v6484
      %v6486 = vpop.f32.mrb[0].mxu0
      %v6487 = vpop.f32.mrb[0].mxu0
      %v6488 = vadd.f32 0.0, %v6487
      %v6489 = vpop.f32.mrb[0].mxu0
      %6490 = vmatprep.mubr.bf16.mxu0 0
      %6491 = vmatmul.mubr.bf16.gmra.mrb[0].mxu0 %v6125
      %v6492 = vpop.f32.mrb[0].mxu0
      %v6493 = vadd.f32 0.0, %v6492
      %v6494 = vpop.f32.mrb[0].mxu0
      %v6495 = vpop.f32.mrb[0].mxu0
      %v6496 = vadd.f32 0.0, %v6495
      %v6497 = vpop.f32.mrb[0].mxu0
      %6498 = vmatprep.mubr.bf16.mxu0 0
      %6499 = vmatmul.mubr.bf16.gmra.mrb[0].mxu0 %v6128
      %v6500 = vpop.f32.mrb[0].mxu0
      %v6501 = vadd.f32 0.0, %v6500
      %v6502 = vpop.f32.mrb[0].mxu0
      %v6503 = vpop.f32.mrb[0].mxu0
      %v6504 = vadd.f32 0.0, %v6503
      %v6505 = vpop.f32.mrb[0].mxu0
      %6506 = vmatprep.mubr.bf16.mxu0 0
      %6507 = vmatmul.mubr.bf16.gmra.mrb[0].mxu0 %v6131
      %v6508 = vpop.f32.mrb[0].mxu0
      %v6509 = vadd.f32 0.0, %v6508
      %v6510 = vpop.f32.mrb[0].mxu0
      %v6511 = vpop.f32.mrb[0].mxu0
      %v6512 = vadd.f32 0.0, %v6511
      %v6513 = vpop.f32.mrb[0].mxu0
      %6514 = vmatprep.mubr.bf16.mxu0 0
      %6515 = vmatmul.mubr.bf16.gmra.mrb[0].mxu0 %v6134
      %v6516 = vpop.f32.mrb[0].mxu0
      %v6517 = vadd.f32 0.0, %v6516
      %v6518 = vpop.f32.mrb[0].mxu0
      %v6519 = vpop.f32.mrb[0].mxu0
      %v6520 = vadd.f32 0.0, %v6519
      %v6521 = vpop.f32.mrb[0].mxu0
      %6522 = vmatprep.mubr.bf16.mxu0 0
      %6523 = vmatmul.mubr.bf16.gmra.mrb[0].mxu0 %v6137
      %v6524 = vpop.f32.mrb[0].mxu0
      %v6525 = vadd.f32 0.0, %v6524
      %v6526 = vpop.f32.mrb[0].mxu0
      %v6527 = vpop.f32.mrb[0].mxu0
      %v6528 = vadd.f32 0.0, %v6527
      %v6529 = vpop.f32.mrb[0].mxu0
      %6530 = vmatprep.mubr.bf16.mxu0 0
      %6531 = vmatmul.mubr.bf16.gmra.mrb[0].mxu0 %v6140
      %v6532 = vpop.f32.mrb[0].mxu0
      %v6533 = vadd.f32 0.0, %v6532
      %v6534 = vpop.f32.mrb[0].mxu0
      %v6535 = vpop.f32.mrb[0].mxu0
      %v6536 = vadd.f32 0.0, %v6535
      %v6537 = vpop.f32.mrb[0].mxu0
      %6538 = vmatprep.mubr.bf16.mxu0 0
      %6539 = vmatmul.mubr.bf16.gmra.mrb[0].mxu0 %v6143
      %v6540 = vpop.f32.mrb[0].mxu0
      %v6541 = vadd.f32 0.0, %v6540
      %v6542 = vpop.f32.mrb[0].mxu0
      %v6543 = vpop.f32.mrb[0].mxu0
      %v6544 = vadd.f32 0.0, %v6543
      %v6545 = vpop.f32.mrb[0].mxu0
      %6546 = vmatprep.mubr.bf16.mxu0 0
      %6547 = vmatmul.mubr.bf16.gmra.mrb[0].mxu0 %v6146
      %v6548 = vpop.f32.mrb[0].mxu0
      %v6549 = vadd.f32 0.0, %v6548
      %v6550 = vpop.f32.mrb[0].mxu0
      %v6551 = vpop.f32.mrb[0].mxu0
      %v6552 = vadd.f32 0.0, %v6551
      %v6553 = vpop.f32.mrb[0].mxu0
      %6554 = vmatprep.mubr.bf16.mxu0 0
      %6555 = vmatmul.mubr.bf16.gmra.mrb[0].mxu0 %v6149
      %v6556 = vpop.f32.mrb[0].mxu0
      %v6557 = vadd.f32 0.0, %v6556
      %v6558 = vpop.f32.mrb[0].mxu0
      %v6559 = vpop.f32.mrb[0].mxu0
      %v6560 = vadd.f32 0.0, %v6559
      %v6561 = vpop.f32.mrb[0].mxu0
      %6562 = vmatprep.mubr.bf16.mxu0 0
      %6563 = vmatmul.mubr.bf16.gmra.mrb[0].mxu0 %v6152
      %v6564 = vpop.f32.mrb[0].mxu0
      %v6565 = vadd.f32 0.0, %v6564
      %v6566 = vpop.f32.mrb[0].mxu0
      %v6567 = vpop.f32.mrb[0].mxu0
      %v6568 = vadd.f32 0.0, %v6567
      %v6569 = vpop.f32.mrb[0].mxu0
      %6570 = vmatprep.mubr.bf16.mxu0 0
      %6571 = vmatmul.mubr.bf16.gmra.mrb[0].mxu0 %v6155
      %v6572 = vpop.f32.mrb[0].mxu0
      %v6573 = vadd.f32 0.0, %v6572
      %v6574 = vpop.f32.mrb[0].mxu0
      %v6575 = vpop.f32.mrb[0].mxu0
      %v6576 = vadd.f32 0.0, %v6575
      %v6577 = vpop.f32.mrb[0].mxu0
      %6578 = vmatprep.mubr.bf16.mxu0 0
      %6579 = vmatmul.mubr.bf16.gmra.mrb[0].mxu0 %v6158
      %v6580 = vpop.f32.mrb[0].mxu0
      %v6581 = vadd.f32 0.0, %v6580
      %v6582 = vpop.f32.mrb[0].mxu0
      %v6583 = vpop.f32.mrb[0].mxu0
      %v6584 = vadd.f32 0.0, %v6583
      %v6585 = vpop.f32.mrb[0].mxu0
      %6586 = vmatprep.mubr.bf16.mxu0 0
      %6587 = vmatmul.mubr.bf16.gmra.mrb[0].mxu0 %v6161
      %v6588 = vpop.f32.mrb[0].mxu0
      %v6589 = vadd.f32 0.0, %v6588
      %v6590 = vpop.f32.mrb[0].mxu0
      %v6591 = vpop.f32.mrb[0].mxu0
      %v6592 = vadd.f32 0.0, %v6591
      %v6593 = vpop.f32.mrb[0].mxu0
      %6594 = vmatprep.mubr.bf16.mxu0 0
      %6595 = vmatmul.mubr.bf16.gmra.mrb[0].mxu0 %v6164
      %v6596 = vpop.f32.mrb[0].mxu0
      %v6597 = vadd.f32 0.0, %v6596
      %v6598 = vpop.f32.mrb[0].mxu0
      %v6599 = vpop.f32.mrb[0].mxu0
      %v6600 = vadd.f32 0.0, %v6599
      %v6601 = vpop.f32.mrb[0].mxu0
      %6602 = vmatprep.mubr.bf16.mxu0 0
      %6603 = vmatmul.mubr.bf16.gmra.mrb[0].mxu0 %v6167
      %v6604 = vpop.f32.mrb[0].mxu0
      %v6605 = vadd.f32 0.0, %v6604
      %v6606 = vpop.f32.mrb[0].mxu0
      %v6607 = vpop.f32.mrb[0].mxu0
      %v6608 = vadd.f32 0.0, %v6607
      %v6609 = vpop.f32.mrb[0].mxu0
      %6610 = vmatprep.mubr.bf16.mxu0 0
      %6611 = vmatmul.mubr.bf16.gmra.mrb[0].mxu0 %v6170
      %v6612 = vpop.f32.mrb[0].mxu0
      %v6613 = vadd.f32 0.0, %v6612
      %v6614 = vpop.f32.mrb[0].mxu0
      %v6615 = vpop.f32.mrb[0].mxu0
      %v6616 = vadd.f32 0.0, %v6615
      %v6617 = vpop.f32.mrb[0].mxu0
      %6618 = vmatprep.mubr.bf16.mxu0 0
      %6619 = vmatmul.mubr.bf16.gmra.mrb[0].mxu0 %v6173
      %v6620 = vpop.f32.mrb[0].mxu0
      %v6621 = vadd.f32 0.0, %v6620
      %v6622 = vpop.f32.mrb[0].mxu0
      %v6623 = vpop.f32.mrb[0].mxu0
      %v6624 = vadd.f32 0.0, %v6623
      %v6625 = vpop.f32.mrb[0].mxu0
      %6626 = vmatprep.mubr.bf16.mxu0 0
      %6627 = vmatmul.mubr.bf16.gmra.mrb[0].mxu0 %v6176
      %v6628 = vpop.f32.mrb[0].mxu0
      %v6629 = vadd.f32 0.0, %v6628
      %v6630 = vpop.f32.mrb[0].mxu0
      %v6631 = vpop.f32.mrb[0].mxu0
      %v6632 = vadd.f32 0.0, %v6631
      %v6633 = vpop.f32.mrb[0].mxu0
      %6634 = vmatprep.mubr.bf16.mxu0 0
      %6635 = vmatmul.mubr.bf16.gmra.mrb[0].mxu0 %v6179
      %v6636 = vpop.f32.mrb[0].mxu0
      %v6637 = vadd.f32 0.0, %v6636
      %v6638 = vpop.f32.mrb[0].mxu0
      %v6639 = vpop.f32.mrb[0].mxu0
      %v6640 = vadd.f32 0.0, %v6639
      %v6641 = vpop.f32.mrb[0].mxu0
      %6642 = vmatprep.mubr.bf16.mxu0 0
      %6643 = vmatmul.mubr.bf16.gmra.mrb[0].mxu0 %v6182
      %v6644 = vpop.f32.mrb[0].mxu0
      %v6645 = vadd.f32 0.0, %v6644
      %v6646 = vpop.f32.mrb[0].mxu0
      %v6647 = vpop.f32.mrb[0].mxu0
      %v6648 = vadd.f32 0.0, %v6647
      %v6649 = vpop.f32.mrb[0].mxu0
      %6650 = vmatprep.mubr.bf16.mxu0 0
      %6651 = vmatmul.mubr.bf16.gmra.mrb[0].mxu0 %v6185
      %v6652 = vpop.f32.mrb[0].mxu0
      %v6653 = vadd.f32 0.0, %v6652
      %v6654 = vpop.f32.mrb[0].mxu0
      %v6655 = vpop.f32.mrb[0].mxu0
      %v6656 = vadd.f32 0.0, %v6655
      %v6657 = vpop.f32.mrb[0].mxu0
      %6658 = vmatprep.mubr.bf16.mxu0 0
      %6659 = vmatmul.mubr.bf16.gmra.mrb[0].mxu0 %v6188
      %v6660 = vpop.f32.mrb[0].mxu0
      %v6661 = vadd.f32 0.0, %v6660
      %v6662 = vpop.f32.mrb[0].mxu0
      %v6663 = vpop.f32.mrb[0].mxu0
      %v6664 = vadd.f32 0.0, %v6663
      %v6665 = vpop.f32.mrb[0].mxu0
      %6666 = vmatprep.mubr.bf16.mxu0 0
      %6667 = vmatmul.mubr.bf16.gmra.mrb[0].mxu0 %v6191
      %v6668 = vpop.f32.mrb[0].mxu0
      %v6669 = vadd.f32 0.0, %v6668
      %v6670 = vpop.f32.mrb[0].mxu0
      %v6671 = vpop.f32.mrb[0].mxu0
      %v6672 = vadd.f32 0.0, %v6671
      %v6673 = vpop.f32.mrb[0].mxu0
      %6674 = vmatprep.mubr.bf16.mxu0 0
      %6675 = vmatmul.mubr.bf16.gmra.mrb[0].mxu0 %v6194
      %v6676 = vpop.f32.mrb[0].mxu0
      %v6677 = vadd.f32 0.0, %v6676
      %v6678 = vpop.f32.mrb[0].mxu0
      %v6679 = vpop.f32.mrb[0].mxu0
      %v6680 = vadd.f32 0.0, %v6679
      %v6681 = vpop.f32.mrb[0].mxu0
      %6682 = vmatprep.mubr.bf16.mxu0 0
      %6683 = vmatmul.mubr.bf16.gmra.mrb[0].mxu0 %v6197
      %v6684 = vpop.f32.mrb[0].mxu0
      %v6685 = vadd.f32 0.0, %v6684
      %v6686 = vpop.f32.mrb[0].mxu0
      %v6687 = vpop.f32.mrb[0].mxu0
      %v6688 = vadd.f32 0.0, %v6687
      %v6689 = vpop.f32.mrb[0].mxu0
      %6690 = vmatprep.mubr.bf16.mxu0 0
      %6691 = vmatmul.mubr.bf16.gmra.mrb[0].mxu0 %v6200
      %v6692 = vpop.f32.mrb[0].mxu0
      %v6693 = vadd.f32 0.0, %v6692
      %v6694 = vpop.f32.mrb[0].mxu0
      %v6695 = vpop.f32.mrb[0].mxu0
      %v6696 = vadd.f32 0.0, %v6695
      %v6697 = vpop.f32.mrb[0].mxu0
      %6698 = vmatprep.mubr.bf16.mxu0 0
      %6699 = vmatmul.mubr.bf16.gmra.mrb[0].mxu0 %v6203
      %v6700 = vpop.f32.mrb[0].mxu0
      %v6701 = vadd.f32 0.0, %v6700
      %v6702 = vpop.f32.mrb[0].mxu0
      %v6703 = vpop.f32.mrb[0].mxu0
      %v6704 = vadd.f32 0.0, %v6703
      %v6705 = vpop.f32.mrb[0].mxu0
      %6706 = vmatprep.mubr.bf16.mxu0 0
      %6707 = vmatmul.mubr.bf16.gmra.mrb[0].mxu0 %v6206
      %v6708 = vpop.f32.mrb[0].mxu0
      %v6709 = vadd.f32 0.0, %v6708
      %v6710 = vpop.f32.mrb[0].mxu0
      %v6711 = vpop.f32.mrb[0].mxu0
      %v6712 = vadd.f32 0.0, %v6711
      %v6713 = vpop.f32.mrb[0].mxu0
      %6714 = vmatprep.mubr.bf16.mxu0 0
      %6715 = vmatmul.mubr.bf16.gmra.mrb[0].mxu0 %v6209
      %v6716 = vpop.f32.mrb[0].mxu0
      %v6717 = vadd.f32 0.0, %v6716
      %v6718 = vpop.f32.mrb[0].mxu0
      %v6719 = vpop.f32.mrb[0].mxu0
      %v6720 = vadd.f32 0.0, %v6719
      %v6721 = vpop.f32.mrb[0].mxu0
      %6722 = vmatprep.mubr.bf16.mxu0 0
      %6723 = vmatmul.mubr.bf16.gmra.mrb[0].mxu0 %v6212
      %v6724 = vpop.f32.mrb[0].mxu0
      %v6725 = vadd.f32 0.0, %v6724
      %v6726 = vpop.f32.mrb[0].mxu0
      %v6727 = vpop.f32.mrb[0].mxu0
      %v6728 = vadd.f32 0.0, %v6727
      %v6729 = vpop.f32.mrb[0].mxu0
      %6730 = vmatprep.mubr.bf16.mxu0 0
      %6731 = vmatmul.mubr.bf16.gmra.mrb[0].mxu0 %v6215
      %v6732 = vpop.f32.mrb[0].mxu0
      %v6733 = vadd.f32 0.0, %v6732
      %v6734 = vpop.f32.mrb[0].mxu0
      %v6735 = vpop.f32.mrb[0].mxu0
      %v6736 = vadd.f32 0.0, %v6735
      %v6737 = vpop.f32.mrb[0].mxu0
      %6738 = vmatprep.mubr.bf16.mxu0 0
      %6739 = vmatmul.mubr.bf16.gmra.mrb[0].mxu0 %v6218
      %v6740 = vpop.f32.mrb[0].mxu0
      %v6741 = vadd.f32 0.0, %v6740
      %v6742 = vpop.f32.mrb[0].mxu0
      %v6743 = vpop.f32.mrb[0].mxu0
      %v6744 = vadd.f32 0.0, %v6743
      %v6745 = vpop.f32.mrb[0].mxu0
      %6746 = vmatprep.mubr.bf16.mxu0 0
      %6747 = vmatmul.mubr.bf16.gmra.mrb[0].mxu0 %v6221
      %v6748 = vpop.f32.mrb[0].mxu0
      %v6749 = vadd.f32 0.0, %v6748
      %v6750 = vpop.f32.mrb[0].mxu0
      %v6751 = vpop.f32.mrb[0].mxu0
      %v6752 = vadd.f32 0.0, %v6751
      %v6753 = vpop.f32.mrb[0].mxu0
      %6754 = vmatprep.mubr.bf16.mxu0 0
      %6755 = vmatmul.mubr.bf16.gmra.mrb[0].mxu0 %v6224
      %v6756 = vpop.f32.mrb[0].mxu0
      %v6757 = vadd.f32 0.0, %v6756
      %v6758 = vpop.f32.mrb[0].mxu0
      %v6759 = vpop.f32.mrb[0].mxu0
      %v6760 = vadd.f32 0.0, %v6759
      %v6761 = vpop.f32.mrb[0].mxu0
      %6762 = vmatprep.mubr.bf16.mxu0 0
      %6763 = vmatmul.mubr.bf16.gmra.mrb[0].mxu0 %v6227
      %v6764 = vpop.f32.mrb[0].mxu0
      %v6765 = vadd.f32 0.0, %v6764
      %v6766 = vpop.f32.mrb[0].mxu0
      %v6767 = vpop.f32.mrb[0].mxu0
      %v6768 = vadd.f32 0.0, %v6767
      %v6769 = vpop.f32.mrb[0].mxu0
      %6770 = vmatprep.mubr.bf16.mxu0 0
      %6771 = vmatmul.mubr.bf16.gmra.mrb[0].mxu0 %v6230
      %v6772 = vpop.f32.mrb[0].mxu0
      %v6773 = vadd.f32 0.0, %v6772
      %v6774 = vpop.f32.mrb[0].mxu0
      %v6775 = vpop.f32.mrb[0].mxu0
      %v6776 = vadd.f32 0.0, %v6775
      %v6777 = vpop.f32.mrb[0].mxu0
      %6778 = vmatprep.mubr.bf16.mxu0 0
      %6779 = vmatmul.mubr.bf16.gmra.mrb[0].mxu0 %v6233
      %v6780 = vpop.f32.mrb[0].mxu0
      %v6781 = vadd.f32 0.0, %v6780
      %v6782 = vpop.f32.mrb[0].mxu0
      %v6783 = vpop.f32.mrb[0].mxu0
      %v6784 = vadd.f32 0.0, %v6783
      %v6785 = vpop.f32.mrb[0].mxu0
      %6786 = vmatprep.mubr.bf16.mxu0 0
      %6787 = vmatmul.mubr.bf16.gmra.mrb[0].mxu0 %v6236
      %v6788 = vpop.f32.mrb[0].mxu0
      %v6789 = vadd.f32 0.0, %v6788
      %v6790 = vpop.f32.mrb[0].mxu0
      %v6791 = vpop.f32.mrb[0].mxu0
      %v6792 = vadd.f32 0.0, %v6791
      %v6793 = vpop.f32.mrb[0].mxu0
      %6794 = vmatprep.mubr.bf16.mxu0 0
      %6795 = vmatmul.mubr.bf16.gmra.mrb[0].mxu0 %v6239
      %v6796 = vpop.f32.mrb[0].mxu0
      %v6797 = vadd.f32 0.0, %v6796
      %v6798 = vpop.f32.mrb[0].mxu0
      %v6799 = vpop.f32.mrb[0].mxu0
      %v6800 = vadd.f32 0.0, %v6799
      %v6801 = vpop.f32.mrb[0].mxu0
      %6802 = vmatprep.mubr.bf16.mxu0 0
      %6803 = vmatmul.mubr.bf16.gmra.mrb[0].mxu0 %v6242
      %v6804 = vpop.f32.mrb[0].mxu0
      %v6805 = vadd.f32 0.0, %v6804
      %v6806 = vpop.f32.mrb[0].mxu0
      %v6807 = vpop.f32.mrb[0].mxu0
      %v6808 = vadd.f32 0.0, %v6807
      %v6809 = vpop.f32.mrb[0].mxu0
      %6810 = vmatprep.mubr.bf16.mxu0 0
      %6811 = vmatmul.mubr.bf16.gmra.mrb[0].mxu0 %v6245
      %v6812 = vpop.f32.mrb[0].mxu0
      %v6813 = vadd.f32 0.0, %v6812
      %v6814 = vpop.f32.mrb[0].mxu0
      %v6815 = vpop.f32.mrb[0].mxu0
      %v6816 = vadd.f32 0.0, %v6815
      %v6817 = vpop.f32.mrb[0].mxu0
      %6818 = vmatprep.mubr.bf16.mxu0 0
      %6819 = vmatmul.mubr.bf16.gmra.mrb[0].mxu0 %v6248
      %v6820 = vpop.f32.mrb[0].mxu0
      %v6821 = vadd.f32 0.0, %v6820
      %v6822 = vpop.f32.mrb[0].mxu0
      %v6823 = vpop.f32.mrb[0].mxu0
      %v6824 = vadd.f32 0.0, %v6823
      %v6825 = vpop.f32.mrb[0].mxu0
      %6826 = vdwg.mxu0
      %v6827 = vadd.f32 %v5277, %v6285
      %v6828 = vadd.f32 %v5278, %v6288
      %v6829 = vadd.f32 %v5279, %v6293
      %v6830 = vadd.f32 %v5280, %v6296
      %v6831 = vadd.f32 %v5281, %v6301
      %v6832 = vadd.f32 %v5282, %v6304
      %v6833 = vadd.f32 %v5283, %v6309
      %v6834 = vadd.f32 %v5284, %v6312
      %v6835 = vadd.f32 %v5285, %v6317
      %v6836 = vadd.f32 %v5286, %v6320
      %v6837 = vadd.f32 %v5287, %v6325
      %v6838 = vadd.f32 %v5288, %v6328
      %v6839 = vadd.f32 %v5289, %v6333
      %v6840 = vadd.f32 %v5290, %v6336
      %v6841 = vadd.f32 %v5291, %v6341
      %v6842 = vadd.f32 %v5292, %v6344
      %v6843 = vadd.f32 %v5293, %v6349
      %v6844 = vadd.f32 %v5294, %v6352
      %v6845 = vadd.f32 %v5295, %v6357
      %v6846 = vadd.f32 %v5296, %v6360
      %v6847 = vadd.f32 %v5297, %v6365
      %v6848 = vadd.f32 %v5298, %v6368
      %v6849 = vadd.f32 %v5299, %v6373
      %v6850 = vadd.f32 %v5300, %v6376
      %v6851 = vadd.f32 %v5301, %v6381
      %v6852 = vadd.f32 %v5302, %v6384
      %v6853 = vadd.f32 %v5303, %v6389
      %v6854 = vadd.f32 %v5304, %v6392
      %v6855 = vadd.f32 %v5305, %v6397
      %v6856 = vadd.f32 %v5306, %v6400
      %v6857 = vadd.f32 %v5307, %v6405
      %v6858 = vadd.f32 %v5308, %v6408
      %v6859 = vadd.f32 %v5309, %v6413
      %v6860 = vadd.f32 %v5310, %v6416
      %v6861 = vadd.f32 %v5311, %v6421
      %v6862 = vadd.f32 %v5312, %v6424
      %v6863 = vadd.f32 %v5313, %v6429
      %v6864 = vadd.f32 %v5314, %v6432
      %v6865 = vadd.f32 %v5315, %v6437
      %v6866 = vadd.f32 %v5316, %v6440
      %v6867 = vadd.f32 %v5317, %v6445
      %v6868 = vadd.f32 %v5318, %v6448
      %v6869 = vadd.f32 %v5319, %v6453
      %v6870 = vadd.f32 %v5320, %v6456
      %v6871 = vadd.f32 %v5321, %v6461
      %v6872 = vadd.f32 %v5322, %v6464
      %v6873 = vadd.f32 %v5323, %v6469
      %v6874 = vadd.f32 %v5324, %v6472
      %v6875 = vadd.f32 %v5325, %v6477
      %v6876 = vadd.f32 %v5326, %v6480
      %v6877 = vadd.f32 %v5327, %v6485
      %v6878 = vadd.f32 %v5328, %v6488
      %v6879 = vadd.f32 %v5329, %v6493
      %v6880 = vadd.f32 %v5330, %v6496
      %v6881 = vadd.f32 %v5331, %v6501
      %v6882 = vadd.f32 %v5332, %v6504
      %v6883 = vadd.f32 %v5333, %v6509
      %v6884 = vadd.f32 %v5334, %v6512
      %v6885 = vadd.f32 %v5335, %v6517
      %v6886 = vadd.f32 %v5336, %v6520
      %v6887 = vadd.f32 %v5337, %v6525
      %v6888 = vadd.f32 %v5338, %v6528
      %v6889 = vadd.f32 %v5339, %v6533
      %v6890 = vadd.f32 %v5340, %v6536
      %v6891 = vadd.f32 %v5341, %v6541
      %v6892 = vadd.f32 %v5342, %v6544
      %v6893 = vadd.f32 %v5343, %v6549
      %v6894 = vadd.f32 %v5344, %v6552
      %v6895 = vadd.f32 %v5345, %v6557
      %v6896 = vadd.f32 %v5346, %v6560
      %v6897 = vadd.f32 %v5347, %v6565
      %v6898 = vadd.f32 %v5348, %v6568
      %v6899 = vadd.f32 %v5349, %v6573
      %v6900 = vadd.f32 %v5350, %v6576
      %v6901 = vadd.f32 %v5351, %v6581
      %v6902 = vadd.f32 %v5352, %v6584
      %v6903 = vadd.f32 %v5353, %v6589
      %v6904 = vadd.f32 %v5354, %v6592
      %v6905 = vadd.f32 %v5355, %v6597
      %v6906 = vadd.f32 %v5356, %v6600
      %v6907 = vadd.f32 %v5357, %v6605
      %v6908 = vadd.f32 %v5358, %v6608
      %v6909 = vadd.f32 %v5359, %v6613
      %v6910 = vadd.f32 %v5360, %v6616
      %v6911 = vadd.f32 %v5361, %v6621
      %v6912 = vadd.f32 %v5362, %v6624
      %v6913 = vadd.f32 %v5363, %v6629
      %v6914 = vadd.f32 %v5364, %v6632
      %v6915 = vadd.f32 %v5365, %v6637
      %v6916 = vadd.f32 %v5366, %v6640
      %v6917 = vadd.f32 %v5367, %v6645
      %v6918 = vadd.f32 %v5368, %v6648
      %v6919 = vadd.f32 %v5369, %v6653
      %v6920 = vadd.f32 %v5370, %v6656
      %v6921 = vadd.f32 %v5371, %v6661
      %v6922 = vadd.f32 %v5372, %v6664
      %v6923 = vadd.f32 %v5373, %v6669
      %v6924 = vadd.f32 %v5374, %v6672
      %v6925 = vadd.f32 %v5375, %v6677
      %v6926 = vadd.f32 %v5376, %v6680
      %v6927 = vadd.f32 %v5377, %v6685
      %v6928 = vadd.f32 %v5378, %v6688
      %v6929 = vadd.f32 %v5379, %v6693
      %v6930 = vadd.f32 %v5380, %v6696
      %v6931 = vadd.f32 %v5381, %v6701
      %v6932 = vadd.f32 %v5382, %v6704
      %v6933 = vadd.f32 %v5383, %v6709
      %v6934 = vadd.f32 %v5384, %v6712
      %v6935 = vadd.f32 %v5385, %v6717
      %v6936 = vadd.f32 %v5386, %v6720
      %v6937 = vadd.f32 %v5387, %v6725
      %v6938 = vadd.f32 %v5388, %v6728
      %v6939 = vadd.f32 %v5389, %v6733
      %v6940 = vadd.f32 %v5390, %v6736
      %v6941 = vadd.f32 %v5391, %v6741
      %v6942 = vadd.f32 %v5392, %v6744
      %v6943 = vadd.f32 %v5393, %v6749
      %v6944 = vadd.f32 %v5394, %v6752
      %v6945 = vadd.f32 %v5395, %v6757
      %v6946 = vadd.f32 %v5396, %v6760
      %v6947 = vadd.f32 %v5397, %v6765
      %v6948 = vadd.f32 %v5398, %v6768
      %v6949 = vadd.f32 %v5399, %v6773
      %v6950 = vadd.f32 %v5400, %v6776
      %v6951 = vadd.f32 %v5401, %v6781
      %v6952 = vadd.f32 %v5402, %v6784
      %v6953 = vadd.f32 %v5403, %v6789
      %v6954 = vadd.f32 %v5404, %v6792
      %v6955 = vadd.f32 %v5405, %v6797
      %v6956 = vadd.f32 %v5406, %v6800
      %v6957 = vadd.f32 %v5407, %v6805
      %v6958 = vadd.f32 %v5408, %v6808
      %v6959 = vadd.f32 %v5409, %v6813
      %v6960 = vadd.f32 %v5410, %v6816
      %v6961 = vadd.f32 %v5411, %v6821
      %v6962 = vadd.f32 %v5412, %v6824
      %v6963 = vld [vmem:[%s244 + $0x10] sm:$0xc]
      %v6964 = vld [vmem:[%s248 + $0x28] sm:$0xf]
      %v6965 = vld [vmem:[%s248 + $0x2c] sm:$0xf]
      %v6967 = vunpack.c.l.b16 %v6963
      %v6968 = vpack.c.b16 %v4148, %v6967
      %vm6969 = vcmask 1045504
      %v6970 = vrot.slane %v6968, 2
      %v6971 = vrot.slane %v4285, 2
      %v6972 = vsel %vm6969, %v6970, %v6971
      %v6973 = vrot.slane %v4286, 2
      %v6974 = vsel %vm6969, %v6971, %v6973
      %v6975 = vrot.slane %v4287, 2
      %v6976 = vsel %vm6969, %v6973, %v6975
      %v6977 = vrot.slane %v4288, 2
      %v6978 = vsel %vm6969, %v6975, %v6977
      %v6979 = vrot.slane %v4289, 2
      %v6980 = vsel %vm6969, %v6977, %v6979
      %v6981 = vrot.slane %v4290, 2
      %v6982 = vsel %vm6969, %v6979, %v6981
      %v6983 = vrot.slane %v4291, 2
      %v6984 = vsel %vm6969, %v6981, %v6983
      %v6985 = vrot.slane %v4292, 2
      %v6986 = vsel %vm6969, %v6983, %v6985
      %v6987 = vrot.slane %v4293, 2
      %v6988 = vsel %vm6969, %v6985, %v6987
      %v6989 = vrot.slane %v4294, 2
      %v6990 = vsel %vm6969, %v6987, %v6989
      %v6991 = vrot.slane %v4295, 2
      %v6992 = vsel %vm6969, %v6989, %v6991
      %v6993 = vrot.slane %v4296, 2
      %v6994 = vsel %vm6969, %v6991, %v6993
      %v6995 = vrot.slane %v4297, 2
      %v6996 = vsel %vm6969, %v6993, %v6995
      %v6997 = vrot.slane %v4298, 2
      %v6998 = vsel %vm6969, %v6995, %v6997
      %v6999 = vrot.slane %v4299, 2
      %v7000 = vsel %vm6969, %v6997, %v6999
      %v7001 = vrot.slane %v4300, 2
      %v7002 = vsel %vm6969, %v6999, %v7001
      %v7003 = vrot.slane %v4301, 2
      %v7004 = vsel %vm6969, %v7001, %v7003
      %v7005 = vrot.slane %v4302, 2
      %v7006 = vsel %vm6969, %v7003, %v7005
      %v7007 = vrot.slane %v4303, 2
      %v7008 = vsel %vm6969, %v7005, %v7007
      %v7009 = vrot.slane %v4304, 2
      %v7010 = vsel %vm6969, %v7007, %v7009
      %v7011 = vrot.slane %v4305, 2
      %v7012 = vsel %vm6969, %v7009, %v7011
      %v7013 = vrot.slane %v4306, 2
      %v7014 = vsel %vm6969, %v7011, %v7013
      %v7015 = vrot.slane %v4307, 2
      %v7016 = vsel %vm6969, %v7013, %v7015
      %v7017 = vrot.slane %v4308, 2
      %v7018 = vsel %vm6969, %v7015, %v7017
      %v7019 = vrot.slane %v4309, 2
      %v7020 = vsel %vm6969, %v7017, %v7019
      %v7021 = vrot.slane %v4310, 2
      %v7022 = vsel %vm6969, %v7019, %v7021
      %v7023 = vrot.slane %v4311, 2
      %v7024 = vsel %vm6969, %v7021, %v7023
      %v7025 = vrot.slane %v4312, 2
      %v7026 = vsel %vm6969, %v7023, %v7025
      %v7027 = vrot.slane %v4313, 2
      %v7028 = vsel %vm6969, %v7025, %v7027
      %v7029 = vrot.slane %v4314, 2
      %v7030 = vsel %vm6969, %v7027, %v7029
      %v7031 = vrot.slane %v4315, 2
      %v7032 = vsel %vm6969, %v7029, %v7031
      %v7033 = vrot.slane %v4316, 2
      %v7034 = vsel %vm6969, %v7031, %v7033
      %v7035 = vrot.slane %v4317, 2
      %v7036 = vsel %vm6969, %v7033, %v7035
      %v7037 = vrot.slane %v4318, 2
      %v7038 = vsel %vm6969, %v7035, %v7037
      %v7039 = vrot.slane %v4319, 2
      %v7040 = vsel %vm6969, %v7037, %v7039
      %v7041 = vrot.slane %v4320, 2
      %v7042 = vsel %vm6969, %v7039, %v7041
      %v7043 = vrot.slane %v4321, 2
      %v7044 = vsel %vm6969, %v7041, %v7043
      %v7045 = vrot.slane %v4322, 2
      %v7046 = vsel %vm6969, %v7043, %v7045
      %v7047 = vrot.slane %v4323, 2
      %v7048 = vsel %vm6969, %v7045, %v7047
      %v7049 = vrot.slane %v4324, 2
      %v7050 = vsel %vm6969, %v7047, %v7049
      %v7051 = vrot.slane %v4325, 2
      %v7052 = vsel %vm6969, %v7049, %v7051
      %v7053 = vrot.slane %v4326, 2
      %v7054 = vsel %vm6969, %v7051, %v7053
      %v7055 = vrot.slane %v4327, 2
      %v7056 = vsel %vm6969, %v7053, %v7055
      %v7057 = vrot.slane %v4328, 2
      %v7058 = vsel %vm6969, %v7055, %v7057
      %v7059 = vrot.slane %v4329, 2
      %v7060 = vsel %vm6969, %v7057, %v7059
      %v7061 = vrot.slane %v4330, 2
      %v7062 = vsel %vm6969, %v7059, %v7061
      %v7063 = vrot.slane %v4331, 2
      %v7064 = vsel %vm6969, %v7061, %v7063
      %v7065 = vrot.slane %v4332, 2
      %v7066 = vsel %vm6969, %v7063, %v7065
      %v7067 = vrot.slane %v4333, 2
      %v7068 = vsel %vm6969, %v7065, %v7067
      %v7069 = vrot.slane %v4334, 2
      %v7070 = vsel %vm6969, %v7067, %v7069
      %v7071 = vrot.slane %v4335, 2
      %v7072 = vsel %vm6969, %v7069, %v7071
      %v7073 = vrot.slane %v4336, 2
      %v7074 = vsel %vm6969, %v7071, %v7073
      %v7075 = vrot.slane %v4337, 2
      %v7076 = vsel %vm6969, %v7073, %v7075
      %v7077 = vrot.slane %v4338, 2
      %v7078 = vsel %vm6969, %v7075, %v7077
      %v7079 = vrot.slane %v4339, 2
      %v7080 = vsel %vm6969, %v7077, %v7079
      %v7081 = vrot.slane %v4340, 2
      %v7082 = vsel %vm6969, %v7079, %v7081
      %v7083 = vrot.slane %v4341, 2
      %v7084 = vsel %vm6969, %v7081, %v7083
      %v7085 = vrot.slane %v4342, 2
      %v7086 = vsel %vm6969, %v7083, %v7085
      %v7087 = vrot.slane %v4343, 2
      %v7088 = vsel %vm6969, %v7085, %v7087
      %v7089 = vrot.slane %v4344, 2
      %v7090 = vsel %vm6969, %v7087, %v7089
      %v7091 = vrot.slane %v4345, 2
      %v7092 = vsel %vm6969, %v7089, %v7091
      %v7093 = vrot.slane %v4346, 2
      %v7094 = vsel %vm6969, %v7091, %v7093
      %v7095 = vrot.slane %v4347, 2
      %v7096 = vsel %vm6969, %v7093, %v7095
      %v7097 = vrot.slane %v4348, 2
      %v7098 = vsel %vm6969, %v7095, %v7097
      %v7099 = vrot.slane %v4349, 2
      %v7100 = vsel %vm6969, %v7097, %v7099
      %v7101 = vrot.slane %v4350, 2
      %v7102 = vsel %vm6969, %v7099, %v7101
      %v7103 = vrot.slane %v4351, 2
      %v7104 = vsel %vm6969, %v7101, %v7103
      %v7105 = vrot.slane %v5418, 2
      %v7106 = vsel %vm6969, %v7103, %v7105
      %v7109 = vunpack.c.l.b16 %v6964
      %v7110 = vunpack.c.l.b16 %v6965
      %v7111 = vpack.c.b16 %v7110, %v7109
      %v7114 = vsel %vm1303, %v6972, 0
      %v7117 = vsel %vm1303, %v6974, 0
      %v7120 = vsel %vm1303, %v6976, 0
      %v7123 = vsel %vm1303, %v6978, 0
      %v7126 = vsel %vm1303, %v6980, 0
      %v7129 = vsel %vm1303, %v6982, 0
      %v7132 = vsel %vm1303, %v6984, 0
      %v7135 = vsel %vm1303, %v6986, 0
      %v7138 = vsel %vm1303, %v6988, 0
      %v7141 = vsel %vm1303, %v6990, 0
      %v7144 = vsel %vm1303, %v6992, 0
      %v7147 = vsel %vm1303, %v6994, 0
      %v7150 = vsel %vm1303, %v6996, 0
      %v7153 = vsel %vm1303, %v6998, 0
      %v7156 = vsel %vm1303, %v7000, 0
      %v7159 = vsel %vm1303, %v7002, 0
      %v7162 = vsel %vm1303, %v7004, 0
      %v7165 = vsel %vm1303, %v7006, 0
      %v7168 = vsel %vm1303, %v7008, 0
      %v7171 = vsel %vm1303, %v7010, 0
      %v7174 = vsel %vm1303, %v7012, 0
      %v7177 = vsel %vm1303, %v7014, 0
      %v7180 = vsel %vm1303, %v7016, 0
      %v7183 = vsel %vm1303, %v7018, 0
      %v7186 = vsel %vm1303, %v7020, 0
      %v7189 = vsel %vm1303, %v7022, 0
      %v7192 = vsel %vm1303, %v7024, 0
      %v7195 = vsel %vm1303, %v7026, 0
      %v7198 = vsel %vm1303, %v7028, 0
      %v7201 = vsel %vm1303, %v7030, 0
      %v7204 = vsel %vm1303, %v7032, 0
      %v7207 = vsel %vm1303, %v7034, 0
      %v7210 = vsel %vm1303, %v7036, 0
      %v7213 = vsel %vm1303, %v7038, 0
      %v7216 = vsel %vm1303, %v7040, 0
      %v7219 = vsel %vm1303, %v7042, 0
      %v7222 = vsel %vm1303, %v7044, 0
      %v7225 = vsel %vm1303, %v7046, 0
      %v7228 = vsel %vm1303, %v7048, 0
      %v7231 = vsel %vm1303, %v7050, 0
      %v7234 = vsel %vm1303, %v7052, 0
      %v7237 = vsel %vm1303, %v7054, 0
      %v7240 = vsel %vm1303, %v7056, 0
      %v7243 = vsel %vm1303, %v7058, 0
      %v7246 = vsel %vm1303, %v7060, 0
      %v7249 = vsel %vm1303, %v7062, 0
      %v7252 = vsel %vm1303, %v7064, 0
      %v7255 = vsel %vm1303, %v7066, 0
      %v7258 = vsel %vm1303, %v7068, 0
      %v7261 = vsel %vm1303, %v7070, 0
      %v7264 = vsel %vm1303, %v7072, 0
      %v7267 = vsel %vm1303, %v7074, 0
      %v7270 = vsel %vm1303, %v7076, 0
      %v7273 = vsel %vm1303, %v7078, 0
      %v7276 = vsel %vm1303, %v7080, 0
      %v7279 = vsel %vm1303, %v7082, 0
      %v7282 = vsel %vm1303, %v7084, 0
      %v7285 = vsel %vm1303, %v7086, 0
      %v7288 = vsel %vm1303, %v7088, 0
      %v7291 = vsel %vm1303, %v7090, 0
      %v7294 = vsel %vm1303, %v7092, 0
      %v7297 = vsel %vm1303, %v7094, 0
      %v7300 = vsel %vm1303, %v7096, 0
      %v7303 = vsel %vm1303, %v7098, 0
      %v7306 = vsel %vm1303, %v7100, 0
      %v7309 = vsel %vm1303, %v7102, 0
      %v7312 = vsel %vm1303, %v7104, 0
      %v7315 = vsel %vm1303, %v7106, 0
      %7317 = vmatprep.subr.bf16.mxu0 0
      %7318 = vmatpush1.bf16.msra.mxu0 %v7111
      %7319 = vmatprep.subr.bf16.mxu0 0
      %7320 = vmatpush1.bf16.msra.mxu0 0
      %7321 = vmatprep.subr.bf16.mxu0 0
      %7322 = vmatpush1.bf16.msra.mxu0 0
      %7323 = vmatprep.subr.bf16.mxu0 0
      %7324 = vmatpush1.bf16.msra.mxu0 0
      %7325 = vmatprep.subr.bf16.mxu0 0
      %7326 = vmatpush1.bf16.msra.mxu0 0
      %7327 = vmatprep.subr.bf16.mxu0 0
      %7328 = vmatpush1.bf16.msra.mxu0 0
      %7329 = vmatprep.subr.bf16.mxu0 0
      %7330 = vmatpush1.bf16.msra.mxu0 0
      %7331 = vmatprep.subr.bf16.mxu0 0
      %7332 = vmatpush1.bf16.msra.mxu0 0
      %7333 = vmatprep.subr.bf16.mxu0 0
      %7334 = vmatpush1.bf16.msra.mxu0 0
      %7335 = vmatprep.subr.bf16.mxu0 0
      %7336 = vmatpush1.bf16.msra.mxu0 0
      %7337 = vmatprep.subr.bf16.mxu0 0
      %7338 = vmatpush1.bf16.msra.mxu0 0
      %7339 = vmatprep.subr.bf16.mxu0 0
      %7340 = vmatpush1.bf16.msra.mxu0 0
      %7341 = vmatprep.subr.bf16.mxu0 0
      %7342 = vmatpush1.bf16.msra.mxu0 0
      %7343 = vmatprep.subr.bf16.mxu0 0
      %7344 = vmatpush1.bf16.msra.mxu0 0
      %7345 = vmatprep.subr.bf16.mxu0 0
      %7346 = vmatpush1.bf16.msra.mxu0 0
      %7347 = vmatprep.subr.bf16.mxu0 0
      %7348 = vmatpush1.bf16.msra.mxu0 0
      %7349 = vmatprep.mubr.bf16.mxu0 0
      %7350 = vmatmul.mubr.bf16.gmra.mrb[0].mxu0 %v7114
      %v7351 = vpop.f32.mrb[0].mxu0
      %v7352 = vadd.f32 0.0, %v7351
      %v7353 = vpop.f32.mrb[0].mxu0
      %v7354 = vpop.f32.mrb[0].mxu0
      %v7355 = vadd.f32 0.0, %v7354
      %v7356 = vpop.f32.mrb[0].mxu0
      %7357 = vmatprep.mubr.bf16.mxu0 0
      %7358 = vmatmul.mubr.bf16.gmra.mrb[0].mxu0 %v7117
      %v7359 = vpop.f32.mrb[0].mxu0
      %v7360 = vadd.f32 0.0, %v7359
      %v7361 = vpop.f32.mrb[0].mxu0
      %v7362 = vpop.f32.mrb[0].mxu0
      %v7363 = vadd.f32 0.0, %v7362
      %v7364 = vpop.f32.mrb[0].mxu0
      %7365 = vmatprep.mubr.bf16.mxu0 0
      %7366 = vmatmul.mubr.bf16.gmra.mrb[0].mxu0 %v7120
      %v7367 = vpop.f32.mrb[0].mxu0
      %v7368 = vadd.f32 0.0, %v7367
      %v7369 = vpop.f32.mrb[0].mxu0
      %v7370 = vpop.f32.mrb[0].mxu0
      %v7371 = vadd.f32 0.0, %v7370
      %v7372 = vpop.f32.mrb[0].mxu0
      %7373 = vmatprep.mubr.bf16.mxu0 0
      %7374 = vmatmul.mubr.bf16.gmra.mrb[0].mxu0 %v7123
      %v7375 = vpop.f32.mrb[0].mxu0
      %v7376 = vadd.f32 0.0, %v7375
      %v7377 = vpop.f32.mrb[0].mxu0
      %v7378 = vpop.f32.mrb[0].mxu0
      %v7379 = vadd.f32 0.0, %v7378
      %v7380 = vpop.f32.mrb[0].mxu0
      %7381 = vmatprep.mubr.bf16.mxu0 0
      %7382 = vmatmul.mubr.bf16.gmra.mrb[0].mxu0 %v7126
      %v7383 = vpop.f32.mrb[0].mxu0
      %v7384 = vadd.f32 0.0, %v7383
      %v7385 = vpop.f32.mrb[0].mxu0
      %v7386 = vpop.f32.mrb[0].mxu0
      %v7387 = vadd.f32 0.0, %v7386
      %v7388 = vpop.f32.mrb[0].mxu0
      %7389 = vmatprep.mubr.bf16.mxu0 0
      %7390 = vmatmul.mubr.bf16.gmra.mrb[0].mxu0 %v7129
      %v7391 = vpop.f32.mrb[0].mxu0
      %v7392 = vadd.f32 0.0, %v7391
      %v7393 = vpop.f32.mrb[0].mxu0
      %v7394 = vpop.f32.mrb[0].mxu0
      %v7395 = vadd.f32 0.0, %v7394
      %v7396 = vpop.f32.mrb[0].mxu0
      %7397 = vmatprep.mubr.bf16.mxu0 0
      %7398 = vmatmul.mubr.bf16.gmra.mrb[0].mxu0 %v7132
      %v7399 = vpop.f32.mrb[0].mxu0
      %v7400 = vadd.f32 0.0, %v7399
      %v7401 = vpop.f32.mrb[0].mxu0
      %v7402 = vpop.f32.mrb[0].mxu0
      %v7403 = vadd.f32 0.0, %v7402
      %v7404 = vpop.f32.mrb[0].mxu0
      %7405 = vmatprep.mubr.bf16.mxu0 0
      %7406 = vmatmul.mubr.bf16.gmra.mrb[0].mxu0 %v7135
      %v7407 = vpop.f32.mrb[0].mxu0
      %v7408 = vadd.f32 0.0, %v7407
      %v7409 = vpop.f32.mrb[0].mxu0
      %v7410 = vpop.f32.mrb[0].mxu0
      %v7411 = vadd.f32 0.0, %v7410
      %v7412 = vpop.f32.mrb[0].mxu0
      %7413 = vmatprep.mubr.bf16.mxu0 0
      %7414 = vmatmul.mubr.bf16.gmra.mrb[0].mxu0 %v7138
      %v7415 = vpop.f32.mrb[0].mxu0
      %v7416 = vadd.f32 0.0, %v7415
      %v7417 = vpop.f32.mrb[0].mxu0
      %v7418 = vpop.f32.mrb[0].mxu0
      %v7419 = vadd.f32 0.0, %v7418
      %v7420 = vpop.f32.mrb[0].mxu0
      %7421 = vmatprep.mubr.bf16.mxu0 0
      %7422 = vmatmul.mubr.bf16.gmra.mrb[0].mxu0 %v7141
      %v7423 = vpop.f32.mrb[0].mxu0
      %v7424 = vadd.f32 0.0, %v7423
      %v7425 = vpop.f32.mrb[0].mxu0
      %v7426 = vpop.f32.mrb[0].mxu0
      %v7427 = vadd.f32 0.0, %v7426
      %v7428 = vpop.f32.mrb[0].mxu0
      %7429 = vmatprep.mubr.bf16.mxu0 0
      %7430 = vmatmul.mubr.bf16.gmra.mrb[0].mxu0 %v7144
      %v7431 = vpop.f32.mrb[0].mxu0
      %v7432 = vadd.f32 0.0, %v7431
      %v7433 = vpop.f32.mrb[0].mxu0
      %v7434 = vpop.f32.mrb[0].mxu0
      %v7435 = vadd.f32 0.0, %v7434
      %v7436 = vpop.f32.mrb[0].mxu0
      %7437 = vmatprep.mubr.bf16.mxu0 0
      %7438 = vmatmul.mubr.bf16.gmra.mrb[0].mxu0 %v7147
      %v7439 = vpop.f32.mrb[0].mxu0
      %v7440 = vadd.f32 0.0, %v7439
      %v7441 = vpop.f32.mrb[0].mxu0
      %v7442 = vpop.f32.mrb[0].mxu0
      %v7443 = vadd.f32 0.0, %v7442
      %v7444 = vpop.f32.mrb[0].mxu0
      %7445 = vmatprep.mubr.bf16.mxu0 0
      %7446 = vmatmul.mubr.bf16.gmra.mrb[0].mxu0 %v7150
      %v7447 = vpop.f32.mrb[0].mxu0
      %v7448 = vadd.f32 0.0, %v7447
      %v7449 = vpop.f32.mrb[0].mxu0
      %v7450 = vpop.f32.mrb[0].mxu0
      %v7451 = vadd.f32 0.0, %v7450
      %v7452 = vpop.f32.mrb[0].mxu0
      %7453 = vmatprep.mubr.bf16.mxu0 0
      %7454 = vmatmul.mubr.bf16.gmra.mrb[0].mxu0 %v7153
      %v7455 = vpop.f32.mrb[0].mxu0
      %v7456 = vadd.f32 0.0, %v7455
      %v7457 = vpop.f32.mrb[0].mxu0
      %v7458 = vpop.f32.mrb[0].mxu0
      %v7459 = vadd.f32 0.0, %v7458
      %v7460 = vpop.f32.mrb[0].mxu0
      %7461 = vmatprep.mubr.bf16.mxu0 0
      %7462 = vmatmul.mubr.bf16.gmra.mrb[0].mxu0 %v7156
      %v7463 = vpop.f32.mrb[0].mxu0
      %v7464 = vadd.f32 0.0, %v7463
      %v7465 = vpop.f32.mrb[0].mxu0
      %v7466 = vpop.f32.mrb[0].mxu0
      %v7467 = vadd.f32 0.0, %v7466
      %v7468 = vpop.f32.mrb[0].mxu0
      %7469 = vmatprep.mubr.bf16.mxu0 0
      %7470 = vmatmul.mubr.bf16.gmra.mrb[0].mxu0 %v7159
      %v7471 = vpop.f32.mrb[0].mxu0
      %v7472 = vadd.f32 0.0, %v7471
      %v7473 = vpop.f32.mrb[0].mxu0
      %v7474 = vpop.f32.mrb[0].mxu0
      %v7475 = vadd.f32 0.0, %v7474
      %v7476 = vpop.f32.mrb[0].mxu0
      %7477 = vmatprep.mubr.bf16.mxu0 0
      %7478 = vmatmul.mubr.bf16.gmra.mrb[0].mxu0 %v7162
      %v7479 = vpop.f32.mrb[0].mxu0
      %v7480 = vadd.f32 0.0, %v7479
      %v7481 = vpop.f32.mrb[0].mxu0
      %v7482 = vpop.f32.mrb[0].mxu0
      %v7483 = vadd.f32 0.0, %v7482
      %v7484 = vpop.f32.mrb[0].mxu0
      %7485 = vmatprep.mubr.bf16.mxu0 0
      %7486 = vmatmul.mubr.bf16.gmra.mrb[0].mxu0 %v7165
      %v7487 = vpop.f32.mrb[0].mxu0
      %v7488 = vadd.f32 0.0, %v7487
      %v7489 = vpop.f32.mrb[0].mxu0
      %v7490 = vpop.f32.mrb[0].mxu0
      %v7491 = vadd.f32 0.0, %v7490
      %v7492 = vpop.f32.mrb[0].mxu0
      %7493 = vmatprep.mubr.bf16.mxu0 0
      %7494 = vmatmul.mubr.bf16.gmra.mrb[0].mxu0 %v7168
      %v7495 = vpop.f32.mrb[0].mxu0
      %v7496 = vadd.f32 0.0, %v7495
      %v7497 = vpop.f32.mrb[0].mxu0
      %v7498 = vpop.f32.mrb[0].mxu0
      %v7499 = vadd.f32 0.0, %v7498
      %v7500 = vpop.f32.mrb[0].mxu0
      %7501 = vmatprep.mubr.bf16.mxu0 0
      %7502 = vmatmul.mubr.bf16.gmra.mrb[0].mxu0 %v7171
      %v7503 = vpop.f32.mrb[0].mxu0
      %v7504 = vadd.f32 0.0, %v7503
      %v7505 = vpop.f32.mrb[0].mxu0
      %v7506 = vpop.f32.mrb[0].mxu0
      %v7507 = vadd.f32 0.0, %v7506
      %v7508 = vpop.f32.mrb[0].mxu0
      %7509 = vmatprep.mubr.bf16.mxu0 0
      %7510 = vmatmul.mubr.bf16.gmra.mrb[0].mxu0 %v7174
      %v7511 = vpop.f32.mrb[0].mxu0
      %v7512 = vadd.f32 0.0, %v7511
      %v7513 = vpop.f32.mrb[0].mxu0
      %v7514 = vpop.f32.mrb[0].mxu0
      %v7515 = vadd.f32 0.0, %v7514
      %v7516 = vpop.f32.mrb[0].mxu0
      %7517 = vmatprep.mubr.bf16.mxu0 0
      %7518 = vmatmul.mubr.bf16.gmra.mrb[0].mxu0 %v7177
      %v7519 = vpop.f32.mrb[0].mxu0
      %v7520 = vadd.f32 0.0, %v7519
      %v7521 = vpop.f32.mrb[0].mxu0
      %v7522 = vpop.f32.mrb[0].mxu0
      %v7523 = vadd.f32 0.0, %v7522
      %v7524 = vpop.f32.mrb[0].mxu0
      %7525 = vmatprep.mubr.bf16.mxu0 0
      %7526 = vmatmul.mubr.bf16.gmra.mrb[0].mxu0 %v7180
      %v7527 = vpop.f32.mrb[0].mxu0
      %v7528 = vadd.f32 0.0, %v7527
      %v7529 = vpop.f32.mrb[0].mxu0
      %v7530 = vpop.f32.mrb[0].mxu0
      %v7531 = vadd.f32 0.0, %v7530
      %v7532 = vpop.f32.mrb[0].mxu0
      %7533 = vmatprep.mubr.bf16.mxu0 0
      %7534 = vmatmul.mubr.bf16.gmra.mrb[0].mxu0 %v7183
      %v7535 = vpop.f32.mrb[0].mxu0
      %v7536 = vadd.f32 0.0, %v7535
      %v7537 = vpop.f32.mrb[0].mxu0
      %v7538 = vpop.f32.mrb[0].mxu0
      %v7539 = vadd.f32 0.0, %v7538
      %v7540 = vpop.f32.mrb[0].mxu0
      %7541 = vmatprep.mubr.bf16.mxu0 0
      %7542 = vmatmul.mubr.bf16.gmra.mrb[0].mxu0 %v7186
      %v7543 = vpop.f32.mrb[0].mxu0
      %v7544 = vadd.f32 0.0, %v7543
      %v7545 = vpop.f32.mrb[0].mxu0
      %v7546 = vpop.f32.mrb[0].mxu0
      %v7547 = vadd.f32 0.0, %v7546
      %v7548 = vpop.f32.mrb[0].mxu0
      %7549 = vmatprep.mubr.bf16.mxu0 0
      %7550 = vmatmul.mubr.bf16.gmra.mrb[0].mxu0 %v7189
      %v7551 = vpop.f32.mrb[0].mxu0
      %v7552 = vadd.f32 0.0, %v7551
      %v7553 = vpop.f32.mrb[0].mxu0
      %v7554 = vpop.f32.mrb[0].mxu0
      %v7555 = vadd.f32 0.0, %v7554
      %v7556 = vpop.f32.mrb[0].mxu0
      %7557 = vmatprep.mubr.bf16.mxu0 0
      %7558 = vmatmul.mubr.bf16.gmra.mrb[0].mxu0 %v7192
      %v7559 = vpop.f32.mrb[0].mxu0
      %v7560 = vadd.f32 0.0, %v7559
      %v7561 = vpop.f32.mrb[0].mxu0
      %v7562 = vpop.f32.mrb[0].mxu0
      %v7563 = vadd.f32 0.0, %v7562
      %v7564 = vpop.f32.mrb[0].mxu0
      %7565 = vmatprep.mubr.bf16.mxu0 0
      %7566 = vmatmul.mubr.bf16.gmra.mrb[0].mxu0 %v7195
      %v7567 = vpop.f32.mrb[0].mxu0
      %v7568 = vadd.f32 0.0, %v7567
      %v7569 = vpop.f32.mrb[0].mxu0
      %v7570 = vpop.f32.mrb[0].mxu0
      %v7571 = vadd.f32 0.0, %v7570
      %v7572 = vpop.f32.mrb[0].mxu0
      %7573 = vmatprep.mubr.bf16.mxu0 0
      %7574 = vmatmul.mubr.bf16.gmra.mrb[0].mxu0 %v7198
      %v7575 = vpop.f32.mrb[0].mxu0
      %v7576 = vadd.f32 0.0, %v7575
      %v7577 = vpop.f32.mrb[0].mxu0
      %v7578 = vpop.f32.mrb[0].mxu0
      %v7579 = vadd.f32 0.0, %v7578
      %v7580 = vpop.f32.mrb[0].mxu0
      %7581 = vmatprep.mubr.bf16.mxu0 0
      %7582 = vmatmul.mubr.bf16.gmra.mrb[0].mxu0 %v7201
      %v7583 = vpop.f32.mrb[0].mxu0
      %v7584 = vadd.f32 0.0, %v7583
      %v7585 = vpop.f32.mrb[0].mxu0
      %v7586 = vpop.f32.mrb[0].mxu0
      %v7587 = vadd.f32 0.0, %v7586
      %v7588 = vpop.f32.mrb[0].mxu0
      %7589 = vmatprep.mubr.bf16.mxu0 0
      %7590 = vmatmul.mubr.bf16.gmra.mrb[0].mxu0 %v7204
      %v7591 = vpop.f32.mrb[0].mxu0
      %v7592 = vadd.f32 0.0, %v7591
      %v7593 = vpop.f32.mrb[0].mxu0
      %v7594 = vpop.f32.mrb[0].mxu0
      %v7595 = vadd.f32 0.0, %v7594
      %v7596 = vpop.f32.mrb[0].mxu0
      %7597 = vmatprep.mubr.bf16.mxu0 0
      %7598 = vmatmul.mubr.bf16.gmra.mrb[0].mxu0 %v7207
      %v7599 = vpop.f32.mrb[0].mxu0
      %v7600 = vadd.f32 0.0, %v7599
      %v7601 = vpop.f32.mrb[0].mxu0
      %v7602 = vpop.f32.mrb[0].mxu0
      %v7603 = vadd.f32 0.0, %v7602
      %v7604 = vpop.f32.mrb[0].mxu0
      %7605 = vmatprep.mubr.bf16.mxu0 0
      %7606 = vmatmul.mubr.bf16.gmra.mrb[0].mxu0 %v7210
      %v7607 = vpop.f32.mrb[0].mxu0
      %v7608 = vadd.f32 0.0, %v7607
      %v7609 = vpop.f32.mrb[0].mxu0
      %v7610 = vpop.f32.mrb[0].mxu0
      %v7611 = vadd.f32 0.0, %v7610
      %v7612 = vpop.f32.mrb[0].mxu0
      %7613 = vmatprep.mubr.bf16.mxu0 0
      %7614 = vmatmul.mubr.bf16.gmra.mrb[0].mxu0 %v7213
      %v7615 = vpop.f32.mrb[0].mxu0
      %v7616 = vadd.f32 0.0, %v7615
      %v7617 = vpop.f32.mrb[0].mxu0
      %v7618 = vpop.f32.mrb[0].mxu0
      %v7619 = vadd.f32 0.0, %v7618
      %v7620 = vpop.f32.mrb[0].mxu0
      %7621 = vmatprep.mubr.bf16.mxu0 0
      %7622 = vmatmul.mubr.bf16.gmra.mrb[0].mxu0 %v7216
      %v7623 = vpop.f32.mrb[0].mxu0
      %v7624 = vadd.f32 0.0, %v7623
      %v7625 = vpop.f32.mrb[0].mxu0
      %v7626 = vpop.f32.mrb[0].mxu0
      %v7627 = vadd.f32 0.0, %v7626
      %v7628 = vpop.f32.mrb[0].mxu0
      %7629 = vmatprep.mubr.bf16.mxu0 0
      %7630 = vmatmul.mubr.bf16.gmra.mrb[0].mxu0 %v7219
      %v7631 = vpop.f32.mrb[0].mxu0
      %v7632 = vadd.f32 0.0, %v7631
      %v7633 = vpop.f32.mrb[0].mxu0
      %v7634 = vpop.f32.mrb[0].mxu0
      %v7635 = vadd.f32 0.0, %v7634
      %v7636 = vpop.f32.mrb[0].mxu0
      %7637 = vmatprep.mubr.bf16.mxu0 0
      %7638 = vmatmul.mubr.bf16.gmra.mrb[0].mxu0 %v7222
      %v7639 = vpop.f32.mrb[0].mxu0
      %v7640 = vadd.f32 0.0, %v7639
      %v7641 = vpop.f32.mrb[0].mxu0
      %v7642 = vpop.f32.mrb[0].mxu0
      %v7643 = vadd.f32 0.0, %v7642
      %v7644 = vpop.f32.mrb[0].mxu0
      %7645 = vmatprep.mubr.bf16.mxu0 0
      %7646 = vmatmul.mubr.bf16.gmra.mrb[0].mxu0 %v7225
      %v7647 = vpop.f32.mrb[0].mxu0
      %v7648 = vadd.f32 0.0, %v7647
      %v7649 = vpop.f32.mrb[0].mxu0
      %v7650 = vpop.f32.mrb[0].mxu0
      %v7651 = vadd.f32 0.0, %v7650
      %v7652 = vpop.f32.mrb[0].mxu0
      %7653 = vmatprep.mubr.bf16.mxu0 0
      %7654 = vmatmul.mubr.bf16.gmra.mrb[0].mxu0 %v7228
      %v7655 = vpop.f32.mrb[0].mxu0
      %v7656 = vadd.f32 0.0, %v7655
      %v7657 = vpop.f32.mrb[0].mxu0
      %v7658 = vpop.f32.mrb[0].mxu0
      %v7659 = vadd.f32 0.0, %v7658
      %v7660 = vpop.f32.mrb[0].mxu0
      %7661 = vmatprep.mubr.bf16.mxu0 0
      %7662 = vmatmul.mubr.bf16.gmra.mrb[0].mxu0 %v7231
      %v7663 = vpop.f32.mrb[0].mxu0
      %v7664 = vadd.f32 0.0, %v7663
      %v7665 = vpop.f32.mrb[0].mxu0
      %v7666 = vpop.f32.mrb[0].mxu0
      %v7667 = vadd.f32 0.0, %v7666
      %v7668 = vpop.f32.mrb[0].mxu0
      %7669 = vmatprep.mubr.bf16.mxu0 0
      %7670 = vmatmul.mubr.bf16.gmra.mrb[0].mxu0 %v7234
      %v7671 = vpop.f32.mrb[0].mxu0
      %v7672 = vadd.f32 0.0, %v7671
      %v7673 = vpop.f32.mrb[0].mxu0
      %v7674 = vpop.f32.mrb[0].mxu0
      %v7675 = vadd.f32 0.0, %v7674
      %v7676 = vpop.f32.mrb[0].mxu0
      %7677 = vmatprep.mubr.bf16.mxu0 0
      %7678 = vmatmul.mubr.bf16.gmra.mrb[0].mxu0 %v7237
      %v7679 = vpop.f32.mrb[0].mxu0
      %v7680 = vadd.f32 0.0, %v7679
      %v7681 = vpop.f32.mrb[0].mxu0
      %v7682 = vpop.f32.mrb[0].mxu0
      %v7683 = vadd.f32 0.0, %v7682
      %v7684 = vpop.f32.mrb[0].mxu0
      %7685 = vmatprep.mubr.bf16.mxu0 0
      %7686 = vmatmul.mubr.bf16.gmra.mrb[0].mxu0 %v7240
      %v7687 = vpop.f32.mrb[0].mxu0
      %v7688 = vadd.f32 0.0, %v7687
      %v7689 = vpop.f32.mrb[0].mxu0
      %v7690 = vpop.f32.mrb[0].mxu0
      %v7691 = vadd.f32 0.0, %v7690
      %v7692 = vpop.f32.mrb[0].mxu0
      %7693 = vmatprep.mubr.bf16.mxu0 0
      %7694 = vmatmul.mubr.bf16.gmra.mrb[0].mxu0 %v7243
      %v7695 = vpop.f32.mrb[0].mxu0
      %v7696 = vadd.f32 0.0, %v7695
      %v7697 = vpop.f32.mrb[0].mxu0
      %v7698 = vpop.f32.mrb[0].mxu0
      %v7699 = vadd.f32 0.0, %v7698
      %v7700 = vpop.f32.mrb[0].mxu0
      %7701 = vmatprep.mubr.bf16.mxu0 0
      %7702 = vmatmul.mubr.bf16.gmra.mrb[0].mxu0 %v7246
      %v7703 = vpop.f32.mrb[0].mxu0
      %v7704 = vadd.f32 0.0, %v7703
      %v7705 = vpop.f32.mrb[0].mxu0
      %v7706 = vpop.f32.mrb[0].mxu0
      %v7707 = vadd.f32 0.0, %v7706
      %v7708 = vpop.f32.mrb[0].mxu0
      %7709 = vmatprep.mubr.bf16.mxu0 0
      %7710 = vmatmul.mubr.bf16.gmra.mrb[0].mxu0 %v7249
      %v7711 = vpop.f32.mrb[0].mxu0
      %v7712 = vadd.f32 0.0, %v7711
      %v7713 = vpop.f32.mrb[0].mxu0
      %v7714 = vpop.f32.mrb[0].mxu0
      %v7715 = vadd.f32 0.0, %v7714
      %v7716 = vpop.f32.mrb[0].mxu0
      %7717 = vmatprep.mubr.bf16.mxu0 0
      %7718 = vmatmul.mubr.bf16.gmra.mrb[0].mxu0 %v7252
      %v7719 = vpop.f32.mrb[0].mxu0
      %v7720 = vadd.f32 0.0, %v7719
      %v7721 = vpop.f32.mrb[0].mxu0
      %v7722 = vpop.f32.mrb[0].mxu0
      %v7723 = vadd.f32 0.0, %v7722
      %v7724 = vpop.f32.mrb[0].mxu0
      %7725 = vmatprep.mubr.bf16.mxu0 0
      %7726 = vmatmul.mubr.bf16.gmra.mrb[0].mxu0 %v7255
      %v7727 = vpop.f32.mrb[0].mxu0
      %v7728 = vadd.f32 0.0, %v7727
      %v7729 = vpop.f32.mrb[0].mxu0
      %v7730 = vpop.f32.mrb[0].mxu0
      %v7731 = vadd.f32 0.0, %v7730
      %v7732 = vpop.f32.mrb[0].mxu0
      %7733 = vmatprep.mubr.bf16.mxu0 0
      %7734 = vmatmul.mubr.bf16.gmra.mrb[0].mxu0 %v7258
      %v7735 = vpop.f32.mrb[0].mxu0
      %v7736 = vadd.f32 0.0, %v7735
      %v7737 = vpop.f32.mrb[0].mxu0
      %v7738 = vpop.f32.mrb[0].mxu0
      %v7739 = vadd.f32 0.0, %v7738
      %v7740 = vpop.f32.mrb[0].mxu0
      %7741 = vmatprep.mubr.bf16.mxu0 0
      %7742 = vmatmul.mubr.bf16.gmra.mrb[0].mxu0 %v7261
      %v7743 = vpop.f32.mrb[0].mxu0
      %v7744 = vadd.f32 0.0, %v7743
      %v7745 = vpop.f32.mrb[0].mxu0
      %v7746 = vpop.f32.mrb[0].mxu0
      %v7747 = vadd.f32 0.0, %v7746
      %v7748 = vpop.f32.mrb[0].mxu0
      %7749 = vmatprep.mubr.bf16.mxu0 0
      %7750 = vmatmul.mubr.bf16.gmra.mrb[0].mxu0 %v7264
      %v7751 = vpop.f32.mrb[0].mxu0
      %v7752 = vadd.f32 0.0, %v7751
      %v7753 = vpop.f32.mrb[0].mxu0
      %v7754 = vpop.f32.mrb[0].mxu0
      %v7755 = vadd.f32 0.0, %v7754
      %v7756 = vpop.f32.mrb[0].mxu0
      %7757 = vmatprep.mubr.bf16.mxu0 0
      %7758 = vmatmul.mubr.bf16.gmra.mrb[0].mxu0 %v7267
      %v7759 = vpop.f32.mrb[0].mxu0
      %v7760 = vadd.f32 0.0, %v7759
      %v7761 = vpop.f32.mrb[0].mxu0
      %v7762 = vpop.f32.mrb[0].mxu0
      %v7763 = vadd.f32 0.0, %v7762
      %v7764 = vpop.f32.mrb[0].mxu0
      %7765 = vmatprep.mubr.bf16.mxu0 0
      %7766 = vmatmul.mubr.bf16.gmra.mrb[0].mxu0 %v7270
      %v7767 = vpop.f32.mrb[0].mxu0
      %v7768 = vadd.f32 0.0, %v7767
      %v7769 = vpop.f32.mrb[0].mxu0
      %v7770 = vpop.f32.mrb[0].mxu0
      %v7771 = vadd.f32 0.0, %v7770
      %v7772 = vpop.f32.mrb[0].mxu0
      %7773 = vmatprep.mubr.bf16.mxu0 0
      %7774 = vmatmul.mubr.bf16.gmra.mrb[0].mxu0 %v7273
      %v7775 = vpop.f32.mrb[0].mxu0
      %v7776 = vadd.f32 0.0, %v7775
      %v7777 = vpop.f32.mrb[0].mxu0
      %v7778 = vpop.f32.mrb[0].mxu0
      %v7779 = vadd.f32 0.0, %v7778
      %v7780 = vpop.f32.mrb[0].mxu0
      %7781 = vmatprep.mubr.bf16.mxu0 0
      %7782 = vmatmul.mubr.bf16.gmra.mrb[0].mxu0 %v7276
      %v7783 = vpop.f32.mrb[0].mxu0
      %v7784 = vadd.f32 0.0, %v7783
      %v7785 = vpop.f32.mrb[0].mxu0
      %v7786 = vpop.f32.mrb[0].mxu0
      %v7787 = vadd.f32 0.0, %v7786
      %v7788 = vpop.f32.mrb[0].mxu0
      %7789 = vmatprep.mubr.bf16.mxu0 0
      %7790 = vmatmul.mubr.bf16.gmra.mrb[0].mxu0 %v7279
      %v7791 = vpop.f32.mrb[0].mxu0
      %v7792 = vadd.f32 0.0, %v7791
      %v7793 = vpop.f32.mrb[0].mxu0
      %v7794 = vpop.f32.mrb[0].mxu0
      %v7795 = vadd.f32 0.0, %v7794
      %v7796 = vpop.f32.mrb[0].mxu0
      %7797 = vmatprep.mubr.bf16.mxu0 0
      %7798 = vmatmul.mubr.bf16.gmra.mrb[0].mxu0 %v7282
      %v7799 = vpop.f32.mrb[0].mxu0
      %v7800 = vadd.f32 0.0, %v7799
      %v7801 = vpop.f32.mrb[0].mxu0
      %v7802 = vpop.f32.mrb[0].mxu0
      %v7803 = vadd.f32 0.0, %v7802
      %v7804 = vpop.f32.mrb[0].mxu0
      %7805 = vmatprep.mubr.bf16.mxu0 0
      %7806 = vmatmul.mubr.bf16.gmra.mrb[0].mxu0 %v7285
      %v7807 = vpop.f32.mrb[0].mxu0
      %v7808 = vadd.f32 0.0, %v7807
      %v7809 = vpop.f32.mrb[0].mxu0
      %v7810 = vpop.f32.mrb[0].mxu0
      %v7811 = vadd.f32 0.0, %v7810
      %v7812 = vpop.f32.mrb[0].mxu0
      %7813 = vmatprep.mubr.bf16.mxu0 0
      %7814 = vmatmul.mubr.bf16.gmra.mrb[0].mxu0 %v7288
      %v7815 = vpop.f32.mrb[0].mxu0
      %v7816 = vadd.f32 0.0, %v7815
      %v7817 = vpop.f32.mrb[0].mxu0
      %v7818 = vpop.f32.mrb[0].mxu0
      %v7819 = vadd.f32 0.0, %v7818
      %v7820 = vpop.f32.mrb[0].mxu0
      %7821 = vmatprep.mubr.bf16.mxu0 0
      %7822 = vmatmul.mubr.bf16.gmra.mrb[0].mxu0 %v7291
      %v7823 = vpop.f32.mrb[0].mxu0
      %v7824 = vadd.f32 0.0, %v7823
      %v7825 = vpop.f32.mrb[0].mxu0
      %v7826 = vpop.f32.mrb[0].mxu0
      %v7827 = vadd.f32 0.0, %v7826
      %v7828 = vpop.f32.mrb[0].mxu0
      %7829 = vmatprep.mubr.bf16.mxu0 0
      %7830 = vmatmul.mubr.bf16.gmra.mrb[0].mxu0 %v7294
      %v7831 = vpop.f32.mrb[0].mxu0
      %v7832 = vadd.f32 0.0, %v7831
      %v7833 = vpop.f32.mrb[0].mxu0
      %v7834 = vpop.f32.mrb[0].mxu0
      %v7835 = vadd.f32 0.0, %v7834
      %v7836 = vpop.f32.mrb[0].mxu0
      %7837 = vmatprep.mubr.bf16.mxu0 0
      %7838 = vmatmul.mubr.bf16.gmra.mrb[0].mxu0 %v7297
      %v7839 = vpop.f32.mrb[0].mxu0
      %v7840 = vadd.f32 0.0, %v7839
      %v7841 = vpop.f32.mrb[0].mxu0
      %v7842 = vpop.f32.mrb[0].mxu0
      %v7843 = vadd.f32 0.0, %v7842
      %v7844 = vpop.f32.mrb[0].mxu0
      %7845 = vmatprep.mubr.bf16.mxu0 0
      %7846 = vmatmul.mubr.bf16.gmra.mrb[0].mxu0 %v7300
      %v7847 = vpop.f32.mrb[0].mxu0
      %v7848 = vadd.f32 0.0, %v7847
      %v7849 = vpop.f32.mrb[0].mxu0
      %v7850 = vpop.f32.mrb[0].mxu0
      %v7851 = vadd.f32 0.0, %v7850
      %v7852 = vpop.f32.mrb[0].mxu0
      %7853 = vmatprep.mubr.bf16.mxu0 0
      %7854 = vmatmul.mubr.bf16.gmra.mrb[0].mxu0 %v7303
      %v7855 = vpop.f32.mrb[0].mxu0
      %v7856 = vadd.f32 0.0, %v7855
      %v7857 = vpop.f32.mrb[0].mxu0
      %v7858 = vpop.f32.mrb[0].mxu0
      %v7859 = vadd.f32 0.0, %v7858
      %v7860 = vpop.f32.mrb[0].mxu0
      %7861 = vmatprep.mubr.bf16.mxu0 0
      %7862 = vmatmul.mubr.bf16.gmra.mrb[0].mxu0 %v7306
      %v7863 = vpop.f32.mrb[0].mxu0
      %v7864 = vadd.f32 0.0, %v7863
      %v7865 = vpop.f32.mrb[0].mxu0
      %v7866 = vpop.f32.mrb[0].mxu0
      %v7867 = vadd.f32 0.0, %v7866
      %v7868 = vpop.f32.mrb[0].mxu0
      %7869 = vmatprep.mubr.bf16.mxu0 0
      %7870 = vmatmul.mubr.bf16.gmra.mrb[0].mxu0 %v7309
      %v7871 = vpop.f32.mrb[0].mxu0
      %v7872 = vadd.f32 0.0, %v7871
      %v7873 = vpop.f32.mrb[0].mxu0
      %v7874 = vpop.f32.mrb[0].mxu0
      %v7875 = vadd.f32 0.0, %v7874
      %v7876 = vpop.f32.mrb[0].mxu0
      %7877 = vmatprep.mubr.bf16.mxu0 0
      %7878 = vmatmul.mubr.bf16.gmra.mrb[0].mxu0 %v7312
      %v7879 = vpop.f32.mrb[0].mxu0
      %v7880 = vadd.f32 0.0, %v7879
      %v7881 = vpop.f32.mrb[0].mxu0
      %v7882 = vpop.f32.mrb[0].mxu0
      %v7883 = vadd.f32 0.0, %v7882
      %v7884 = vpop.f32.mrb[0].mxu0
      %7885 = vmatprep.mubr.bf16.mxu0 0
      %7886 = vmatmul.mubr.bf16.gmra.mrb[0].mxu0 %v7315
      %v7887 = vpop.f32.mrb[0].mxu0
      %v7888 = vadd.f32 0.0, %v7887
      %v7889 = vpop.f32.mrb[0].mxu0
      %v7890 = vpop.f32.mrb[0].mxu0
      %v7891 = vadd.f32 0.0, %v7890
      %v7892 = vpop.f32.mrb[0].mxu0
      %7893 = vdwg.mxu0
      %v7894 = vadd.f32 %v6827, %v7352
      %v7895 = vadd.f32 %v6828, %v7355
      %v7896 = vadd.f32 %v6829, %v7360
      %v7897 = vadd.f32 %v6830, %v7363
      %v7898 = vadd.f32 %v6831, %v7368
      %v7899 = vadd.f32 %v6832, %v7371
      %v7900 = vadd.f32 %v6833, %v7376
      %v7901 = vadd.f32 %v6834, %v7379
      %v7902 = vadd.f32 %v6835, %v7384
      %v7903 = vadd.f32 %v6836, %v7387
      %v7904 = vadd.f32 %v6837, %v7392
      %v7905 = vadd.f32 %v6838, %v7395
      %v7906 = vadd.f32 %v6839, %v7400
      %v7907 = vadd.f32 %v6840, %v7403
      %v7908 = vadd.f32 %v6841, %v7408
      %v7909 = vadd.f32 %v6842, %v7411
      %v7910 = vadd.f32 %v6843, %v7416
      %v7911 = vadd.f32 %v6844, %v7419
      %v7912 = vadd.f32 %v6845, %v7424
      %v7913 = vadd.f32 %v6846, %v7427
      %v7914 = vadd.f32 %v6847, %v7432
      %v7915 = vadd.f32 %v6848, %v7435
      %v7916 = vadd.f32 %v6849, %v7440
      %v7917 = vadd.f32 %v6850, %v7443
      %v7918 = vadd.f32 %v6851, %v7448
      %v7919 = vadd.f32 %v6852, %v7451
      %v7920 = vadd.f32 %v6853, %v7456
      %v7921 = vadd.f32 %v6854, %v7459
      %v7922 = vadd.f32 %v6855, %v7464
      %v7923 = vadd.f32 %v6856, %v7467
      %v7924 = vadd.f32 %v6857, %v7472
      %v7925 = vadd.f32 %v6858, %v7475
      %v7926 = vadd.f32 %v6859, %v7480
      %v7927 = vadd.f32 %v6860, %v7483
      %v7928 = vadd.f32 %v6861, %v7488
      %v7929 = vadd.f32 %v6862, %v7491
      %v7930 = vadd.f32 %v6863, %v7496
      %v7931 = vadd.f32 %v6864, %v7499
      %v7932 = vadd.f32 %v6865, %v7504
      %v7933 = vadd.f32 %v6866, %v7507
      %v7934 = vadd.f32 %v6867, %v7512
      %v7935 = vadd.f32 %v6868, %v7515
      %v7936 = vadd.f32 %v6869, %v7520
      %v7937 = vadd.f32 %v6870, %v7523
      %v7938 = vadd.f32 %v6871, %v7528
      %v7939 = vadd.f32 %v6872, %v7531
      %v7940 = vadd.f32 %v6873, %v7536
      %v7941 = vadd.f32 %v6874, %v7539
      %v7942 = vadd.f32 %v6875, %v7544
      %v7943 = vadd.f32 %v6876, %v7547
      %v7944 = vadd.f32 %v6877, %v7552
      %v7945 = vadd.f32 %v6878, %v7555
      %v7946 = vadd.f32 %v6879, %v7560
      %v7947 = vadd.f32 %v6880, %v7563
      %v7948 = vadd.f32 %v6881, %v7568
      %v7949 = vadd.f32 %v6882, %v7571
      %v7950 = vadd.f32 %v6883, %v7576
      %v7951 = vadd.f32 %v6884, %v7579
      %v7952 = vadd.f32 %v6885, %v7584
      %v7953 = vadd.f32 %v6886, %v7587
      %v7954 = vadd.f32 %v6887, %v7592
      %v7955 = vadd.f32 %v6888, %v7595
      %v7956 = vadd.f32 %v6889, %v7600
      %v7957 = vadd.f32 %v6890, %v7603
      %v7958 = vadd.f32 %v6891, %v7608
      %v7959 = vadd.f32 %v6892, %v7611
      %v7960 = vadd.f32 %v6893, %v7616
      %v7961 = vadd.f32 %v6894, %v7619
      %v7962 = vadd.f32 %v6895, %v7624
      %v7963 = vadd.f32 %v6896, %v7627
      %v7964 = vadd.f32 %v6897, %v7632
      %v7965 = vadd.f32 %v6898, %v7635
      %v7966 = vadd.f32 %v6899, %v7640
      %v7967 = vadd.f32 %v6900, %v7643
      %v7968 = vadd.f32 %v6901, %v7648
      %v7969 = vadd.f32 %v6902, %v7651
      %v7970 = vadd.f32 %v6903, %v7656
      %v7971 = vadd.f32 %v6904, %v7659
      %v7972 = vadd.f32 %v6905, %v7664
      %v7973 = vadd.f32 %v6906, %v7667
      %v7974 = vadd.f32 %v6907, %v7672
      %v7975 = vadd.f32 %v6908, %v7675
      %v7976 = vadd.f32 %v6909, %v7680
      %v7977 = vadd.f32 %v6910, %v7683
      %v7978 = vadd.f32 %v6911, %v7688
      %v7979 = vadd.f32 %v6912, %v7691
      %v7980 = vadd.f32 %v6913, %v7696
      %v7981 = vadd.f32 %v6914, %v7699
      %v7982 = vadd.f32 %v6915, %v7704
      %v7983 = vadd.f32 %v6916, %v7707
      %v7984 = vadd.f32 %v6917, %v7712
      %v7985 = vadd.f32 %v6918, %v7715
      %v7986 = vadd.f32 %v6919, %v7720
      %v7987 = vadd.f32 %v6920, %v7723
      %v7988 = vadd.f32 %v6921, %v7728
      %v7989 = vadd.f32 %v6922, %v7731
      %v7990 = vadd.f32 %v6923, %v7736
      %v7991 = vadd.f32 %v6924, %v7739
      %v7992 = vadd.f32 %v6925, %v7744
      %v7993 = vadd.f32 %v6926, %v7747
      %v7994 = vadd.f32 %v6927, %v7752
      %v7995 = vadd.f32 %v6928, %v7755
      %v7996 = vadd.f32 %v6929, %v7760
      %v7997 = vadd.f32 %v6930, %v7763
      %v7998 = vadd.f32 %v6931, %v7768
      %v7999 = vadd.f32 %v6932, %v7771
      %v8000 = vadd.f32 %v6933, %v7776
      %v8001 = vadd.f32 %v6934, %v7779
      %v8002 = vadd.f32 %v6935, %v7784
      %v8003 = vadd.f32 %v6936, %v7787
      %v8004 = vadd.f32 %v6937, %v7792
      %v8005 = vadd.f32 %v6938, %v7795
      %v8006 = vadd.f32 %v6939, %v7800
      %v8007 = vadd.f32 %v6940, %v7803
      %v8008 = vadd.f32 %v6941, %v7808
      %v8009 = vadd.f32 %v6942, %v7811
      %v8010 = vadd.f32 %v6943, %v7816
      %v8011 = vadd.f32 %v6944, %v7819
      %v8012 = vadd.f32 %v6945, %v7824
      %v8013 = vadd.f32 %v6946, %v7827
      %v8014 = vadd.f32 %v6947, %v7832
      %v8015 = vadd.f32 %v6948, %v7835
      %v8016 = vadd.f32 %v6949, %v7840
      %v8017 = vadd.f32 %v6950, %v7843
      %v8018 = vadd.f32 %v6951, %v7848
      %v8019 = vadd.f32 %v6952, %v7851
      %v8020 = vadd.f32 %v6953, %v7856
      %v8021 = vadd.f32 %v6954, %v7859
      %v8022 = vadd.f32 %v6955, %v7864
      %v8023 = vadd.f32 %v6956, %v7867
      %v8024 = vadd.f32 %v6957, %v7872
      %v8025 = vadd.f32 %v6958, %v7875
      %v8026 = vadd.f32 %v6959, %v7880
      %v8027 = vadd.f32 %v6960, %v7883
      %v8028 = vadd.f32 %v6961, %v7888
      %v8029 = vadd.f32 %v6962, %v7891
      %v8030 = vld [vmem:[%s244 + $0x20] sm:$0xc]
      %v8031 = vld [vmem:[%s244 + $0x24] sm:$0xf]
      %v8032 = vld [vmem:[%s244 + $0x28] sm:$0xf]
      %v8033 = vld [vmem:[%s244 + $0x2c] sm:$0xf]
      %v8034 = vld [vmem:[%s244 + $0x30] sm:$0xf]
      %v8035 = vld [vmem:[%s244 + $0x34] sm:$0xf]
      %v8036 = vld [vmem:[%s244 + $0x38] sm:$0xf]
      %v8037 = vld [vmem:[%s244 + $0x3c] sm:$0xf]
      %v8038 = vld [vmem:[%s244 + $0x40] sm:$0xf]
      %v8039 = vld [vmem:[%s244 + $0x44] sm:$0xf]
      %v8040 = vld [vmem:[%s244 + $0x48] sm:$0xf]
      %v8041 = vld [vmem:[%s244 + $0x4c] sm:$0xf]
      %v8042 = vld [vmem:[%s244 + $0x50] sm:$0xf]
      %v8043 = vld [vmem:[%s244 + $0x54] sm:$0xf]
      %v8044 = vld [vmem:[%s244 + $0x58] sm:$0xf]
      %v8045 = vld [vmem:[%s244 + $0x5c] sm:$0xf]
      %v8046 = vld [vmem:[%s244 + $0x60] sm:$0xf]
      %v8047 = vld [vmem:[%s244 + $0x64] sm:$0xf]
      %v8048 = vld [vmem:[%s244 + $0x68] sm:$0xf]
      %v8049 = vld [vmem:[%s244 + $0x6c] sm:$0xf]
      %v8050 = vld [vmem:[%s244 + $0x70] sm:$0xf]
      %v8051 = vld [vmem:[%s244 + $0x74] sm:$0xf]
      %v8052 = vld [vmem:[%s244 + $0x78] sm:$0xf]
      %v8053 = vld [vmem:[%s244 + $0x7c] sm:$0xf]
      %v8054 = vld [vmem:[%s244 + $0x80] sm:$0xf]
      %v8055 = vld [vmem:[%s244 + $0x84] sm:$0xf]
      %v8056 = vld [vmem:[%s244 + $0x88] sm:$0xf]
      %v8057 = vld [vmem:[%s244 + $0x8c] sm:$0xf]
      %v8058 = vld [vmem:[%s244 + $0x90] sm:$0xf]
      %v8059 = vld [vmem:[%s244 + $0x94] sm:$0xf]
      %v8060 = vld [vmem:[%s244 + $0x98] sm:$0xf]
      %v8061 = vld [vmem:[%s244 + $0x9c] sm:$0xf]
      %v8062 = vld [vmem:[%s244 + $0xa0] sm:$0xf]
      %v8063 = vld [vmem:[%s244 + $0xa4] sm:$0xf]
      %v8064 = vld [vmem:[%s244 + $0xa8] sm:$0xf]
      %v8065 = vld [vmem:[%s244 + $0xac] sm:$0xf]
      %v8066 = vld [vmem:[%s244 + $0xb0] sm:$0xf]
      %v8067 = vld [vmem:[%s244 + $0xb4] sm:$0xf]
      %v8068 = vld [vmem:[%s244 + $0xb8] sm:$0xf]
      %v8069 = vld [vmem:[%s244 + $0xbc] sm:$0xf]
      %v8070 = vld [vmem:[%s244 + $0xc0] sm:$0xf]
      %v8071 = vld [vmem:[%s244 + $0xc4] sm:$0xf]
      %v8072 = vld [vmem:[%s244 + $0xc8] sm:$0xf]
      %v8073 = vld [vmem:[%s244 + $0xcc] sm:$0xf]
      %v8074 = vld [vmem:[%s244 + $0xd0] sm:$0xf]
      %v8075 = vld [vmem:[%s244 + $0xd4] sm:$0xf]
      %v8076 = vld [vmem:[%s244 + $0xd8] sm:$0xf]
      %v8077 = vld [vmem:[%s244 + $0xdc] sm:$0xf]
      %v8078 = vld [vmem:[%s244 + $0xe0] sm:$0xf]
      %v8079 = vld [vmem:[%s244 + $0xe4] sm:$0xf]
      %v8080 = vld [vmem:[%s244 + $0xe8] sm:$0xf]
      %v8081 = vld [vmem:[%s244 + $0xec] sm:$0xf]
      %v8082 = vld [vmem:[%s244 + $0xf0] sm:$0xf]
      %v8083 = vld [vmem:[%s244 + $0xf4] sm:$0xf]
      %v8084 = vld [vmem:[%s244 + $0xf8] sm:$0xf]
      %v8085 = vld [vmem:[%s244 + $0xfc] sm:$0xf]
      %v8086 = vld [vmem:[%s244 + $0x100] sm:$0xf]
      %v8087 = vld [vmem:[%s244 + $0x104] sm:$0xf]
      %v8088 = vld [vmem:[%s244 + $0x108] sm:$0xf]
      %v8089 = vld [vmem:[%s244 + $0x10c] sm:$0xf]
      %v8090 = vld [vmem:[%s244 + $0x110] sm:$0xf]
      %v8091 = vld [vmem:[%s244 + $0x114] sm:$0xf]
      %v8092 = vld [vmem:[%s244 + $0x118] sm:$0xf]
      %v8093 = vld [vmem:[%s244 + $0x11c] sm:$0xf]
      %v8094 = vld [vmem:[%s244 + $0x120] sm:$0xf]
      %v8095 = vld [vmem:[%s244 + $0x124] sm:$0xf]
      %v8096 = vld [vmem:[%s244 + $0x128] sm:$0xf]
      %v8097 = vld [vmem:[%s244 + $0x12c] sm:$0xf]
      %v8098 = vld [vmem:[%s244 + $0x130] sm:$0xf]
      %v8099 = vld [vmem:[%s244 + $0x134] sm:$0xf]
      %v8100 = vld [vmem:[%s244 + $0x138] sm:$0xf]
      %v8101 = vld [vmem:[%s244 + $0x13c] sm:$0xf]
      %v8102 = vld [vmem:[%s244 + $0x140] sm:$0xf]
      %v8103 = vld [vmem:[%s244 + $0x144] sm:$0xf]
      %v8104 = vld [vmem:[%s244 + $0x148] sm:$0xf]
      %v8105 = vld [vmem:[%s244 + $0x14c] sm:$0xf]
      %v8106 = vld [vmem:[%s244 + $0x150] sm:$0xf]
      %v8107 = vld [vmem:[%s244 + $0x154] sm:$0xf]
      %v8108 = vld [vmem:[%s244 + $0x158] sm:$0xf]
      %v8109 = vld [vmem:[%s244 + $0x15c] sm:$0xf]
      %v8110 = vld [vmem:[%s244 + $0x160] sm:$0xf]
      %v8111 = vld [vmem:[%s244 + $0x164] sm:$0xf]
      %v8112 = vld [vmem:[%s244 + $0x168] sm:$0xf]
      %v8113 = vld [vmem:[%s244 + $0x16c] sm:$0xf]
      %v8114 = vld [vmem:[%s244 + $0x170] sm:$0xf]
      %v8115 = vld [vmem:[%s244 + $0x174] sm:$0xf]
      %v8116 = vld [vmem:[%s244 + $0x178] sm:$0xf]
      %v8117 = vld [vmem:[%s244 + $0x17c] sm:$0xf]
      %v8118 = vld [vmem:[%s244 + $0x180] sm:$0xf]
      %v8119 = vld [vmem:[%s244 + $0x184] sm:$0xf]
      %v8120 = vld [vmem:[%s244 + $0x188] sm:$0xf]
      %v8121 = vld [vmem:[%s244 + $0x18c] sm:$0xf]
      %v8122 = vld [vmem:[%s244 + $0x190] sm:$0xf]
      %v8123 = vld [vmem:[%s244 + $0x194] sm:$0xf]
      %v8124 = vld [vmem:[%s244 + $0x198] sm:$0xf]
      %v8125 = vld [vmem:[%s244 + $0x19c] sm:$0xf]
      %v8126 = vld [vmem:[%s244 + $0x1a0] sm:$0xf]
      %v8127 = vld [vmem:[%s244 + $0x1a4] sm:$0xf]
      %v8128 = vld [vmem:[%s244 + $0x1a8] sm:$0xf]
      %v8129 = vld [vmem:[%s244 + $0x1ac] sm:$0xf]
      %v8130 = vld [vmem:[%s244 + $0x1b0] sm:$0xf]
      %v8131 = vld [vmem:[%s244 + $0x1b4] sm:$0xf]
      %v8132 = vld [vmem:[%s244 + $0x1b8] sm:$0xf]
      %v8133 = vld [vmem:[%s244 + $0x1bc] sm:$0xf]
      %v8134 = vld [vmem:[%s244 + $0x1c0] sm:$0xf]
      %v8135 = vld [vmem:[%s244 + $0x1c4] sm:$0xf]
      %v8136 = vld [vmem:[%s244 + $0x1c8] sm:$0xf]
      %v8137 = vld [vmem:[%s244 + $0x1cc] sm:$0xf]
      %v8138 = vld [vmem:[%s244 + $0x1d0] sm:$0xf]
      %v8139 = vld [vmem:[%s244 + $0x1d4] sm:$0xf]
      %v8140 = vld [vmem:[%s244 + $0x1d8] sm:$0xf]
      %v8141 = vld [vmem:[%s244 + $0x1dc] sm:$0xf]
      %v8142 = vld [vmem:[%s244 + $0x1e0] sm:$0xf]
      %v8143 = vld [vmem:[%s244 + $0x1e4] sm:$0xf]
      %v8144 = vld [vmem:[%s244 + $0x1e8] sm:$0xf]
      %v8145 = vld [vmem:[%s244 + $0x1ec] sm:$0xf]
      %v8146 = vld [vmem:[%s244 + $0x1f0] sm:$0xf]
      %v8147 = vld [vmem:[%s244 + $0x1f4] sm:$0xf]
      %v8148 = vld [vmem:[%s244 + $0x1f8] sm:$0xf]
      %v8149 = vld [vmem:[%s244 + $0x1fc] sm:$0xf]
      %v8150 = vld [vmem:[%s244 + $0x200] sm:$0xf]
      %v8151 = vld [vmem:[%s244 + $0x204] sm:$0xf]
      %v8152 = vld [vmem:[%s244 + $0x208] sm:$0xf]
      %v8153 = vld [vmem:[%s244 + $0x20c] sm:$0xf]
      %v8154 = vld [vmem:[%s244 + $0x210] sm:$0xf]
      %v8155 = vld [vmem:[%s244 + $0x214] sm:$0xf]
      %v8156 = vld [vmem:[%s244 + $0x218] sm:$0xf]
      %v8157 = vld [vmem:[%s244 + $0x21c] sm:$0xf]
      %v8158 = vld [vmem:[%s244 + $0x220] sm:$0xf]
      %v8159 = vld [vmem:[%s244 + $0x224] sm:$0xf]
      %v8160 = vld [vmem:[%s244 + $0x228] sm:$0xf]
      %v8161 = vld [vmem:[%s244 + $0x22c] sm:$0xf]
      %v8162 = vld [vmem:[%s244 + $0x230] sm:$0xf]
      %v8163 = vld [vmem:[%s244 + $0x234] sm:$0xf]
      %v8164 = vld [vmem:[%s244 + $0x238] sm:$0xf]
      %v8165 = vld [vmem:[%s244 + $0x23c] sm:$0xf]
      %v8166 = vld [vmem:[%s244 + $0x240] sm:$0x3]
      %v8167 = vld [vmem:[%s248 + $0x30] sm:$0xf]
      %v8168 = vld [vmem:[%s248 + $0x34] sm:$0xf]
      %v8306 = vunpack.c.l.b16 %v8030
      %v8307 = vunpack.c.l.b16 %v8031
      %v8308 = vunpack.c.l.b16 %v8032
      %v8309 = vunpack.c.l.b16 %v8033
      %v8310 = vunpack.c.l.b16 %v8034
      %v8311 = vunpack.c.l.b16 %v8035
      %v8312 = vunpack.c.l.b16 %v8036
      %v8313 = vunpack.c.l.b16 %v8037
      %v8314 = vunpack.c.l.b16 %v8038
      %v8315 = vunpack.c.l.b16 %v8039
      %v8316 = vunpack.c.l.b16 %v8040
      %v8317 = vunpack.c.l.b16 %v8041
      %v8318 = vunpack.c.l.b16 %v8042
      %v8319 = vunpack.c.l.b16 %v8043
      %v8320 = vunpack.c.l.b16 %v8044
      %v8321 = vunpack.c.l.b16 %v8045
      %v8322 = vunpack.c.l.b16 %v8046
      %v8323 = vunpack.c.l.b16 %v8047
      %v8324 = vunpack.c.l.b16 %v8048
      %v8325 = vunpack.c.l.b16 %v8049
      %v8326 = vunpack.c.l.b16 %v8050
      %v8327 = vunpack.c.l.b16 %v8051
      %v8328 = vunpack.c.l.b16 %v8052
      %v8329 = vunpack.c.l.b16 %v8053
      %v8330 = vunpack.c.l.b16 %v8054
      %v8331 = vunpack.c.l.b16 %v8055
      %v8332 = vunpack.c.l.b16 %v8056
      %v8333 = vunpack.c.l.b16 %v8057
      %v8334 = vunpack.c.l.b16 %v8058
      %v8335 = vunpack.c.l.b16 %v8059
      %v8336 = vunpack.c.l.b16 %v8060
      %v8337 = vunpack.c.l.b16 %v8061
      %v8338 = vunpack.c.l.b16 %v8062
      %v8339 = vunpack.c.l.b16 %v8063
      %v8340 = vunpack.c.l.b16 %v8064
      %v8341 = vunpack.c.l.b16 %v8065
      %v8342 = vunpack.c.l.b16 %v8066
      %v8343 = vunpack.c.l.b16 %v8067
      %v8344 = vunpack.c.l.b16 %v8068
      %v8345 = vunpack.c.l.b16 %v8069
      %v8346 = vunpack.c.l.b16 %v8070
      %v8347 = vunpack.c.l.b16 %v8071
      %v8348 = vunpack.c.l.b16 %v8072
      %v8349 = vunpack.c.l.b16 %v8073
      %v8350 = vunpack.c.l.b16 %v8074
      %v8351 = vunpack.c.l.b16 %v8075
      %v8352 = vunpack.c.l.b16 %v8076
      %v8353 = vunpack.c.l.b16 %v8077
      %v8354 = vunpack.c.l.b16 %v8078
      %v8355 = vunpack.c.l.b16 %v8079
      %v8356 = vunpack.c.l.b16 %v8080
      %v8357 = vunpack.c.l.b16 %v8081
      %v8358 = vunpack.c.l.b16 %v8082
      %v8359 = vunpack.c.l.b16 %v8083
      %v8360 = vunpack.c.l.b16 %v8084
      %v8361 = vunpack.c.l.b16 %v8085
      %v8362 = vunpack.c.l.b16 %v8086
      %v8363 = vunpack.c.l.b16 %v8087
      %v8364 = vunpack.c.l.b16 %v8088
      %v8365 = vunpack.c.l.b16 %v8089
      %v8366 = vunpack.c.l.b16 %v8090
      %v8367 = vunpack.c.l.b16 %v8091
      %v8368 = vunpack.c.l.b16 %v8092
      %v8369 = vunpack.c.l.b16 %v8093
      %v8370 = vunpack.c.l.b16 %v8094
      %v8371 = vunpack.c.l.b16 %v8095
      %v8372 = vunpack.c.l.b16 %v8096
      %v8373 = vunpack.c.l.b16 %v8097
      %v8374 = vunpack.c.l.b16 %v8098
      %v8375 = vunpack.c.l.b16 %v8099
      %v8376 = vunpack.c.l.b16 %v8100
      %v8377 = vunpack.c.l.b16 %v8101
      %v8378 = vunpack.c.l.b16 %v8102
      %v8379 = vunpack.c.l.b16 %v8103
      %v8380 = vunpack.c.l.b16 %v8104
      %v8381 = vunpack.c.l.b16 %v8105
      %v8382 = vunpack.c.l.b16 %v8106
      %v8383 = vunpack.c.l.b16 %v8107
      %v8384 = vunpack.c.l.b16 %v8108
      %v8385 = vunpack.c.l.b16 %v8109
      %v8386 = vunpack.c.l.b16 %v8110
      %v8387 = vunpack.c.l.b16 %v8111
      %v8388 = vunpack.c.l.b16 %v8112
      %v8389 = vunpack.c.l.b16 %v8113
      %v8390 = vunpack.c.l.b16 %v8114
      %v8391 = vunpack.c.l.b16 %v8115
      %v8392 = vunpack.c.l.b16 %v8116
      %v8393 = vunpack.c.l.b16 %v8117
      %v8394 = vunpack.c.l.b16 %v8118
      %v8395 = vunpack.c.l.b16 %v8119
      %v8396 = vunpack.c.l.b16 %v8120
      %v8397 = vunpack.c.l.b16 %v8121
      %v8398 = vunpack.c.l.b16 %v8122
      %v8399 = vunpack.c.l.b16 %v8123
      %v8400 = vunpack.c.l.b16 %v8124
      %v8401 = vunpack.c.l.b16 %v8125
      %v8402 = vunpack.c.l.b16 %v8126
      %v8403 = vunpack.c.l.b16 %v8127
      %v8404 = vunpack.c.l.b16 %v8128
      %v8405 = vunpack.c.l.b16 %v8129
      %v8406 = vunpack.c.l.b16 %v8130
      %v8407 = vunpack.c.l.b16 %v8131
      %v8408 = vunpack.c.l.b16 %v8132
      %v8409 = vunpack.c.l.b16 %v8133
      %v8410 = vunpack.c.l.b16 %v8134
      %v8411 = vunpack.c.l.b16 %v8135
      %v8412 = vunpack.c.l.b16 %v8136
      %v8413 = vunpack.c.l.b16 %v8137
      %v8414 = vunpack.c.l.b16 %v8138
      %v8415 = vunpack.c.l.b16 %v8139
      %v8416 = vunpack.c.l.b16 %v8140
      %v8417 = vunpack.c.l.b16 %v8141
      %v8418 = vunpack.c.l.b16 %v8142
      %v8419 = vunpack.c.l.b16 %v8143
      %v8420 = vunpack.c.l.b16 %v8144
      %v8421 = vunpack.c.l.b16 %v8145
      %v8422 = vunpack.c.l.b16 %v8146
      %v8423 = vunpack.c.l.b16 %v8147
      %v8424 = vunpack.c.l.b16 %v8148
      %v8425 = vunpack.c.l.b16 %v8149
      %v8426 = vunpack.c.l.b16 %v8150
      %v8427 = vunpack.c.l.b16 %v8151
      %v8428 = vunpack.c.l.b16 %v8152
      %v8429 = vunpack.c.l.b16 %v8153
      %v8430 = vunpack.c.l.b16 %v8154
      %v8431 = vunpack.c.l.b16 %v8155
      %v8432 = vunpack.c.l.b16 %v8156
      %v8433 = vunpack.c.l.b16 %v8157
      %v8434 = vunpack.c.l.b16 %v8158
      %v8435 = vunpack.c.l.b16 %v8159
      %v8436 = vunpack.c.l.b16 %v8160
      %v8437 = vunpack.c.l.b16 %v8161
      %v8438 = vunpack.c.l.b16 %v8162
      %v8439 = vunpack.c.l.b16 %v8163
      %v8440 = vunpack.c.l.b16 %v8164
      %v8441 = vunpack.c.l.b16 %v8165
      %v8442 = vunpack.c.l.b16 %v8166
      %v8443 = vpack.c.b16 %v8307, %v8306
      %v8444 = vpack.c.b16 %v8309, %v8308
      %v8445 = vpack.c.b16 %v8311, %v8310
      %v8446 = vpack.c.b16 %v8313, %v8312
      %v8447 = vpack.c.b16 %v8315, %v8314
      %v8448 = vpack.c.b16 %v8317, %v8316
      %v8449 = vpack.c.b16 %v8319, %v8318
      %v8450 = vpack.c.b16 %v8321, %v8320
      %v8451 = vpack.c.b16 %v8323, %v8322
      %v8452 = vpack.c.b16 %v8325, %v8324
      %v8453 = vpack.c.b16 %v8327, %v8326
      %v8454 = vpack.c.b16 %v8329, %v8328
      %v8455 = vpack.c.b16 %v8331, %v8330
      %v8456 = vpack.c.b16 %v8333, %v8332
      %v8457 = vpack.c.b16 %v8335, %v8334
      %v8458 = vpack.c.b16 %v8337, %v8336
      %v8459 = vpack.c.b16 %v8339, %v8338
      %v8460 = vpack.c.b16 %v8341, %v8340
      %v8461 = vpack.c.b16 %v8343, %v8342
      %v8462 = vpack.c.b16 %v8345, %v8344
      %v8463 = vpack.c.b16 %v8347, %v8346
      %v8464 = vpack.c.b16 %v8349, %v8348
      %v8465 = vpack.c.b16 %v8351, %v8350
      %v8466 = vpack.c.b16 %v8353, %v8352
      %v8467 = vpack.c.b16 %v8355, %v8354
      %v8468 = vpack.c.b16 %v8357, %v8356
      %v8469 = vpack.c.b16 %v8359, %v8358
      %v8470 = vpack.c.b16 %v8361, %v8360
      %v8471 = vpack.c.b16 %v8363, %v8362
      %v8472 = vpack.c.b16 %v8365, %v8364
      %v8473 = vpack.c.b16 %v8367, %v8366
      %v8474 = vpack.c.b16 %v8369, %v8368
      %v8475 = vpack.c.b16 %v8371, %v8370
      %v8476 = vpack.c.b16 %v8373, %v8372
      %v8477 = vpack.c.b16 %v8375, %v8374
      %v8478 = vpack.c.b16 %v8377, %v8376
      %v8479 = vpack.c.b16 %v8379, %v8378
      %v8480 = vpack.c.b16 %v8381, %v8380
      %v8481 = vpack.c.b16 %v8383, %v8382
      %v8482 = vpack.c.b16 %v8385, %v8384
      %v8483 = vpack.c.b16 %v8387, %v8386
      %v8484 = vpack.c.b16 %v8389, %v8388
      %v8485 = vpack.c.b16 %v8391, %v8390
      %v8486 = vpack.c.b16 %v8393, %v8392
      %v8487 = vpack.c.b16 %v8395, %v8394
      %v8488 = vpack.c.b16 %v8397, %v8396
      %v8489 = vpack.c.b16 %v8399, %v8398
      %v8490 = vpack.c.b16 %v8401, %v8400
      %v8491 = vpack.c.b16 %v8403, %v8402
      %v8492 = vpack.c.b16 %v8405, %v8404
      %v8493 = vpack.c.b16 %v8407, %v8406
      %v8494 = vpack.c.b16 %v8409, %v8408
      %v8495 = vpack.c.b16 %v8411, %v8410
      %v8496 = vpack.c.b16 %v8413, %v8412
      %v8497 = vpack.c.b16 %v8415, %v8414
      %v8498 = vpack.c.b16 %v8417, %v8416
      %v8499 = vpack.c.b16 %v8419, %v8418
      %v8500 = vpack.c.b16 %v8421, %v8420
      %v8501 = vpack.c.b16 %v8423, %v8422
      %v8502 = vpack.c.b16 %v8425, %v8424
      %v8503 = vpack.c.b16 %v8427, %v8426
      %v8504 = vpack.c.b16 %v8429, %v8428
      %v8505 = vpack.c.b16 %v8431, %v8430
      %v8506 = vpack.c.b16 %v8433, %v8432
      %v8507 = vpack.c.b16 %v8435, %v8434
      %v8508 = vpack.c.b16 %v8437, %v8436
      %v8509 = vpack.c.b16 %v8439, %v8438
      %v8510 = vpack.c.b16 %v8441, %v8440
      %v8511 = vpack.c.b16 %v8442, %v8442
      %v8512 = vrot.slane %v8443, 2
      %v8513 = vrot.slane %v8444, 2
      %v8514 = vsel %vm6969, %v8512, %v8513
      %v8515 = vrot.slane %v8445, 2
      %v8516 = vsel %vm6969, %v8513, %v8515
      %v8517 = vrot.slane %v8446, 2
      %v8518 = vsel %vm6969, %v8515, %v8517
      %v8519 = vrot.slane %v8447, 2
      %v8520 = vsel %vm6969, %v8517, %v8519
      %v8521 = vrot.slane %v8448, 2
      %v8522 = vsel %vm6969, %v8519, %v8521
      %v8523 = vrot.slane %v8449, 2
      %v8524 = vsel %vm6969, %v8521, %v8523
      %v8525 = vrot.slane %v8450, 2
      %v8526 = vsel %vm6969, %v8523, %v8525
      %v8527 = vrot.slane %v8451, 2
      %v8528 = vsel %vm6969, %v8525, %v8527
      %v8529 = vrot.slane %v8452, 2
      %v8530 = vsel %vm6969, %v8527, %v8529
      %v8531 = vrot.slane %v8453, 2
      %v8532 = vsel %vm6969, %v8529, %v8531
      %v8533 = vrot.slane %v8454, 2
      %v8534 = vsel %vm6969, %v8531, %v8533
      %v8535 = vrot.slane %v8455, 2
      %v8536 = vsel %vm6969, %v8533, %v8535
      %v8537 = vrot.slane %v8456, 2
      %v8538 = vsel %vm6969, %v8535, %v8537
      %v8539 = vrot.slane %v8457, 2
      %v8540 = vsel %vm6969, %v8537, %v8539
      %v8541 = vrot.slane %v8458, 2
      %v8542 = vsel %vm6969, %v8539, %v8541
      %v8543 = vrot.slane %v8459, 2
      %v8544 = vsel %vm6969, %v8541, %v8543
      %v8545 = vrot.slane %v8460, 2
      %v8546 = vsel %vm6969, %v8543, %v8545
      %v8547 = vrot.slane %v8461, 2
      %v8548 = vsel %vm6969, %v8545, %v8547
      %v8549 = vrot.slane %v8462, 2
      %v8550 = vsel %vm6969, %v8547, %v8549
      %v8551 = vrot.slane %v8463, 2
      %v8552 = vsel %vm6969, %v8549, %v8551
      %v8553 = vrot.slane %v8464, 2
      %v8554 = vsel %vm6969, %v8551, %v8553
      %v8555 = vrot.slane %v8465, 2
      %v8556 = vsel %vm6969, %v8553, %v8555
      %v8557 = vrot.slane %v8466, 2
      %v8558 = vsel %vm6969, %v8555, %v8557
      %v8559 = vrot.slane %v8467, 2
      %v8560 = vsel %vm6969, %v8557, %v8559
      %v8561 = vrot.slane %v8468, 2
      %v8562 = vsel %vm6969, %v8559, %v8561
      %v8563 = vrot.slane %v8469, 2
      %v8564 = vsel %vm6969, %v8561, %v8563
      %v8565 = vrot.slane %v8470, 2
      %v8566 = vsel %vm6969, %v8563, %v8565
      %v8567 = vrot.slane %v8471, 2
      %v8568 = vsel %vm6969, %v8565, %v8567
      %v8569 = vrot.slane %v8472, 2
      %v8570 = vsel %vm6969, %v8567, %v8569
      %v8571 = vrot.slane %v8473, 2
      %v8572 = vsel %vm6969, %v8569, %v8571
      %v8573 = vrot.slane %v8474, 2
      %v8574 = vsel %vm6969, %v8571, %v8573
      %v8575 = vrot.slane %v8475, 2
      %v8576 = vsel %vm6969, %v8573, %v8575
      %v8577 = vrot.slane %v8476, 2
      %v8578 = vsel %vm6969, %v8575, %v8577
      %v8579 = vrot.slane %v8477, 2
      %v8580 = vsel %vm6969, %v8577, %v8579
      %v8581 = vrot.slane %v8478, 2
      %v8582 = vsel %vm6969, %v8579, %v8581
      %v8583 = vrot.slane %v8479, 2
      %v8584 = vsel %vm6969, %v8581, %v8583
      %v8585 = vrot.slane %v8480, 2
      %v8586 = vsel %vm6969, %v8583, %v8585
      %v8587 = vrot.slane %v8481, 2
      %v8588 = vsel %vm6969, %v8585, %v8587
      %v8589 = vrot.slane %v8482, 2
      %v8590 = vsel %vm6969, %v8587, %v8589
      %v8591 = vrot.slane %v8483, 2
      %v8592 = vsel %vm6969, %v8589, %v8591
      %v8593 = vrot.slane %v8484, 2
      %v8594 = vsel %vm6969, %v8591, %v8593
      %v8595 = vrot.slane %v8485, 2
      %v8596 = vsel %vm6969, %v8593, %v8595
      %v8597 = vrot.slane %v8486, 2
      %v8598 = vsel %vm6969, %v8595, %v8597
      %v8599 = vrot.slane %v8487, 2
      %v8600 = vsel %vm6969, %v8597, %v8599
      %v8601 = vrot.slane %v8488, 2
      %v8602 = vsel %vm6969, %v8599, %v8601
      %v8603 = vrot.slane %v8489, 2
      %v8604 = vsel %vm6969, %v8601, %v8603
      %v8605 = vrot.slane %v8490, 2
      %v8606 = vsel %vm6969, %v8603, %v8605
      %v8607 = vrot.slane %v8491, 2
      %v8608 = vsel %vm6969, %v8605, %v8607
      %v8609 = vrot.slane %v8492, 2
      %v8610 = vsel %vm6969, %v8607, %v8609
      %v8611 = vrot.slane %v8493, 2
      %v8612 = vsel %vm6969, %v8609, %v8611
      %v8613 = vrot.slane %v8494, 2
      %v8614 = vsel %vm6969, %v8611, %v8613
      %v8615 = vrot.slane %v8495, 2
      %v8616 = vsel %vm6969, %v8613, %v8615
      %v8617 = vrot.slane %v8496, 2
      %v8618 = vsel %vm6969, %v8615, %v8617
      %v8619 = vrot.slane %v8497, 2
      %v8620 = vsel %vm6969, %v8617, %v8619
      %v8621 = vrot.slane %v8498, 2
      %v8622 = vsel %vm6969, %v8619, %v8621
      %v8623 = vrot.slane %v8499, 2
      %v8624 = vsel %vm6969, %v8621, %v8623
      %v8625 = vrot.slane %v8500, 2
      %v8626 = vsel %vm6969, %v8623, %v8625
      %v8627 = vrot.slane %v8501, 2
      %v8628 = vsel %vm6969, %v8625, %v8627
      %v8629 = vrot.slane %v8502, 2
      %v8630 = vsel %vm6969, %v8627, %v8629
      %v8631 = vrot.slane %v8503, 2
      %v8632 = vsel %vm6969, %v8629, %v8631
      %v8633 = vrot.slane %v8504, 2
      %v8634 = vsel %vm6969, %v8631, %v8633
      %v8635 = vrot.slane %v8505, 2
      %v8636 = vsel %vm6969, %v8633, %v8635
      %v8637 = vrot.slane %v8506, 2
      %v8638 = vsel %vm6969, %v8635, %v8637
      %v8639 = vrot.slane %v8507, 2
      %v8640 = vsel %vm6969, %v8637, %v8639
      %v8641 = vrot.slane %v8508, 2
      %v8642 = vsel %vm6969, %v8639, %v8641
      %v8643 = vrot.slane %v8509, 2
      %v8644 = vsel %vm6969, %v8641, %v8643
      %v8645 = vrot.slane %v8510, 2
      %v8646 = vsel %vm6969, %v8643, %v8645
      %v8647 = vrot.slane %v8511, 2
      %v8648 = vsel %vm6969, %v8645, %v8647
      %v8651 = vunpack.c.l.b16 %v8167
      %v8652 = vunpack.c.l.b16 %v8168
      %v8653 = vpack.c.b16 %v8652, %v8651
      %v8656 = vsel %vm1303, %v8514, 0
      %v8659 = vsel %vm1303, %v8516, 0
      %v8662 = vsel %vm1303, %v8518, 0
      %v8665 = vsel %vm1303, %v8520, 0
      %v8668 = vsel %vm1303, %v8522, 0
      %v8671 = vsel %vm1303, %v8524, 0
      %v8674 = vsel %vm1303, %v8526, 0
      %v8677 = vsel %vm1303, %v8528, 0
      %v8680 = vsel %vm1303, %v8530, 0
      %v8683 = vsel %vm1303, %v8532, 0
      %v8686 = vsel %vm1303, %v8534, 0
      %v8689 = vsel %vm1303, %v8536, 0
      %v8692 = vsel %vm1303, %v8538, 0
      %v8695 = vsel %vm1303, %v8540, 0
      %v8698 = vsel %vm1303, %v8542, 0
      %v8701 = vsel %vm1303, %v8544, 0
      %v8704 = vsel %vm1303, %v8546, 0
      %v8707 = vsel %vm1303, %v8548, 0
      %v8710 = vsel %vm1303, %v8550, 0
      %v8713 = vsel %vm1303, %v8552, 0
      %v8716 = vsel %vm1303, %v8554, 0
      %v8719 = vsel %vm1303, %v8556, 0
      %v8722 = vsel %vm1303, %v8558, 0
      %v8725 = vsel %vm1303, %v8560, 0
      %v8728 = vsel %vm1303, %v8562, 0
      %v8731 = vsel %vm1303, %v8564, 0
      %v8734 = vsel %vm1303, %v8566, 0
      %v8737 = vsel %vm1303, %v8568, 0
      %v8740 = vsel %vm1303, %v8570, 0
      %v8743 = vsel %vm1303, %v8572, 0
      %v8746 = vsel %vm1303, %v8574, 0
      %v8749 = vsel %vm1303, %v8576, 0
      %v8752 = vsel %vm1303, %v8578, 0
      %v8755 = vsel %vm1303, %v8580, 0
      %v8758 = vsel %vm1303, %v8582, 0
      %v8761 = vsel %vm1303, %v8584, 0
      %v8764 = vsel %vm1303, %v8586, 0
      %v8767 = vsel %vm1303, %v8588, 0
      %v8770 = vsel %vm1303, %v8590, 0
      %v8773 = vsel %vm1303, %v8592, 0
      %v8776 = vsel %vm1303, %v8594, 0
      %v8779 = vsel %vm1303, %v8596, 0
      %v8782 = vsel %vm1303, %v8598, 0
      %v8785 = vsel %vm1303, %v8600, 0
      %v8788 = vsel %vm1303, %v8602, 0
      %v8791 = vsel %vm1303, %v8604, 0
      %v8794 = vsel %vm1303, %v8606, 0
      %v8797 = vsel %vm1303, %v8608, 0
      %v8800 = vsel %vm1303, %v8610, 0
      %v8803 = vsel %vm1303, %v8612, 0
      %v8806 = vsel %vm1303, %v8614, 0
      %v8809 = vsel %vm1303, %v8616, 0
      %v8812 = vsel %vm1303, %v8618, 0
      %v8815 = vsel %vm1303, %v8620, 0
      %v8818 = vsel %vm1303, %v8622, 0
      %v8821 = vsel %vm1303, %v8624, 0
      %v8824 = vsel %vm1303, %v8626, 0
      %v8827 = vsel %vm1303, %v8628, 0
      %v8830 = vsel %vm1303, %v8630, 0
      %v8833 = vsel %vm1303, %v8632, 0
      %v8836 = vsel %vm1303, %v8634, 0
      %v8839 = vsel %vm1303, %v8636, 0
      %v8842 = vsel %vm1303, %v8638, 0
      %v8845 = vsel %vm1303, %v8640, 0
      %v8848 = vsel %vm1303, %v8642, 0
      %v8851 = vsel %vm1303, %v8644, 0
      %v8854 = vsel %vm1303, %v8646, 0
      %v8857 = vsel %vm1303, %v8648, 0
      %8859 = vmatprep.subr.bf16.mxu0 0
      %8860 = vmatpush1.bf16.msra.mxu0 %v8653
      %8861 = vmatprep.subr.bf16.mxu0 0
      %8862 = vmatpush1.bf16.msra.mxu0 0
      %8863 = vmatprep.subr.bf16.mxu0 0
      %8864 = vmatpush1.bf16.msra.mxu0 0
      %8865 = vmatprep.subr.bf16.mxu0 0
      %8866 = vmatpush1.bf16.msra.mxu0 0
      %8867 = vmatprep.subr.bf16.mxu0 0
      %8868 = vmatpush1.bf16.msra.mxu0 0
      %8869 = vmatprep.subr.bf16.mxu0 0
      %8870 = vmatpush1.bf16.msra.mxu0 0
      %8871 = vmatprep.subr.bf16.mxu0 0
      %8872 = vmatpush1.bf16.msra.mxu0 0
      %8873 = vmatprep.subr.bf16.mxu0 0
      %8874 = vmatpush1.bf16.msra.mxu0 0
      %8875 = vmatprep.subr.bf16.mxu0 0
      %8876 = vmatpush1.bf16.msra.mxu0 0
      %8877 = vmatprep.subr.bf16.mxu0 0
      %8878 = vmatpush1.bf16.msra.mxu0 0
      %8879 = vmatprep.subr.bf16.mxu0 0
      %8880 = vmatpush1.bf16.msra.mxu0 0
      %8881 = vmatprep.subr.bf16.mxu0 0
      %8882 = vmatpush1.bf16.msra.mxu0 0
      %8883 = vmatprep.subr.bf16.mxu0 0
      %8884 = vmatpush1.bf16.msra.mxu0 0
      %8885 = vmatprep.subr.bf16.mxu0 0
      %8886 = vmatpush1.bf16.msra.mxu0 0
      %8887 = vmatprep.subr.bf16.mxu0 0
      %8888 = vmatpush1.bf16.msra.mxu0 0
      %8889 = vmatprep.subr.bf16.mxu0 0
      %8890 = vmatpush1.bf16.msra.mxu0 0
      %8891 = vmatprep.mubr.bf16.mxu0 0
      %8892 = vmatmul.mubr.bf16.gmra.mrb[0].mxu0 %v8656
      %v8893 = vpop.f32.mrb[0].mxu0
      %v8894 = vadd.f32 0.0, %v8893
      %v8895 = vpop.f32.mrb[0].mxu0
      %v8896 = vpop.f32.mrb[0].mxu0
      %v8897 = vadd.f32 0.0, %v8896
      %v8898 = vpop.f32.mrb[0].mxu0
      %8899 = vmatprep.mubr.bf16.mxu0 0
      %8900 = vmatmul.mubr.bf16.gmra.mrb[0].mxu0 %v8659
      %v8901 = vpop.f32.mrb[0].mxu0
      %v8902 = vadd.f32 0.0, %v8901
      %v8903 = vpop.f32.mrb[0].mxu0
      %v8904 = vpop.f32.mrb[0].mxu0
      %v8905 = vadd.f32 0.0, %v8904
      %v8906 = vpop.f32.mrb[0].mxu0
      %8907 = vmatprep.mubr.bf16.mxu0 0
      %8908 = vmatmul.mubr.bf16.gmra.mrb[0].mxu0 %v8662
      %v8909 = vpop.f32.mrb[0].mxu0
      %v8910 = vadd.f32 0.0, %v8909
      %v8911 = vpop.f32.mrb[0].mxu0
      %v8912 = vpop.f32.mrb[0].mxu0
      %v8913 = vadd.f32 0.0, %v8912
      %v8914 = vpop.f32.mrb[0].mxu0
      %8915 = vmatprep.mubr.bf16.mxu0 0
      %8916 = vmatmul.mubr.bf16.gmra.mrb[0].mxu0 %v8665
      %v8917 = vpop.f32.mrb[0].mxu0
      %v8918 = vadd.f32 0.0, %v8917
      %v8919 = vpop.f32.mrb[0].mxu0
      %v8920 = vpop.f32.mrb[0].mxu0
      %v8921 = vadd.f32 0.0, %v8920
      %v8922 = vpop.f32.mrb[0].mxu0
      %8923 = vmatprep.mubr.bf16.mxu0 0
      %8924 = vmatmul.mubr.bf16.gmra.mrb[0].mxu0 %v8668
      %v8925 = vpop.f32.mrb[0].mxu0
      %v8926 = vadd.f32 0.0, %v8925
      %v8927 = vpop.f32.mrb[0].mxu0
      %v8928 = vpop.f32.mrb[0].mxu0
      %v8929 = vadd.f32 0.0, %v8928
      %v8930 = vpop.f32.mrb[0].mxu0
      %8931 = vmatprep.mubr.bf16.mxu0 0
      %8932 = vmatmul.mubr.bf16.gmra.mrb[0].mxu0 %v8671
      %v8933 = vpop.f32.mrb[0].mxu0
      %v8934 = vadd.f32 0.0, %v8933
      %v8935 = vpop.f32.mrb[0].mxu0
      %v8936 = vpop.f32.mrb[0].mxu0
      %v8937 = vadd.f32 0.0, %v8936
      %v8938 = vpop.f32.mrb[0].mxu0
      %8939 = vmatprep.mubr.bf16.mxu0 0
      %8940 = vmatmul.mubr.bf16.gmra.mrb[0].mxu0 %v8674
      %v8941 = vpop.f32.mrb[0].mxu0
      %v8942 = vadd.f32 0.0, %v8941
      %v8943 = vpop.f32.mrb[0].mxu0
      %v8944 = vpop.f32.mrb[0].mxu0
      %v8945 = vadd.f32 0.0, %v8944
      %v8946 = vpop.f32.mrb[0].mxu0
      %8947 = vmatprep.mubr.bf16.mxu0 0
      %8948 = vmatmul.mubr.bf16.gmra.mrb[0].mxu0 %v8677
      %v8949 = vpop.f32.mrb[0].mxu0
      %v8950 = vadd.f32 0.0, %v8949
      %v8951 = vpop.f32.mrb[0].mxu0
      %v8952 = vpop.f32.mrb[0].mxu0
      %v8953 = vadd.f32 0.0, %v8952
      %v8954 = vpop.f32.mrb[0].mxu0
      %8955 = vmatprep.mubr.bf16.mxu0 0
      %8956 = vmatmul.mubr.bf16.gmra.mrb[0].mxu0 %v8680
      %v8957 = vpop.f32.mrb[0].mxu0
      %v8958 = vadd.f32 0.0, %v8957
      %v8959 = vpop.f32.mrb[0].mxu0
      %v8960 = vpop.f32.mrb[0].mxu0
      %v8961 = vadd.f32 0.0, %v8960
      %v8962 = vpop.f32.mrb[0].mxu0
      %8963 = vmatprep.mubr.bf16.mxu0 0
      %8964 = vmatmul.mubr.bf16.gmra.mrb[0].mxu0 %v8683
      %v8965 = vpop.f32.mrb[0].mxu0
      %v8966 = vadd.f32 0.0, %v8965
      %v8967 = vpop.f32.mrb[0].mxu0
      %v8968 = vpop.f32.mrb[0].mxu0
      %v8969 = vadd.f32 0.0, %v8968
      %v8970 = vpop.f32.mrb[0].mxu0
      %8971 = vmatprep.mubr.bf16.mxu0 0
      %8972 = vmatmul.mubr.bf16.gmra.mrb[0].mxu0 %v8686
      %v8973 = vpop.f32.mrb[0].mxu0
      %v8974 = vadd.f32 0.0, %v8973
      %v8975 = vpop.f32.mrb[0].mxu0
      %v8976 = vpop.f32.mrb[0].mxu0
      %v8977 = vadd.f32 0.0, %v8976
      %v8978 = vpop.f32.mrb[0].mxu0
      %8979 = vmatprep.mubr.bf16.mxu0 0
      %8980 = vmatmul.mubr.bf16.gmra.mrb[0].mxu0 %v8689
      %v8981 = vpop.f32.mrb[0].mxu0
      %v8982 = vadd.f32 0.0, %v8981
      %v8983 = vpop.f32.mrb[0].mxu0
      %v8984 = vpop.f32.mrb[0].mxu0
      %v8985 = vadd.f32 0.0, %v8984
      %v8986 = vpop.f32.mrb[0].mxu0
      %8987 = vmatprep.mubr.bf16.mxu0 0
      %8988 = vmatmul.mubr.bf16.gmra.mrb[0].mxu0 %v8692
      %v8989 = vpop.f32.mrb[0].mxu0
      %v8990 = vadd.f32 0.0, %v8989
      %v8991 = vpop.f32.mrb[0].mxu0
      %v8992 = vpop.f32.mrb[0].mxu0
      %v8993 = vadd.f32 0.0, %v8992
      %v8994 = vpop.f32.mrb[0].mxu0
      %8995 = vmatprep.mubr.bf16.mxu0 0
      %8996 = vmatmul.mubr.bf16.gmra.mrb[0].mxu0 %v8695
      %v8997 = vpop.f32.mrb[0].mxu0
      %v8998 = vadd.f32 0.0, %v8997
      %v8999 = vpop.f32.mrb[0].mxu0
      %v9000 = vpop.f32.mrb[0].mxu0
      %v9001 = vadd.f32 0.0, %v9000
      %v9002 = vpop.f32.mrb[0].mxu0
      %9003 = vmatprep.mubr.bf16.mxu0 0
      %9004 = vmatmul.mubr.bf16.gmra.mrb[0].mxu0 %v8698
      %v9005 = vpop.f32.mrb[0].mxu0
      %v9006 = vadd.f32 0.0, %v9005
      %v9007 = vpop.f32.mrb[0].mxu0
      %v9008 = vpop.f32.mrb[0].mxu0
      %v9009 = vadd.f32 0.0, %v9008
      %v9010 = vpop.f32.mrb[0].mxu0
      %9011 = vmatprep.mubr.bf16.mxu0 0
      %9012 = vmatmul.mubr.bf16.gmra.mrb[0].mxu0 %v8701
      %v9013 = vpop.f32.mrb[0].mxu0
      %v9014 = vadd.f32 0.0, %v9013
      %v9015 = vpop.f32.mrb[0].mxu0
      %v9016 = vpop.f32.mrb[0].mxu0
      %v9017 = vadd.f32 0.0, %v9016
      %v9018 = vpop.f32.mrb[0].mxu0
      %9019 = vmatprep.mubr.bf16.mxu0 0
      %9020 = vmatmul.mubr.bf16.gmra.mrb[0].mxu0 %v8704
      %v9021 = vpop.f32.mrb[0].mxu0
      %v9022 = vadd.f32 0.0, %v9021
      %v9023 = vpop.f32.mrb[0].mxu0
      %v9024 = vpop.f32.mrb[0].mxu0
      %v9025 = vadd.f32 0.0, %v9024
      %v9026 = vpop.f32.mrb[0].mxu0
      %9027 = vmatprep.mubr.bf16.mxu0 0
      %9028 = vmatmul.mubr.bf16.gmra.mrb[0].mxu0 %v8707
      %v9029 = vpop.f32.mrb[0].mxu0
      %v9030 = vadd.f32 0.0, %v9029
      %v9031 = vpop.f32.mrb[0].mxu0
      %v9032 = vpop.f32.mrb[0].mxu0
      %v9033 = vadd.f32 0.0, %v9032
      %v9034 = vpop.f32.mrb[0].mxu0
      %9035 = vmatprep.mubr.bf16.mxu0 0
      %9036 = vmatmul.mubr.bf16.gmra.mrb[0].mxu0 %v8710
      %v9037 = vpop.f32.mrb[0].mxu0
      %v9038 = vadd.f32 0.0, %v9037
      %v9039 = vpop.f32.mrb[0].mxu0
      %v9040 = vpop.f32.mrb[0].mxu0
      %v9041 = vadd.f32 0.0, %v9040
      %v9042 = vpop.f32.mrb[0].mxu0
      %9043 = vmatprep.mubr.bf16.mxu0 0
      %9044 = vmatmul.mubr.bf16.gmra.mrb[0].mxu0 %v8713
      %v9045 = vpop.f32.mrb[0].mxu0
      %v9046 = vadd.f32 0.0, %v9045
      %v9047 = vpop.f32.mrb[0].mxu0
      %v9048 = vpop.f32.mrb[0].mxu0
      %v9049 = vadd.f32 0.0, %v9048
      %v9050 = vpop.f32.mrb[0].mxu0
      %9051 = vmatprep.mubr.bf16.mxu0 0
      %9052 = vmatmul.mubr.bf16.gmra.mrb[0].mxu0 %v8716
      %v9053 = vpop.f32.mrb[0].mxu0
      %v9054 = vadd.f32 0.0, %v9053
      %v9055 = vpop.f32.mrb[0].mxu0
      %v9056 = vpop.f32.mrb[0].mxu0
      %v9057 = vadd.f32 0.0, %v9056
      %v9058 = vpop.f32.mrb[0].mxu0
      %9059 = vmatprep.mubr.bf16.mxu0 0
      %9060 = vmatmul.mubr.bf16.gmra.mrb[0].mxu0 %v8719
      %v9061 = vpop.f32.mrb[0].mxu0
      %v9062 = vadd.f32 0.0, %v9061
      %v9063 = vpop.f32.mrb[0].mxu0
      %v9064 = vpop.f32.mrb[0].mxu0
      %v9065 = vadd.f32 0.0, %v9064
      %v9066 = vpop.f32.mrb[0].mxu0
      %9067 = vmatprep.mubr.bf16.mxu0 0
      %9068 = vmatmul.mubr.bf16.gmra.mrb[0].mxu0 %v8722
      %v9069 = vpop.f32.mrb[0].mxu0
      %v9070 = vadd.f32 0.0, %v9069
      %v9071 = vpop.f32.mrb[0].mxu0
      %v9072 = vpop.f32.mrb[0].mxu0
      %v9073 = vadd.f32 0.0, %v9072
      %v9074 = vpop.f32.mrb[0].mxu0
      %9075 = vmatprep.mubr.bf16.mxu0 0
      %9076 = vmatmul.mubr.bf16.gmra.mrb[0].mxu0 %v8725
      %v9077 = vpop.f32.mrb[0].mxu0
      %v9078 = vadd.f32 0.0, %v9077
      %v9079 = vpop.f32.mrb[0].mxu0
      %v9080 = vpop.f32.mrb[0].mxu0
      %v9081 = vadd.f32 0.0, %v9080
      %v9082 = vpop.f32.mrb[0].mxu0
      %9083 = vmatprep.mubr.bf16.mxu0 0
      %9084 = vmatmul.mubr.bf16.gmra.mrb[0].mxu0 %v8728
      %v9085 = vpop.f32.mrb[0].mxu0
      %v9086 = vadd.f32 0.0, %v9085
      %v9087 = vpop.f32.mrb[0].mxu0
      %v9088 = vpop.f32.mrb[0].mxu0
      %v9089 = vadd.f32 0.0, %v9088
      %v9090 = vpop.f32.mrb[0].mxu0
      %9091 = vmatprep.mubr.bf16.mxu0 0
      %9092 = vmatmul.mubr.bf16.gmra.mrb[0].mxu0 %v8731
      %v9093 = vpop.f32.mrb[0].mxu0
      %v9094 = vadd.f32 0.0, %v9093
      %v9095 = vpop.f32.mrb[0].mxu0
      %v9096 = vpop.f32.mrb[0].mxu0
      %v9097 = vadd.f32 0.0, %v9096
      %v9098 = vpop.f32.mrb[0].mxu0
      %9099 = vmatprep.mubr.bf16.mxu0 0
      %9100 = vmatmul.mubr.bf16.gmra.mrb[0].mxu0 %v8734
      %v9101 = vpop.f32.mrb[0].mxu0
      %v9102 = vadd.f32 0.0, %v9101
      %v9103 = vpop.f32.mrb[0].mxu0
      %v9104 = vpop.f32.mrb[0].mxu0
      %v9105 = vadd.f32 0.0, %v9104
      %v9106 = vpop.f32.mrb[0].mxu0
      %9107 = vmatprep.mubr.bf16.mxu0 0
      %9108 = vmatmul.mubr.bf16.gmra.mrb[0].mxu0 %v8737
      %v9109 = vpop.f32.mrb[0].mxu0
      %v9110 = vadd.f32 0.0, %v9109
      %v9111 = vpop.f32.mrb[0].mxu0
      %v9112 = vpop.f32.mrb[0].mxu0
      %v9113 = vadd.f32 0.0, %v9112
      %v9114 = vpop.f32.mrb[0].mxu0
      %9115 = vmatprep.mubr.bf16.mxu0 0
      %9116 = vmatmul.mubr.bf16.gmra.mrb[0].mxu0 %v8740
      %v9117 = vpop.f32.mrb[0].mxu0
      %v9118 = vadd.f32 0.0, %v9117
      %v9119 = vpop.f32.mrb[0].mxu0
      %v9120 = vpop.f32.mrb[0].mxu0
      %v9121 = vadd.f32 0.0, %v9120
      %v9122 = vpop.f32.mrb[0].mxu0
      %9123 = vmatprep.mubr.bf16.mxu0 0
      %9124 = vmatmul.mubr.bf16.gmra.mrb[0].mxu0 %v8743
      %v9125 = vpop.f32.mrb[0].mxu0
      %v9126 = vadd.f32 0.0, %v9125
      %v9127 = vpop.f32.mrb[0].mxu0
      %v9128 = vpop.f32.mrb[0].mxu0
      %v9129 = vadd.f32 0.0, %v9128
      %v9130 = vpop.f32.mrb[0].mxu0
      %9131 = vmatprep.mubr.bf16.mxu0 0
      %9132 = vmatmul.mubr.bf16.gmra.mrb[0].mxu0 %v8746
      %v9133 = vpop.f32.mrb[0].mxu0
      %v9134 = vadd.f32 0.0, %v9133
      %v9135 = vpop.f32.mrb[0].mxu0
      %v9136 = vpop.f32.mrb[0].mxu0
      %v9137 = vadd.f32 0.0, %v9136
      %v9138 = vpop.f32.mrb[0].mxu0
      %9139 = vmatprep.mubr.bf16.mxu0 0
      %9140 = vmatmul.mubr.bf16.gmra.mrb[0].mxu0 %v8749
      %v9141 = vpop.f32.mrb[0].mxu0
      %v9142 = vadd.f32 0.0, %v9141
      %v9143 = vpop.f32.mrb[0].mxu0
      %v9144 = vpop.f32.mrb[0].mxu0
      %v9145 = vadd.f32 0.0, %v9144
      %v9146 = vpop.f32.mrb[0].mxu0
      %9147 = vmatprep.mubr.bf16.mxu0 0
      %9148 = vmatmul.mubr.bf16.gmra.mrb[0].mxu0 %v8752
      %v9149 = vpop.f32.mrb[0].mxu0
      %v9150 = vadd.f32 0.0, %v9149
      %v9151 = vpop.f32.mrb[0].mxu0
      %v9152 = vpop.f32.mrb[0].mxu0
      %v9153 = vadd.f32 0.0, %v9152
      %v9154 = vpop.f32.mrb[0].mxu0
      %9155 = vmatprep.mubr.bf16.mxu0 0
      %9156 = vmatmul.mubr.bf16.gmra.mrb[0].mxu0 %v8755
      %v9157 = vpop.f32.mrb[0].mxu0
      %v9158 = vadd.f32 0.0, %v9157
      %v9159 = vpop.f32.mrb[0].mxu0
      %v9160 = vpop.f32.mrb[0].mxu0
      %v9161 = vadd.f32 0.0, %v9160
      %v9162 = vpop.f32.mrb[0].mxu0
      %9163 = vmatprep.mubr.bf16.mxu0 0
      %9164 = vmatmul.mubr.bf16.gmra.mrb[0].mxu0 %v8758
      %v9165 = vpop.f32.mrb[0].mxu0
      %v9166 = vadd.f32 0.0, %v9165
      %v9167 = vpop.f32.mrb[0].mxu0
      %v9168 = vpop.f32.mrb[0].mxu0
      %v9169 = vadd.f32 0.0, %v9168
      %v9170 = vpop.f32.mrb[0].mxu0
      %9171 = vmatprep.mubr.bf16.mxu0 0
      %9172 = vmatmul.mubr.bf16.gmra.mrb[0].mxu0 %v8761
      %v9173 = vpop.f32.mrb[0].mxu0
      %v9174 = vadd.f32 0.0, %v9173
      %v9175 = vpop.f32.mrb[0].mxu0
      %v9176 = vpop.f32.mrb[0].mxu0
      %v9177 = vadd.f32 0.0, %v9176
      %v9178 = vpop.f32.mrb[0].mxu0
      %9179 = vmatprep.mubr.bf16.mxu0 0
      %9180 = vmatmul.mubr.bf16.gmra.mrb[0].mxu0 %v8764
      %v9181 = vpop.f32.mrb[0].mxu0
      %v9182 = vadd.f32 0.0, %v9181
      %v9183 = vpop.f32.mrb[0].mxu0
      %v9184 = vpop.f32.mrb[0].mxu0
      %v9185 = vadd.f32 0.0, %v9184
      %v9186 = vpop.f32.mrb[0].mxu0
      %9187 = vmatprep.mubr.bf16.mxu0 0
      %9188 = vmatmul.mubr.bf16.gmra.mrb[0].mxu0 %v8767
      %v9189 = vpop.f32.mrb[0].mxu0
      %v9190 = vadd.f32 0.0, %v9189
      %v9191 = vpop.f32.mrb[0].mxu0
      %v9192 = vpop.f32.mrb[0].mxu0
      %v9193 = vadd.f32 0.0, %v9192
      %v9194 = vpop.f32.mrb[0].mxu0
      %9195 = vmatprep.mubr.bf16.mxu0 0
      %9196 = vmatmul.mubr.bf16.gmra.mrb[0].mxu0 %v8770
      %v9197 = vpop.f32.mrb[0].mxu0
      %v9198 = vadd.f32 0.0, %v9197
      %v9199 = vpop.f32.mrb[0].mxu0
      %v9200 = vpop.f32.mrb[0].mxu0
      %v9201 = vadd.f32 0.0, %v9200
      %v9202 = vpop.f32.mrb[0].mxu0
      %9203 = vmatprep.mubr.bf16.mxu0 0
      %9204 = vmatmul.mubr.bf16.gmra.mrb[0].mxu0 %v8773
      %v9205 = vpop.f32.mrb[0].mxu0
      %v9206 = vadd.f32 0.0, %v9205
      %v9207 = vpop.f32.mrb[0].mxu0
      %v9208 = vpop.f32.mrb[0].mxu0
      %v9209 = vadd.f32 0.0, %v9208
      %v9210 = vpop.f32.mrb[0].mxu0
      %9211 = vmatprep.mubr.bf16.mxu0 0
      %9212 = vmatmul.mubr.bf16.gmra.mrb[0].mxu0 %v8776
      %v9213 = vpop.f32.mrb[0].mxu0
      %v9214 = vadd.f32 0.0, %v9213
      %v9215 = vpop.f32.mrb[0].mxu0
      %v9216 = vpop.f32.mrb[0].mxu0
      %v9217 = vadd.f32 0.0, %v9216
      %v9218 = vpop.f32.mrb[0].mxu0
      %9219 = vmatprep.mubr.bf16.mxu0 0
      %9220 = vmatmul.mubr.bf16.gmra.mrb[0].mxu0 %v8779
      %v9221 = vpop.f32.mrb[0].mxu0
      %v9222 = vadd.f32 0.0, %v9221
      %v9223 = vpop.f32.mrb[0].mxu0
      %v9224 = vpop.f32.mrb[0].mxu0
      %v9225 = vadd.f32 0.0, %v9224
      %v9226 = vpop.f32.mrb[0].mxu0
      %9227 = vmatprep.mubr.bf16.mxu0 0
      %9228 = vmatmul.mubr.bf16.gmra.mrb[0].mxu0 %v8782
      %v9229 = vpop.f32.mrb[0].mxu0
      %v9230 = vadd.f32 0.0, %v9229
      %v9231 = vpop.f32.mrb[0].mxu0
      %v9232 = vpop.f32.mrb[0].mxu0
      %v9233 = vadd.f32 0.0, %v9232
      %v9234 = vpop.f32.mrb[0].mxu0
      %9235 = vmatprep.mubr.bf16.mxu0 0
      %9236 = vmatmul.mubr.bf16.gmra.mrb[0].mxu0 %v8785
      %v9237 = vpop.f32.mrb[0].mxu0
      %v9238 = vadd.f32 0.0, %v9237
      %v9239 = vpop.f32.mrb[0].mxu0
      %v9240 = vpop.f32.mrb[0].mxu0
      %v9241 = vadd.f32 0.0, %v9240
      %v9242 = vpop.f32.mrb[0].mxu0
      %9243 = vmatprep.mubr.bf16.mxu0 0
      %9244 = vmatmul.mubr.bf16.gmra.mrb[0].mxu0 %v8788
      %v9245 = vpop.f32.mrb[0].mxu0
      %v9246 = vadd.f32 0.0, %v9245
      %v9247 = vpop.f32.mrb[0].mxu0
      %v9248 = vpop.f32.mrb[0].mxu0
      %v9249 = vadd.f32 0.0, %v9248
      %v9250 = vpop.f32.mrb[0].mxu0
      %9251 = vmatprep.mubr.bf16.mxu0 0
      %9252 = vmatmul.mubr.bf16.gmra.mrb[0].mxu0 %v8791
      %v9253 = vpop.f32.mrb[0].mxu0
      %v9254 = vadd.f32 0.0, %v9253
      %v9255 = vpop.f32.mrb[0].mxu0
      %v9256 = vpop.f32.mrb[0].mxu0
      %v9257 = vadd.f32 0.0, %v9256
      %v9258 = vpop.f32.mrb[0].mxu0
      %9259 = vmatprep.mubr.bf16.mxu0 0
      %9260 = vmatmul.mubr.bf16.gmra.mrb[0].mxu0 %v8794
      %v9261 = vpop.f32.mrb[0].mxu0
      %v9262 = vadd.f32 0.0, %v9261
      %v9263 = vpop.f32.mrb[0].mxu0
      %v9264 = vpop.f32.mrb[0].mxu0
      %v9265 = vadd.f32 0.0, %v9264
      %v9266 = vpop.f32.mrb[0].mxu0
      %9267 = vmatprep.mubr.bf16.mxu0 0
      %9268 = vmatmul.mubr.bf16.gmra.mrb[0].mxu0 %v8797
      %v9269 = vpop.f32.mrb[0].mxu0
      %v9270 = vadd.f32 0.0, %v9269
      %v9271 = vpop.f32.mrb[0].mxu0
      %v9272 = vpop.f32.mrb[0].mxu0
      %v9273 = vadd.f32 0.0, %v9272
      %v9274 = vpop.f32.mrb[0].mxu0
      %9275 = vmatprep.mubr.bf16.mxu0 0
      %9276 = vmatmul.mubr.bf16.gmra.mrb[0].mxu0 %v8800
      %v9277 = vpop.f32.mrb[0].mxu0
      %v9278 = vadd.f32 0.0, %v9277
      %v9279 = vpop.f32.mrb[0].mxu0
      %v9280 = vpop.f32.mrb[0].mxu0
      %v9281 = vadd.f32 0.0, %v9280
      %v9282 = vpop.f32.mrb[0].mxu0
      %9283 = vmatprep.mubr.bf16.mxu0 0
      %9284 = vmatmul.mubr.bf16.gmra.mrb[0].mxu0 %v8803
      %v9285 = vpop.f32.mrb[0].mxu0
      %v9286 = vadd.f32 0.0, %v9285
      %v9287 = vpop.f32.mrb[0].mxu0
      %v9288 = vpop.f32.mrb[0].mxu0
      %v9289 = vadd.f32 0.0, %v9288
      %v9290 = vpop.f32.mrb[0].mxu0
      %9291 = vmatprep.mubr.bf16.mxu0 0
      %9292 = vmatmul.mubr.bf16.gmra.mrb[0].mxu0 %v8806
      %v9293 = vpop.f32.mrb[0].mxu0
      %v9294 = vadd.f32 0.0, %v9293
      %v9295 = vpop.f32.mrb[0].mxu0
      %v9296 = vpop.f32.mrb[0].mxu0
      %v9297 = vadd.f32 0.0, %v9296
      %v9298 = vpop.f32.mrb[0].mxu0
      %9299 = vmatprep.mubr.bf16.mxu0 0
      %9300 = vmatmul.mubr.bf16.gmra.mrb[0].mxu0 %v8809
      %v9301 = vpop.f32.mrb[0].mxu0
      %v9302 = vadd.f32 0.0, %v9301
      %v9303 = vpop.f32.mrb[0].mxu0
      %v9304 = vpop.f32.mrb[0].mxu0
      %v9305 = vadd.f32 0.0, %v9304
      %v9306 = vpop.f32.mrb[0].mxu0
      %9307 = vmatprep.mubr.bf16.mxu0 0
      %9308 = vmatmul.mubr.bf16.gmra.mrb[0].mxu0 %v8812
      %v9309 = vpop.f32.mrb[0].mxu0
      %v9310 = vadd.f32 0.0, %v9309
      %v9311 = vpop.f32.mrb[0].mxu0
      %v9312 = vpop.f32.mrb[0].mxu0
      %v9313 = vadd.f32 0.0, %v9312
      %v9314 = vpop.f32.mrb[0].mxu0
      %9315 = vmatprep.mubr.bf16.mxu0 0
      %9316 = vmatmul.mubr.bf16.gmra.mrb[0].mxu0 %v8815
      %v9317 = vpop.f32.mrb[0].mxu0
      %v9318 = vadd.f32 0.0, %v9317
      %v9319 = vpop.f32.mrb[0].mxu0
      %v9320 = vpop.f32.mrb[0].mxu0
      %v9321 = vadd.f32 0.0, %v9320
      %v9322 = vpop.f32.mrb[0].mxu0
      %9323 = vmatprep.mubr.bf16.mxu0 0
      %9324 = vmatmul.mubr.bf16.gmra.mrb[0].mxu0 %v8818
      %v9325 = vpop.f32.mrb[0].mxu0
      %v9326 = vadd.f32 0.0, %v9325
      %v9327 = vpop.f32.mrb[0].mxu0
      %v9328 = vpop.f32.mrb[0].mxu0
      %v9329 = vadd.f32 0.0, %v9328
      %v9330 = vpop.f32.mrb[0].mxu0
      %9331 = vmatprep.mubr.bf16.mxu0 0
      %9332 = vmatmul.mubr.bf16.gmra.mrb[0].mxu0 %v8821
      %v9333 = vpop.f32.mrb[0].mxu0
      %v9334 = vadd.f32 0.0, %v9333
      %v9335 = vpop.f32.mrb[0].mxu0
      %v9336 = vpop.f32.mrb[0].mxu0
      %v9337 = vadd.f32 0.0, %v9336
      %v9338 = vpop.f32.mrb[0].mxu0
      %9339 = vmatprep.mubr.bf16.mxu0 0
      %9340 = vmatmul.mubr.bf16.gmra.mrb[0].mxu0 %v8824
      %v9341 = vpop.f32.mrb[0].mxu0
      %v9342 = vadd.f32 0.0, %v9341
      %v9343 = vpop.f32.mrb[0].mxu0
      %v9344 = vpop.f32.mrb[0].mxu0
      %v9345 = vadd.f32 0.0, %v9344
      %v9346 = vpop.f32.mrb[0].mxu0
      %9347 = vmatprep.mubr.bf16.mxu0 0
      %9348 = vmatmul.mubr.bf16.gmra.mrb[0].mxu0 %v8827
      %v9349 = vpop.f32.mrb[0].mxu0
      %v9350 = vadd.f32 0.0, %v9349
      %v9351 = vpop.f32.mrb[0].mxu0
      %v9352 = vpop.f32.mrb[0].mxu0
      %v9353 = vadd.f32 0.0, %v9352
      %v9354 = vpop.f32.mrb[0].mxu0
      %9355 = vmatprep.mubr.bf16.mxu0 0
      %9356 = vmatmul.mubr.bf16.gmra.mrb[0].mxu0 %v8830
      %v9357 = vpop.f32.mrb[0].mxu0
      %v9358 = vadd.f32 0.0, %v9357
      %v9359 = vpop.f32.mrb[0].mxu0
      %v9360 = vpop.f32.mrb[0].mxu0
      %v9361 = vadd.f32 0.0, %v9360
      %v9362 = vpop.f32.mrb[0].mxu0
      %9363 = vmatprep.mubr.bf16.mxu0 0
      %9364 = vmatmul.mubr.bf16.gmra.mrb[0].mxu0 %v8833
      %v9365 = vpop.f32.mrb[0].mxu0
      %v9366 = vadd.f32 0.0, %v9365
      %v9367 = vpop.f32.mrb[0].mxu0
      %v9368 = vpop.f32.mrb[0].mxu0
      %v9369 = vadd.f32 0.0, %v9368
      %v9370 = vpop.f32.mrb[0].mxu0
      %9371 = vmatprep.mubr.bf16.mxu0 0
      %9372 = vmatmul.mubr.bf16.gmra.mrb[0].mxu0 %v8836
      %v9373 = vpop.f32.mrb[0].mxu0
      %v9374 = vadd.f32 0.0, %v9373
      %v9375 = vpop.f32.mrb[0].mxu0
      %v9376 = vpop.f32.mrb[0].mxu0
      %v9377 = vadd.f32 0.0, %v9376
      %v9378 = vpop.f32.mrb[0].mxu0
      %9379 = vmatprep.mubr.bf16.mxu0 0
      %9380 = vmatmul.mubr.bf16.gmra.mrb[0].mxu0 %v8839
      %v9381 = vpop.f32.mrb[0].mxu0
      %v9382 = vadd.f32 0.0, %v9381
      %v9383 = vpop.f32.mrb[0].mxu0
      %v9384 = vpop.f32.mrb[0].mxu0
      %v9385 = vadd.f32 0.0, %v9384
      %v9386 = vpop.f32.mrb[0].mxu0
      %9387 = vmatprep.mubr.bf16.mxu0 0
      %9388 = vmatmul.mubr.bf16.gmra.mrb[0].mxu0 %v8842
      %v9389 = vpop.f32.mrb[0].mxu0
      %v9390 = vadd.f32 0.0, %v9389
      %v9391 = vpop.f32.mrb[0].mxu0
      %v9392 = vpop.f32.mrb[0].mxu0
      %v9393 = vadd.f32 0.0, %v9392
      %v9394 = vpop.f32.mrb[0].mxu0
      %9395 = vmatprep.mubr.bf16.mxu0 0
      %9396 = vmatmul.mubr.bf16.gmra.mrb[0].mxu0 %v8845
      %v9397 = vpop.f32.mrb[0].mxu0
      %v9398 = vadd.f32 0.0, %v9397
      %v9399 = vpop.f32.mrb[0].mxu0
      %v9400 = vpop.f32.mrb[0].mxu0
      %v9401 = vadd.f32 0.0, %v9400
      %v9402 = vpop.f32.mrb[0].mxu0
      %9403 = vmatprep.mubr.bf16.mxu0 0
      %9404 = vmatmul.mubr.bf16.gmra.mrb[0].mxu0 %v8848
      %v9405 = vpop.f32.mrb[0].mxu0
      %v9406 = vadd.f32 0.0, %v9405
      %v9407 = vpop.f32.mrb[0].mxu0
      %v9408 = vpop.f32.mrb[0].mxu0
      %v9409 = vadd.f32 0.0, %v9408
      %v9410 = vpop.f32.mrb[0].mxu0
      %9411 = vmatprep.mubr.bf16.mxu0 0
      %9412 = vmatmul.mubr.bf16.gmra.mrb[0].mxu0 %v8851
      %v9413 = vpop.f32.mrb[0].mxu0
      %v9414 = vadd.f32 0.0, %v9413
      %v9415 = vpop.f32.mrb[0].mxu0
      %v9416 = vpop.f32.mrb[0].mxu0
      %v9417 = vadd.f32 0.0, %v9416
      %v9418 = vpop.f32.mrb[0].mxu0
      %9419 = vmatprep.mubr.bf16.mxu0 0
      %9420 = vmatmul.mubr.bf16.gmra.mrb[0].mxu0 %v8854
      %v9421 = vpop.f32.mrb[0].mxu0
      %v9422 = vadd.f32 0.0, %v9421
      %v9423 = vpop.f32.mrb[0].mxu0
      %v9424 = vpop.f32.mrb[0].mxu0
      %v9425 = vadd.f32 0.0, %v9424
      %v9426 = vpop.f32.mrb[0].mxu0
      %9427 = vmatprep.mubr.bf16.mxu0 0
      %9428 = vmatmul.mubr.bf16.gmra.mrb[0].mxu0 %v8857
      %v9429 = vpop.f32.mrb[0].mxu0
      %v9430 = vadd.f32 0.0, %v9429
      %v9431 = vpop.f32.mrb[0].mxu0
      %v9432 = vpop.f32.mrb[0].mxu0
      %v9433 = vadd.f32 0.0, %v9432
      %v9434 = vpop.f32.mrb[0].mxu0
      %9435 = vdwg.mxu0
      %v9436 = vadd.f32 %v7894, %v8894
      %v9437 = vadd.f32 %v7895, %v8897
      %v9438 = vadd.f32 %v7896, %v8902
      %v9439 = vadd.f32 %v7897, %v8905
      %v9440 = vadd.f32 %v7898, %v8910
      %v9441 = vadd.f32 %v7899, %v8913
      %v9442 = vadd.f32 %v7900, %v8918
      %v9443 = vadd.f32 %v7901, %v8921
      %v9444 = vadd.f32 %v7902, %v8926
      %v9445 = vadd.f32 %v7903, %v8929
      %v9446 = vadd.f32 %v7904, %v8934
      %v9447 = vadd.f32 %v7905, %v8937
      %v9448 = vadd.f32 %v7906, %v8942
      %v9449 = vadd.f32 %v7907, %v8945
      %v9450 = vadd.f32 %v7908, %v8950
      %v9451 = vadd.f32 %v7909, %v8953
      %v9452 = vadd.f32 %v7910, %v8958
      %v9453 = vadd.f32 %v7911, %v8961
      %v9454 = vadd.f32 %v7912, %v8966
      %v9455 = vadd.f32 %v7913, %v8969
      %v9456 = vadd.f32 %v7914, %v8974
      %v9457 = vadd.f32 %v7915, %v8977
      %v9458 = vadd.f32 %v7916, %v8982
      %v9459 = vadd.f32 %v7917, %v8985
      %v9460 = vadd.f32 %v7918, %v8990
      %v9461 = vadd.f32 %v7919, %v8993
      %v9462 = vadd.f32 %v7920, %v8998
      %v9463 = vadd.f32 %v7921, %v9001
      %v9464 = vadd.f32 %v7922, %v9006
      %v9465 = vadd.f32 %v7923, %v9009
      %v9466 = vadd.f32 %v7924, %v9014
      %v9467 = vadd.f32 %v7925, %v9017
      %v9468 = vadd.f32 %v7926, %v9022
      %v9469 = vadd.f32 %v7927, %v9025
      %v9470 = vadd.f32 %v7928, %v9030
      %v9471 = vadd.f32 %v7929, %v9033
      %v9472 = vadd.f32 %v7930, %v9038
      %v9473 = vadd.f32 %v7931, %v9041
      %v9474 = vadd.f32 %v7932, %v9046
      %v9475 = vadd.f32 %v7933, %v9049
      %v9476 = vadd.f32 %v7934, %v9054
      %v9477 = vadd.f32 %v7935, %v9057
      %v9478 = vadd.f32 %v7936, %v9062
      %v9479 = vadd.f32 %v7937, %v9065
      %v9480 = vadd.f32 %v7938, %v9070
      %v9481 = vadd.f32 %v7939, %v9073
      %v9482 = vadd.f32 %v7940, %v9078
      %v9483 = vadd.f32 %v7941, %v9081
      %v9484 = vadd.f32 %v7942, %v9086
      %v9485 = vadd.f32 %v7943, %v9089
      %v9486 = vadd.f32 %v7944, %v9094
      %v9487 = vadd.f32 %v7945, %v9097
      %v9488 = vadd.f32 %v7946, %v9102
      %v9489 = vadd.f32 %v7947, %v9105
      %v9490 = vadd.f32 %v7948, %v9110
      %v9491 = vadd.f32 %v7949, %v9113
      %v9492 = vadd.f32 %v7950, %v9118
      %v9493 = vadd.f32 %v7951, %v9121
      %v9494 = vadd.f32 %v7952, %v9126
      %v9495 = vadd.f32 %v7953, %v9129
      %v9496 = vadd.f32 %v7954, %v9134
      %v9497 = vadd.f32 %v7955, %v9137
      %v9498 = vadd.f32 %v7956, %v9142
      %v9499 = vadd.f32 %v7957, %v9145
      %v9500 = vadd.f32 %v7958, %v9150
      %v9501 = vadd.f32 %v7959, %v9153
      %v9502 = vadd.f32 %v7960, %v9158
      %v9503 = vadd.f32 %v7961, %v9161
      %v9504 = vadd.f32 %v7962, %v9166
      %v9505 = vadd.f32 %v7963, %v9169
      %v9506 = vadd.f32 %v7964, %v9174
      %v9507 = vadd.f32 %v7965, %v9177
      %v9508 = vadd.f32 %v7966, %v9182
      %v9509 = vadd.f32 %v7967, %v9185
      %v9510 = vadd.f32 %v7968, %v9190
      %v9511 = vadd.f32 %v7969, %v9193
      %v9512 = vadd.f32 %v7970, %v9198
      %v9513 = vadd.f32 %v7971, %v9201
      %v9514 = vadd.f32 %v7972, %v9206
      %v9515 = vadd.f32 %v7973, %v9209
      %v9516 = vadd.f32 %v7974, %v9214
      %v9517 = vadd.f32 %v7975, %v9217
      %v9518 = vadd.f32 %v7976, %v9222
      %v9519 = vadd.f32 %v7977, %v9225
      %v9520 = vadd.f32 %v7978, %v9230
      %v9521 = vadd.f32 %v7979, %v9233
      %v9522 = vadd.f32 %v7980, %v9238
      %v9523 = vadd.f32 %v7981, %v9241
      %v9524 = vadd.f32 %v7982, %v9246
      %v9525 = vadd.f32 %v7983, %v9249
      %v9526 = vadd.f32 %v7984, %v9254
      %v9527 = vadd.f32 %v7985, %v9257
      %v9528 = vadd.f32 %v7986, %v9262
      %v9529 = vadd.f32 %v7987, %v9265
      %v9530 = vadd.f32 %v7988, %v9270
      %v9531 = vadd.f32 %v7989, %v9273
      %v9532 = vadd.f32 %v7990, %v9278
      %v9533 = vadd.f32 %v7991, %v9281
      %v9534 = vadd.f32 %v7992, %v9286
      %v9535 = vadd.f32 %v7993, %v9289
      %v9536 = vadd.f32 %v7994, %v9294
      %v9537 = vadd.f32 %v7995, %v9297
      %v9538 = vadd.f32 %v7996, %v9302
      %v9539 = vadd.f32 %v7997, %v9305
      %v9540 = vadd.f32 %v7998, %v9310
      %v9541 = vadd.f32 %v7999, %v9313
      %v9542 = vadd.f32 %v8000, %v9318
      %v9543 = vadd.f32 %v8001, %v9321
      %v9544 = vadd.f32 %v8002, %v9326
      %v9545 = vadd.f32 %v8003, %v9329
      %v9546 = vadd.f32 %v8004, %v9334
      %v9547 = vadd.f32 %v8005, %v9337
      %v9548 = vadd.f32 %v8006, %v9342
      %v9549 = vadd.f32 %v8007, %v9345
      %v9550 = vadd.f32 %v8008, %v9350
      %v9551 = vadd.f32 %v8009, %v9353
      %v9552 = vadd.f32 %v8010, %v9358
      %v9553 = vadd.f32 %v8011, %v9361
      %v9554 = vadd.f32 %v8012, %v9366
      %v9555 = vadd.f32 %v8013, %v9369
      %v9556 = vadd.f32 %v8014, %v9374
      %v9557 = vadd.f32 %v8015, %v9377
      %v9558 = vadd.f32 %v8016, %v9382
      %v9559 = vadd.f32 %v8017, %v9385
      %v9560 = vadd.f32 %v8018, %v9390
      %v9561 = vadd.f32 %v8019, %v9393
      %v9562 = vadd.f32 %v8020, %v9398
      %v9563 = vadd.f32 %v8021, %v9401
      %v9564 = vadd.f32 %v8022, %v9406
      %v9565 = vadd.f32 %v8023, %v9409
      %v9566 = vadd.f32 %v8024, %v9414
      %v9567 = vadd.f32 %v8025, %v9417
      %v9568 = vadd.f32 %v8026, %v9422
      %v9569 = vadd.f32 %v8027, %v9425
      %v9570 = vadd.f32 %v8028, %v9430
      %v9571 = vadd.f32 %v8029, %v9433
      %v9572 = vld [vmem:[%s244 + $0x240] sm:$0x7]
      %v9573 = vld [vmem:[%s248 + $0x38] sm:$0xf]
      %v9574 = vld [vmem:[%s248 + $0x3c] sm:$0xf]
      %v9576 = vunpack.c.l.b16 %v9572
      %v9577 = vpack.c.b16 %v9576, %v9576
      %vm9578 = vsmask.f32 5376
      %v9580 = vshrl.u32 %v8443, 16
      %v9582 = vrot.slane %v9580, 2
      %v9583 = vshll.u32 %v8443, 16
      %v9585 = vrot.slane %v9583, 3
      %v9586 = vor.u32 %v9582, %v9585
      %v9588 = vshrl.u32 %v8444, 16
      %v9590 = vrot.slane %v9588, 2
      %v9591 = vshll.u32 %v8444, 16
      %v9593 = vrot.slane %v9591, 3
      %v9594 = vor.u32 %v9590, %v9593
      %v9595 = vsel %vm9578, %v9586, %v9594
      %v9597 = vshrl.u32 %v8445, 16
      %v9599 = vrot.slane %v9597, 2
      %v9600 = vshll.u32 %v8445, 16
      %v9602 = vrot.slane %v9600, 3
      %v9603 = vor.u32 %v9599, %v9602
      %v9604 = vsel %vm9578, %v9594, %v9603
      %v9606 = vshrl.u32 %v8446, 16
      %v9608 = vrot.slane %v9606, 2
      %v9609 = vshll.u32 %v8446, 16
      %v9611 = vrot.slane %v9609, 3
      %v9612 = vor.u32 %v9608, %v9611
      %v9613 = vsel %vm9578, %v9603, %v9612
      %v9615 = vshrl.u32 %v8447, 16
      %v9617 = vrot.slane %v9615, 2
      %v9618 = vshll.u32 %v8447, 16
      %v9620 = vrot.slane %v9618, 3
      %v9621 = vor.u32 %v9617, %v9620
      %v9622 = vsel %vm9578, %v9612, %v9621
      %v9624 = vshrl.u32 %v8448, 16
      %v9626 = vrot.slane %v9624, 2
      %v9627 = vshll.u32 %v8448, 16
      %v9629 = vrot.slane %v9627, 3
      %v9630 = vor.u32 %v9626, %v9629
      %v9631 = vsel %vm9578, %v9621, %v9630
      %v9633 = vshrl.u32 %v8449, 16
      %v9635 = vrot.slane %v9633, 2
      %v9636 = vshll.u32 %v8449, 16
      %v9638 = vrot.slane %v9636, 3
      %v9639 = vor.u32 %v9635, %v9638
      %v9640 = vsel %vm9578, %v9630, %v9639
      %v9642 = vshrl.u32 %v8450, 16
      %v9644 = vrot.slane %v9642, 2
      %v9645 = vshll.u32 %v8450, 16
      %v9647 = vrot.slane %v9645, 3
      %v9648 = vor.u32 %v9644, %v9647
      %v9649 = vsel %vm9578, %v9639, %v9648
      %v9651 = vshrl.u32 %v8451, 16
      %v9653 = vrot.slane %v9651, 2
      %v9654 = vshll.u32 %v8451, 16
      %v9656 = vrot.slane %v9654, 3
      %v9657 = vor.u32 %v9653, %v9656
      %v9658 = vsel %vm9578, %v9648, %v9657
      %v9660 = vshrl.u32 %v8452, 16
      %v9662 = vrot.slane %v9660, 2
      %v9663 = vshll.u32 %v8452, 16
      %v9665 = vrot.slane %v9663, 3
      %v9666 = vor.u32 %v9662, %v9665
      %v9667 = vsel %vm9578, %v9657, %v9666
      %v9669 = vshrl.u32 %v8453, 16
      %v9671 = vrot.slane %v9669, 2
      %v9672 = vshll.u32 %v8453, 16
      %v9674 = vrot.slane %v9672, 3
      %v9675 = vor.u32 %v9671, %v9674
      %v9676 = vsel %vm9578, %v9666, %v9675
      %v9678 = vshrl.u32 %v8454, 16
      %v9680 = vrot.slane %v9678, 2
      %v9681 = vshll.u32 %v8454, 16
      %v9683 = vrot.slane %v9681, 3
      %v9684 = vor.u32 %v9680, %v9683
      %v9685 = vsel %vm9578, %v9675, %v9684
      %v9687 = vshrl.u32 %v8455, 16
      %v9689 = vrot.slane %v9687, 2
      %v9690 = vshll.u32 %v8455, 16
      %v9692 = vrot.slane %v9690, 3
      %v9693 = vor.u32 %v9689, %v9692
      %v9694 = vsel %vm9578, %v9684, %v9693
      %v9696 = vshrl.u32 %v8456, 16
      %v9698 = vrot.slane %v9696, 2
      %v9699 = vshll.u32 %v8456, 16
      %v9701 = vrot.slane %v9699, 3
      %v9702 = vor.u32 %v9698, %v9701
      %v9703 = vsel %vm9578, %v9693, %v9702
      %v9705 = vshrl.u32 %v8457, 16
      %v9707 = vrot.slane %v9705, 2
      %v9708 = vshll.u32 %v8457, 16
      %v9710 = vrot.slane %v9708, 3
      %v9711 = vor.u32 %v9707, %v9710
      %v9712 = vsel %vm9578, %v9702, %v9711
      %v9714 = vshrl.u32 %v8458, 16
      %v9716 = vrot.slane %v9714, 2
      %v9717 = vshll.u32 %v8458, 16
      %v9719 = vrot.slane %v9717, 3
      %v9720 = vor.u32 %v9716, %v9719
      %v9721 = vsel %vm9578, %v9711, %v9720
      %v9723 = vshrl.u32 %v8459, 16
      %v9725 = vrot.slane %v9723, 2
      %v9726 = vshll.u32 %v8459, 16
      %v9728 = vrot.slane %v9726, 3
      %v9729 = vor.u32 %v9725, %v9728
      %v9730 = vsel %vm9578, %v9720, %v9729
      %v9732 = vshrl.u32 %v8460, 16
      %v9734 = vrot.slane %v9732, 2
      %v9735 = vshll.u32 %v8460, 16
      %v9737 = vrot.slane %v9735, 3
      %v9738 = vor.u32 %v9734, %v9737
      %v9739 = vsel %vm9578, %v9729, %v9738
      %v9741 = vshrl.u32 %v8461, 16
      %v9743 = vrot.slane %v9741, 2
      %v9744 = vshll.u32 %v8461, 16
      %v9746 = vrot.slane %v9744, 3
      %v9747 = vor.u32 %v9743, %v9746
      %v9748 = vsel %vm9578, %v9738, %v9747
      %v9750 = vshrl.u32 %v8462, 16
      %v9752 = vrot.slane %v9750, 2
      %v9753 = vshll.u32 %v8462, 16
      %v9755 = vrot.slane %v9753, 3
      %v9756 = vor.u32 %v9752, %v9755
      %v9757 = vsel %vm9578, %v9747, %v9756
      %v9759 = vshrl.u32 %v8463, 16
      %v9761 = vrot.slane %v9759, 2
      %v9762 = vshll.u32 %v8463, 16
      %v9764 = vrot.slane %v9762, 3
      %v9765 = vor.u32 %v9761, %v9764
      %v9766 = vsel %vm9578, %v9756, %v9765
      %v9768 = vshrl.u32 %v8464, 16
      %v9770 = vrot.slane %v9768, 2
      %v9771 = vshll.u32 %v8464, 16
      %v9773 = vrot.slane %v9771, 3
      %v9774 = vor.u32 %v9770, %v9773
      %v9775 = vsel %vm9578, %v9765, %v9774
      %v9777 = vshrl.u32 %v8465, 16
      %v9779 = vrot.slane %v9777, 2
      %v9780 = vshll.u32 %v8465, 16
      %v9782 = vrot.slane %v9780, 3
      %v9783 = vor.u32 %v9779, %v9782
      %v9784 = vsel %vm9578, %v9774, %v9783
      %v9786 = vshrl.u32 %v8466, 16
      %v9788 = vrot.slane %v9786, 2
      %v9789 = vshll.u32 %v8466, 16
      %v9791 = vrot.slane %v9789, 3
      %v9792 = vor.u32 %v9788, %v9791
      %v9793 = vsel %vm9578, %v9783, %v9792
      %v9795 = vshrl.u32 %v8467, 16
      %v9797 = vrot.slane %v9795, 2
      %v9798 = vshll.u32 %v8467, 16
      %v9800 = vrot.slane %v9798, 3
      %v9801 = vor.u32 %v9797, %v9800
      %v9802 = vsel %vm9578, %v9792, %v9801
      %v9804 = vshrl.u32 %v8468, 16
      %v9806 = vrot.slane %v9804, 2
      %v9807 = vshll.u32 %v8468, 16
      %v9809 = vrot.slane %v9807, 3
      %v9810 = vor.u32 %v9806, %v9809
      %v9811 = vsel %vm9578, %v9801, %v9810
      %v9813 = vshrl.u32 %v8469, 16
      %v9815 = vrot.slane %v9813, 2
      %v9816 = vshll.u32 %v8469, 16
      %v9818 = vrot.slane %v9816, 3
      %v9819 = vor.u32 %v9815, %v9818
      %v9820 = vsel %vm9578, %v9810, %v9819
      %v9822 = vshrl.u32 %v8470, 16
      %v9824 = vrot.slane %v9822, 2
      %v9825 = vshll.u32 %v8470, 16
      %v9827 = vrot.slane %v9825, 3
      %v9828 = vor.u32 %v9824, %v9827
      %v9829 = vsel %vm9578, %v9819, %v9828
      %v9831 = vshrl.u32 %v8471, 16
      %v9833 = vrot.slane %v9831, 2
      %v9834 = vshll.u32 %v8471, 16
      %v9836 = vrot.slane %v9834, 3
      %v9837 = vor.u32 %v9833, %v9836
      %v9838 = vsel %vm9578, %v9828, %v9837
      %v9840 = vshrl.u32 %v8472, 16
      %v9842 = vrot.slane %v9840, 2
      %v9843 = vshll.u32 %v8472, 16
      %v9845 = vrot.slane %v9843, 3
      %v9846 = vor.u32 %v9842, %v9845
      %v9847 = vsel %vm9578, %v9837, %v9846
      %v9849 = vshrl.u32 %v8473, 16
      %v9851 = vrot.slane %v9849, 2
      %v9852 = vshll.u32 %v8473, 16
      %v9854 = vrot.slane %v9852, 3
      %v9855 = vor.u32 %v9851, %v9854
      %v9856 = vsel %vm9578, %v9846, %v9855
      %v9858 = vshrl.u32 %v8474, 16
      %v9860 = vrot.slane %v9858, 2
      %v9861 = vshll.u32 %v8474, 16
      %v9863 = vrot.slane %v9861, 3
      %v9864 = vor.u32 %v9860, %v9863
      %v9865 = vsel %vm9578, %v9855, %v9864
      %v9867 = vshrl.u32 %v8475, 16
      %v9869 = vrot.slane %v9867, 2
      %v9870 = vshll.u32 %v8475, 16
      %v9872 = vrot.slane %v9870, 3
      %v9873 = vor.u32 %v9869, %v9872
      %v9874 = vsel %vm9578, %v9864, %v9873
      %v9876 = vshrl.u32 %v8476, 16
      %v9878 = vrot.slane %v9876, 2
      %v9879 = vshll.u32 %v8476, 16
      %v9881 = vrot.slane %v9879, 3
      %v9882 = vor.u32 %v9878, %v9881
      %v9883 = vsel %vm9578, %v9873, %v9882
      %v9885 = vshrl.u32 %v8477, 16
      %v9887 = vrot.slane %v9885, 2
      %v9888 = vshll.u32 %v8477, 16
      %v9890 = vrot.slane %v9888, 3
      %v9891 = vor.u32 %v9887, %v9890
      %v9892 = vsel %vm9578, %v9882, %v9891
      %v9894 = vshrl.u32 %v8478, 16
      %v9896 = vrot.slane %v9894, 2
      %v9897 = vshll.u32 %v8478, 16
      %v9899 = vrot.slane %v9897, 3
      %v9900 = vor.u32 %v9896, %v9899
      %v9901 = vsel %vm9578, %v9891, %v9900
      %v9903 = vshrl.u32 %v8479, 16
      %v9905 = vrot.slane %v9903, 2
      %v9906 = vshll.u32 %v8479, 16
      %v9908 = vrot.slane %v9906, 3
      %v9909 = vor.u32 %v9905, %v9908
      %v9910 = vsel %vm9578, %v9900, %v9909
      %v9912 = vshrl.u32 %v8480, 16
      %v9914 = vrot.slane %v9912, 2
      %v9915 = vshll.u32 %v8480, 16
      %v9917 = vrot.slane %v9915, 3
      %v9918 = vor.u32 %v9914, %v9917
      %v9919 = vsel %vm9578, %v9909, %v9918
      %v9921 = vshrl.u32 %v8481, 16
      %v9923 = vrot.slane %v9921, 2
      %v9924 = vshll.u32 %v8481, 16
      %v9926 = vrot.slane %v9924, 3
      %v9927 = vor.u32 %v9923, %v9926
      %v9928 = vsel %vm9578, %v9918, %v9927
      %v9930 = vshrl.u32 %v8482, 16
      %v9932 = vrot.slane %v9930, 2
      %v9933 = vshll.u32 %v8482, 16
      %v9935 = vrot.slane %v9933, 3
      %v9936 = vor.u32 %v9932, %v9935
      %v9937 = vsel %vm9578, %v9927, %v9936
      %v9939 = vshrl.u32 %v8483, 16
      %v9941 = vrot.slane %v9939, 2
      %v9942 = vshll.u32 %v8483, 16
      %v9944 = vrot.slane %v9942, 3
      %v9945 = vor.u32 %v9941, %v9944
      %v9946 = vsel %vm9578, %v9936, %v9945
      %v9948 = vshrl.u32 %v8484, 16
      %v9950 = vrot.slane %v9948, 2
      %v9951 = vshll.u32 %v8484, 16
      %v9953 = vrot.slane %v9951, 3
      %v9954 = vor.u32 %v9950, %v9953
      %v9955 = vsel %vm9578, %v9945, %v9954
      %v9957 = vshrl.u32 %v8485, 16
      %v9959 = vrot.slane %v9957, 2
      %v9960 = vshll.u32 %v8485, 16
      %v9962 = vrot.slane %v9960, 3
      %v9963 = vor.u32 %v9959, %v9962
      %v9964 = vsel %vm9578, %v9954, %v9963
      %v9966 = vshrl.u32 %v8486, 16
      %v9968 = vrot.slane %v9966, 2
      %v9969 = vshll.u32 %v8486, 16
      %v9971 = vrot.slane %v9969, 3
      %v9972 = vor.u32 %v9968, %v9971
      %v9973 = vsel %vm9578, %v9963, %v9972
      %v9975 = vshrl.u32 %v8487, 16
      %v9977 = vrot.slane %v9975, 2
      %v9978 = vshll.u32 %v8487, 16
      %v9980 = vrot.slane %v9978, 3
      %v9981 = vor.u32 %v9977, %v9980
      %v9982 = vsel %vm9578, %v9972, %v9981
      %v9984 = vshrl.u32 %v8488, 16
      %v9986 = vrot.slane %v9984, 2
      %v9987 = vshll.u32 %v8488, 16
      %v9989 = vrot.slane %v9987, 3
      %v9990 = vor.u32 %v9986, %v9989
      %v9991 = vsel %vm9578, %v9981, %v9990
      %v9993 = vshrl.u32 %v8489, 16
      %v9995 = vrot.slane %v9993, 2
      %v9996 = vshll.u32 %v8489, 16
      %v9998 = vrot.slane %v9996, 3
      %v9999 = vor.u32 %v9995, %v9998
      %v10000 = vsel %vm9578, %v9990, %v9999
      %v10002 = vshrl.u32 %v8490, 16
      %v10004 = vrot.slane %v10002, 2
      %v10005 = vshll.u32 %v8490, 16
      %v10007 = vrot.slane %v10005, 3
      %v10008 = vor.u32 %v10004, %v10007
      %v10009 = vsel %vm9578, %v9999, %v10008
      %v10011 = vshrl.u32 %v8491, 16
      %v10013 = vrot.slane %v10011, 2
      %v10014 = vshll.u32 %v8491, 16
      %v10016 = vrot.slane %v10014, 3
      %v10017 = vor.u32 %v10013, %v10016
      %v10018 = vsel %vm9578, %v10008, %v10017
      %v10020 = vshrl.u32 %v8492, 16
      %v10022 = vrot.slane %v10020, 2
      %v10023 = vshll.u32 %v8492, 16
      %v10025 = vrot.slane %v10023, 3
      %v10026 = vor.u32 %v10022, %v10025
      %v10027 = vsel %vm9578, %v10017, %v10026
      %v10029 = vshrl.u32 %v8493, 16
      %v10031 = vrot.slane %v10029, 2
      %v10032 = vshll.u32 %v8493, 16
      %v10034 = vrot.slane %v10032, 3
      %v10035 = vor.u32 %v10031, %v10034
      %v10036 = vsel %vm9578, %v10026, %v10035
      %v10038 = vshrl.u32 %v8494, 16
      %v10040 = vrot.slane %v10038, 2
      %v10041 = vshll.u32 %v8494, 16
      %v10043 = vrot.slane %v10041, 3
      %v10044 = vor.u32 %v10040, %v10043
      %v10045 = vsel %vm9578, %v10035, %v10044
      %v10047 = vshrl.u32 %v8495, 16
      %v10049 = vrot.slane %v10047, 2
      %v10050 = vshll.u32 %v8495, 16
      %v10052 = vrot.slane %v10050, 3
      %v10053 = vor.u32 %v10049, %v10052
      %v10054 = vsel %vm9578, %v10044, %v10053
      %v10056 = vshrl.u32 %v8496, 16
      %v10058 = vrot.slane %v10056, 2
      %v10059 = vshll.u32 %v8496, 16
      %v10061 = vrot.slane %v10059, 3
      %v10062 = vor.u32 %v10058, %v10061
      %v10063 = vsel %vm9578, %v10053, %v10062
      %v10065 = vshrl.u32 %v8497, 16
      %v10067 = vrot.slane %v10065, 2
      %v10068 = vshll.u32 %v8497, 16
      %v10070 = vrot.slane %v10068, 3
      %v10071 = vor.u32 %v10067, %v10070
      %v10072 = vsel %vm9578, %v10062, %v10071
      %v10074 = vshrl.u32 %v8498, 16
      %v10076 = vrot.slane %v10074, 2
      %v10077 = vshll.u32 %v8498, 16
      %v10079 = vrot.slane %v10077, 3
      %v10080 = vor.u32 %v10076, %v10079
      %v10081 = vsel %vm9578, %v10071, %v10080
      %v10083 = vshrl.u32 %v8499, 16
      %v10085 = vrot.slane %v10083, 2
      %v10086 = vshll.u32 %v8499, 16
      %v10088 = vrot.slane %v10086, 3
      %v10089 = vor.u32 %v10085, %v10088
      %v10090 = vsel %vm9578, %v10080, %v10089
      %v10092 = vshrl.u32 %v8500, 16
      %v10094 = vrot.slane %v10092, 2
      %v10095 = vshll.u32 %v8500, 16
      %v10097 = vrot.slane %v10095, 3
      %v10098 = vor.u32 %v10094, %v10097
      %v10099 = vsel %vm9578, %v10089, %v10098
      %v10101 = vshrl.u32 %v8501, 16
      %v10103 = vrot.slane %v10101, 2
      %v10104 = vshll.u32 %v8501, 16
      %v10106 = vrot.slane %v10104, 3
      %v10107 = vor.u32 %v10103, %v10106
      %v10108 = vsel %vm9578, %v10098, %v10107
      %v10110 = vshrl.u32 %v8502, 16
      %v10112 = vrot.slane %v10110, 2
      %v10113 = vshll.u32 %v8502, 16
      %v10115 = vrot.slane %v10113, 3
      %v10116 = vor.u32 %v10112, %v10115
      %v10117 = vsel %vm9578, %v10107, %v10116
      %v10119 = vshrl.u32 %v8503, 16
      %v10121 = vrot.slane %v10119, 2
      %v10122 = vshll.u32 %v8503, 16
      %v10124 = vrot.slane %v10122, 3
      %v10125 = vor.u32 %v10121, %v10124
      %v10126 = vsel %vm9578, %v10116, %v10125
      %v10128 = vshrl.u32 %v8504, 16
      %v10130 = vrot.slane %v10128, 2
      %v10131 = vshll.u32 %v8504, 16
      %v10133 = vrot.slane %v10131, 3
      %v10134 = vor.u32 %v10130, %v10133
      %v10135 = vsel %vm9578, %v10125, %v10134
      %v10137 = vshrl.u32 %v8505, 16
      %v10139 = vrot.slane %v10137, 2
      %v10140 = vshll.u32 %v8505, 16
      %v10142 = vrot.slane %v10140, 3
      %v10143 = vor.u32 %v10139, %v10142
      %v10144 = vsel %vm9578, %v10134, %v10143
      %v10146 = vshrl.u32 %v8506, 16
      %v10148 = vrot.slane %v10146, 2
      %v10149 = vshll.u32 %v8506, 16
      %v10151 = vrot.slane %v10149, 3
      %v10152 = vor.u32 %v10148, %v10151
      %v10153 = vsel %vm9578, %v10143, %v10152
      %v10155 = vshrl.u32 %v8507, 16
      %v10157 = vrot.slane %v10155, 2
      %v10158 = vshll.u32 %v8507, 16
      %v10160 = vrot.slane %v10158, 3
      %v10161 = vor.u32 %v10157, %v10160
      %v10162 = vsel %vm9578, %v10152, %v10161
      %v10164 = vshrl.u32 %v8508, 16
      %v10166 = vrot.slane %v10164, 2
      %v10167 = vshll.u32 %v8508, 16
      %v10169 = vrot.slane %v10167, 3
      %v10170 = vor.u32 %v10166, %v10169
      %v10171 = vsel %vm9578, %v10161, %v10170
      %v10173 = vshrl.u32 %v8509, 16
      %v10175 = vrot.slane %v10173, 2
      %v10176 = vshll.u32 %v8509, 16
      %v10178 = vrot.slane %v10176, 3
      %v10179 = vor.u32 %v10175, %v10178
      %v10180 = vsel %vm9578, %v10170, %v10179
      %v10182 = vshrl.u32 %v8510, 16
      %v10184 = vrot.slane %v10182, 2
      %v10185 = vshll.u32 %v8510, 16
      %v10187 = vrot.slane %v10185, 3
      %v10188 = vor.u32 %v10184, %v10187
      %v10189 = vsel %vm9578, %v10179, %v10188
      %v10191 = vshrl.u32 %v9577, 16
      %v10193 = vrot.slane %v10191, 2
      %v10194 = vshll.u32 %v9577, 16
      %v10196 = vrot.slane %v10194, 3
      %v10197 = vor.u32 %v10193, %v10196
      %v10198 = vsel %vm9578, %v10188, %v10197
      %v10201 = vunpack.c.l.b16 %v9573
      %v10202 = vunpack.c.l.b16 %v9574
      %v10203 = vpack.c.b16 %v10202, %v10201
      %v10206 = vsel %vm1303, %v9595, 0
      %v10209 = vsel %vm1303, %v9604, 0
      %v10212 = vsel %vm1303, %v9613, 0
      %v10215 = vsel %vm1303, %v9622, 0
      %v10218 = vsel %vm1303, %v9631, 0
      %v10221 = vsel %vm1303, %v9640, 0
      %v10224 = vsel %vm1303, %v9649, 0
      %v10227 = vsel %vm1303, %v9658, 0
      %v10230 = vsel %vm1303, %v9667, 0
      %v10233 = vsel %vm1303, %v9676, 0
      %v10236 = vsel %vm1303, %v9685, 0
      %v10239 = vsel %vm1303, %v9694, 0
      %v10242 = vsel %vm1303, %v9703, 0
      %v10245 = vsel %vm1303, %v9712, 0
      %v10248 = vsel %vm1303, %v9721, 0
      %v10251 = vsel %vm1303, %v9730, 0
      %v10254 = vsel %vm1303, %v9739, 0
      %v10257 = vsel %vm1303, %v9748, 0
      %v10260 = vsel %vm1303, %v9757, 0
      %v10263 = vsel %vm1303, %v9766, 0
      %v10266 = vsel %vm1303, %v9775, 0
      %v10269 = vsel %vm1303, %v9784, 0
      %v10272 = vsel %vm1303, %v9793, 0
      %v10275 = vsel %vm1303, %v9802, 0
      %v10278 = vsel %vm1303, %v9811, 0
      %v10281 = vsel %vm1303, %v9820, 0
      %v10284 = vsel %vm1303, %v9829, 0
      %v10287 = vsel %vm1303, %v9838, 0
      %v10290 = vsel %vm1303, %v9847, 0
      %v10293 = vsel %vm1303, %v9856, 0
      %v10296 = vsel %vm1303, %v9865, 0
      %v10299 = vsel %vm1303, %v9874, 0
      %v10302 = vsel %vm1303, %v9883, 0
      %v10305 = vsel %vm1303, %v9892, 0
      %v10308 = vsel %vm1303, %v9901, 0
      %v10311 = vsel %vm1303, %v9910, 0
      %v10314 = vsel %vm1303, %v9919, 0
      %v10317 = vsel %vm1303, %v9928, 0
      %v10320 = vsel %vm1303, %v9937, 0
      %v10323 = vsel %vm1303, %v9946, 0
      %v10326 = vsel %vm1303, %v9955, 0
      %v10329 = vsel %vm1303, %v9964, 0
      %v10332 = vsel %vm1303, %v9973, 0
      %v10335 = vsel %vm1303, %v9982, 0
      %v10338 = vsel %vm1303, %v9991, 0
      %v10341 = vsel %vm1303, %v10000, 0
      %v10344 = vsel %vm1303, %v10009, 0
      %v10347 = vsel %vm1303, %v10018, 0
      %v10350 = vsel %vm1303, %v10027, 0
      %v10353 = vsel %vm1303, %v10036, 0
      %v10356 = vsel %vm1303, %v10045, 0
      %v10359 = vsel %vm1303, %v10054, 0
      %v10362 = vsel %vm1303, %v10063, 0
      %v10365 = vsel %vm1303, %v10072, 0
      %v10368 = vsel %vm1303, %v10081, 0
      %v10371 = vsel %vm1303, %v10090, 0
      %v10374 = vsel %vm1303, %v10099, 0
      %v10377 = vsel %vm1303, %v10108, 0
      %v10380 = vsel %vm1303, %v10117, 0
      %v10383 = vsel %vm1303, %v10126, 0
      %v10386 = vsel %vm1303, %v10135, 0
      %v10389 = vsel %vm1303, %v10144, 0
      %v10392 = vsel %vm1303, %v10153, 0
      %v10395 = vsel %vm1303, %v10162, 0
      %v10398 = vsel %vm1303, %v10171, 0
      %v10401 = vsel %vm1303, %v10180, 0
      %v10404 = vsel %vm1303, %v10189, 0
      %v10407 = vsel %vm1303, %v10198, 0
      %10409 = vmatprep.subr.bf16.mxu0 0
      %10410 = vmatpush1.bf16.msra.mxu0 %v10203
      %10411 = vmatprep.subr.bf16.mxu0 0
      %10412 = vmatpush1.bf16.msra.mxu0 0
      %10413 = vmatprep.subr.bf16.mxu0 0
      %10414 = vmatpush1.bf16.msra.mxu0 0
      %10415 = vmatprep.subr.bf16.mxu0 0
      %10416 = vmatpush1.bf16.msra.mxu0 0
      %10417 = vmatprep.subr.bf16.mxu0 0
      %10418 = vmatpush1.bf16.msra.mxu0 0
      %10419 = vmatprep.subr.bf16.mxu0 0
      %10420 = vmatpush1.bf16.msra.mxu0 0
      %10421 = vmatprep.subr.bf16.mxu0 0
      %10422 = vmatpush1.bf16.msra.mxu0 0
      %10423 = vmatprep.subr.bf16.mxu0 0
      %10424 = vmatpush1.bf16.msra.mxu0 0
      %10425 = vmatprep.subr.bf16.mxu0 0
      %10426 = vmatpush1.bf16.msra.mxu0 0
      %10427 = vmatprep.subr.bf16.mxu0 0
      %10428 = vmatpush1.bf16.msra.mxu0 0
      %10429 = vmatprep.subr.bf16.mxu0 0
      %10430 = vmatpush1.bf16.msra.mxu0 0
      %10431 = vmatprep.subr.bf16.mxu0 0
      %10432 = vmatpush1.bf16.msra.mxu0 0
      %10433 = vmatprep.subr.bf16.mxu0 0
      %10434 = vmatpush1.bf16.msra.mxu0 0
      %10435 = vmatprep.subr.bf16.mxu0 0
      %10436 = vmatpush1.bf16.msra.mxu0 0
      %10437 = vmatprep.subr.bf16.mxu0 0
      %10438 = vmatpush1.bf16.msra.mxu0 0
      %10439 = vmatprep.subr.bf16.mxu0 0
      %10440 = vmatpush1.bf16.msra.mxu0 0
      %10441 = vmatprep.mubr.bf16.mxu0 0
      %10442 = vmatmul.mubr.bf16.gmra.mrb[0].mxu0 %v10206
      %v10443 = vpop.f32.mrb[0].mxu0
      %v10444 = vadd.f32 0.0, %v10443
      %v10445 = vpop.f32.mrb[0].mxu0
      %v10446 = vpop.f32.mrb[0].mxu0
      %v10447 = vadd.f32 0.0, %v10446
      %v10448 = vpop.f32.mrb[0].mxu0
      %10449 = vmatprep.mubr.bf16.mxu0 0
      %10450 = vmatmul.mubr.bf16.gmra.mrb[0].mxu0 %v10209
      %v10451 = vpop.f32.mrb[0].mxu0
      %v10452 = vadd.f32 0.0, %v10451
      %v10453 = vpop.f32.mrb[0].mxu0
      %v10454 = vpop.f32.mrb[0].mxu0
      %v10455 = vadd.f32 0.0, %v10454
      %v10456 = vpop.f32.mrb[0].mxu0
      %10457 = vmatprep.mubr.bf16.mxu0 0
      %10458 = vmatmul.mubr.bf16.gmra.mrb[0].mxu0 %v10212
      %v10459 = vpop.f32.mrb[0].mxu0
      %v10460 = vadd.f32 0.0, %v10459
      %v10461 = vpop.f32.mrb[0].mxu0
      %v10462 = vpop.f32.mrb[0].mxu0
      %v10463 = vadd.f32 0.0, %v10462
      %v10464 = vpop.f32.mrb[0].mxu0
      %10465 = vmatprep.mubr.bf16.mxu0 0
      %10466 = vmatmul.mubr.bf16.gmra.mrb[0].mxu0 %v10215
      %v10467 = vpop.f32.mrb[0].mxu0
      %v10468 = vadd.f32 0.0, %v10467
      %v10469 = vpop.f32.mrb[0].mxu0
      %v10470 = vpop.f32.mrb[0].mxu0
      %v10471 = vadd.f32 0.0, %v10470
      %v10472 = vpop.f32.mrb[0].mxu0
      %10473 = vmatprep.mubr.bf16.mxu0 0
      %10474 = vmatmul.mubr.bf16.gmra.mrb[0].mxu0 %v10218
      %v10475 = vpop.f32.mrb[0].mxu0
      %v10476 = vadd.f32 0.0, %v10475
      %v10477 = vpop.f32.mrb[0].mxu0
      %v10478 = vpop.f32.mrb[0].mxu0
      %v10479 = vadd.f32 0.0, %v10478
      %v10480 = vpop.f32.mrb[0].mxu0
      %10481 = vmatprep.mubr.bf16.mxu0 0
      %10482 = vmatmul.mubr.bf16.gmra.mrb[0].mxu0 %v10221
      %v10483 = vpop.f32.mrb[0].mxu0
      %v10484 = vadd.f32 0.0, %v10483
      %v10485 = vpop.f32.mrb[0].mxu0
      %v10486 = vpop.f32.mrb[0].mxu0
      %v10487 = vadd.f32 0.0, %v10486
      %v10488 = vpop.f32.mrb[0].mxu0
      %10489 = vmatprep.mubr.bf16.mxu0 0
      %10490 = vmatmul.mubr.bf16.gmra.mrb[0].mxu0 %v10224
      %v10491 = vpop.f32.mrb[0].mxu0
      %v10492 = vadd.f32 0.0, %v10491
      %v10493 = vpop.f32.mrb[0].mxu0
      %v10494 = vpop.f32.mrb[0].mxu0
      %v10495 = vadd.f32 0.0, %v10494
      %v10496 = vpop.f32.mrb[0].mxu0
      %10497 = vmatprep.mubr.bf16.mxu0 0
      %10498 = vmatmul.mubr.bf16.gmra.mrb[0].mxu0 %v10227
      %v10499 = vpop.f32.mrb[0].mxu0
      %v10500 = vadd.f32 0.0, %v10499
      %v10501 = vpop.f32.mrb[0].mxu0
      %v10502 = vpop.f32.mrb[0].mxu0
      %v10503 = vadd.f32 0.0, %v10502
      %v10504 = vpop.f32.mrb[0].mxu0
      %10505 = vmatprep.mubr.bf16.mxu0 0
      %10506 = vmatmul.mubr.bf16.gmra.mrb[0].mxu0 %v10230
      %v10507 = vpop.f32.mrb[0].mxu0
      %v10508 = vadd.f32 0.0, %v10507
      %v10509 = vpop.f32.mrb[0].mxu0
      %v10510 = vpop.f32.mrb[0].mxu0
      %v10511 = vadd.f32 0.0, %v10510
      %v10512 = vpop.f32.mrb[0].mxu0
      %10513 = vmatprep.mubr.bf16.mxu0 0
      %10514 = vmatmul.mubr.bf16.gmra.mrb[0].mxu0 %v10233
      %v10515 = vpop.f32.mrb[0].mxu0
      %v10516 = vadd.f32 0.0, %v10515
      %v10517 = vpop.f32.mrb[0].mxu0
      %v10518 = vpop.f32.mrb[0].mxu0
      %v10519 = vadd.f32 0.0, %v10518
      %v10520 = vpop.f32.mrb[0].mxu0
      %10521 = vmatprep.mubr.bf16.mxu0 0
      %10522 = vmatmul.mubr.bf16.gmra.mrb[0].mxu0 %v10236
      %v10523 = vpop.f32.mrb[0].mxu0
      %v10524 = vadd.f32 0.0, %v10523
      %v10525 = vpop.f32.mrb[0].mxu0
      %v10526 = vpop.f32.mrb[0].mxu0
      %v10527 = vadd.f32 0.0, %v10526
      %v10528 = vpop.f32.mrb[0].mxu0
      %10529 = vmatprep.mubr.bf16.mxu0 0
      %10530 = vmatmul.mubr.bf16.gmra.mrb[0].mxu0 %v10239
      %v10531 = vpop.f32.mrb[0].mxu0
      %v10532 = vadd.f32 0.0, %v10531
      %v10533 = vpop.f32.mrb[0].mxu0
      %v10534 = vpop.f32.mrb[0].mxu0
      %v10535 = vadd.f32 0.0, %v10534
      %v10536 = vpop.f32.mrb[0].mxu0
      %10537 = vmatprep.mubr.bf16.mxu0 0
      %10538 = vmatmul.mubr.bf16.gmra.mrb[0].mxu0 %v10242
      %v10539 = vpop.f32.mrb[0].mxu0
      %v10540 = vadd.f32 0.0, %v10539
      %v10541 = vpop.f32.mrb[0].mxu0
      %v10542 = vpop.f32.mrb[0].mxu0
      %v10543 = vadd.f32 0.0, %v10542
      %v10544 = vpop.f32.mrb[0].mxu0
      %10545 = vmatprep.mubr.bf16.mxu0 0
      %10546 = vmatmul.mubr.bf16.gmra.mrb[0].mxu0 %v10245
      %v10547 = vpop.f32.mrb[0].mxu0
      %v10548 = vadd.f32 0.0, %v10547
      %v10549 = vpop.f32.mrb[0].mxu0
      %v10550 = vpop.f32.mrb[0].mxu0
      %v10551 = vadd.f32 0.0, %v10550
      %v10552 = vpop.f32.mrb[0].mxu0
      %10553 = vmatprep.mubr.bf16.mxu0 0
      %10554 = vmatmul.mubr.bf16.gmra.mrb[0].mxu0 %v10248
      %v10555 = vpop.f32.mrb[0].mxu0
      %v10556 = vadd.f32 0.0, %v10555
      %v10557 = vpop.f32.mrb[0].mxu0
      %v10558 = vpop.f32.mrb[0].mxu0
      %v10559 = vadd.f32 0.0, %v10558
      %v10560 = vpop.f32.mrb[0].mxu0
      %10561 = vmatprep.mubr.bf16.mxu0 0
      %10562 = vmatmul.mubr.bf16.gmra.mrb[0].mxu0 %v10251
      %v10563 = vpop.f32.mrb[0].mxu0
      %v10564 = vadd.f32 0.0, %v10563
      %v10565 = vpop.f32.mrb[0].mxu0
      %v10566 = vpop.f32.mrb[0].mxu0
      %v10567 = vadd.f32 0.0, %v10566
      %v10568 = vpop.f32.mrb[0].mxu0
      %10569 = vmatprep.mubr.bf16.mxu0 0
      %10570 = vmatmul.mubr.bf16.gmra.mrb[0].mxu0 %v10254
      %v10571 = vpop.f32.mrb[0].mxu0
      %v10572 = vadd.f32 0.0, %v10571
      %v10573 = vpop.f32.mrb[0].mxu0
      %v10574 = vpop.f32.mrb[0].mxu0
      %v10575 = vadd.f32 0.0, %v10574
      %v10576 = vpop.f32.mrb[0].mxu0
      %10577 = vmatprep.mubr.bf16.mxu0 0
      %10578 = vmatmul.mubr.bf16.gmra.mrb[0].mxu0 %v10257
      %v10579 = vpop.f32.mrb[0].mxu0
      %v10580 = vadd.f32 0.0, %v10579
      %v10581 = vpop.f32.mrb[0].mxu0
      %v10582 = vpop.f32.mrb[0].mxu0
      %v10583 = vadd.f32 0.0, %v10582
      %v10584 = vpop.f32.mrb[0].mxu0
      %10585 = vmatprep.mubr.bf16.mxu0 0
      %10586 = vmatmul.mubr.bf16.gmra.mrb[0].mxu0 %v10260
      %v10587 = vpop.f32.mrb[0].mxu0
      %v10588 = vadd.f32 0.0, %v10587
      %v10589 = vpop.f32.mrb[0].mxu0
      %v10590 = vpop.f32.mrb[0].mxu0
      %v10591 = vadd.f32 0.0, %v10590
      %v10592 = vpop.f32.mrb[0].mxu0
      %10593 = vmatprep.mubr.bf16.mxu0 0
      %10594 = vmatmul.mubr.bf16.gmra.mrb[0].mxu0 %v10263
      %v10595 = vpop.f32.mrb[0].mxu0
      %v10596 = vadd.f32 0.0, %v10595
      %v10597 = vpop.f32.mrb[0].mxu0
      %v10598 = vpop.f32.mrb[0].mxu0
      %v10599 = vadd.f32 0.0, %v10598
      %v10600 = vpop.f32.mrb[0].mxu0
      %10601 = vmatprep.mubr.bf16.mxu0 0
      %10602 = vmatmul.mubr.bf16.gmra.mrb[0].mxu0 %v10266
      %v10603 = vpop.f32.mrb[0].mxu0
      %v10604 = vadd.f32 0.0, %v10603
      %v10605 = vpop.f32.mrb[0].mxu0
      %v10606 = vpop.f32.mrb[0].mxu0
      %v10607 = vadd.f32 0.0, %v10606
      %v10608 = vpop.f32.mrb[0].mxu0
      %10609 = vmatprep.mubr.bf16.mxu0 0
      %10610 = vmatmul.mubr.bf16.gmra.mrb[0].mxu0 %v10269
      %v10611 = vpop.f32.mrb[0].mxu0
      %v10612 = vadd.f32 0.0, %v10611
      %v10613 = vpop.f32.mrb[0].mxu0
      %v10614 = vpop.f32.mrb[0].mxu0
      %v10615 = vadd.f32 0.0, %v10614
      %v10616 = vpop.f32.mrb[0].mxu0
      %10617 = vmatprep.mubr.bf16.mxu0 0
      %10618 = vmatmul.mubr.bf16.gmra.mrb[0].mxu0 %v10272
      %v10619 = vpop.f32.mrb[0].mxu0
      %v10620 = vadd.f32 0.0, %v10619
      %v10621 = vpop.f32.mrb[0].mxu0
      %v10622 = vpop.f32.mrb[0].mxu0
      %v10623 = vadd.f32 0.0, %v10622
      %v10624 = vpop.f32.mrb[0].mxu0
      %10625 = vmatprep.mubr.bf16.mxu0 0
      %10626 = vmatmul.mubr.bf16.gmra.mrb[0].mxu0 %v10275
      %v10627 = vpop.f32.mrb[0].mxu0
      %v10628 = vadd.f32 0.0, %v10627
      %v10629 = vpop.f32.mrb[0].mxu0
      %v10630 = vpop.f32.mrb[0].mxu0
      %v10631 = vadd.f32 0.0, %v10630
      %v10632 = vpop.f32.mrb[0].mxu0
      %10633 = vmatprep.mubr.bf16.mxu0 0
      %10634 = vmatmul.mubr.bf16.gmra.mrb[0].mxu0 %v10278
      %v10635 = vpop.f32.mrb[0].mxu0
      %v10636 = vadd.f32 0.0, %v10635
      %v10637 = vpop.f32.mrb[0].mxu0
      %v10638 = vpop.f32.mrb[0].mxu0
      %v10639 = vadd.f32 0.0, %v10638
      %v10640 = vpop.f32.mrb[0].mxu0
      %10641 = vmatprep.mubr.bf16.mxu0 0
      %10642 = vmatmul.mubr.bf16.gmra.mrb[0].mxu0 %v10281
      %v10643 = vpop.f32.mrb[0].mxu0
      %v10644 = vadd.f32 0.0, %v10643
      %v10645 = vpop.f32.mrb[0].mxu0
      %v10646 = vpop.f32.mrb[0].mxu0
      %v10647 = vadd.f32 0.0, %v10646
      %v10648 = vpop.f32.mrb[0].mxu0
      %10649 = vmatprep.mubr.bf16.mxu0 0
      %10650 = vmatmul.mubr.bf16.gmra.mrb[0].mxu0 %v10284
      %v10651 = vpop.f32.mrb[0].mxu0
      %v10652 = vadd.f32 0.0, %v10651
      %v10653 = vpop.f32.mrb[0].mxu0
      %v10654 = vpop.f32.mrb[0].mxu0
      %v10655 = vadd.f32 0.0, %v10654
      %v10656 = vpop.f32.mrb[0].mxu0
      %10657 = vmatprep.mubr.bf16.mxu0 0
      %10658 = vmatmul.mubr.bf16.gmra.mrb[0].mxu0 %v10287
      %v10659 = vpop.f32.mrb[0].mxu0
      %v10660 = vadd.f32 0.0, %v10659
      %v10661 = vpop.f32.mrb[0].mxu0
      %v10662 = vpop.f32.mrb[0].mxu0
      %v10663 = vadd.f32 0.0, %v10662
      %v10664 = vpop.f32.mrb[0].mxu0
      %10665 = vmatprep.mubr.bf16.mxu0 0
      %10666 = vmatmul.mubr.bf16.gmra.mrb[0].mxu0 %v10290
      %v10667 = vpop.f32.mrb[0].mxu0
      %v10668 = vadd.f32 0.0, %v10667
      %v10669 = vpop.f32.mrb[0].mxu0
      %v10670 = vpop.f32.mrb[0].mxu0
      %v10671 = vadd.f32 0.0, %v10670
      %v10672 = vpop.f32.mrb[0].mxu0
      %10673 = vmatprep.mubr.bf16.mxu0 0
      %10674 = vmatmul.mubr.bf16.gmra.mrb[0].mxu0 %v10293
      %v10675 = vpop.f32.mrb[0].mxu0
      %v10676 = vadd.f32 0.0, %v10675
      %v10677 = vpop.f32.mrb[0].mxu0
      %v10678 = vpop.f32.mrb[0].mxu0
      %v10679 = vadd.f32 0.0, %v10678
      %v10680 = vpop.f32.mrb[0].mxu0
      %10681 = vmatprep.mubr.bf16.mxu0 0
      %10682 = vmatmul.mubr.bf16.gmra.mrb[0].mxu0 %v10296
      %v10683 = vpop.f32.mrb[0].mxu0
      %v10684 = vadd.f32 0.0, %v10683
      %v10685 = vpop.f32.mrb[0].mxu0
      %v10686 = vpop.f32.mrb[0].mxu0
      %v10687 = vadd.f32 0.0, %v10686
      %v10688 = vpop.f32.mrb[0].mxu0
      %10689 = vmatprep.mubr.bf16.mxu0 0
      %10690 = vmatmul.mubr.bf16.gmra.mrb[0].mxu0 %v10299
      %v10691 = vpop.f32.mrb[0].mxu0
      %v10692 = vadd.f32 0.0, %v10691
      %v10693 = vpop.f32.mrb[0].mxu0
      %v10694 = vpop.f32.mrb[0].mxu0
      %v10695 = vadd.f32 0.0, %v10694
      %v10696 = vpop.f32.mrb[0].mxu0
      %10697 = vmatprep.mubr.bf16.mxu0 0
      %10698 = vmatmul.mubr.bf16.gmra.mrb[0].mxu0 %v10302
      %v10699 = vpop.f32.mrb[0].mxu0
      %v10700 = vadd.f32 0.0, %v10699
      %v10701 = vpop.f32.mrb[0].mxu0
      %v10702 = vpop.f32.mrb[0].mxu0
      %v10703 = vadd.f32 0.0, %v10702
      %v10704 = vpop.f32.mrb[0].mxu0
      %10705 = vmatprep.mubr.bf16.mxu0 0
      %10706 = vmatmul.mubr.bf16.gmra.mrb[0].mxu0 %v10305
      %v10707 = vpop.f32.mrb[0].mxu0
      %v10708 = vadd.f32 0.0, %v10707
      %v10709 = vpop.f32.mrb[0].mxu0
      %v10710 = vpop.f32.mrb[0].mxu0
      %v10711 = vadd.f32 0.0, %v10710
      %v10712 = vpop.f32.mrb[0].mxu0
      %10713 = vmatprep.mubr.bf16.mxu0 0
      %10714 = vmatmul.mubr.bf16.gmra.mrb[0].mxu0 %v10308
      %v10715 = vpop.f32.mrb[0].mxu0
      %v10716 = vadd.f32 0.0, %v10715
      %v10717 = vpop.f32.mrb[0].mxu0
      %v10718 = vpop.f32.mrb[0].mxu0
      %v10719 = vadd.f32 0.0, %v10718
      %v10720 = vpop.f32.mrb[0].mxu0
      %10721 = vmatprep.mubr.bf16.mxu0 0
      %10722 = vmatmul.mubr.bf16.gmra.mrb[0].mxu0 %v10311
      %v10723 = vpop.f32.mrb[0].mxu0
      %v10724 = vadd.f32 0.0, %v10723
      %v10725 = vpop.f32.mrb[0].mxu0
      %v10726 = vpop.f32.mrb[0].mxu0
      %v10727 = vadd.f32 0.0, %v10726
      %v10728 = vpop.f32.mrb[0].mxu0
      %10729 = vmatprep.mubr.bf16.mxu0 0
      %10730 = vmatmul.mubr.bf16.gmra.mrb[0].mxu0 %v10314
      %v10731 = vpop.f32.mrb[0].mxu0
      %v10732 = vadd.f32 0.0, %v10731
      %v10733 = vpop.f32.mrb[0].mxu0
      %v10734 = vpop.f32.mrb[0].mxu0
      %v10735 = vadd.f32 0.0, %v10734
      %v10736 = vpop.f32.mrb[0].mxu0
      %10737 = vmatprep.mubr.bf16.mxu0 0
      %10738 = vmatmul.mubr.bf16.gmra.mrb[0].mxu0 %v10317
      %v10739 = vpop.f32.mrb[0].mxu0
      %v10740 = vadd.f32 0.0, %v10739
      %v10741 = vpop.f32.mrb[0].mxu0
      %v10742 = vpop.f32.mrb[0].mxu0
      %v10743 = vadd.f32 0.0, %v10742
      %v10744 = vpop.f32.mrb[0].mxu0
      %10745 = vmatprep.mubr.bf16.mxu0 0
      %10746 = vmatmul.mubr.bf16.gmra.mrb[0].mxu0 %v10320
      %v10747 = vpop.f32.mrb[0].mxu0
      %v10748 = vadd.f32 0.0, %v10747
      %v10749 = vpop.f32.mrb[0].mxu0
      %v10750 = vpop.f32.mrb[0].mxu0
      %v10751 = vadd.f32 0.0, %v10750
      %v10752 = vpop.f32.mrb[0].mxu0
      %10753 = vmatprep.mubr.bf16.mxu0 0
      %10754 = vmatmul.mubr.bf16.gmra.mrb[0].mxu0 %v10323
      %v10755 = vpop.f32.mrb[0].mxu0
      %v10756 = vadd.f32 0.0, %v10755
      %v10757 = vpop.f32.mrb[0].mxu0
      %v10758 = vpop.f32.mrb[0].mxu0
      %v10759 = vadd.f32 0.0, %v10758
      %v10760 = vpop.f32.mrb[0].mxu0
      %10761 = vmatprep.mubr.bf16.mxu0 0
      %10762 = vmatmul.mubr.bf16.gmra.mrb[0].mxu0 %v10326
      %v10763 = vpop.f32.mrb[0].mxu0
      %v10764 = vadd.f32 0.0, %v10763
      %v10765 = vpop.f32.mrb[0].mxu0
      %v10766 = vpop.f32.mrb[0].mxu0
      %v10767 = vadd.f32 0.0, %v10766
      %v10768 = vpop.f32.mrb[0].mxu0
      %10769 = vmatprep.mubr.bf16.mxu0 0
      %10770 = vmatmul.mubr.bf16.gmra.mrb[0].mxu0 %v10329
      %v10771 = vpop.f32.mrb[0].mxu0
      %v10772 = vadd.f32 0.0, %v10771
      %v10773 = vpop.f32.mrb[0].mxu0
      %v10774 = vpop.f32.mrb[0].mxu0
      %v10775 = vadd.f32 0.0, %v10774
      %v10776 = vpop.f32.mrb[0].mxu0
      %10777 = vmatprep.mubr.bf16.mxu0 0
      %10778 = vmatmul.mubr.bf16.gmra.mrb[0].mxu0 %v10332
      %v10779 = vpop.f32.mrb[0].mxu0
      %v10780 = vadd.f32 0.0, %v10779
      %v10781 = vpop.f32.mrb[0].mxu0
      %v10782 = vpop.f32.mrb[0].mxu0
      %v10783 = vadd.f32 0.0, %v10782
      %v10784 = vpop.f32.mrb[0].mxu0
      %10785 = vmatprep.mubr.bf16.mxu0 0
      %10786 = vmatmul.mubr.bf16.gmra.mrb[0].mxu0 %v10335
      %v10787 = vpop.f32.mrb[0].mxu0
      %v10788 = vadd.f32 0.0, %v10787
      %v10789 = vpop.f32.mrb[0].mxu0
      %v10790 = vpop.f32.mrb[0].mxu0
      %v10791 = vadd.f32 0.0, %v10790
      %v10792 = vpop.f32.mrb[0].mxu0
      %10793 = vmatprep.mubr.bf16.mxu0 0
      %10794 = vmatmul.mubr.bf16.gmra.mrb[0].mxu0 %v10338
      %v10795 = vpop.f32.mrb[0].mxu0
      %v10796 = vadd.f32 0.0, %v10795
      %v10797 = vpop.f32.mrb[0].mxu0
      %v10798 = vpop.f32.mrb[0].mxu0
      %v10799 = vadd.f32 0.0, %v10798
      %v10800 = vpop.f32.mrb[0].mxu0
      %10801 = vmatprep.mubr.bf16.mxu0 0
      %10802 = vmatmul.mubr.bf16.gmra.mrb[0].mxu0 %v10341
      %v10803 = vpop.f32.mrb[0].mxu0
      %v10804 = vadd.f32 0.0, %v10803
      %v10805 = vpop.f32.mrb[0].mxu0
      %v10806 = vpop.f32.mrb[0].mxu0
      %v10807 = vadd.f32 0.0, %v10806
      %v10808 = vpop.f32.mrb[0].mxu0
      %10809 = vmatprep.mubr.bf16.mxu0 0
      %10810 = vmatmul.mubr.bf16.gmra.mrb[0].mxu0 %v10344
      %v10811 = vpop.f32.mrb[0].mxu0
      %v10812 = vadd.f32 0.0, %v10811
      %v10813 = vpop.f32.mrb[0].mxu0
      %v10814 = vpop.f32.mrb[0].mxu0
      %v10815 = vadd.f32 0.0, %v10814
      %v10816 = vpop.f32.mrb[0].mxu0
      %10817 = vmatprep.mubr.bf16.mxu0 0
      %10818 = vmatmul.mubr.bf16.gmra.mrb[0].mxu0 %v10347
      %v10819 = vpop.f32.mrb[0].mxu0
      %v10820 = vadd.f32 0.0, %v10819
      %v10821 = vpop.f32.mrb[0].mxu0
      %v10822 = vpop.f32.mrb[0].mxu0
      %v10823 = vadd.f32 0.0, %v10822
      %v10824 = vpop.f32.mrb[0].mxu0
      %10825 = vmatprep.mubr.bf16.mxu0 0
      %10826 = vmatmul.mubr.bf16.gmra.mrb[0].mxu0 %v10350
      %v10827 = vpop.f32.mrb[0].mxu0
      %v10828 = vadd.f32 0.0, %v10827
      %v10829 = vpop.f32.mrb[0].mxu0
      %v10830 = vpop.f32.mrb[0].mxu0
      %v10831 = vadd.f32 0.0, %v10830
      %v10832 = vpop.f32.mrb[0].mxu0
      %10833 = vmatprep.mubr.bf16.mxu0 0
      %10834 = vmatmul.mubr.bf16.gmra.mrb[0].mxu0 %v10353
      %v10835 = vpop.f32.mrb[0].mxu0
      %v10836 = vadd.f32 0.0, %v10835
      %v10837 = vpop.f32.mrb[0].mxu0
      %v10838 = vpop.f32.mrb[0].mxu0
      %v10839 = vadd.f32 0.0, %v10838
      %v10840 = vpop.f32.mrb[0].mxu0
      %10841 = vmatprep.mubr.bf16.mxu0 0
      %10842 = vmatmul.mubr.bf16.gmra.mrb[0].mxu0 %v10356
      %v10843 = vpop.f32.mrb[0].mxu0
      %v10844 = vadd.f32 0.0, %v10843
      %v10845 = vpop.f32.mrb[0].mxu0
      %v10846 = vpop.f32.mrb[0].mxu0
      %v10847 = vadd.f32 0.0, %v10846
      %v10848 = vpop.f32.mrb[0].mxu0
      %10849 = vmatprep.mubr.bf16.mxu0 0
      %10850 = vmatmul.mubr.bf16.gmra.mrb[0].mxu0 %v10359
      %v10851 = vpop.f32.mrb[0].mxu0
      %v10852 = vadd.f32 0.0, %v10851
      %v10853 = vpop.f32.mrb[0].mxu0
      %v10854 = vpop.f32.mrb[0].mxu0
      %v10855 = vadd.f32 0.0, %v10854
      %v10856 = vpop.f32.mrb[0].mxu0
      %10857 = vmatprep.mubr.bf16.mxu0 0
      %10858 = vmatmul.mubr.bf16.gmra.mrb[0].mxu0 %v10362
      %v10859 = vpop.f32.mrb[0].mxu0
      %v10860 = vadd.f32 0.0, %v10859
      %v10861 = vpop.f32.mrb[0].mxu0
      %v10862 = vpop.f32.mrb[0].mxu0
      %v10863 = vadd.f32 0.0, %v10862
      %v10864 = vpop.f32.mrb[0].mxu0
      %10865 = vmatprep.mubr.bf16.mxu0 0
      %10866 = vmatmul.mubr.bf16.gmra.mrb[0].mxu0 %v10365
      %v10867 = vpop.f32.mrb[0].mxu0
      %v10868 = vadd.f32 0.0, %v10867
      %v10869 = vpop.f32.mrb[0].mxu0
      %v10870 = vpop.f32.mrb[0].mxu0
      %v10871 = vadd.f32 0.0, %v10870
      %v10872 = vpop.f32.mrb[0].mxu0
      %10873 = vmatprep.mubr.bf16.mxu0 0
      %10874 = vmatmul.mubr.bf16.gmra.mrb[0].mxu0 %v10368
      %v10875 = vpop.f32.mrb[0].mxu0
      %v10876 = vadd.f32 0.0, %v10875
      %v10877 = vpop.f32.mrb[0].mxu0
      %v10878 = vpop.f32.mrb[0].mxu0
      %v10879 = vadd.f32 0.0, %v10878
      %v10880 = vpop.f32.mrb[0].mxu0
      %10881 = vmatprep.mubr.bf16.mxu0 0
      %10882 = vmatmul.mubr.bf16.gmra.mrb[0].mxu0 %v10371
      %v10883 = vpop.f32.mrb[0].mxu0
      %v10884 = vadd.f32 0.0, %v10883
      %v10885 = vpop.f32.mrb[0].mxu0
      %v10886 = vpop.f32.mrb[0].mxu0
      %v10887 = vadd.f32 0.0, %v10886
      %v10888 = vpop.f32.mrb[0].mxu0
      %10889 = vmatprep.mubr.bf16.mxu0 0
      %10890 = vmatmul.mubr.bf16.gmra.mrb[0].mxu0 %v10374
      %v10891 = vpop.f32.mrb[0].mxu0
      %v10892 = vadd.f32 0.0, %v10891
      %v10893 = vpop.f32.mrb[0].mxu0
      %v10894 = vpop.f32.mrb[0].mxu0
      %v10895 = vadd.f32 0.0, %v10894
      %v10896 = vpop.f32.mrb[0].mxu0
      %10897 = vmatprep.mubr.bf16.mxu0 0
      %10898 = vmatmul.mubr.bf16.gmra.mrb[0].mxu0 %v10377
      %v10899 = vpop.f32.mrb[0].mxu0
      %v10900 = vadd.f32 0.0, %v10899
      %v10901 = vpop.f32.mrb[0].mxu0
      %v10902 = vpop.f32.mrb[0].mxu0
      %v10903 = vadd.f32 0.0, %v10902
      %v10904 = vpop.f32.mrb[0].mxu0
      %10905 = vmatprep.mubr.bf16.mxu0 0
      %10906 = vmatmul.mubr.bf16.gmra.mrb[0].mxu0 %v10380
      %v10907 = vpop.f32.mrb[0].mxu0
      %v10908 = vadd.f32 0.0, %v10907
      %v10909 = vpop.f32.mrb[0].mxu0
      %v10910 = vpop.f32.mrb[0].mxu0
      %v10911 = vadd.f32 0.0, %v10910
      %v10912 = vpop.f32.mrb[0].mxu0
      %10913 = vmatprep.mubr.bf16.mxu0 0
      %10914 = vmatmul.mubr.bf16.gmra.mrb[0].mxu0 %v10383
      %v10915 = vpop.f32.mrb[0].mxu0
      %v10916 = vadd.f32 0.0, %v10915
      %v10917 = vpop.f32.mrb[0].mxu0
      %v10918 = vpop.f32.mrb[0].mxu0
      %v10919 = vadd.f32 0.0, %v10918
      %v10920 = vpop.f32.mrb[0].mxu0
      %10921 = vmatprep.mubr.bf16.mxu0 0
      %10922 = vmatmul.mubr.bf16.gmra.mrb[0].mxu0 %v10386
      %v10923 = vpop.f32.mrb[0].mxu0
      %v10924 = vadd.f32 0.0, %v10923
      %v10925 = vpop.f32.mrb[0].mxu0
      %v10926 = vpop.f32.mrb[0].mxu0
      %v10927 = vadd.f32 0.0, %v10926
      %v10928 = vpop.f32.mrb[0].mxu0
      %10929 = vmatprep.mubr.bf16.mxu0 0
      %10930 = vmatmul.mubr.bf16.gmra.mrb[0].mxu0 %v10389
      %v10931 = vpop.f32.mrb[0].mxu0
      %v10932 = vadd.f32 0.0, %v10931
      %v10933 = vpop.f32.mrb[0].mxu0
      %v10934 = vpop.f32.mrb[0].mxu0
      %v10935 = vadd.f32 0.0, %v10934
      %v10936 = vpop.f32.mrb[0].mxu0
      %10937 = vmatprep.mubr.bf16.mxu0 0
      %10938 = vmatmul.mubr.bf16.gmra.mrb[0].mxu0 %v10392
      %v10939 = vpop.f32.mrb[0].mxu0
      %v10940 = vadd.f32 0.0, %v10939
      %v10941 = vpop.f32.mrb[0].mxu0
      %v10942 = vpop.f32.mrb[0].mxu0
      %v10943 = vadd.f32 0.0, %v10942
      %v10944 = vpop.f32.mrb[0].mxu0
      %10945 = vmatprep.mubr.bf16.mxu0 0
      %10946 = vmatmul.mubr.bf16.gmra.mrb[0].mxu0 %v10395
      %v10947 = vpop.f32.mrb[0].mxu0
      %v10948 = vadd.f32 0.0, %v10947
      %v10949 = vpop.f32.mrb[0].mxu0
      %v10950 = vpop.f32.mrb[0].mxu0
      %v10951 = vadd.f32 0.0, %v10950
      %v10952 = vpop.f32.mrb[0].mxu0
      %10953 = vmatprep.mubr.bf16.mxu0 0
      %10954 = vmatmul.mubr.bf16.gmra.mrb[0].mxu0 %v10398
      %v10955 = vpop.f32.mrb[0].mxu0
      %v10956 = vadd.f32 0.0, %v10955
      %v10957 = vpop.f32.mrb[0].mxu0
      %v10958 = vpop.f32.mrb[0].mxu0
      %v10959 = vadd.f32 0.0, %v10958
      %v10960 = vpop.f32.mrb[0].mxu0
      %10961 = vmatprep.mubr.bf16.mxu0 0
      %10962 = vmatmul.mubr.bf16.gmra.mrb[0].mxu0 %v10401
      %v10963 = vpop.f32.mrb[0].mxu0
      %v10964 = vadd.f32 0.0, %v10963
      %v10965 = vpop.f32.mrb[0].mxu0
      %v10966 = vpop.f32.mrb[0].mxu0
      %v10967 = vadd.f32 0.0, %v10966
      %v10968 = vpop.f32.mrb[0].mxu0
      %10969 = vmatprep.mubr.bf16.mxu0 0
      %10970 = vmatmul.mubr.bf16.gmra.mrb[0].mxu0 %v10404
      %v10971 = vpop.f32.mrb[0].mxu0
      %v10972 = vadd.f32 0.0, %v10971
      %v10973 = vpop.f32.mrb[0].mxu0
      %v10974 = vpop.f32.mrb[0].mxu0
      %v10975 = vadd.f32 0.0, %v10974
      %v10976 = vpop.f32.mrb[0].mxu0
      %10977 = vmatprep.mubr.bf16.mxu0 0
      %10978 = vmatmul.mubr.bf16.gmra.mrb[0].mxu0 %v10407
      %v10979 = vpop.f32.mrb[0].mxu0
      %v10980 = vadd.f32 0.0, %v10979
      %v10981 = vpop.f32.mrb[0].mxu0
      %v10982 = vpop.f32.mrb[0].mxu0
      %v10983 = vadd.f32 0.0, %v10982
      %v10984 = vpop.f32.mrb[0].mxu0
      %10985 = vdwg.mxu0
      %v10986 = vadd.f32 %v9436, %v10444
      %v10987 = vadd.f32 %v9437, %v10447
      %v10988 = vadd.f32 %v9438, %v10452
      %v10989 = vadd.f32 %v9439, %v10455
      %v10990 = vadd.f32 %v9440, %v10460
      %v10991 = vadd.f32 %v9441, %v10463
      %v10992 = vadd.f32 %v9442, %v10468
      %v10993 = vadd.f32 %v9443, %v10471
      %v10994 = vadd.f32 %v9444, %v10476
      %v10995 = vadd.f32 %v9445, %v10479
      %v10996 = vadd.f32 %v9446, %v10484
      %v10997 = vadd.f32 %v9447, %v10487
      %v10998 = vadd.f32 %v9448, %v10492
      %v10999 = vadd.f32 %v9449, %v10495
      %v11000 = vadd.f32 %v9450, %v10500
      %v11001 = vadd.f32 %v9451, %v10503
      %v11002 = vadd.f32 %v9452, %v10508
      %v11003 = vadd.f32 %v9453, %v10511
      %v11004 = vadd.f32 %v9454, %v10516
      %v11005 = vadd.f32 %v9455, %v10519
      %v11006 = vadd.f32 %v9456, %v10524
      %v11007 = vadd.f32 %v9457, %v10527
      %v11008 = vadd.f32 %v9458, %v10532
      %v11009 = vadd.f32 %v9459, %v10535
      %v11010 = vadd.f32 %v9460, %v10540
      %v11011 = vadd.f32 %v9461, %v10543
      %v11012 = vadd.f32 %v9462, %v10548
      %v11013 = vadd.f32 %v9463, %v10551
      %v11014 = vadd.f32 %v9464, %v10556
      %v11015 = vadd.f32 %v9465, %v10559
      %v11016 = vadd.f32 %v9466, %v10564
      %v11017 = vadd.f32 %v9467, %v10567
      %v11018 = vadd.f32 %v9468, %v10572
      %v11019 = vadd.f32 %v9469, %v10575
      %v11020 = vadd.f32 %v9470, %v10580
      %v11021 = vadd.f32 %v9471, %v10583
      %v11022 = vadd.f32 %v9472, %v10588
      %v11023 = vadd.f32 %v9473, %v10591
      %v11024 = vadd.f32 %v9474, %v10596
      %v11025 = vadd.f32 %v9475, %v10599
      %v11026 = vadd.f32 %v9476, %v10604
      %v11027 = vadd.f32 %v9477, %v10607
      %v11028 = vadd.f32 %v9478, %v10612
      %v11029 = vadd.f32 %v9479, %v10615
      %v11030 = vadd.f32 %v9480, %v10620
      %v11031 = vadd.f32 %v9481, %v10623
      %v11032 = vadd.f32 %v9482, %v10628
      %v11033 = vadd.f32 %v9483, %v10631
      %v11034 = vadd.f32 %v9484, %v10636
      %v11035 = vadd.f32 %v9485, %v10639
      %v11036 = vadd.f32 %v9486, %v10644
      %v11037 = vadd.f32 %v9487, %v10647
      %v11038 = vadd.f32 %v9488, %v10652
      %v11039 = vadd.f32 %v9489, %v10655
      %v11040 = vadd.f32 %v9490, %v10660
      %v11041 = vadd.f32 %v9491, %v10663
      %v11042 = vadd.f32 %v9492, %v10668
      %v11043 = vadd.f32 %v9493, %v10671
      %v11044 = vadd.f32 %v9494, %v10676
      %v11045 = vadd.f32 %v9495, %v10679
      %v11046 = vadd.f32 %v9496, %v10684
      %v11047 = vadd.f32 %v9497, %v10687
      %v11048 = vadd.f32 %v9498, %v10692
      %v11049 = vadd.f32 %v9499, %v10695
      %v11050 = vadd.f32 %v9500, %v10700
      %v11051 = vadd.f32 %v9501, %v10703
      %v11052 = vadd.f32 %v9502, %v10708
      %v11053 = vadd.f32 %v9503, %v10711
      %v11054 = vadd.f32 %v9504, %v10716
      %v11055 = vadd.f32 %v9505, %v10719
      %v11056 = vadd.f32 %v9506, %v10724
      %v11057 = vadd.f32 %v9507, %v10727
      %v11058 = vadd.f32 %v9508, %v10732
      %v11059 = vadd.f32 %v9509, %v10735
      %v11060 = vadd.f32 %v9510, %v10740
      %v11061 = vadd.f32 %v9511, %v10743
      %v11062 = vadd.f32 %v9512, %v10748
      %v11063 = vadd.f32 %v9513, %v10751
      %v11064 = vadd.f32 %v9514, %v10756
      %v11065 = vadd.f32 %v9515, %v10759
      %v11066 = vadd.f32 %v9516, %v10764
      %v11067 = vadd.f32 %v9517, %v10767
      %v11068 = vadd.f32 %v9518, %v10772
      %v11069 = vadd.f32 %v9519, %v10775
      %v11070 = vadd.f32 %v9520, %v10780
      %v11071 = vadd.f32 %v9521, %v10783
      %v11072 = vadd.f32 %v9522, %v10788
      %v11073 = vadd.f32 %v9523, %v10791
      %v11074 = vadd.f32 %v9524, %v10796
      %v11075 = vadd.f32 %v9525, %v10799
      %v11076 = vadd.f32 %v9526, %v10804
      %v11077 = vadd.f32 %v9527, %v10807
      %v11078 = vadd.f32 %v9528, %v10812
      %v11079 = vadd.f32 %v9529, %v10815
      %v11080 = vadd.f32 %v9530, %v10820
      %v11081 = vadd.f32 %v9531, %v10823
      %v11082 = vadd.f32 %v9532, %v10828
      %v11083 = vadd.f32 %v9533, %v10831
      %v11084 = vadd.f32 %v9534, %v10836
      %v11085 = vadd.f32 %v9535, %v10839
      %v11086 = vadd.f32 %v9536, %v10844
      %v11087 = vadd.f32 %v9537, %v10847
      %v11088 = vadd.f32 %v9538, %v10852
      %v11089 = vadd.f32 %v9539, %v10855
      %v11090 = vadd.f32 %v9540, %v10860
      %v11091 = vadd.f32 %v9541, %v10863
      %v11092 = vadd.f32 %v9542, %v10868
      %v11093 = vadd.f32 %v9543, %v10871
      %v11094 = vadd.f32 %v9544, %v10876
      %v11095 = vadd.f32 %v9545, %v10879
      %v11096 = vadd.f32 %v9546, %v10884
      %v11097 = vadd.f32 %v9547, %v10887
      %v11098 = vadd.f32 %v9548, %v10892
      %v11099 = vadd.f32 %v9549, %v10895
      %v11100 = vadd.f32 %v9550, %v10900
      %v11101 = vadd.f32 %v9551, %v10903
      %v11102 = vadd.f32 %v9552, %v10908
      %v11103 = vadd.f32 %v9553, %v10911
      %v11104 = vadd.f32 %v9554, %v10916
      %v11105 = vadd.f32 %v9555, %v10919
      %v11106 = vadd.f32 %v9556, %v10924
      %v11107 = vadd.f32 %v9557, %v10927
      %v11108 = vadd.f32 %v9558, %v10932
      %v11109 = vadd.f32 %v9559, %v10935
      %v11110 = vadd.f32 %v9560, %v10940
      %v11111 = vadd.f32 %v9561, %v10943
      %v11112 = vadd.f32 %v9562, %v10948
      %v11113 = vadd.f32 %v9563, %v10951
      %v11114 = vadd.f32 %v9564, %v10956
      %v11115 = vadd.f32 %v9565, %v10959
      %v11116 = vadd.f32 %v9566, %v10964
      %v11117 = vadd.f32 %v9567, %v10967
      %v11118 = vadd.f32 %v9568, %v10972
      %v11119 = vadd.f32 %v9569, %v10975
      %v11120 = vadd.f32 %v9570, %v10980
      %v11121 = vadd.f32 %v9571, %v10983
      %v11122 = vld [vmem:[%s244 + $0x20] sm:$0x8]
      %v11123 = vld [vmem:[%s248 + $0x40] sm:$0xf]
      %v11124 = vld [vmem:[%s248 + $0x44] sm:$0xf]
      %v11126 = vunpack.c.l.b16 %v11122
      %v11127 = vpack.c.b16 %v8307, %v11126
      %vm11128 = vcmask 1044480
      %v11129 = vrot.slane %v11127, 3
      %v11130 = vrot.slane %v8444, 3
      %v11131 = vsel %vm11128, %v11129, %v11130
      %v11132 = vrot.slane %v8445, 3
      %v11133 = vsel %vm11128, %v11130, %v11132
      %v11134 = vrot.slane %v8446, 3
      %v11135 = vsel %vm11128, %v11132, %v11134
      %v11136 = vrot.slane %v8447, 3
      %v11137 = vsel %vm11128, %v11134, %v11136
      %v11138 = vrot.slane %v8448, 3
      %v11139 = vsel %vm11128, %v11136, %v11138
      %v11140 = vrot.slane %v8449, 3
      %v11141 = vsel %vm11128, %v11138, %v11140
      %v11142 = vrot.slane %v8450, 3
      %v11143 = vsel %vm11128, %v11140, %v11142
      %v11144 = vrot.slane %v8451, 3
      %v11145 = vsel %vm11128, %v11142, %v11144
      %v11146 = vrot.slane %v8452, 3
      %v11147 = vsel %vm11128, %v11144, %v11146
      %v11148 = vrot.slane %v8453, 3
      %v11149 = vsel %vm11128, %v11146, %v11148
      %v11150 = vrot.slane %v8454, 3
      %v11151 = vsel %vm11128, %v11148, %v11150
      %v11152 = vrot.slane %v8455, 3
      %v11153 = vsel %vm11128, %v11150, %v11152
      %v11154 = vrot.slane %v8456, 3
      %v11155 = vsel %vm11128, %v11152, %v11154
      %v11156 = vrot.slane %v8457, 3
      %v11157 = vsel %vm11128, %v11154, %v11156
      %v11158 = vrot.slane %v8458, 3
      %v11159 = vsel %vm11128, %v11156, %v11158
      %v11160 = vrot.slane %v8459, 3
      %v11161 = vsel %vm11128, %v11158, %v11160
      %v11162 = vrot.slane %v8460, 3
      %v11163 = vsel %vm11128, %v11160, %v11162
      %v11164 = vrot.slane %v8461, 3
      %v11165 = vsel %vm11128, %v11162, %v11164
      %v11166 = vrot.slane %v8462, 3
      %v11167 = vsel %vm11128, %v11164, %v11166
      %v11168 = vrot.slane %v8463, 3
      %v11169 = vsel %vm11128, %v11166, %v11168
      %v11170 = vrot.slane %v8464, 3
      %v11171 = vsel %vm11128, %v11168, %v11170
      %v11172 = vrot.slane %v8465, 3
      %v11173 = vsel %vm11128, %v11170, %v11172
      %v11174 = vrot.slane %v8466, 3
      %v11175 = vsel %vm11128, %v11172, %v11174
      %v11176 = vrot.slane %v8467, 3
      %v11177 = vsel %vm11128, %v11174, %v11176
      %v11178 = vrot.slane %v8468, 3
      %v11179 = vsel %vm11128, %v11176, %v11178
      %v11180 = vrot.slane %v8469, 3
      %v11181 = vsel %vm11128, %v11178, %v11180
      %v11182 = vrot.slane %v8470, 3
      %v11183 = vsel %vm11128, %v11180, %v11182
      %v11184 = vrot.slane %v8471, 3
      %v11185 = vsel %vm11128, %v11182, %v11184
      %v11186 = vrot.slane %v8472, 3
      %v11187 = vsel %vm11128, %v11184, %v11186
      %v11188 = vrot.slane %v8473, 3
      %v11189 = vsel %vm11128, %v11186, %v11188
      %v11190 = vrot.slane %v8474, 3
      %v11191 = vsel %vm11128, %v11188, %v11190
      %v11192 = vrot.slane %v8475, 3
      %v11193 = vsel %vm11128, %v11190, %v11192
      %v11194 = vrot.slane %v8476, 3
      %v11195 = vsel %vm11128, %v11192, %v11194
      %v11196 = vrot.slane %v8477, 3
      %v11197 = vsel %vm11128, %v11194, %v11196
      %v11198 = vrot.slane %v8478, 3
      %v11199 = vsel %vm11128, %v11196, %v11198
      %v11200 = vrot.slane %v8479, 3
      %v11201 = vsel %vm11128, %v11198, %v11200
      %v11202 = vrot.slane %v8480, 3
      %v11203 = vsel %vm11128, %v11200, %v11202
      %v11204 = vrot.slane %v8481, 3
      %v11205 = vsel %vm11128, %v11202, %v11204
      %v11206 = vrot.slane %v8482, 3
      %v11207 = vsel %vm11128, %v11204, %v11206
      %v11208 = vrot.slane %v8483, 3
      %v11209 = vsel %vm11128, %v11206, %v11208
      %v11210 = vrot.slane %v8484, 3
      %v11211 = vsel %vm11128, %v11208, %v11210
      %v11212 = vrot.slane %v8485, 3
      %v11213 = vsel %vm11128, %v11210, %v11212
      %v11214 = vrot.slane %v8486, 3
      %v11215 = vsel %vm11128, %v11212, %v11214
      %v11216 = vrot.slane %v8487, 3
      %v11217 = vsel %vm11128, %v11214, %v11216
      %v11218 = vrot.slane %v8488, 3
      %v11219 = vsel %vm11128, %v11216, %v11218
      %v11220 = vrot.slane %v8489, 3
      %v11221 = vsel %vm11128, %v11218, %v11220
      %v11222 = vrot.slane %v8490, 3
      %v11223 = vsel %vm11128, %v11220, %v11222
      %v11224 = vrot.slane %v8491, 3
      %v11225 = vsel %vm11128, %v11222, %v11224
      %v11226 = vrot.slane %v8492, 3
      %v11227 = vsel %vm11128, %v11224, %v11226
      %v11228 = vrot.slane %v8493, 3
      %v11229 = vsel %vm11128, %v11226, %v11228
      %v11230 = vrot.slane %v8494, 3
      %v11231 = vsel %vm11128, %v11228, %v11230
      %v11232 = vrot.slane %v8495, 3
      %v11233 = vsel %vm11128, %v11230, %v11232
      %v11234 = vrot.slane %v8496, 3
      %v11235 = vsel %vm11128, %v11232, %v11234
      %v11236 = vrot.slane %v8497, 3
      %v11237 = vsel %vm11128, %v11234, %v11236
      %v11238 = vrot.slane %v8498, 3
      %v11239 = vsel %vm11128, %v11236, %v11238
      %v11240 = vrot.slane %v8499, 3
      %v11241 = vsel %vm11128, %v11238, %v11240
      %v11242 = vrot.slane %v8500, 3
      %v11243 = vsel %vm11128, %v11240, %v11242
      %v11244 = vrot.slane %v8501, 3
      %v11245 = vsel %vm11128, %v11242, %v11244
      %v11246 = vrot.slane %v8502, 3
      %v11247 = vsel %vm11128, %v11244, %v11246
      %v11248 = vrot.slane %v8503, 3
      %v11249 = vsel %vm11128, %v11246, %v11248
      %v11250 = vrot.slane %v8504, 3
      %v11251 = vsel %vm11128, %v11248, %v11250
      %v11252 = vrot.slane %v8505, 3
      %v11253 = vsel %vm11128, %v11250, %v11252
      %v11254 = vrot.slane %v8506, 3
      %v11255 = vsel %vm11128, %v11252, %v11254
      %v11256 = vrot.slane %v8507, 3
      %v11257 = vsel %vm11128, %v11254, %v11256
      %v11258 = vrot.slane %v8508, 3
      %v11259 = vsel %vm11128, %v11256, %v11258
      %v11260 = vrot.slane %v8509, 3
      %v11261 = vsel %vm11128, %v11258, %v11260
      %v11262 = vrot.slane %v8510, 3
      %v11263 = vsel %vm11128, %v11260, %v11262
      %v11264 = vrot.slane %v9577, 3
      %v11265 = vsel %vm11128, %v11262, %v11264
      %v11268 = vunpack.c.l.b16 %v11123
      %v11269 = vunpack.c.l.b16 %v11124
      %v11270 = vpack.c.b16 %v11269, %v11268
      %v11273 = vsel %vm1303, %v11131, 0
      %v11276 = vsel %vm1303, %v11133, 0
      %v11279 = vsel %vm1303, %v11135, 0
      %v11282 = vsel %vm1303, %v11137, 0
      %v11285 = vsel %vm1303, %v11139, 0
      %v11288 = vsel %vm1303, %v11141, 0
      %v11291 = vsel %vm1303, %v11143, 0
      %v11294 = vsel %vm1303, %v11145, 0
      %v11297 = vsel %vm1303, %v11147, 0
      %v11300 = vsel %vm1303, %v11149, 0
      %v11303 = vsel %vm1303, %v11151, 0
      %v11306 = vsel %vm1303, %v11153, 0
      %v11309 = vsel %vm1303, %v11155, 0
      %v11312 = vsel %vm1303, %v11157, 0
      %v11315 = vsel %vm1303, %v11159, 0
      %v11318 = vsel %vm1303, %v11161, 0
      %v11321 = vsel %vm1303, %v11163, 0
      %v11324 = vsel %vm1303, %v11165, 0
      %v11327 = vsel %vm1303, %v11167, 0
      %v11330 = vsel %vm1303, %v11169, 0
      %v11333 = vsel %vm1303, %v11171, 0
      %v11336 = vsel %vm1303, %v11173, 0
      %v11339 = vsel %vm1303, %v11175, 0
      %v11342 = vsel %vm1303, %v11177, 0
      %v11345 = vsel %vm1303, %v11179, 0
      %v11348 = vsel %vm1303, %v11181, 0
      %v11351 = vsel %vm1303, %v11183, 0
      %v11354 = vsel %vm1303, %v11185, 0
      %v11357 = vsel %vm1303, %v11187, 0
      %v11360 = vsel %vm1303, %v11189, 0
      %v11363 = vsel %vm1303, %v11191, 0
      %v11366 = vsel %vm1303, %v11193, 0
      %v11369 = vsel %vm1303, %v11195, 0
      %v11372 = vsel %vm1303, %v11197, 0
      %v11375 = vsel %vm1303, %v11199, 0
      %v11378 = vsel %vm1303, %v11201, 0
      %v11381 = vsel %vm1303, %v11203, 0
      %v11384 = vsel %vm1303, %v11205, 0
      %v11387 = vsel %vm1303, %v11207, 0
      %v11390 = vsel %vm1303, %v11209, 0
      %v11393 = vsel %vm1303, %v11211, 0
      %v11396 = vsel %vm1303, %v11213, 0
      %v11399 = vsel %vm1303, %v11215, 0
      %v11402 = vsel %vm1303, %v11217, 0
      %v11405 = vsel %vm1303, %v11219, 0
      %v11408 = vsel %vm1303, %v11221, 0
      %v11411 = vsel %vm1303, %v11223, 0
      %v11414 = vsel %vm1303, %v11225, 0
      %v11417 = vsel %vm1303, %v11227, 0
      %v11420 = vsel %vm1303, %v11229, 0
      %v11423 = vsel %vm1303, %v11231, 0
      %v11426 = vsel %vm1303, %v11233, 0
      %v11429 = vsel %vm1303, %v11235, 0
      %v11432 = vsel %vm1303, %v11237, 0
      %v11435 = vsel %vm1303, %v11239, 0
      %v11438 = vsel %vm1303, %v11241, 0
      %v11441 = vsel %vm1303, %v11243, 0
      %v11444 = vsel %vm1303, %v11245, 0
      %v11447 = vsel %vm1303, %v11247, 0
      %v11450 = vsel %vm1303, %v11249, 0
      %v11453 = vsel %vm1303, %v11251, 0
      %v11456 = vsel %vm1303, %v11253, 0
      %v11459 = vsel %vm1303, %v11255, 0
      %v11462 = vsel %vm1303, %v11257, 0
      %v11465 = vsel %vm1303, %v11259, 0
      %v11468 = vsel %vm1303, %v11261, 0
      %v11471 = vsel %vm1303, %v11263, 0
      %v11474 = vsel %vm1303, %v11265, 0
      %11476 = vmatprep.subr.bf16.mxu0 0
      %11477 = vmatpush1.bf16.msra.mxu0 %v11270
      %11478 = vmatprep.subr.bf16.mxu0 0
      %11479 = vmatpush1.bf16.msra.mxu0 0
      %11480 = vmatprep.subr.bf16.mxu0 0
      %11481 = vmatpush1.bf16.msra.mxu0 0
      %11482 = vmatprep.subr.bf16.mxu0 0
      %11483 = vmatpush1.bf16.msra.mxu0 0
      %11484 = vmatprep.subr.bf16.mxu0 0
      %11485 = vmatpush1.bf16.msra.mxu0 0
      %11486 = vmatprep.subr.bf16.mxu0 0
      %11487 = vmatpush1.bf16.msra.mxu0 0
      %11488 = vmatprep.subr.bf16.mxu0 0
      %11489 = vmatpush1.bf16.msra.mxu0 0
      %11490 = vmatprep.subr.bf16.mxu0 0
      %11491 = vmatpush1.bf16.msra.mxu0 0
      %11492 = vmatprep.subr.bf16.mxu0 0
      %11493 = vmatpush1.bf16.msra.mxu0 0
      %11494 = vmatprep.subr.bf16.mxu0 0
      %11495 = vmatpush1.bf16.msra.mxu0 0
      %11496 = vmatprep.subr.bf16.mxu0 0
      %11497 = vmatpush1.bf16.msra.mxu0 0
      %11498 = vmatprep.subr.bf16.mxu0 0
      %11499 = vmatpush1.bf16.msra.mxu0 0
      %11500 = vmatprep.subr.bf16.mxu0 0
      %11501 = vmatpush1.bf16.msra.mxu0 0
      %11502 = vmatprep.subr.bf16.mxu0 0
      %11503 = vmatpush1.bf16.msra.mxu0 0
      %11504 = vmatprep.subr.bf16.mxu0 0
      %11505 = vmatpush1.bf16.msra.mxu0 0
      %11506 = vmatprep.subr.bf16.mxu0 0
      %11507 = vmatpush1.bf16.msra.mxu0 0
      %11508 = vmatprep.mubr.bf16.mxu0 0
      %11509 = vmatmul.mubr.bf16.gmra.mrb[0].mxu0 %v11273
      %v11510 = vpop.f32.mrb[0].mxu0
      %v11511 = vadd.f32 0.0, %v11510
      %v11512 = vpop.f32.mrb[0].mxu0
      %v11513 = vpop.f32.mrb[0].mxu0
      %v11514 = vadd.f32 0.0, %v11513
      %v11515 = vpop.f32.mrb[0].mxu0
      %11516 = vmatprep.mubr.bf16.mxu0 0
      %11517 = vmatmul.mubr.bf16.gmra.mrb[0].mxu0 %v11276
      %v11518 = vpop.f32.mrb[0].mxu0
      %v11519 = vadd.f32 0.0, %v11518
      %v11520 = vpop.f32.mrb[0].mxu0
      %v11521 = vpop.f32.mrb[0].mxu0
      %v11522 = vadd.f32 0.0, %v11521
      %v11523 = vpop.f32.mrb[0].mxu0
      %11524 = vmatprep.mubr.bf16.mxu0 0
      %11525 = vmatmul.mubr.bf16.gmra.mrb[0].mxu0 %v11279
      %v11526 = vpop.f32.mrb[0].mxu0
      %v11527 = vadd.f32 0.0, %v11526
      %v11528 = vpop.f32.mrb[0].mxu0
      %v11529 = vpop.f32.mrb[0].mxu0
      %v11530 = vadd.f32 0.0, %v11529
      %v11531 = vpop.f32.mrb[0].mxu0
      %11532 = vmatprep.mubr.bf16.mxu0 0
      %11533 = vmatmul.mubr.bf16.gmra.mrb[0].mxu0 %v11282
      %v11534 = vpop.f32.mrb[0].mxu0
      %v11535 = vadd.f32 0.0, %v11534
      %v11536 = vpop.f32.mrb[0].mxu0
      %v11537 = vpop.f32.mrb[0].mxu0
      %v11538 = vadd.f32 0.0, %v11537
      %v11539 = vpop.f32.mrb[0].mxu0
      %11540 = vmatprep.mubr.bf16.mxu0 0
      %11541 = vmatmul.mubr.bf16.gmra.mrb[0].mxu0 %v11285
      %v11542 = vpop.f32.mrb[0].mxu0
      %v11543 = vadd.f32 0.0, %v11542
      %v11544 = vpop.f32.mrb[0].mxu0
      %v11545 = vpop.f32.mrb[0].mxu0
      %v11546 = vadd.f32 0.0, %v11545
      %v11547 = vpop.f32.mrb[0].mxu0
      %11548 = vmatprep.mubr.bf16.mxu0 0
      %11549 = vmatmul.mubr.bf16.gmra.mrb[0].mxu0 %v11288
      %v11550 = vpop.f32.mrb[0].mxu0
      %v11551 = vadd.f32 0.0, %v11550
      %v11552 = vpop.f32.mrb[0].mxu0
      %v11553 = vpop.f32.mrb[0].mxu0
      %v11554 = vadd.f32 0.0, %v11553
      %v11555 = vpop.f32.mrb[0].mxu0
      %11556 = vmatprep.mubr.bf16.mxu0 0
      %11557 = vmatmul.mubr.bf16.gmra.mrb[0].mxu0 %v11291
      %v11558 = vpop.f32.mrb[0].mxu0
      %v11559 = vadd.f32 0.0, %v11558
      %v11560 = vpop.f32.mrb[0].mxu0
      %v11561 = vpop.f32.mrb[0].mxu0
      %v11562 = vadd.f32 0.0, %v11561
      %v11563 = vpop.f32.mrb[0].mxu0
      %11564 = vmatprep.mubr.bf16.mxu0 0
      %11565 = vmatmul.mubr.bf16.gmra.mrb[0].mxu0 %v11294
      %v11566 = vpop.f32.mrb[0].mxu0
      %v11567 = vadd.f32 0.0, %v11566
      %v11568 = vpop.f32.mrb[0].mxu0
      %v11569 = vpop.f32.mrb[0].mxu0
      %v11570 = vadd.f32 0.0, %v11569
      %v11571 = vpop.f32.mrb[0].mxu0
      %11572 = vmatprep.mubr.bf16.mxu0 0
      %11573 = vmatmul.mubr.bf16.gmra.mrb[0].mxu0 %v11297
      %v11574 = vpop.f32.mrb[0].mxu0
      %v11575 = vadd.f32 0.0, %v11574
      %v11576 = vpop.f32.mrb[0].mxu0
      %v11577 = vpop.f32.mrb[0].mxu0
      %v11578 = vadd.f32 0.0, %v11577
      %v11579 = vpop.f32.mrb[0].mxu0
      %11580 = vmatprep.mubr.bf16.mxu0 0
      %11581 = vmatmul.mubr.bf16.gmra.mrb[0].mxu0 %v11300
      %v11582 = vpop.f32.mrb[0].mxu0
      %v11583 = vadd.f32 0.0, %v11582
      %v11584 = vpop.f32.mrb[0].mxu0
      %v11585 = vpop.f32.mrb[0].mxu0
      %v11586 = vadd.f32 0.0, %v11585
      %v11587 = vpop.f32.mrb[0].mxu0
      %11588 = vmatprep.mubr.bf16.mxu0 0
      %11589 = vmatmul.mubr.bf16.gmra.mrb[0].mxu0 %v11303
      %v11590 = vpop.f32.mrb[0].mxu0
      %v11591 = vadd.f32 0.0, %v11590
      %v11592 = vpop.f32.mrb[0].mxu0
      %v11593 = vpop.f32.mrb[0].mxu0
      %v11594 = vadd.f32 0.0, %v11593
      %v11595 = vpop.f32.mrb[0].mxu0
      %11596 = vmatprep.mubr.bf16.mxu0 0
      %11597 = vmatmul.mubr.bf16.gmra.mrb[0].mxu0 %v11306
      %v11598 = vpop.f32.mrb[0].mxu0
      %v11599 = vadd.f32 0.0, %v11598
      %v11600 = vpop.f32.mrb[0].mxu0
      %v11601 = vpop.f32.mrb[0].mxu0
      %v11602 = vadd.f32 0.0, %v11601
      %v11603 = vpop.f32.mrb[0].mxu0
      %11604 = vmatprep.mubr.bf16.mxu0 0
      %11605 = vmatmul.mubr.bf16.gmra.mrb[0].mxu0 %v11309
      %v11606 = vpop.f32.mrb[0].mxu0
      %v11607 = vadd.f32 0.0, %v11606
      %v11608 = vpop.f32.mrb[0].mxu0
      %v11609 = vpop.f32.mrb[0].mxu0
      %v11610 = vadd.f32 0.0, %v11609
      %v11611 = vpop.f32.mrb[0].mxu0
      %11612 = vmatprep.mubr.bf16.mxu0 0
      %11613 = vmatmul.mubr.bf16.gmra.mrb[0].mxu0 %v11312
      %v11614 = vpop.f32.mrb[0].mxu0
      %v11615 = vadd.f32 0.0, %v11614
      %v11616 = vpop.f32.mrb[0].mxu0
      %v11617 = vpop.f32.mrb[0].mxu0
      %v11618 = vadd.f32 0.0, %v11617
      %v11619 = vpop.f32.mrb[0].mxu0
      %11620 = vmatprep.mubr.bf16.mxu0 0
      %11621 = vmatmul.mubr.bf16.gmra.mrb[0].mxu0 %v11315
      %v11622 = vpop.f32.mrb[0].mxu0
      %v11623 = vadd.f32 0.0, %v11622
      %v11624 = vpop.f32.mrb[0].mxu0
      %v11625 = vpop.f32.mrb[0].mxu0
      %v11626 = vadd.f32 0.0, %v11625
      %v11627 = vpop.f32.mrb[0].mxu0
      %11628 = vmatprep.mubr.bf16.mxu0 0
      %11629 = vmatmul.mubr.bf16.gmra.mrb[0].mxu0 %v11318
      %v11630 = vpop.f32.mrb[0].mxu0
      %v11631 = vadd.f32 0.0, %v11630
      %v11632 = vpop.f32.mrb[0].mxu0
      %v11633 = vpop.f32.mrb[0].mxu0
      %v11634 = vadd.f32 0.0, %v11633
      %v11635 = vpop.f32.mrb[0].mxu0
      %11636 = vmatprep.mubr.bf16.mxu0 0
      %11637 = vmatmul.mubr.bf16.gmra.mrb[0].mxu0 %v11321
      %v11638 = vpop.f32.mrb[0].mxu0
      %v11639 = vadd.f32 0.0, %v11638
      %v11640 = vpop.f32.mrb[0].mxu0
      %v11641 = vpop.f32.mrb[0].mxu0
      %v11642 = vadd.f32 0.0, %v11641
      %v11643 = vpop.f32.mrb[0].mxu0
      %11644 = vmatprep.mubr.bf16.mxu0 0
      %11645 = vmatmul.mubr.bf16.gmra.mrb[0].mxu0 %v11324
      %v11646 = vpop.f32.mrb[0].mxu0
      %v11647 = vadd.f32 0.0, %v11646
      %v11648 = vpop.f32.mrb[0].mxu0
      %v11649 = vpop.f32.mrb[0].mxu0
      %v11650 = vadd.f32 0.0, %v11649
      %v11651 = vpop.f32.mrb[0].mxu0
      %11652 = vmatprep.mubr.bf16.mxu0 0
      %11653 = vmatmul.mubr.bf16.gmra.mrb[0].mxu0 %v11327
      %v11654 = vpop.f32.mrb[0].mxu0
      %v11655 = vadd.f32 0.0, %v11654
      %v11656 = vpop.f32.mrb[0].mxu0
      %v11657 = vpop.f32.mrb[0].mxu0
      %v11658 = vadd.f32 0.0, %v11657
      %v11659 = vpop.f32.mrb[0].mxu0
      %11660 = vmatprep.mubr.bf16.mxu0 0
      %11661 = vmatmul.mubr.bf16.gmra.mrb[0].mxu0 %v11330
      %v11662 = vpop.f32.mrb[0].mxu0
      %v11663 = vadd.f32 0.0, %v11662
      %v11664 = vpop.f32.mrb[0].mxu0
      %v11665 = vpop.f32.mrb[0].mxu0
      %v11666 = vadd.f32 0.0, %v11665
      %v11667 = vpop.f32.mrb[0].mxu0
      %11668 = vmatprep.mubr.bf16.mxu0 0
      %11669 = vmatmul.mubr.bf16.gmra.mrb[0].mxu0 %v11333
      %v11670 = vpop.f32.mrb[0].mxu0
      %v11671 = vadd.f32 0.0, %v11670
      %v11672 = vpop.f32.mrb[0].mxu0
      %v11673 = vpop.f32.mrb[0].mxu0
      %v11674 = vadd.f32 0.0, %v11673
      %v11675 = vpop.f32.mrb[0].mxu0
      %11676 = vmatprep.mubr.bf16.mxu0 0
      %11677 = vmatmul.mubr.bf16.gmra.mrb[0].mxu0 %v11336
      %v11678 = vpop.f32.mrb[0].mxu0
      %v11679 = vadd.f32 0.0, %v11678
      %v11680 = vpop.f32.mrb[0].mxu0
      %v11681 = vpop.f32.mrb[0].mxu0
      %v11682 = vadd.f32 0.0, %v11681
      %v11683 = vpop.f32.mrb[0].mxu0
      %11684 = vmatprep.mubr.bf16.mxu0 0
      %11685 = vmatmul.mubr.bf16.gmra.mrb[0].mxu0 %v11339
      %v11686 = vpop.f32.mrb[0].mxu0
      %v11687 = vadd.f32 0.0, %v11686
      %v11688 = vpop.f32.mrb[0].mxu0
      %v11689 = vpop.f32.mrb[0].mxu0
      %v11690 = vadd.f32 0.0, %v11689
      %v11691 = vpop.f32.mrb[0].mxu0
      %11692 = vmatprep.mubr.bf16.mxu0 0
      %11693 = vmatmul.mubr.bf16.gmra.mrb[0].mxu0 %v11342
      %v11694 = vpop.f32.mrb[0].mxu0
      %v11695 = vadd.f32 0.0, %v11694
      %v11696 = vpop.f32.mrb[0].mxu0
      %v11697 = vpop.f32.mrb[0].mxu0
      %v11698 = vadd.f32 0.0, %v11697
      %v11699 = vpop.f32.mrb[0].mxu0
      %11700 = vmatprep.mubr.bf16.mxu0 0
      %11701 = vmatmul.mubr.bf16.gmra.mrb[0].mxu0 %v11345
      %v11702 = vpop.f32.mrb[0].mxu0
      %v11703 = vadd.f32 0.0, %v11702
      %v11704 = vpop.f32.mrb[0].mxu0
      %v11705 = vpop.f32.mrb[0].mxu0
      %v11706 = vadd.f32 0.0, %v11705
      %v11707 = vpop.f32.mrb[0].mxu0
      %11708 = vmatprep.mubr.bf16.mxu0 0
      %11709 = vmatmul.mubr.bf16.gmra.mrb[0].mxu0 %v11348
      %v11710 = vpop.f32.mrb[0].mxu0
      %v11711 = vadd.f32 0.0, %v11710
      %v11712 = vpop.f32.mrb[0].mxu0
      %v11713 = vpop.f32.mrb[0].mxu0
      %v11714 = vadd.f32 0.0, %v11713
      %v11715 = vpop.f32.mrb[0].mxu0
      %11716 = vmatprep.mubr.bf16.mxu0 0
      %11717 = vmatmul.mubr.bf16.gmra.mrb[0].mxu0 %v11351
      %v11718 = vpop.f32.mrb[0].mxu0
      %v11719 = vadd.f32 0.0, %v11718
      %v11720 = vpop.f32.mrb[0].mxu0
      %v11721 = vpop.f32.mrb[0].mxu0
      %v11722 = vadd.f32 0.0, %v11721
      %v11723 = vpop.f32.mrb[0].mxu0
      %11724 = vmatprep.mubr.bf16.mxu0 0
      %11725 = vmatmul.mubr.bf16.gmra.mrb[0].mxu0 %v11354
      %v11726 = vpop.f32.mrb[0].mxu0
      %v11727 = vadd.f32 0.0, %v11726
      %v11728 = vpop.f32.mrb[0].mxu0
      %v11729 = vpop.f32.mrb[0].mxu0
      %v11730 = vadd.f32 0.0, %v11729
      %v11731 = vpop.f32.mrb[0].mxu0
      %11732 = vmatprep.mubr.bf16.mxu0 0
      %11733 = vmatmul.mubr.bf16.gmra.mrb[0].mxu0 %v11357
      %v11734 = vpop.f32.mrb[0].mxu0
      %v11735 = vadd.f32 0.0, %v11734
      %v11736 = vpop.f32.mrb[0].mxu0
      %v11737 = vpop.f32.mrb[0].mxu0
      %v11738 = vadd.f32 0.0, %v11737
      %v11739 = vpop.f32.mrb[0].mxu0
      %11740 = vmatprep.mubr.bf16.mxu0 0
      %11741 = vmatmul.mubr.bf16.gmra.mrb[0].mxu0 %v11360
      %v11742 = vpop.f32.mrb[0].mxu0
      %v11743 = vadd.f32 0.0, %v11742
      %v11744 = vpop.f32.mrb[0].mxu0
      %v11745 = vpop.f32.mrb[0].mxu0
      %v11746 = vadd.f32 0.0, %v11745
      %v11747 = vpop.f32.mrb[0].mxu0
      %11748 = vmatprep.mubr.bf16.mxu0 0
      %11749 = vmatmul.mubr.bf16.gmra.mrb[0].mxu0 %v11363
      %v11750 = vpop.f32.mrb[0].mxu0
      %v11751 = vadd.f32 0.0, %v11750
      %v11752 = vpop.f32.mrb[0].mxu0
      %v11753 = vpop.f32.mrb[0].mxu0
      %v11754 = vadd.f32 0.0, %v11753
      %v11755 = vpop.f32.mrb[0].mxu0
      %11756 = vmatprep.mubr.bf16.mxu0 0
      %11757 = vmatmul.mubr.bf16.gmra.mrb[0].mxu0 %v11366
      %v11758 = vpop.f32.mrb[0].mxu0
      %v11759 = vadd.f32 0.0, %v11758
      %v11760 = vpop.f32.mrb[0].mxu0
      %v11761 = vpop.f32.mrb[0].mxu0
      %v11762 = vadd.f32 0.0, %v11761
      %v11763 = vpop.f32.mrb[0].mxu0
      %11764 = vmatprep.mubr.bf16.mxu0 0
      %11765 = vmatmul.mubr.bf16.gmra.mrb[0].mxu0 %v11369
      %v11766 = vpop.f32.mrb[0].mxu0
      %v11767 = vadd.f32 0.0, %v11766
      %v11768 = vpop.f32.mrb[0].mxu0
      %v11769 = vpop.f32.mrb[0].mxu0
      %v11770 = vadd.f32 0.0, %v11769
      %v11771 = vpop.f32.mrb[0].mxu0
      %11772 = vmatprep.mubr.bf16.mxu0 0
      %11773 = vmatmul.mubr.bf16.gmra.mrb[0].mxu0 %v11372
      %v11774 = vpop.f32.mrb[0].mxu0
      %v11775 = vadd.f32 0.0, %v11774
      %v11776 = vpop.f32.mrb[0].mxu0
      %v11777 = vpop.f32.mrb[0].mxu0
      %v11778 = vadd.f32 0.0, %v11777
      %v11779 = vpop.f32.mrb[0].mxu0
      %11780 = vmatprep.mubr.bf16.mxu0 0
      %11781 = vmatmul.mubr.bf16.gmra.mrb[0].mxu0 %v11375
      %v11782 = vpop.f32.mrb[0].mxu0
      %v11783 = vadd.f32 0.0, %v11782
      %v11784 = vpop.f32.mrb[0].mxu0
      %v11785 = vpop.f32.mrb[0].mxu0
      %v11786 = vadd.f32 0.0, %v11785
      %v11787 = vpop.f32.mrb[0].mxu0
      %11788 = vmatprep.mubr.bf16.mxu0 0
      %11789 = vmatmul.mubr.bf16.gmra.mrb[0].mxu0 %v11378
      %v11790 = vpop.f32.mrb[0].mxu0
      %v11791 = vadd.f32 0.0, %v11790
      %v11792 = vpop.f32.mrb[0].mxu0
      %v11793 = vpop.f32.mrb[0].mxu0
      %v11794 = vadd.f32 0.0, %v11793
      %v11795 = vpop.f32.mrb[0].mxu0
      %11796 = vmatprep.mubr.bf16.mxu0 0
      %11797 = vmatmul.mubr.bf16.gmra.mrb[0].mxu0 %v11381
      %v11798 = vpop.f32.mrb[0].mxu0
      %v11799 = vadd.f32 0.0, %v11798
      %v11800 = vpop.f32.mrb[0].mxu0
      %v11801 = vpop.f32.mrb[0].mxu0
      %v11802 = vadd.f32 0.0, %v11801
      %v11803 = vpop.f32.mrb[0].mxu0
      %11804 = vmatprep.mubr.bf16.mxu0 0
      %11805 = vmatmul.mubr.bf16.gmra.mrb[0].mxu0 %v11384
      %v11806 = vpop.f32.mrb[0].mxu0
      %v11807 = vadd.f32 0.0, %v11806
      %v11808 = vpop.f32.mrb[0].mxu0
      %v11809 = vpop.f32.mrb[0].mxu0
      %v11810 = vadd.f32 0.0, %v11809
      %v11811 = vpop.f32.mrb[0].mxu0
      %11812 = vmatprep.mubr.bf16.mxu0 0
      %11813 = vmatmul.mubr.bf16.gmra.mrb[0].mxu0 %v11387
      %v11814 = vpop.f32.mrb[0].mxu0
      %v11815 = vadd.f32 0.0, %v11814
      %v11816 = vpop.f32.mrb[0].mxu0
      %v11817 = vpop.f32.mrb[0].mxu0
      %v11818 = vadd.f32 0.0, %v11817
      %v11819 = vpop.f32.mrb[0].mxu0
      %11820 = vmatprep.mubr.bf16.mxu0 0
      %11821 = vmatmul.mubr.bf16.gmra.mrb[0].mxu0 %v11390
      %v11822 = vpop.f32.mrb[0].mxu0
      %v11823 = vadd.f32 0.0, %v11822
      %v11824 = vpop.f32.mrb[0].mxu0
      %v11825 = vpop.f32.mrb[0].mxu0
      %v11826 = vadd.f32 0.0, %v11825
      %v11827 = vpop.f32.mrb[0].mxu0
      %11828 = vmatprep.mubr.bf16.mxu0 0
      %11829 = vmatmul.mubr.bf16.gmra.mrb[0].mxu0 %v11393
      %v11830 = vpop.f32.mrb[0].mxu0
      %v11831 = vadd.f32 0.0, %v11830
      %v11832 = vpop.f32.mrb[0].mxu0
      %v11833 = vpop.f32.mrb[0].mxu0
      %v11834 = vadd.f32 0.0, %v11833
      %v11835 = vpop.f32.mrb[0].mxu0
      %11836 = vmatprep.mubr.bf16.mxu0 0
      %11837 = vmatmul.mubr.bf16.gmra.mrb[0].mxu0 %v11396
      %v11838 = vpop.f32.mrb[0].mxu0
      %v11839 = vadd.f32 0.0, %v11838
      %v11840 = vpop.f32.mrb[0].mxu0
      %v11841 = vpop.f32.mrb[0].mxu0
      %v11842 = vadd.f32 0.0, %v11841
      %v11843 = vpop.f32.mrb[0].mxu0
      %11844 = vmatprep.mubr.bf16.mxu0 0
      %11845 = vmatmul.mubr.bf16.gmra.mrb[0].mxu0 %v11399
      %v11846 = vpop.f32.mrb[0].mxu0
      %v11847 = vadd.f32 0.0, %v11846
      %v11848 = vpop.f32.mrb[0].mxu0
      %v11849 = vpop.f32.mrb[0].mxu0
      %v11850 = vadd.f32 0.0, %v11849
      %v11851 = vpop.f32.mrb[0].mxu0
      %11852 = vmatprep.mubr.bf16.mxu0 0
      %11853 = vmatmul.mubr.bf16.gmra.mrb[0].mxu0 %v11402
      %v11854 = vpop.f32.mrb[0].mxu0
      %v11855 = vadd.f32 0.0, %v11854
      %v11856 = vpop.f32.mrb[0].mxu0
      %v11857 = vpop.f32.mrb[0].mxu0
      %v11858 = vadd.f32 0.0, %v11857
      %v11859 = vpop.f32.mrb[0].mxu0
      %11860 = vmatprep.mubr.bf16.mxu0 0
      %11861 = vmatmul.mubr.bf16.gmra.mrb[0].mxu0 %v11405
      %v11862 = vpop.f32.mrb[0].mxu0
      %v11863 = vadd.f32 0.0, %v11862
      %v11864 = vpop.f32.mrb[0].mxu0
      %v11865 = vpop.f32.mrb[0].mxu0
      %v11866 = vadd.f32 0.0, %v11865
      %v11867 = vpop.f32.mrb[0].mxu0
      %11868 = vmatprep.mubr.bf16.mxu0 0
      %11869 = vmatmul.mubr.bf16.gmra.mrb[0].mxu0 %v11408
      %v11870 = vpop.f32.mrb[0].mxu0
      %v11871 = vadd.f32 0.0, %v11870
      %v11872 = vpop.f32.mrb[0].mxu0
      %v11873 = vpop.f32.mrb[0].mxu0
      %v11874 = vadd.f32 0.0, %v11873
      %v11875 = vpop.f32.mrb[0].mxu0
      %11876 = vmatprep.mubr.bf16.mxu0 0
      %11877 = vmatmul.mubr.bf16.gmra.mrb[0].mxu0 %v11411
      %v11878 = vpop.f32.mrb[0].mxu0
      %v11879 = vadd.f32 0.0, %v11878
      %v11880 = vpop.f32.mrb[0].mxu0
      %v11881 = vpop.f32.mrb[0].mxu0
      %v11882 = vadd.f32 0.0, %v11881
      %v11883 = vpop.f32.mrb[0].mxu0
      %11884 = vmatprep.mubr.bf16.mxu0 0
      %11885 = vmatmul.mubr.bf16.gmra.mrb[0].mxu0 %v11414
      %v11886 = vpop.f32.mrb[0].mxu0
      %v11887 = vadd.f32 0.0, %v11886
      %v11888 = vpop.f32.mrb[0].mxu0
      %v11889 = vpop.f32.mrb[0].mxu0
      %v11890 = vadd.f32 0.0, %v11889
      %v11891 = vpop.f32.mrb[0].mxu0
      %11892 = vmatprep.mubr.bf16.mxu0 0
      %11893 = vmatmul.mubr.bf16.gmra.mrb[0].mxu0 %v11417
      %v11894 = vpop.f32.mrb[0].mxu0
      %v11895 = vadd.f32 0.0, %v11894
      %v11896 = vpop.f32.mrb[0].mxu0
      %v11897 = vpop.f32.mrb[0].mxu0
      %v11898 = vadd.f32 0.0, %v11897
      %v11899 = vpop.f32.mrb[0].mxu0
      %11900 = vmatprep.mubr.bf16.mxu0 0
      %11901 = vmatmul.mubr.bf16.gmra.mrb[0].mxu0 %v11420
      %v11902 = vpop.f32.mrb[0].mxu0
      %v11903 = vadd.f32 0.0, %v11902
      %v11904 = vpop.f32.mrb[0].mxu0
      %v11905 = vpop.f32.mrb[0].mxu0
      %v11906 = vadd.f32 0.0, %v11905
      %v11907 = vpop.f32.mrb[0].mxu0
      %11908 = vmatprep.mubr.bf16.mxu0 0
      %11909 = vmatmul.mubr.bf16.gmra.mrb[0].mxu0 %v11423
      %v11910 = vpop.f32.mrb[0].mxu0
      %v11911 = vadd.f32 0.0, %v11910
      %v11912 = vpop.f32.mrb[0].mxu0
      %v11913 = vpop.f32.mrb[0].mxu0
      %v11914 = vadd.f32 0.0, %v11913
      %v11915 = vpop.f32.mrb[0].mxu0
      %11916 = vmatprep.mubr.bf16.mxu0 0
      %11917 = vmatmul.mubr.bf16.gmra.mrb[0].mxu0 %v11426
      %v11918 = vpop.f32.mrb[0].mxu0
      %v11919 = vadd.f32 0.0, %v11918
      %v11920 = vpop.f32.mrb[0].mxu0
      %v11921 = vpop.f32.mrb[0].mxu0
      %v11922 = vadd.f32 0.0, %v11921
      %v11923 = vpop.f32.mrb[0].mxu0
      %11924 = vmatprep.mubr.bf16.mxu0 0
      %11925 = vmatmul.mubr.bf16.gmra.mrb[0].mxu0 %v11429
      %v11926 = vpop.f32.mrb[0].mxu0
      %v11927 = vadd.f32 0.0, %v11926
      %v11928 = vpop.f32.mrb[0].mxu0
      %v11929 = vpop.f32.mrb[0].mxu0
      %v11930 = vadd.f32 0.0, %v11929
      %v11931 = vpop.f32.mrb[0].mxu0
      %11932 = vmatprep.mubr.bf16.mxu0 0
      %11933 = vmatmul.mubr.bf16.gmra.mrb[0].mxu0 %v11432
      %v11934 = vpop.f32.mrb[0].mxu0
      %v11935 = vadd.f32 0.0, %v11934
      %v11936 = vpop.f32.mrb[0].mxu0
      %v11937 = vpop.f32.mrb[0].mxu0
      %v11938 = vadd.f32 0.0, %v11937
      %v11939 = vpop.f32.mrb[0].mxu0
      %11940 = vmatprep.mubr.bf16.mxu0 0
      %11941 = vmatmul.mubr.bf16.gmra.mrb[0].mxu0 %v11435
      %v11942 = vpop.f32.mrb[0].mxu0
      %v11943 = vadd.f32 0.0, %v11942
      %v11944 = vpop.f32.mrb[0].mxu0
      %v11945 = vpop.f32.mrb[0].mxu0
      %v11946 = vadd.f32 0.0, %v11945
      %v11947 = vpop.f32.mrb[0].mxu0
      %11948 = vmatprep.mubr.bf16.mxu0 0
      %11949 = vmatmul.mubr.bf16.gmra.mrb[0].mxu0 %v11438
      %v11950 = vpop.f32.mrb[0].mxu0
      %v11951 = vadd.f32 0.0, %v11950
      %v11952 = vpop.f32.mrb[0].mxu0
      %v11953 = vpop.f32.mrb[0].mxu0
      %v11954 = vadd.f32 0.0, %v11953
      %v11955 = vpop.f32.mrb[0].mxu0
      %11956 = vmatprep.mubr.bf16.mxu0 0
      %11957 = vmatmul.mubr.bf16.gmra.mrb[0].mxu0 %v11441
      %v11958 = vpop.f32.mrb[0].mxu0
      %v11959 = vadd.f32 0.0, %v11958
      %v11960 = vpop.f32.mrb[0].mxu0
      %v11961 = vpop.f32.mrb[0].mxu0
      %v11962 = vadd.f32 0.0, %v11961
      %v11963 = vpop.f32.mrb[0].mxu0
      %11964 = vmatprep.mubr.bf16.mxu0 0
      %11965 = vmatmul.mubr.bf16.gmra.mrb[0].mxu0 %v11444
      %v11966 = vpop.f32.mrb[0].mxu0
      %v11967 = vadd.f32 0.0, %v11966
      %v11968 = vpop.f32.mrb[0].mxu0
      %v11969 = vpop.f32.mrb[0].mxu0
      %v11970 = vadd.f32 0.0, %v11969
      %v11971 = vpop.f32.mrb[0].mxu0
      %11972 = vmatprep.mubr.bf16.mxu0 0
      %11973 = vmatmul.mubr.bf16.gmra.mrb[0].mxu0 %v11447
      %v11974 = vpop.f32.mrb[0].mxu0
      %v11975 = vadd.f32 0.0, %v11974
      %v11976 = vpop.f32.mrb[0].mxu0
      %v11977 = vpop.f32.mrb[0].mxu0
      %v11978 = vadd.f32 0.0, %v11977
      %v11979 = vpop.f32.mrb[0].mxu0
      %11980 = vmatprep.mubr.bf16.mxu0 0
      %11981 = vmatmul.mubr.bf16.gmra.mrb[0].mxu0 %v11450
      %v11982 = vpop.f32.mrb[0].mxu0
      %v11983 = vadd.f32 0.0, %v11982
      %v11984 = vpop.f32.mrb[0].mxu0
      %v11985 = vpop.f32.mrb[0].mxu0
      %v11986 = vadd.f32 0.0, %v11985
      %v11987 = vpop.f32.mrb[0].mxu0
      %11988 = vmatprep.mubr.bf16.mxu0 0
      %11989 = vmatmul.mubr.bf16.gmra.mrb[0].mxu0 %v11453
      %v11990 = vpop.f32.mrb[0].mxu0
      %v11991 = vadd.f32 0.0, %v11990
      %v11992 = vpop.f32.mrb[0].mxu0
      %v11993 = vpop.f32.mrb[0].mxu0
      %v11994 = vadd.f32 0.0, %v11993
      %v11995 = vpop.f32.mrb[0].mxu0
      %11996 = vmatprep.mubr.bf16.mxu0 0
      %11997 = vmatmul.mubr.bf16.gmra.mrb[0].mxu0 %v11456
      %v11998 = vpop.f32.mrb[0].mxu0
      %v11999 = vadd.f32 0.0, %v11998
      %v12000 = vpop.f32.mrb[0].mxu0
      %v12001 = vpop.f32.mrb[0].mxu0
      %v12002 = vadd.f32 0.0, %v12001
      %v12003 = vpop.f32.mrb[0].mxu0
      %12004 = vmatprep.mubr.bf16.mxu0 0
      %12005 = vmatmul.mubr.bf16.gmra.mrb[0].mxu0 %v11459
      %v12006 = vpop.f32.mrb[0].mxu0
      %v12007 = vadd.f32 0.0, %v12006
      %v12008 = vpop.f32.mrb[0].mxu0
      %v12009 = vpop.f32.mrb[0].mxu0
      %v12010 = vadd.f32 0.0, %v12009
      %v12011 = vpop.f32.mrb[0].mxu0
      %12012 = vmatprep.mubr.bf16.mxu0 0
      %12013 = vmatmul.mubr.bf16.gmra.mrb[0].mxu0 %v11462
      %v12014 = vpop.f32.mrb[0].mxu0
      %v12015 = vadd.f32 0.0, %v12014
      %v12016 = vpop.f32.mrb[0].mxu0
      %v12017 = vpop.f32.mrb[0].mxu0
      %v12018 = vadd.f32 0.0, %v12017
      %v12019 = vpop.f32.mrb[0].mxu0
      %12020 = vmatprep.mubr.bf16.mxu0 0
      %12021 = vmatmul.mubr.bf16.gmra.mrb[0].mxu0 %v11465
      %v12022 = vpop.f32.mrb[0].mxu0
      %v12023 = vadd.f32 0.0, %v12022
      %v12024 = vpop.f32.mrb[0].mxu0
      %v12025 = vpop.f32.mrb[0].mxu0
      %v12026 = vadd.f32 0.0, %v12025
      %v12027 = vpop.f32.mrb[0].mxu0
      %12028 = vmatprep.mubr.bf16.mxu0 0
      %12029 = vmatmul.mubr.bf16.gmra.mrb[0].mxu0 %v11468
      %v12030 = vpop.f32.mrb[0].mxu0
      %v12031 = vadd.f32 0.0, %v12030
      %v12032 = vpop.f32.mrb[0].mxu0
      %v12033 = vpop.f32.mrb[0].mxu0
      %v12034 = vadd.f32 0.0, %v12033
      %v12035 = vpop.f32.mrb[0].mxu0
      %12036 = vmatprep.mubr.bf16.mxu0 0
      %12037 = vmatmul.mubr.bf16.gmra.mrb[0].mxu0 %v11471
      %v12038 = vpop.f32.mrb[0].mxu0
      %v12039 = vadd.f32 0.0, %v12038
      %v12040 = vpop.f32.mrb[0].mxu0
      %v12041 = vpop.f32.mrb[0].mxu0
      %v12042 = vadd.f32 0.0, %v12041
      %v12043 = vpop.f32.mrb[0].mxu0
      %12044 = vmatprep.mubr.bf16.mxu0 0
      %12045 = vmatmul.mubr.bf16.gmra.mrb[0].mxu0 %v11474
      %v12046 = vpop.f32.mrb[0].mxu0
      %v12047 = vadd.f32 0.0, %v12046
      %v12048 = vpop.f32.mrb[0].mxu0
      %v12049 = vpop.f32.mrb[0].mxu0
      %v12050 = vadd.f32 0.0, %v12049
      %v12051 = vpop.f32.mrb[0].mxu0
      %12052 = vdwg.mxu0
      %v12053 = vadd.f32 %v10986, %v11511
      %v12054 = vadd.f32 %v10987, %v11514
      %v12055 = vadd.f32 %v10988, %v11519
      %v12056 = vadd.f32 %v10989, %v11522
      %v12057 = vadd.f32 %v10990, %v11527
      %v12058 = vadd.f32 %v10991, %v11530
      %v12059 = vadd.f32 %v10992, %v11535
      %v12060 = vadd.f32 %v10993, %v11538
      %v12061 = vadd.f32 %v10994, %v11543
      %v12062 = vadd.f32 %v10995, %v11546
      %v12063 = vadd.f32 %v10996, %v11551
      %v12064 = vadd.f32 %v10997, %v11554
      %v12065 = vadd.f32 %v10998, %v11559
      %v12066 = vadd.f32 %v10999, %v11562
      %v12067 = vadd.f32 %v11000, %v11567
      %v12068 = vadd.f32 %v11001, %v11570
      %v12069 = vadd.f32 %v11002, %v11575
      %v12070 = vadd.f32 %v11003, %v11578
      %v12071 = vadd.f32 %v11004, %v11583
      %v12072 = vadd.f32 %v11005, %v11586
      %v12073 = vadd.f32 %v11006, %v11591
      %v12074 = vadd.f32 %v11007, %v11594
      %v12075 = vadd.f32 %v11008, %v11599
      %v12076 = vadd.f32 %v11009, %v11602
      %v12077 = vadd.f32 %v11010, %v11607
      %v12078 = vadd.f32 %v11011, %v11610
      %v12079 = vadd.f32 %v11012, %v11615
      %v12080 = vadd.f32 %v11013, %v11618
      %v12081 = vadd.f32 %v11014, %v11623
      %v12082 = vadd.f32 %v11015, %v11626
      %v12083 = vadd.f32 %v11016, %v11631
      %v12084 = vadd.f32 %v11017, %v11634
      %v12085 = vadd.f32 %v11018, %v11639
      %v12086 = vadd.f32 %v11019, %v11642
      %v12087 = vadd.f32 %v11020, %v11647
      %v12088 = vadd.f32 %v11021, %v11650
      %v12089 = vadd.f32 %v11022, %v11655
      %v12090 = vadd.f32 %v11023, %v11658
      %v12091 = vadd.f32 %v11024, %v11663
      %v12092 = vadd.f32 %v11025, %v11666
      %v12093 = vadd.f32 %v11026, %v11671
      %v12094 = vadd.f32 %v11027, %v11674
      %v12095 = vadd.f32 %v11028, %v11679
      %v12096 = vadd.f32 %v11029, %v11682
      %v12097 = vadd.f32 %v11030, %v11687
      %v12098 = vadd.f32 %v11031, %v11690
      %v12099 = vadd.f32 %v11032, %v11695
      %v12100 = vadd.f32 %v11033, %v11698
      %v12101 = vadd.f32 %v11034, %v11703
      %v12102 = vadd.f32 %v11035, %v11706
      %v12103 = vadd.f32 %v11036, %v11711
      %v12104 = vadd.f32 %v11037, %v11714
      %v12105 = vadd.f32 %v11038, %v11719
      %v12106 = vadd.f32 %v11039, %v11722
      %v12107 = vadd.f32 %v11040, %v11727
      %v12108 = vadd.f32 %v11041, %v11730
      %v12109 = vadd.f32 %v11042, %v11735
      %v12110 = vadd.f32 %v11043, %v11738
      %v12111 = vadd.f32 %v11044, %v11743
      %v12112 = vadd.f32 %v11045, %v11746
      %v12113 = vadd.f32 %v11046, %v11751
      %v12114 = vadd.f32 %v11047, %v11754
      %v12115 = vadd.f32 %v11048, %v11759
      %v12116 = vadd.f32 %v11049, %v11762
      %v12117 = vadd.f32 %v11050, %v11767
      %v12118 = vadd.f32 %v11051, %v11770
      %v12119 = vadd.f32 %v11052, %v11775
      %v12120 = vadd.f32 %v11053, %v11778
      %v12121 = vadd.f32 %v11054, %v11783
      %v12122 = vadd.f32 %v11055, %v11786
      %v12123 = vadd.f32 %v11056, %v11791
      %v12124 = vadd.f32 %v11057, %v11794
      %v12125 = vadd.f32 %v11058, %v11799
      %v12126 = vadd.f32 %v11059, %v11802
      %v12127 = vadd.f32 %v11060, %v11807
      %v12128 = vadd.f32 %v11061, %v11810
      %v12129 = vadd.f32 %v11062, %v11815
      %v12130 = vadd.f32 %v11063, %v11818
      %v12131 = vadd.f32 %v11064, %v11823
      %v12132 = vadd.f32 %v11065, %v11826
      %v12133 = vadd.f32 %v11066, %v11831
      %v12134 = vadd.f32 %v11067, %v11834
      %v12135 = vadd.f32 %v11068, %v11839
      %v12136 = vadd.f32 %v11069, %v11842
      %v12137 = vadd.f32 %v11070, %v11847
      %v12138 = vadd.f32 %v11071, %v11850
      %v12139 = vadd.f32 %v11072, %v11855
      %v12140 = vadd.f32 %v11073, %v11858
      %v12141 = vadd.f32 %v11074, %v11863
      %v12142 = vadd.f32 %v11075, %v11866
      %v12143 = vadd.f32 %v11076, %v11871
      %v12144 = vadd.f32 %v11077, %v11874
      %v12145 = vadd.f32 %v11078, %v11879
      %v12146 = vadd.f32 %v11079, %v11882
      %v12147 = vadd.f32 %v11080, %v11887
      %v12148 = vadd.f32 %v11081, %v11890
      %v12149 = vadd.f32 %v11082, %v11895
      %v12150 = vadd.f32 %v11083, %v11898
      %v12151 = vadd.f32 %v11084, %v11903
      %v12152 = vadd.f32 %v11085, %v11906
      %v12153 = vadd.f32 %v11086, %v11911
      %v12154 = vadd.f32 %v11087, %v11914
      %v12155 = vadd.f32 %v11088, %v11919
      %v12156 = vadd.f32 %v11089, %v11922
      %v12157 = vadd.f32 %v11090, %v11927
      %v12158 = vadd.f32 %v11091, %v11930
      %v12159 = vadd.f32 %v11092, %v11935
      %v12160 = vadd.f32 %v11093, %v11938
      %v12161 = vadd.f32 %v11094, %v11943
      %v12162 = vadd.f32 %v11095, %v11946
      %v12163 = vadd.f32 %v11096, %v11951
      %v12164 = vadd.f32 %v11097, %v11954
      %v12165 = vadd.f32 %v11098, %v11959
      %v12166 = vadd.f32 %v11099, %v11962
      %v12167 = vadd.f32 %v11100, %v11967
      %v12168 = vadd.f32 %v11101, %v11970
      %v12169 = vadd.f32 %v11102, %v11975
      %v12170 = vadd.f32 %v11103, %v11978
      %v12171 = vadd.f32 %v11104, %v11983
      %v12172 = vadd.f32 %v11105, %v11986
      %v12173 = vadd.f32 %v11106, %v11991
      %v12174 = vadd.f32 %v11107, %v11994
      %v12175 = vadd.f32 %v11108, %v11999
      %v12176 = vadd.f32 %v11109, %v12002
      %v12177 = vadd.f32 %v11110, %v12007
      %v12178 = vadd.f32 %v11111, %v12010
      %v12179 = vadd.f32 %v11112, %v12015
      %v12180 = vadd.f32 %v11113, %v12018
      %v12181 = vadd.f32 %v11114, %v12023
      %v12182 = vadd.f32 %v11115, %v12026
      %v12183 = vadd.f32 %v11116, %v12031
      %v12184 = vadd.f32 %v11117, %v12034
      %v12185 = vadd.f32 %v11118, %v12039
      %v12186 = vadd.f32 %v11119, %v12042
      %v12187 = vadd.f32 %v11120, %v12047
      %v12188 = vadd.f32 %v11121, %v12050
      %v12189 = vld [vmem:[%s251] sm:$0x1]
      %v12191 = vlaneseq
      %v12192 = vshrl.u32 %v12191, 7
      %v12193 = vsub.s32 0, %v12192
      %v12194 = vrot.slane %v12189, %v12193
      %v12196 = vmul.f32 %v12053, %v12194
      %v12197 = vmul.f32 %v12054, %v12194
      %v12198 = vmul.f32 %v12055, %v12194
      %v12199 = vmul.f32 %v12056, %v12194
      %v12200 = vmul.f32 %v12057, %v12194
      %v12201 = vmul.f32 %v12058, %v12194
      %v12202 = vmul.f32 %v12059, %v12194
      %v12203 = vmul.f32 %v12060, %v12194
      %v12204 = vmul.f32 %v12061, %v12194
      %v12205 = vmul.f32 %v12062, %v12194
      %v12206 = vmul.f32 %v12063, %v12194
      %v12207 = vmul.f32 %v12064, %v12194
      %v12208 = vmul.f32 %v12065, %v12194
      %v12209 = vmul.f32 %v12066, %v12194
      %v12210 = vmul.f32 %v12067, %v12194
      %v12211 = vmul.f32 %v12068, %v12194
      %v12212 = vmul.f32 %v12069, %v12194
      %v12213 = vmul.f32 %v12070, %v12194
      %v12214 = vmul.f32 %v12071, %v12194
      %v12215 = vmul.f32 %v12072, %v12194
      %v12216 = vmul.f32 %v12073, %v12194
      %v12217 = vmul.f32 %v12074, %v12194
      %v12218 = vmul.f32 %v12075, %v12194
      %v12219 = vmul.f32 %v12076, %v12194
      %v12220 = vmul.f32 %v12077, %v12194
      %v12221 = vmul.f32 %v12078, %v12194
      %v12222 = vmul.f32 %v12079, %v12194
      %v12223 = vmul.f32 %v12080, %v12194
      %v12224 = vmul.f32 %v12081, %v12194
      %v12225 = vmul.f32 %v12082, %v12194
      %v12226 = vmul.f32 %v12083, %v12194
      %v12227 = vmul.f32 %v12084, %v12194
      %v12228 = vmul.f32 %v12085, %v12194
      %v12229 = vmul.f32 %v12086, %v12194
      %v12230 = vmul.f32 %v12087, %v12194
      %v12231 = vmul.f32 %v12088, %v12194
      %v12232 = vmul.f32 %v12089, %v12194
      %v12233 = vmul.f32 %v12090, %v12194
      %v12234 = vmul.f32 %v12091, %v12194
      %v12235 = vmul.f32 %v12092, %v12194
      %v12236 = vmul.f32 %v12093, %v12194
      %v12237 = vmul.f32 %v12094, %v12194
      %v12238 = vmul.f32 %v12095, %v12194
      %v12239 = vmul.f32 %v12096, %v12194
      %v12240 = vmul.f32 %v12097, %v12194
      %v12241 = vmul.f32 %v12098, %v12194
      %v12242 = vmul.f32 %v12099, %v12194
      %v12243 = vmul.f32 %v12100, %v12194
      %v12244 = vmul.f32 %v12101, %v12194
      %v12245 = vmul.f32 %v12102, %v12194
      %v12246 = vmul.f32 %v12103, %v12194
      %v12247 = vmul.f32 %v12104, %v12194
      %v12248 = vmul.f32 %v12105, %v12194
      %v12249 = vmul.f32 %v12106, %v12194
      %v12250 = vmul.f32 %v12107, %v12194
      %v12251 = vmul.f32 %v12108, %v12194
      %v12252 = vmul.f32 %v12109, %v12194
      %v12253 = vmul.f32 %v12110, %v12194
      %v12254 = vmul.f32 %v12111, %v12194
      %v12255 = vmul.f32 %v12112, %v12194
      %v12256 = vmul.f32 %v12113, %v12194
      %v12257 = vmul.f32 %v12114, %v12194
      %v12258 = vmul.f32 %v12115, %v12194
      %v12259 = vmul.f32 %v12116, %v12194
      %v12260 = vmul.f32 %v12117, %v12194
      %v12261 = vmul.f32 %v12118, %v12194
      %v12262 = vmul.f32 %v12119, %v12194
      %v12263 = vmul.f32 %v12120, %v12194
      %v12264 = vmul.f32 %v12121, %v12194
      %v12265 = vmul.f32 %v12122, %v12194
      %v12266 = vmul.f32 %v12123, %v12194
      %v12267 = vmul.f32 %v12124, %v12194
      %v12268 = vmul.f32 %v12125, %v12194
      %v12269 = vmul.f32 %v12126, %v12194
      %v12270 = vmul.f32 %v12127, %v12194
      %v12271 = vmul.f32 %v12128, %v12194
      %v12272 = vmul.f32 %v12129, %v12194
      %v12273 = vmul.f32 %v12130, %v12194
      %v12274 = vmul.f32 %v12131, %v12194
      %v12275 = vmul.f32 %v12132, %v12194
      %v12276 = vmul.f32 %v12133, %v12194
      %v12277 = vmul.f32 %v12134, %v12194
      %v12278 = vmul.f32 %v12135, %v12194
      %v12279 = vmul.f32 %v12136, %v12194
      %v12280 = vmul.f32 %v12137, %v12194
      %v12281 = vmul.f32 %v12138, %v12194
      %v12282 = vmul.f32 %v12139, %v12194
      %v12283 = vmul.f32 %v12140, %v12194
      %v12284 = vmul.f32 %v12141, %v12194
      %v12285 = vmul.f32 %v12142, %v12194
      %v12286 = vmul.f32 %v12143, %v12194
      %v12287 = vmul.f32 %v12144, %v12194
      %v12288 = vmul.f32 %v12145, %v12194
      %v12289 = vmul.f32 %v12146, %v12194
      %v12290 = vmul.f32 %v12147, %v12194
      %v12291 = vmul.f32 %v12148, %v12194
      %v12292 = vmul.f32 %v12149, %v12194
      %v12293 = vmul.f32 %v12150, %v12194
      %v12294 = vmul.f32 %v12151, %v12194
      %v12295 = vmul.f32 %v12152, %v12194
      %v12296 = vmul.f32 %v12153, %v12194
      %v12297 = vmul.f32 %v12154, %v12194
      %v12298 = vmul.f32 %v12155, %v12194
      %v12299 = vmul.f32 %v12156, %v12194
      %v12300 = vmul.f32 %v12157, %v12194
      %v12301 = vmul.f32 %v12158, %v12194
      %v12302 = vmul.f32 %v12159, %v12194
      %v12303 = vmul.f32 %v12160, %v12194
      %v12304 = vmul.f32 %v12161, %v12194
      %v12305 = vmul.f32 %v12162, %v12194
      %v12306 = vmul.f32 %v12163, %v12194
      %v12307 = vmul.f32 %v12164, %v12194
      %v12308 = vmul.f32 %v12165, %v12194
      %v12309 = vmul.f32 %v12166, %v12194
      %v12310 = vmul.f32 %v12167, %v12194
      %v12311 = vmul.f32 %v12168, %v12194
      %v12312 = vmul.f32 %v12169, %v12194
      %v12313 = vmul.f32 %v12170, %v12194
      %v12314 = vmul.f32 %v12171, %v12194
      %v12315 = vmul.f32 %v12172, %v12194
      %v12316 = vmul.f32 %v12173, %v12194
      %v12317 = vmul.f32 %v12174, %v12194
      %v12318 = vmul.f32 %v12175, %v12194
      %v12319 = vmul.f32 %v12176, %v12194
      %v12320 = vmul.f32 %v12177, %v12194
      %v12321 = vmul.f32 %v12178, %v12194
      %v12322 = vmul.f32 %v12179, %v12194
      %v12323 = vmul.f32 %v12180, %v12194
      %v12324 = vmul.f32 %v12181, %v12194
      %v12325 = vmul.f32 %v12182, %v12194
      %v12326 = vmul.f32 %v12183, %v12194
      %v12327 = vmul.f32 %v12184, %v12194
      %v12328 = vmul.f32 %v12185, %v12194
      %v12329 = vmul.f32 %v12186, %v12194
      %v12330 = vmul.f32 %v12187, %v12194
      %v12331 = vmul.f32 %v12188, %v12194
      %v12332 = vld [vmem:[%s254] sm:$0x1]
      %v12334 = vlaneseq
      %v12335 = vshrl.u32 %v12334, 7
      %v12336 = vsub.s32 0, %v12335
      %v12337 = vrot.slane %v12332, %v12336
      %v12339 = vadd.f32 %v12196, %v12337
      %v12340 = vadd.f32 %v12197, %v12337
      %v12341 = vadd.f32 %v12198, %v12337
      %v12342 = vadd.f32 %v12199, %v12337
      %v12343 = vadd.f32 %v12200, %v12337
      %v12344 = vadd.f32 %v12201, %v12337
      %v12345 = vadd.f32 %v12202, %v12337
      %v12346 = vadd.f32 %v12203, %v12337
      %v12347 = vadd.f32 %v12204, %v12337
      %v12348 = vadd.f32 %v12205, %v12337
      %v12349 = vadd.f32 %v12206, %v12337
      %v12350 = vadd.f32 %v12207, %v12337
      %v12351 = vadd.f32 %v12208, %v12337
      %v12352 = vadd.f32 %v12209, %v12337
      %v12353 = vadd.f32 %v12210, %v12337
      %v12354 = vadd.f32 %v12211, %v12337
      %v12355 = vadd.f32 %v12212, %v12337
      %v12356 = vadd.f32 %v12213, %v12337
      %v12357 = vadd.f32 %v12214, %v12337
      %v12358 = vadd.f32 %v12215, %v12337
      %v12359 = vadd.f32 %v12216, %v12337
      %v12360 = vadd.f32 %v12217, %v12337
      %v12361 = vadd.f32 %v12218, %v12337
      %v12362 = vadd.f32 %v12219, %v12337
      %v12363 = vadd.f32 %v12220, %v12337
      %v12364 = vadd.f32 %v12221, %v12337
      %v12365 = vadd.f32 %v12222, %v12337
      %v12366 = vadd.f32 %v12223, %v12337
      %v12367 = vadd.f32 %v12224, %v12337
      %v12368 = vadd.f32 %v12225, %v12337
      %v12369 = vadd.f32 %v12226, %v12337
      %v12370 = vadd.f32 %v12227, %v12337
      %v12371 = vadd.f32 %v12228, %v12337
      %v12372 = vadd.f32 %v12229, %v12337
      %v12373 = vadd.f32 %v12230, %v12337
      %v12374 = vadd.f32 %v12231, %v12337
      %v12375 = vadd.f32 %v12232, %v12337
      %v12376 = vadd.f32 %v12233, %v12337
      %v12377 = vadd.f32 %v12234, %v12337
      %v12378 = vadd.f32 %v12235, %v12337
      %v12379 = vadd.f32 %v12236, %v12337
      %v12380 = vadd.f32 %v12237, %v12337
      %v12381 = vadd.f32 %v12238, %v12337
      %v12382 = vadd.f32 %v12239, %v12337
      %v12383 = vadd.f32 %v12240, %v12337
      %v12384 = vadd.f32 %v12241, %v12337
      %v12385 = vadd.f32 %v12242, %v12337
      %v12386 = vadd.f32 %v12243, %v12337
      %v12387 = vadd.f32 %v12244, %v12337
      %v12388 = vadd.f32 %v12245, %v12337
      %v12389 = vadd.f32 %v12246, %v12337
      %v12390 = vadd.f32 %v12247, %v12337
      %v12391 = vadd.f32 %v12248, %v12337
      %v12392 = vadd.f32 %v12249, %v12337
      %v12393 = vadd.f32 %v12250, %v12337
      %v12394 = vadd.f32 %v12251, %v12337
      %v12395 = vadd.f32 %v12252, %v12337
      %v12396 = vadd.f32 %v12253, %v12337
      %v12397 = vadd.f32 %v12254, %v12337
      %v12398 = vadd.f32 %v12255, %v12337
      %v12399 = vadd.f32 %v12256, %v12337
      %v12400 = vadd.f32 %v12257, %v12337
      %v12401 = vadd.f32 %v12258, %v12337
      %v12402 = vadd.f32 %v12259, %v12337
      %v12403 = vadd.f32 %v12260, %v12337
      %v12404 = vadd.f32 %v12261, %v12337
      %v12405 = vadd.f32 %v12262, %v12337
      %v12406 = vadd.f32 %v12263, %v12337
      %v12407 = vadd.f32 %v12264, %v12337
      %v12408 = vadd.f32 %v12265, %v12337
      %v12409 = vadd.f32 %v12266, %v12337
      %v12410 = vadd.f32 %v12267, %v12337
      %v12411 = vadd.f32 %v12268, %v12337
      %v12412 = vadd.f32 %v12269, %v12337
      %v12413 = vadd.f32 %v12270, %v12337
      %v12414 = vadd.f32 %v12271, %v12337
      %v12415 = vadd.f32 %v12272, %v12337
      %v12416 = vadd.f32 %v12273, %v12337
      %v12417 = vadd.f32 %v12274, %v12337
      %v12418 = vadd.f32 %v12275, %v12337
      %v12419 = vadd.f32 %v12276, %v12337
      %v12420 = vadd.f32 %v12277, %v12337
      %v12421 = vadd.f32 %v12278, %v12337
      %v12422 = vadd.f32 %v12279, %v12337
      %v12423 = vadd.f32 %v12280, %v12337
      %v12424 = vadd.f32 %v12281, %v12337
      %v12425 = vadd.f32 %v12282, %v12337
      %v12426 = vadd.f32 %v12283, %v12337
      %v12427 = vadd.f32 %v12284, %v12337
      %v12428 = vadd.f32 %v12285, %v12337
      %v12429 = vadd.f32 %v12286, %v12337
      %v12430 = vadd.f32 %v12287, %v12337
      %v12431 = vadd.f32 %v12288, %v12337
      %v12432 = vadd.f32 %v12289, %v12337
      %v12433 = vadd.f32 %v12290, %v12337
      %v12434 = vadd.f32 %v12291, %v12337
      %v12435 = vadd.f32 %v12292, %v12337
      %v12436 = vadd.f32 %v12293, %v12337
      %v12437 = vadd.f32 %v12294, %v12337
      %v12438 = vadd.f32 %v12295, %v12337
      %v12439 = vadd.f32 %v12296, %v12337
      %v12440 = vadd.f32 %v12297, %v12337
      %v12441 = vadd.f32 %v12298, %v12337
      %v12442 = vadd.f32 %v12299, %v12337
      %v12443 = vadd.f32 %v12300, %v12337
      %v12444 = vadd.f32 %v12301, %v12337
      %v12445 = vadd.f32 %v12302, %v12337
      %v12446 = vadd.f32 %v12303, %v12337
      %v12447 = vadd.f32 %v12304, %v12337
      %v12448 = vadd.f32 %v12305, %v12337
      %v12449 = vadd.f32 %v12306, %v12337
      %v12450 = vadd.f32 %v12307, %v12337
      %v12451 = vadd.f32 %v12308, %v12337
      %v12452 = vadd.f32 %v12309, %v12337
      %v12453 = vadd.f32 %v12310, %v12337
      %v12454 = vadd.f32 %v12311, %v12337
      %v12455 = vadd.f32 %v12312, %v12337
      %v12456 = vadd.f32 %v12313, %v12337
      %v12457 = vadd.f32 %v12314, %v12337
      %v12458 = vadd.f32 %v12315, %v12337
      %v12459 = vadd.f32 %v12316, %v12337
      %v12460 = vadd.f32 %v12317, %v12337
      %v12461 = vadd.f32 %v12318, %v12337
      %v12462 = vadd.f32 %v12319, %v12337
      %v12463 = vadd.f32 %v12320, %v12337
      %v12464 = vadd.f32 %v12321, %v12337
      %v12465 = vadd.f32 %v12322, %v12337
      %v12466 = vadd.f32 %v12323, %v12337
      %v12467 = vadd.f32 %v12324, %v12337
      %v12468 = vadd.f32 %v12325, %v12337
      %v12469 = vadd.f32 %v12326, %v12337
      %v12470 = vadd.f32 %v12327, %v12337
      %v12471 = vadd.f32 %v12328, %v12337
      %v12472 = vadd.f32 %v12329, %v12337
      %v12473 = vadd.f32 %v12330, %v12337
      %v12474 = vadd.f32 %v12331, %v12337
      %vm12475 = vcmp.gt.f32.partialorder %v12339, 0.0
      %vm12476 = vcmp.gt.f32.partialorder %v12340, 0.0
      %vm12477 = vcmp.gt.f32.partialorder %v12341, 0.0
      %vm12478 = vcmp.gt.f32.partialorder %v12342, 0.0
      %vm12479 = vcmp.gt.f32.partialorder %v12343, 0.0
      %vm12480 = vcmp.gt.f32.partialorder %v12344, 0.0
      %vm12481 = vcmp.gt.f32.partialorder %v12345, 0.0
      %vm12482 = vcmp.gt.f32.partialorder %v12346, 0.0
      %vm12483 = vcmp.gt.f32.partialorder %v12347, 0.0
      %vm12484 = vcmp.gt.f32.partialorder %v12348, 0.0
      %vm12485 = vcmp.gt.f32.partialorder %v12349, 0.0
      %vm12486 = vcmp.gt.f32.partialorder %v12350, 0.0
      %vm12487 = vcmp.gt.f32.partialorder %v12351, 0.0
      %vm12488 = vcmp.gt.f32.partialorder %v12352, 0.0
      %vm12489 = vcmp.gt.f32.partialorder %v12353, 0.0
      %vm12490 = vcmp.gt.f32.partialorder %v12354, 0.0
      %vm12491 = vcmp.gt.f32.partialorder %v12355, 0.0
      %vm12492 = vcmp.gt.f32.partialorder %v12356, 0.0
      %vm12493 = vcmp.gt.f32.partialorder %v12357, 0.0
      %vm12494 = vcmp.gt.f32.partialorder %v12358, 0.0
      %vm12495 = vcmp.gt.f32.partialorder %v12359, 0.0
      %vm12496 = vcmp.gt.f32.partialorder %v12360, 0.0
      %vm12497 = vcmp.gt.f32.partialorder %v12361, 0.0
      %vm12498 = vcmp.gt.f32.partialorder %v12362, 0.0
      %vm12499 = vcmp.gt.f32.partialorder %v12363, 0.0
      %vm12500 = vcmp.gt.f32.partialorder %v12364, 0.0
      %vm12501 = vcmp.gt.f32.partialorder %v12365, 0.0
      %vm12502 = vcmp.gt.f32.partialorder %v12366, 0.0
      %vm12503 = vcmp.gt.f32.partialorder %v12367, 0.0
      %vm12504 = vcmp.gt.f32.partialorder %v12368, 0.0
      %vm12505 = vcmp.gt.f32.partialorder %v12369, 0.0
      %vm12506 = vcmp.gt.f32.partialorder %v12370, 0.0
      %vm12507 = vcmp.gt.f32.partialorder %v12371, 0.0
      %vm12508 = vcmp.gt.f32.partialorder %v12372, 0.0
      %vm12509 = vcmp.gt.f32.partialorder %v12373, 0.0
      %vm12510 = vcmp.gt.f32.partialorder %v12374, 0.0
      %vm12511 = vcmp.gt.f32.partialorder %v12375, 0.0
      %vm12512 = vcmp.gt.f32.partialorder %v12376, 0.0
      %vm12513 = vcmp.gt.f32.partialorder %v12377, 0.0
      %vm12514 = vcmp.gt.f32.partialorder %v12378, 0.0
      %vm12515 = vcmp.gt.f32.partialorder %v12379, 0.0
      %vm12516 = vcmp.gt.f32.partialorder %v12380, 0.0
      %vm12517 = vcmp.gt.f32.partialorder %v12381, 0.0
      %vm12518 = vcmp.gt.f32.partialorder %v12382, 0.0
      %vm12519 = vcmp.gt.f32.partialorder %v12383, 0.0
      %vm12520 = vcmp.gt.f32.partialorder %v12384, 0.0
      %vm12521 = vcmp.gt.f32.partialorder %v12385, 0.0
      %vm12522 = vcmp.gt.f32.partialorder %v12386, 0.0
      %vm12523 = vcmp.gt.f32.partialorder %v12387, 0.0
      %vm12524 = vcmp.gt.f32.partialorder %v12388, 0.0
      %vm12525 = vcmp.gt.f32.partialorder %v12389, 0.0
      %vm12526 = vcmp.gt.f32.partialorder %v12390, 0.0
      %vm12527 = vcmp.gt.f32.partialorder %v12391, 0.0
      %vm12528 = vcmp.gt.f32.partialorder %v12392, 0.0
      %vm12529 = vcmp.gt.f32.partialorder %v12393, 0.0
      %vm12530 = vcmp.gt.f32.partialorder %v12394, 0.0
      %vm12531 = vcmp.gt.f32.partialorder %v12395, 0.0
      %vm12532 = vcmp.gt.f32.partialorder %v12396, 0.0
      %vm12533 = vcmp.gt.f32.partialorder %v12397, 0.0
      %vm12534 = vcmp.gt.f32.partialorder %v12398, 0.0
      %vm12535 = vcmp.gt.f32.partialorder %v12399, 0.0
      %vm12536 = vcmp.gt.f32.partialorder %v12400, 0.0
      %vm12537 = vcmp.gt.f32.partialorder %v12401, 0.0
      %vm12538 = vcmp.gt.f32.partialorder %v12402, 0.0
      %vm12539 = vcmp.gt.f32.partialorder %v12403, 0.0
      %vm12540 = vcmp.gt.f32.partialorder %v12404, 0.0
      %vm12541 = vcmp.gt.f32.partialorder %v12405, 0.0
      %vm12542 = vcmp.gt.f32.partialorder %v12406, 0.0
      %vm12543 = vcmp.gt.f32.partialorder %v12407, 0.0
      %vm12544 = vcmp.gt.f32.partialorder %v12408, 0.0
      %vm12545 = vcmp.gt.f32.partialorder %v12409, 0.0
      %vm12546 = vcmp.gt.f32.partialorder %v12410, 0.0
      %vm12547 = vcmp.gt.f32.partialorder %v12411, 0.0
      %vm12548 = vcmp.gt.f32.partialorder %v12412, 0.0
      %vm12549 = vcmp.gt.f32.partialorder %v12413, 0.0
      %vm12550 = vcmp.gt.f32.partialorder %v12414, 0.0
      %vm12551 = vcmp.gt.f32.partialorder %v12415, 0.0
      %vm12552 = vcmp.gt.f32.partialorder %v12416, 0.0
      %vm12553 = vcmp.gt.f32.partialorder %v12417, 0.0
      %vm12554 = vcmp.gt.f32.partialorder %v12418, 0.0
      %vm12555 = vcmp.gt.f32.partialorder %v12419, 0.0
      %vm12556 = vcmp.gt.f32.partialorder %v12420, 0.0
      %vm12557 = vcmp.gt.f32.partialorder %v12421, 0.0
      %vm12558 = vcmp.gt.f32.partialorder %v12422, 0.0
      %vm12559 = vcmp.gt.f32.partialorder %v12423, 0.0
      %vm12560 = vcmp.gt.f32.partialorder %v12424, 0.0
      %vm12561 = vcmp.gt.f32.partialorder %v12425, 0.0
      %vm12562 = vcmp.gt.f32.partialorder %v12426, 0.0
      %vm12563 = vcmp.gt.f32.partialorder %v12427, 0.0
      %vm12564 = vcmp.gt.f32.partialorder %v12428, 0.0
      %vm12565 = vcmp.gt.f32.partialorder %v12429, 0.0
      %vm12566 = vcmp.gt.f32.partialorder %v12430, 0.0
      %vm12567 = vcmp.gt.f32.partialorder %v12431, 0.0
      %vm12568 = vcmp.gt.f32.partialorder %v12432, 0.0
      %vm12569 = vcmp.gt.f32.partialorder %v12433, 0.0
      %vm12570 = vcmp.gt.f32.partialorder %v12434, 0.0
      %vm12571 = vcmp.gt.f32.partialorder %v12435, 0.0
      %vm12572 = vcmp.gt.f32.partialorder %v12436, 0.0
      %vm12573 = vcmp.gt.f32.partialorder %v12437, 0.0
      %vm12574 = vcmp.gt.f32.partialorder %v12438, 0.0
      %vm12575 = vcmp.gt.f32.partialorder %v12439, 0.0
      %vm12576 = vcmp.gt.f32.partialorder %v12440, 0.0
      %vm12577 = vcmp.gt.f32.partialorder %v12441, 0.0
      %vm12578 = vcmp.gt.f32.partialorder %v12442, 0.0
      %vm12579 = vcmp.gt.f32.partialorder %v12443, 0.0
      %vm12580 = vcmp.gt.f32.partialorder %v12444, 0.0
      %vm12581 = vcmp.gt.f32.partialorder %v12445, 0.0
      %vm12582 = vcmp.gt.f32.partialorder %v12446, 0.0
      %vm12583 = vcmp.gt.f32.partialorder %v12447, 0.0
      %vm12584 = vcmp.gt.f32.partialorder %v12448, 0.0
      %vm12585 = vcmp.gt.f32.partialorder %v12449, 0.0
      %vm12586 = vcmp.gt.f32.partialorder %v12450, 0.0
      %vm12587 = vcmp.gt.f32.partialorder %v12451, 0.0
      %vm12588 = vcmp.gt.f32.partialorder %v12452, 0.0
      %vm12589 = vcmp.gt.f32.partialorder %v12453, 0.0
      %vm12590 = vcmp.gt.f32.partialorder %v12454, 0.0
      %vm12591 = vcmp.gt.f32.partialorder %v12455, 0.0
      %vm12592 = vcmp.gt.f32.partialorder %v12456, 0.0
      %vm12593 = vcmp.gt.f32.partialorder %v12457, 0.0
      %vm12594 = vcmp.gt.f32.partialorder %v12458, 0.0
      %vm12595 = vcmp.gt.f32.partialorder %v12459, 0.0
      %vm12596 = vcmp.gt.f32.partialorder %v12460, 0.0
      %vm12597 = vcmp.gt.f32.partialorder %v12461, 0.0
      %vm12598 = vcmp.gt.f32.partialorder %v12462, 0.0
      %vm12599 = vcmp.gt.f32.partialorder %v12463, 0.0
      %vm12600 = vcmp.gt.f32.partialorder %v12464, 0.0
      %vm12601 = vcmp.gt.f32.partialorder %v12465, 0.0
      %vm12602 = vcmp.gt.f32.partialorder %v12466, 0.0
      %vm12603 = vcmp.gt.f32.partialorder %v12467, 0.0
      %vm12604 = vcmp.gt.f32.partialorder %v12468, 0.0
      %vm12605 = vcmp.gt.f32.partialorder %v12469, 0.0
      %vm12606 = vcmp.gt.f32.partialorder %v12470, 0.0
      %vm12607 = vcmp.gt.f32.partialorder %v12471, 0.0
      %vm12608 = vcmp.gt.f32.partialorder %v12472, 0.0
      %vm12609 = vcmp.gt.f32.partialorder %v12473, 0.0
      %vm12610 = vcmp.gt.f32.partialorder %v12474, 0.0
      %v12611 = vmul.f32 %v12339, 0.1
      %v12612 = vmul.f32 %v12340, 0.1
      %v12613 = vmul.f32 %v12341, 0.1
      %v12614 = vmul.f32 %v12342, 0.1
      %v12615 = vmul.f32 %v12343, 0.1
      %v12616 = vmul.f32 %v12344, 0.1
      %v12617 = vmul.f32 %v12345, 0.1
      %v12618 = vmul.f32 %v12346, 0.1
      %v12619 = vmul.f32 %v12347, 0.1
      %v12620 = vmul.f32 %v12348, 0.1
      %v12621 = vmul.f32 %v12349, 0.1
      %v12622 = vmul.f32 %v12350, 0.1
      %v12623 = vmul.f32 %v12351, 0.1
      %v12624 = vmul.f32 %v12352, 0.1
      %v12625 = vmul.f32 %v12353, 0.1
      %v12626 = vmul.f32 %v12354, 0.1
      %v12627 = vmul.f32 %v12355, 0.1
      %v12628 = vmul.f32 %v12356, 0.1
      %v12629 = vmul.f32 %v12357, 0.1
      %v12630 = vmul.f32 %v12358, 0.1
      %v12631 = vmul.f32 %v12359, 0.1
      %v12632 = vmul.f32 %v12360, 0.1
      %v12633 = vmul.f32 %v12361, 0.1
      %v12634 = vmul.f32 %v12362, 0.1
      %v12635 = vmul.f32 %v12363, 0.1
      %v12636 = vmul.f32 %v12364, 0.1
      %v12637 = vmul.f32 %v12365, 0.1
      %v12638 = vmul.f32 %v12366, 0.1
      %v12639 = vmul.f32 %v12367, 0.1
      %v12640 = vmul.f32 %v12368, 0.1
      %v12641 = vmul.f32 %v12369, 0.1
      %v12642 = vmul.f32 %v12370, 0.1
      %v12643 = vmul.f32 %v12371, 0.1
      %v12644 = vmul.f32 %v12372, 0.1
      %v12645 = vmul.f32 %v12373, 0.1
      %v12646 = vmul.f32 %v12374, 0.1
      %v12647 = vmul.f32 %v12375, 0.1
      %v12648 = vmul.f32 %v12376, 0.1
      %v12649 = vmul.f32 %v12377, 0.1
      %v12650 = vmul.f32 %v12378, 0.1
      %v12651 = vmul.f32 %v12379, 0.1
      %v12652 = vmul.f32 %v12380, 0.1
      %v12653 = vmul.f32 %v12381, 0.1
      %v12654 = vmul.f32 %v12382, 0.1
      %v12655 = vmul.f32 %v12383, 0.1
      %v12656 = vmul.f32 %v12384, 0.1
      %v12657 = vmul.f32 %v12385, 0.1
      %v12658 = vmul.f32 %v12386, 0.1
      %v12659 = vmul.f32 %v12387, 0.1
      %v12660 = vmul.f32 %v12388, 0.1
      %v12661 = vmul.f32 %v12389, 0.1
      %v12662 = vmul.f32 %v12390, 0.1
      %v12663 = vmul.f32 %v12391, 0.1
      %v12664 = vmul.f32 %v12392, 0.1
      %v12665 = vmul.f32 %v12393, 0.1
      %v12666 = vmul.f32 %v12394, 0.1
      %v12667 = vmul.f32 %v12395, 0.1
      %v12668 = vmul.f32 %v12396, 0.1
      %v12669 = vmul.f32 %v12397, 0.1
      %v12670 = vmul.f32 %v12398, 0.1
      %v12671 = vmul.f32 %v12399, 0.1
      %v12672 = vmul.f32 %v12400, 0.1
      %v12673 = vmul.f32 %v12401, 0.1
      %v12674 = vmul.f32 %v12402, 0.1
      %v12675 = vmul.f32 %v12403, 0.1
      %v12676 = vmul.f32 %v12404, 0.1
      %v12677 = vmul.f32 %v12405, 0.1
      %v12678 = vmul.f32 %v12406, 0.1
      %v12679 = vmul.f32 %v12407, 0.1
      %v12680 = vmul.f32 %v12408, 0.1
      %v12681 = vmul.f32 %v12409, 0.1
      %v12682 = vmul.f32 %v12410, 0.1
      %v12683 = vmul.f32 %v12411, 0.1
      %v12684 = vmul.f32 %v12412, 0.1
      %v12685 = vmul.f32 %v12413, 0.1
      %v12686 = vmul.f32 %v12414, 0.1
      %v12687 = vmul.f32 %v12415, 0.1
      %v12688 = vmul.f32 %v12416, 0.1
      %v12689 = vmul.f32 %v12417, 0.1
      %v12690 = vmul.f32 %v12418, 0.1
      %v12691 = vmul.f32 %v12419, 0.1
      %v12692 = vmul.f32 %v12420, 0.1
      %v12693 = vmul.f32 %v12421, 0.1
      %v12694 = vmul.f32 %v12422, 0.1
      %v12695 = vmul.f32 %v12423, 0.1
      %v12696 = vmul.f32 %v12424, 0.1
      %v12697 = vmul.f32 %v12425, 0.1
      %v12698 = vmul.f32 %v12426, 0.1
      %v12699 = vmul.f32 %v12427, 0.1
      %v12700 = vmul.f32 %v12428, 0.1
      %v12701 = vmul.f32 %v12429, 0.1
      %v12702 = vmul.f32 %v12430, 0.1
      %v12703 = vmul.f32 %v12431, 0.1
      %v12704 = vmul.f32 %v12432, 0.1
      %v12705 = vmul.f32 %v12433, 0.1
      %v12706 = vmul.f32 %v12434, 0.1
      %v12707 = vmul.f32 %v12435, 0.1
      %v12708 = vmul.f32 %v12436, 0.1
      %v12709 = vmul.f32 %v12437, 0.1
      %v12710 = vmul.f32 %v12438, 0.1
      %v12711 = vmul.f32 %v12439, 0.1
      %v12712 = vmul.f32 %v12440, 0.1
      %v12713 = vmul.f32 %v12441, 0.1
      %v12714 = vmul.f32 %v12442, 0.1
      %v12715 = vmul.f32 %v12443, 0.1
      %v12716 = vmul.f32 %v12444, 0.1
      %v12717 = vmul.f32 %v12445, 0.1
      %v12718 = vmul.f32 %v12446, 0.1
      %v12719 = vmul.f32 %v12447, 0.1
      %v12720 = vmul.f32 %v12448, 0.1
      %v12721 = vmul.f32 %v12449, 0.1
      %v12722 = vmul.f32 %v12450, 0.1
      %v12723 = vmul.f32 %v12451, 0.1
      %v12724 = vmul.f32 %v12452, 0.1
      %v12725 = vmul.f32 %v12453, 0.1
      %v12726 = vmul.f32 %v12454, 0.1
      %v12727 = vmul.f32 %v12455, 0.1
      %v12728 = vmul.f32 %v12456, 0.1
      %v12729 = vmul.f32 %v12457, 0.1
      %v12730 = vmul.f32 %v12458, 0.1
      %v12731 = vmul.f32 %v12459, 0.1
      %v12732 = vmul.f32 %v12460, 0.1
      %v12733 = vmul.f32 %v12461, 0.1
      %v12734 = vmul.f32 %v12462, 0.1
      %v12735 = vmul.f32 %v12463, 0.1
      %v12736 = vmul.f32 %v12464, 0.1
      %v12737 = vmul.f32 %v12465, 0.1
      %v12738 = vmul.f32 %v12466, 0.1
      %v12739 = vmul.f32 %v12467, 0.1
      %v12740 = vmul.f32 %v12468, 0.1
      %v12741 = vmul.f32 %v12469, 0.1
      %v12742 = vmul.f32 %v12470, 0.1
      %v12743 = vmul.f32 %v12471, 0.1
      %v12744 = vmul.f32 %v12472, 0.1
      %v12745 = vmul.f32 %v12473, 0.1
      %v12746 = vmul.f32 %v12474, 0.1
      %v12747 = vsel %vm12475, %v12339, %v12611
      %v12748 = vsel %vm12476, %v12340, %v12612
      %v12749 = vsel %vm12477, %v12341, %v12613
      %v12750 = vsel %vm12478, %v12342, %v12614
      %v12751 = vsel %vm12479, %v12343, %v12615
      %v12752 = vsel %vm12480, %v12344, %v12616
      %v12753 = vsel %vm12481, %v12345, %v12617
      %v12754 = vsel %vm12482, %v12346, %v12618
      %v12755 = vsel %vm12483, %v12347, %v12619
      %v12756 = vsel %vm12484, %v12348, %v12620
      %v12757 = vsel %vm12485, %v12349, %v12621
      %v12758 = vsel %vm12486, %v12350, %v12622
      %v12759 = vsel %vm12487, %v12351, %v12623
      %v12760 = vsel %vm12488, %v12352, %v12624
      %v12761 = vsel %vm12489, %v12353, %v12625
      %v12762 = vsel %vm12490, %v12354, %v12626
      %v12763 = vsel %vm12491, %v12355, %v12627
      %v12764 = vsel %vm12492, %v12356, %v12628
      %v12765 = vsel %vm12493, %v12357, %v12629
      %v12766 = vsel %vm12494, %v12358, %v12630
      %v12767 = vsel %vm12495, %v12359, %v12631
      %v12768 = vsel %vm12496, %v12360, %v12632
      %v12769 = vsel %vm12497, %v12361, %v12633
      %v12770 = vsel %vm12498, %v12362, %v12634
      %v12771 = vsel %vm12499, %v12363, %v12635
      %v12772 = vsel %vm12500, %v12364, %v12636
      %v12773 = vsel %vm12501, %v12365, %v12637
      %v12774 = vsel %vm12502, %v12366, %v12638
      %v12775 = vsel %vm12503, %v12367, %v12639
      %v12776 = vsel %vm12504, %v12368, %v12640
      %v12777 = vsel %vm12505, %v12369, %v12641
      %v12778 = vsel %vm12506, %v12370, %v12642
      %v12779 = vsel %vm12507, %v12371, %v12643
      %v12780 = vsel %vm12508, %v12372, %v12644
      %v12781 = vsel %vm12509, %v12373, %v12645
      %v12782 = vsel %vm12510, %v12374, %v12646
      %v12783 = vsel %vm12511, %v12375, %v12647
      %v12784 = vsel %vm12512, %v12376, %v12648
      %v12785 = vsel %vm12513, %v12377, %v12649
      %v12786 = vsel %vm12514, %v12378, %v12650
      %v12787 = vsel %vm12515, %v12379, %v12651
      %v12788 = vsel %vm12516, %v12380, %v12652
      %v12789 = vsel %vm12517, %v12381, %v12653
      %v12790 = vsel %vm12518, %v12382, %v12654
      %v12791 = vsel %vm12519, %v12383, %v12655
      %v12792 = vsel %vm12520, %v12384, %v12656
      %v12793 = vsel %vm12521, %v12385, %v12657
      %v12794 = vsel %vm12522, %v12386, %v12658
      %v12795 = vsel %vm12523, %v12387, %v12659
      %v12796 = vsel %vm12524, %v12388, %v12660
      %v12797 = vsel %vm12525, %v12389, %v12661
      %v12798 = vsel %vm12526, %v12390, %v12662
      %v12799 = vsel %vm12527, %v12391, %v12663
      %v12800 = vsel %vm12528, %v12392, %v12664
      %v12801 = vsel %vm12529, %v12393, %v12665
      %v12802 = vsel %vm12530, %v12394, %v12666
      %v12803 = vsel %vm12531, %v12395, %v12667
      %v12804 = vsel %vm12532, %v12396, %v12668
      %v12805 = vsel %vm12533, %v12397, %v12669
      %v12806 = vsel %vm12534, %v12398, %v12670
      %v12807 = vsel %vm12535, %v12399, %v12671
      %v12808 = vsel %vm12536, %v12400, %v12672
      %v12809 = vsel %vm12537, %v12401, %v12673
      %v12810 = vsel %vm12538, %v12402, %v12674
      %v12811 = vsel %vm12539, %v12403, %v12675
      %v12812 = vsel %vm12540, %v12404, %v12676
      %v12813 = vsel %vm12541, %v12405, %v12677
      %v12814 = vsel %vm12542, %v12406, %v12678
      %v12815 = vsel %vm12543, %v12407, %v12679
      %v12816 = vsel %vm12544, %v12408, %v12680
      %v12817 = vsel %vm12545, %v12409, %v12681
      %v12818 = vsel %vm12546, %v12410, %v12682
      %v12819 = vsel %vm12547, %v12411, %v12683
      %v12820 = vsel %vm12548, %v12412, %v12684
      %v12821 = vsel %vm12549, %v12413, %v12685
      %v12822 = vsel %vm12550, %v12414, %v12686
      %v12823 = vsel %vm12551, %v12415, %v12687
      %v12824 = vsel %vm12552, %v12416, %v12688
      %v12825 = vsel %vm12553, %v12417, %v12689
      %v12826 = vsel %vm12554, %v12418, %v12690
      %v12827 = vsel %vm12555, %v12419, %v12691
      %v12828 = vsel %vm12556, %v12420, %v12692
      %v12829 = vsel %vm12557, %v12421, %v12693
      %v12830 = vsel %vm12558, %v12422, %v12694
      %v12831 = vsel %vm12559, %v12423, %v12695
      %v12832 = vsel %vm12560, %v12424, %v12696
      %v12833 = vsel %vm12561, %v12425, %v12697
      %v12834 = vsel %vm12562, %v12426, %v12698
      %v12835 = vsel %vm12563, %v12427, %v12699
      %v12836 = vsel %vm12564, %v12428, %v12700
      %v12837 = vsel %vm12565, %v12429, %v12701
      %v12838 = vsel %vm12566, %v12430, %v12702
      %v12839 = vsel %vm12567, %v12431, %v12703
      %v12840 = vsel %vm12568, %v12432, %v12704
      %v12841 = vsel %vm12569, %v12433, %v12705
      %v12842 = vsel %vm12570, %v12434, %v12706
      %v12843 = vsel %vm12571, %v12435, %v12707
      %v12844 = vsel %vm12572, %v12436, %v12708
      %v12845 = vsel %vm12573, %v12437, %v12709
      %v12846 = vsel %vm12574, %v12438, %v12710
      %v12847 = vsel %vm12575, %v12439, %v12711
      %v12848 = vsel %vm12576, %v12440, %v12712
      %v12849 = vsel %vm12577, %v12441, %v12713
      %v12850 = vsel %vm12578, %v12442, %v12714
      %v12851 = vsel %vm12579, %v12443, %v12715
      %v12852 = vsel %vm12580, %v12444, %v12716
      %v12853 = vsel %vm12581, %v12445, %v12717
      %v12854 = vsel %vm12582, %v12446, %v12718
      %v12855 = vsel %vm12583, %v12447, %v12719
      %v12856 = vsel %vm12584, %v12448, %v12720
      %v12857 = vsel %vm12585, %v12449, %v12721
      %v12858 = vsel %vm12586, %v12450, %v12722
      %v12859 = vsel %vm12587, %v12451, %v12723
      %v12860 = vsel %vm12588, %v12452, %v12724
      %v12861 = vsel %vm12589, %v12453, %v12725
      %v12862 = vsel %vm12590, %v12454, %v12726
      %v12863 = vsel %vm12591, %v12455, %v12727
      %v12864 = vsel %vm12592, %v12456, %v12728
      %v12865 = vsel %vm12593, %v12457, %v12729
      %v12866 = vsel %vm12594, %v12458, %v12730
      %v12867 = vsel %vm12595, %v12459, %v12731
      %v12868 = vsel %vm12596, %v12460, %v12732
      %v12869 = vsel %vm12597, %v12461, %v12733
      %v12870 = vsel %vm12598, %v12462, %v12734
      %v12871 = vsel %vm12599, %v12463, %v12735
      %v12872 = vsel %vm12600, %v12464, %v12736
      %v12873 = vsel %vm12601, %v12465, %v12737
      %v12874 = vsel %vm12602, %v12466, %v12738
      %v12875 = vsel %vm12603, %v12467, %v12739
      %v12876 = vsel %vm12604, %v12468, %v12740
      %v12877 = vsel %vm12605, %v12469, %v12741
      %v12878 = vsel %vm12606, %v12470, %v12742
      %v12879 = vsel %vm12607, %v12471, %v12743
      %v12880 = vsel %vm12608, %v12472, %v12744
      %v12881 = vsel %vm12609, %v12473, %v12745
      %v12882 = vsel %vm12610, %v12474, %v12746
      %v12883 = vpack.c.bf16 %v12748, %v12747
      %v12884 = vpack.c.bf16 %v12750, %v12749
      %v12885 = vpack.c.bf16 %v12752, %v12751
      %v12886 = vpack.c.bf16 %v12754, %v12753
      %v12887 = vpack.c.bf16 %v12756, %v12755
      %v12888 = vpack.c.bf16 %v12758, %v12757
      %v12889 = vpack.c.bf16 %v12760, %v12759
      %v12890 = vpack.c.bf16 %v12762, %v12761
      %v12891 = vpack.c.bf16 %v12764, %v12763
      %v12892 = vpack.c.bf16 %v12766, %v12765
      %v12893 = vpack.c.bf16 %v12768, %v12767
      %v12894 = vpack.c.bf16 %v12770, %v12769
      %v12895 = vpack.c.bf16 %v12772, %v12771
      %v12896 = vpack.c.bf16 %v12774, %v12773
      %v12897 = vpack.c.bf16 %v12776, %v12775
      %v12898 = vpack.c.bf16 %v12778, %v12777
      %v12899 = vpack.c.bf16 %v12780, %v12779
      %v12900 = vpack.c.bf16 %v12782, %v12781
      %v12901 = vpack.c.bf16 %v12784, %v12783
      %v12902 = vpack.c.bf16 %v12786, %v12785
      %v12903 = vpack.c.bf16 %v12788, %v12787
      %v12904 = vpack.c.bf16 %v12790, %v12789
      %v12905 = vpack.c.bf16 %v12792, %v12791
      %v12906 = vpack.c.bf16 %v12794, %v12793
      %v12907 = vpack.c.bf16 %v12796, %v12795
      %v12908 = vpack.c.bf16 %v12798, %v12797
      %v12909 = vpack.c.bf16 %v12800, %v12799
      %v12910 = vpack.c.bf16 %v12802, %v12801
      %v12911 = vpack.c.bf16 %v12804, %v12803
      %v12912 = vpack.c.bf16 %v12806, %v12805
      %v12913 = vpack.c.bf16 %v12808, %v12807
      %v12914 = vpack.c.bf16 %v12810, %v12809
      %v12915 = vpack.c.bf16 %v12812, %v12811
      %v12916 = vpack.c.bf16 %v12814, %v12813
      %v12917 = vpack.c.bf16 %v12816, %v12815
      %v12918 = vpack.c.bf16 %v12818, %v12817
      %v12919 = vpack.c.bf16 %v12820, %v12819
      %v12920 = vpack.c.bf16 %v12822, %v12821
      %v12921 = vpack.c.bf16 %v12824, %v12823
      %v12922 = vpack.c.bf16 %v12826, %v12825
      %v12923 = vpack.c.bf16 %v12828, %v12827
      %v12924 = vpack.c.bf16 %v12830, %v12829
      %v12925 = vpack.c.bf16 %v12832, %v12831
      %v12926 = vpack.c.bf16 %v12834, %v12833
      %v12927 = vpack.c.bf16 %v12836, %v12835
      %v12928 = vpack.c.bf16 %v12838, %v12837
      %v12929 = vpack.c.bf16 %v12840, %v12839
      %v12930 = vpack.c.bf16 %v12842, %v12841
      %v12931 = vpack.c.bf16 %v12844, %v12843
      %v12932 = vpack.c.bf16 %v12846, %v12845
      %v12933 = vpack.c.bf16 %v12848, %v12847
      %v12934 = vpack.c.bf16 %v12850, %v12849
      %v12935 = vpack.c.bf16 %v12852, %v12851
      %v12936 = vpack.c.bf16 %v12854, %v12853
      %v12937 = vpack.c.bf16 %v12856, %v12855
      %v12938 = vpack.c.bf16 %v12858, %v12857
      %v12939 = vpack.c.bf16 %v12860, %v12859
      %v12940 = vpack.c.bf16 %v12862, %v12861
      %v12941 = vpack.c.bf16 %v12864, %v12863
      %v12942 = vpack.c.bf16 %v12866, %v12865
      %v12943 = vpack.c.bf16 %v12868, %v12867
      %v12944 = vpack.c.bf16 %v12870, %v12869
      %v12945 = vpack.c.bf16 %v12872, %v12871
      %v12946 = vpack.c.bf16 %v12874, %v12873
      %v12947 = vpack.c.bf16 %v12876, %v12875
      %v12948 = vpack.c.bf16 %v12878, %v12877
      %v12949 = vpack.c.bf16 %v12880, %v12879
      %v12950 = vpack.c.bf16 %v12882, %v12881
      %v13019 = vunpack.c.l.b16 %v12883
      %v13020 = vunpack.c.h.b16 %v12883
      %v13021 = vunpack.c.l.b16 %v12884
      %v13022 = vunpack.c.h.b16 %v12884
      %v13023 = vunpack.c.l.b16 %v12885
      %v13024 = vunpack.c.h.b16 %v12885
      %v13025 = vunpack.c.l.b16 %v12886
      %v13026 = vunpack.c.h.b16 %v12886
      %v13027 = vunpack.c.l.b16 %v12887
      %v13028 = vunpack.c.h.b16 %v12887
      %v13029 = vunpack.c.l.b16 %v12888
      %v13030 = vunpack.c.h.b16 %v12888
      %v13031 = vunpack.c.l.b16 %v12889
      %v13032 = vunpack.c.h.b16 %v12889
      %v13033 = vunpack.c.l.b16 %v12890
      %v13034 = vunpack.c.h.b16 %v12890
      %v13035 = vunpack.c.l.b16 %v12891
      %v13036 = vunpack.c.h.b16 %v12891
      %v13037 = vunpack.c.l.b16 %v12892
      %v13038 = vunpack.c.h.b16 %v12892
      %v13039 = vunpack.c.l.b16 %v12893
      %v13040 = vunpack.c.h.b16 %v12893
      %v13041 = vunpack.c.l.b16 %v12894
      %v13042 = vunpack.c.h.b16 %v12894
      %v13043 = vunpack.c.l.b16 %v12895
      %v13044 = vunpack.c.h.b16 %v12895
      %v13045 = vunpack.c.l.b16 %v12896
      %v13046 = vunpack.c.h.b16 %v12896
      %v13047 = vunpack.c.l.b16 %v12897
      %v13048 = vunpack.c.h.b16 %v12897
      %v13049 = vunpack.c.l.b16 %v12898
      %v13050 = vunpack.c.h.b16 %v12898
      %v13051 = vunpack.c.l.b16 %v12899
      %v13052 = vunpack.c.h.b16 %v12899
      %v13053 = vunpack.c.l.b16 %v12900
      %v13054 = vunpack.c.h.b16 %v12900
      %v13055 = vunpack.c.l.b16 %v12901
      %v13056 = vunpack.c.h.b16 %v12901
      %v13057 = vunpack.c.l.b16 %v12902
      %v13058 = vunpack.c.h.b16 %v12902
      %v13059 = vunpack.c.l.b16 %v12903
      %v13060 = vunpack.c.h.b16 %v12903
      %v13061 = vunpack.c.l.b16 %v12904
      %v13062 = vunpack.c.h.b16 %v12904
      %v13063 = vunpack.c.l.b16 %v12905
      %v13064 = vunpack.c.h.b16 %v12905
      %v13065 = vunpack.c.l.b16 %v12906
      %v13066 = vunpack.c.h.b16 %v12906
      %v13067 = vunpack.c.l.b16 %v12907
      %v13068 = vunpack.c.h.b16 %v12907
      %v13069 = vunpack.c.l.b16 %v12908
      %v13070 = vunpack.c.h.b16 %v12908
      %v13071 = vunpack.c.l.b16 %v12909
      %v13072 = vunpack.c.h.b16 %v12909
      %v13073 = vunpack.c.l.b16 %v12910
      %v13074 = vunpack.c.h.b16 %v12910
      %v13075 = vunpack.c.l.b16 %v12911
      %v13076 = vunpack.c.h.b16 %v12911
      %v13077 = vunpack.c.l.b16 %v12912
      %v13078 = vunpack.c.h.b16 %v12912
      %v13079 = vunpack.c.l.b16 %v12913
      %v13080 = vunpack.c.h.b16 %v12913
      %v13081 = vunpack.c.l.b16 %v12914
      %v13082 = vunpack.c.h.b16 %v12914
      %v13083 = vunpack.c.l.b16 %v12915
      %v13084 = vunpack.c.h.b16 %v12915
      %v13085 = vunpack.c.l.b16 %v12916
      %v13086 = vunpack.c.h.b16 %v12916
      %v13087 = vunpack.c.l.b16 %v12917
      %v13088 = vunpack.c.h.b16 %v12917
      %v13089 = vunpack.c.l.b16 %v12918
      %v13090 = vunpack.c.h.b16 %v12918
      %v13091 = vunpack.c.l.b16 %v12919
      %v13092 = vunpack.c.h.b16 %v12919
      %v13093 = vunpack.c.l.b16 %v12920
      %v13094 = vunpack.c.h.b16 %v12920
      %v13095 = vunpack.c.l.b16 %v12921
      %v13096 = vunpack.c.h.b16 %v12921
      %v13097 = vunpack.c.l.b16 %v12922
      %v13098 = vunpack.c.h.b16 %v12922
      %v13099 = vunpack.c.l.b16 %v12923
      %v13100 = vunpack.c.h.b16 %v12923
      %v13101 = vunpack.c.l.b16 %v12924
      %v13102 = vunpack.c.h.b16 %v12924
      %v13103 = vunpack.c.l.b16 %v12925
      %v13104 = vunpack.c.h.b16 %v12925
      %v13105 = vunpack.c.l.b16 %v12926
      %v13106 = vunpack.c.h.b16 %v12926
      %v13107 = vunpack.c.l.b16 %v12927
      %v13108 = vunpack.c.h.b16 %v12927
      %v13109 = vunpack.c.l.b16 %v12928
      %v13110 = vunpack.c.h.b16 %v12928
      %v13111 = vunpack.c.l.b16 %v12929
      %v13112 = vunpack.c.h.b16 %v12929
      %v13113 = vunpack.c.l.b16 %v12930
      %v13114 = vunpack.c.h.b16 %v12930
      %v13115 = vunpack.c.l.b16 %v12931
      %v13116 = vunpack.c.h.b16 %v12931
      %v13117 = vunpack.c.l.b16 %v12932
      %v13118 = vunpack.c.h.b16 %v12932
      %v13119 = vunpack.c.l.b16 %v12933
      %v13120 = vunpack.c.h.b16 %v12933
      %v13121 = vunpack.c.l.b16 %v12934
      %v13122 = vunpack.c.h.b16 %v12934
      %v13123 = vunpack.c.l.b16 %v12935
      %v13124 = vunpack.c.h.b16 %v12935
      %v13125 = vunpack.c.l.b16 %v12936
      %v13126 = vunpack.c.h.b16 %v12936
      %v13127 = vunpack.c.l.b16 %v12937
      %v13128 = vunpack.c.h.b16 %v12937
      %v13129 = vunpack.c.l.b16 %v12938
      %v13130 = vunpack.c.h.b16 %v12938
      %v13131 = vunpack.c.l.b16 %v12939
      %v13132 = vunpack.c.h.b16 %v12939
      %v13133 = vunpack.c.l.b16 %v12940
      %v13134 = vunpack.c.h.b16 %v12940
      %v13135 = vunpack.c.l.b16 %v12941
      %v13136 = vunpack.c.h.b16 %v12941
      %v13137 = vunpack.c.l.b16 %v12942
      %v13138 = vunpack.c.h.b16 %v12942
      %v13139 = vunpack.c.l.b16 %v12943
      %v13140 = vunpack.c.h.b16 %v12943
      %v13141 = vunpack.c.l.b16 %v12944
      %v13142 = vunpack.c.h.b16 %v12944
      %v13143 = vunpack.c.l.b16 %v12945
      %v13144 = vunpack.c.h.b16 %v12945
      %v13145 = vunpack.c.l.b16 %v12946
      %v13146 = vunpack.c.h.b16 %v12946
      %v13147 = vunpack.c.l.b16 %v12947
      %v13148 = vunpack.c.h.b16 %v12947
      %v13149 = vunpack.c.l.b16 %v12948
      %v13150 = vunpack.c.h.b16 %v12948
      %v13151 = vunpack.c.l.b16 %v12949
      %v13152 = vunpack.c.h.b16 %v12949
      %v13153 = vunpack.c.l.b16 %v12950
      %v13154 = vunpack.c.h.b16 %v12950
      %v13155 = vpack.c.b16 %v13019, %v13019
      %v13156 = vpack.c.b16 %v13020, %v13020
      %v13157 = vpack.c.b16 %v13021, %v13021
      %v13158 = vpack.c.b16 %v13022, %v13022
      %v13159 = vpack.c.b16 %v13023, %v13023
      %v13160 = vpack.c.b16 %v13024, %v13024
      %v13161 = vpack.c.b16 %v13025, %v13025
      %v13162 = vpack.c.b16 %v13026, %v13026
      %v13163 = vpack.c.b16 %v13027, %v13027
      %v13164 = vpack.c.b16 %v13028, %v13028
      %v13165 = vpack.c.b16 %v13029, %v13029
      %v13166 = vpack.c.b16 %v13030, %v13030
      %v13167 = vpack.c.b16 %v13031, %v13031
      %v13168 = vpack.c.b16 %v13032, %v13032
      %v13169 = vpack.c.b16 %v13033, %v13033
      %v13170 = vpack.c.b16 %v13034, %v13034
      %v13171 = vpack.c.b16 %v13035, %v13035
      %v13172 = vpack.c.b16 %v13036, %v13036
      %v13173 = vpack.c.b16 %v13037, %v13037
      %v13174 = vpack.c.b16 %v13038, %v13038
      %v13175 = vpack.c.b16 %v13039, %v13039
      %v13176 = vpack.c.b16 %v13040, %v13040
      %v13177 = vpack.c.b16 %v13041, %v13041
      %v13178 = vpack.c.b16 %v13042, %v13042
      %v13179 = vpack.c.b16 %v13043, %v13043
      %v13180 = vpack.c.b16 %v13044, %v13044
      %v13181 = vpack.c.b16 %v13045, %v13045
      %v13182 = vpack.c.b16 %v13046, %v13046
      %v13183 = vpack.c.b16 %v13047, %v13047
      %v13184 = vpack.c.b16 %v13048, %v13048
      %v13185 = vpack.c.b16 %v13049, %v13049
      %v13186 = vpack.c.b16 %v13050, %v13050
      %v13187 = vpack.c.b16 %v13051, %v13051
      %v13188 = vpack.c.b16 %v13052, %v13052
      %v13189 = vpack.c.b16 %v13053, %v13053
      %v13190 = vpack.c.b16 %v13054, %v13054
      %v13191 = vpack.c.b16 %v13055, %v13055
      %v13192 = vpack.c.b16 %v13056, %v13056
      %v13193 = vpack.c.b16 %v13057, %v13057
      %v13194 = vpack.c.b16 %v13058, %v13058
      %v13195 = vpack.c.b16 %v13059, %v13059
      %v13196 = vpack.c.b16 %v13060, %v13060
      %v13197 = vpack.c.b16 %v13061, %v13061
      %v13198 = vpack.c.b16 %v13062, %v13062
      %v13199 = vpack.c.b16 %v13063, %v13063
      %v13200 = vpack.c.b16 %v13064, %v13064
      %v13201 = vpack.c.b16 %v13065, %v13065
      %v13202 = vpack.c.b16 %v13066, %v13066
      %v13203 = vpack.c.b16 %v13067, %v13067
      %v13204 = vpack.c.b16 %v13068, %v13068
      %v13205 = vpack.c.b16 %v13069, %v13069
      %v13206 = vpack.c.b16 %v13070, %v13070
      %v13207 = vpack.c.b16 %v13071, %v13071
      %v13208 = vpack.c.b16 %v13072, %v13072
      %v13209 = vpack.c.b16 %v13073, %v13073
      %v13210 = vpack.c.b16 %v13074, %v13074
      %v13211 = vpack.c.b16 %v13075, %v13075
      %v13212 = vpack.c.b16 %v13076, %v13076
      %v13213 = vpack.c.b16 %v13077, %v13077
      %v13214 = vpack.c.b16 %v13078, %v13078
      %v13215 = vpack.c.b16 %v13079, %v13079
      %v13216 = vpack.c.b16 %v13080, %v13080
      %v13217 = vpack.c.b16 %v13081, %v13081
      %v13218 = vpack.c.b16 %v13082, %v13082
      %v13219 = vpack.c.b16 %v13083, %v13083
      %v13220 = vpack.c.b16 %v13084, %v13084
      %v13221 = vpack.c.b16 %v13085, %v13085
      %v13222 = vpack.c.b16 %v13086, %v13086
      %v13223 = vpack.c.b16 %v13087, %v13087
      %v13224 = vpack.c.b16 %v13088, %v13088
      %v13225 = vpack.c.b16 %v13089, %v13089
      %v13226 = vpack.c.b16 %v13090, %v13090
      %v13227 = vpack.c.b16 %v13091, %v13091
      %v13228 = vpack.c.b16 %v13092, %v13092
      %v13229 = vpack.c.b16 %v13093, %v13093
      %v13230 = vpack.c.b16 %v13094, %v13094
      %v13231 = vpack.c.b16 %v13095, %v13095
      %v13232 = vpack.c.b16 %v13096, %v13096
      %v13233 = vpack.c.b16 %v13097, %v13097
      %v13234 = vpack.c.b16 %v13098, %v13098
      %v13235 = vpack.c.b16 %v13099, %v13099
      %v13236 = vpack.c.b16 %v13100, %v13100
      %v13237 = vpack.c.b16 %v13101, %v13101
      %v13238 = vpack.c.b16 %v13102, %v13102
      %v13239 = vpack.c.b16 %v13103, %v13103
      %v13240 = vpack.c.b16 %v13104, %v13104
      %v13241 = vpack.c.b16 %v13105, %v13105
      %v13242 = vpack.c.b16 %v13106, %v13106
      %v13243 = vpack.c.b16 %v13107, %v13107
      %v13244 = vpack.c.b16 %v13108, %v13108
      %v13245 = vpack.c.b16 %v13109, %v13109
      %v13246 = vpack.c.b16 %v13110, %v13110
      %v13247 = vpack.c.b16 %v13111, %v13111
      %v13248 = vpack.c.b16 %v13112, %v13112
      %v13249 = vpack.c.b16 %v13113, %v13113
      %v13250 = vpack.c.b16 %v13114, %v13114
      %v13251 = vpack.c.b16 %v13115, %v13115
      %v13252 = vpack.c.b16 %v13116, %v13116
      %v13253 = vpack.c.b16 %v13117, %v13117
      %v13254 = vpack.c.b16 %v13118, %v13118
      %v13255 = vpack.c.b16 %v13119, %v13119
      %v13256 = vpack.c.b16 %v13120, %v13120
      %v13257 = vpack.c.b16 %v13121, %v13121
      %v13258 = vpack.c.b16 %v13122, %v13122
      %v13259 = vpack.c.b16 %v13123, %v13123
      %v13260 = vpack.c.b16 %v13124, %v13124
      %v13261 = vpack.c.b16 %v13125, %v13125
      %v13262 = vpack.c.b16 %v13126, %v13126
      %v13263 = vpack.c.b16 %v13127, %v13127
      %v13264 = vpack.c.b16 %v13128, %v13128
      %v13265 = vpack.c.b16 %v13129, %v13129
      %v13266 = vpack.c.b16 %v13130, %v13130
      %v13267 = vpack.c.b16 %v13131, %v13131
      %v13268 = vpack.c.b16 %v13132, %v13132
      %v13269 = vpack.c.b16 %v13133, %v13133
      %v13270 = vpack.c.b16 %v13134, %v13134
      %v13271 = vpack.c.b16 %v13135, %v13135
      %v13272 = vpack.c.b16 %v13136, %v13136
      %v13273 = vpack.c.b16 %v13137, %v13137
      %v13274 = vpack.c.b16 %v13138, %v13138
      %v13275 = vpack.c.b16 %v13139, %v13139
      %v13276 = vpack.c.b16 %v13140, %v13140
      %v13277 = vpack.c.b16 %v13141, %v13141
      %v13278 = vpack.c.b16 %v13142, %v13142
      %v13279 = vpack.c.b16 %v13143, %v13143
      %v13280 = vpack.c.b16 %v13144, %v13144
      %v13281 = vpack.c.b16 %v13145, %v13145
      %v13282 = vpack.c.b16 %v13146, %v13146
      %v13283 = vpack.c.b16 %v13147, %v13147
      %v13284 = vpack.c.b16 %v13148, %v13148
      %v13285 = vpack.c.b16 %v13149, %v13149
      %v13286 = vpack.c.b16 %v13150, %v13150
      %v13287 = vpack.c.b16 %v13151, %v13151
      %v13288 = vpack.c.b16 %v13152, %v13152
      %v13289 = vpack.c.b16 %v13153, %v13153
      %v13290 = vpack.c.b16 %v13154, %v13154
      %vm13427 = vcmask 257024
      %13428 = vst.msk [vmem:[%s262] sm:$0xf] %vm13427, %v13155
      %13429 = vst.msk [vmem:[%s262 + $0x4] sm:$0xf] %vm13427, %v13156
      %13430 = vst.msk [vmem:[%s262 + $0x8] sm:$0xf] %vm13427, %v13157
      %13431 = vst.msk [vmem:[%s262 + $0xc] sm:$0xf] %vm13427, %v13158
      %13432 = vst.msk [vmem:[%s262 + $0x10] sm:$0xf] %vm13427, %v13159
      %13433 = vst.msk [vmem:[%s262 + $0x14] sm:$0xf] %vm13427, %v13160
      %13434 = vst.msk [vmem:[%s262 + $0x18] sm:$0xf] %vm13427, %v13161
      %13435 = vst.msk [vmem:[%s262 + $0x1c] sm:$0xf] %vm13427, %v13162
      %13436 = vst.msk [vmem:[%s262 + $0x20] sm:$0xf] %vm13427, %v13163
      %13437 = vst.msk [vmem:[%s262 + $0x24] sm:$0xf] %vm13427, %v13164
      %13438 = vst.msk [vmem:[%s262 + $0x28] sm:$0xf] %vm13427, %v13165
      %13439 = vst.msk [vmem:[%s262 + $0x2c] sm:$0xf] %vm13427, %v13166
      %13440 = vst.msk [vmem:[%s262 + $0x30] sm:$0xf] %vm13427, %v13167
      %13441 = vst.msk [vmem:[%s262 + $0x34] sm:$0xf] %vm13427, %v13168
      %13442 = vst.msk [vmem:[%s262 + $0x38] sm:$0xf] %vm13427, %v13169
      %13443 = vst.msk [vmem:[%s262 + $0x3c] sm:$0xf] %vm13427, %v13170
      %13444 = vst.msk [vmem:[%s262 + $0x40] sm:$0xf] %vm13427, %v13171
      %13445 = vst.msk [vmem:[%s262 + $0x44] sm:$0xf] %vm13427, %v13172
      %13446 = vst.msk [vmem:[%s262 + $0x48] sm:$0xf] %vm13427, %v13173
      %13447 = vst.msk [vmem:[%s262 + $0x4c] sm:$0xf] %vm13427, %v13174
      %13448 = vst.msk [vmem:[%s262 + $0x50] sm:$0xf] %vm13427, %v13175
      %13449 = vst.msk [vmem:[%s262 + $0x54] sm:$0xf] %vm13427, %v13176
      %13450 = vst.msk [vmem:[%s262 + $0x58] sm:$0xf] %vm13427, %v13177
      %13451 = vst.msk [vmem:[%s262 + $0x5c] sm:$0xf] %vm13427, %v13178
      %13452 = vst.msk [vmem:[%s262 + $0x60] sm:$0xf] %vm13427, %v13179
      %13453 = vst.msk [vmem:[%s262 + $0x64] sm:$0xf] %vm13427, %v13180
      %13454 = vst.msk [vmem:[%s262 + $0x68] sm:$0xf] %vm13427, %v13181
      %13455 = vst.msk [vmem:[%s262 + $0x6c] sm:$0xf] %vm13427, %v13182
      %13456 = vst.msk [vmem:[%s262 + $0x70] sm:$0xf] %vm13427, %v13183
      %13457 = vst.msk [vmem:[%s262 + $0x74] sm:$0xf] %vm13427, %v13184
      %13458 = vst.msk [vmem:[%s262 + $0x78] sm:$0xf] %vm13427, %v13185
      %13459 = vst.msk [vmem:[%s262 + $0x7c] sm:$0xf] %vm13427, %v13186
      %13460 = vst.msk [vmem:[%s262 + $0x80] sm:$0xf] %vm13427, %v13187
      %13461 = vst.msk [vmem:[%s262 + $0x84] sm:$0xf] %vm13427, %v13188
      %13462 = vst.msk [vmem:[%s262 + $0x88] sm:$0xf] %vm13427, %v13189
      %13463 = vst.msk [vmem:[%s262 + $0x8c] sm:$0xf] %vm13427, %v13190
      %13464 = vst.msk [vmem:[%s262 + $0x90] sm:$0xf] %vm13427, %v13191
      %13465 = vst.msk [vmem:[%s262 + $0x94] sm:$0xf] %vm13427, %v13192
      %13466 = vst.msk [vmem:[%s262 + $0x98] sm:$0xf] %vm13427, %v13193
      %13467 = vst.msk [vmem:[%s262 + $0x9c] sm:$0xf] %vm13427, %v13194
      %13468 = vst.msk [vmem:[%s262 + $0xa0] sm:$0xf] %vm13427, %v13195
      %13469 = vst.msk [vmem:[%s262 + $0xa4] sm:$0xf] %vm13427, %v13196
      %13470 = vst.msk [vmem:[%s262 + $0xa8] sm:$0xf] %vm13427, %v13197
      %13471 = vst.msk [vmem:[%s262 + $0xac] sm:$0xf] %vm13427, %v13198
      %13472 = vst.msk [vmem:[%s262 + $0xb0] sm:$0xf] %vm13427, %v13199
      %13473 = vst.msk [vmem:[%s262 + $0xb4] sm:$0xf] %vm13427, %v13200
      %13474 = vst.msk [vmem:[%s262 + $0xb8] sm:$0xf] %vm13427, %v13201
      %13475 = vst.msk [vmem:[%s262 + $0xbc] sm:$0xf] %vm13427, %v13202
      %13476 = vst.msk [vmem:[%s262 + $0xc0] sm:$0xf] %vm13427, %v13203
      %13477 = vst.msk [vmem:[%s262 + $0xc4] sm:$0xf] %vm13427, %v13204
      %13478 = vst.msk [vmem:[%s262 + $0xc8] sm:$0xf] %vm13427, %v13205
      %13479 = vst.msk [vmem:[%s262 + $0xcc] sm:$0xf] %vm13427, %v13206
      %13480 = vst.msk [vmem:[%s262 + $0xd0] sm:$0xf] %vm13427, %v13207
      %13481 = vst.msk [vmem:[%s262 + $0xd4] sm:$0xf] %vm13427, %v13208
      %13482 = vst.msk [vmem:[%s262 + $0xd8] sm:$0xf] %vm13427, %v13209
      %13483 = vst.msk [vmem:[%s262 + $0xdc] sm:$0xf] %vm13427, %v13210
      %13484 = vst.msk [vmem:[%s262 + $0xe0] sm:$0xf] %vm13427, %v13211
      %13485 = vst.msk [vmem:[%s262 + $0xe4] sm:$0xf] %vm13427, %v13212
      %13486 = vst.msk [vmem:[%s262 + $0xe8] sm:$0xf] %vm13427, %v13213
      %13487 = vst.msk [vmem:[%s262 + $0xec] sm:$0xf] %vm13427, %v13214
      %13488 = vst.msk [vmem:[%s262 + $0xf0] sm:$0xf] %vm13427, %v13215
      %13489 = vst.msk [vmem:[%s262 + $0xf4] sm:$0xf] %vm13427, %v13216
      %13490 = vst.msk [vmem:[%s262 + $0xf8] sm:$0xf] %vm13427, %v13217
      %13491 = vst.msk [vmem:[%s262 + $0xfc] sm:$0xf] %vm13427, %v13218
      %13492 = vst.msk [vmem:[%s262 + $0x100] sm:$0xf] %vm13427, %v13219
      %13493 = vst.msk [vmem:[%s262 + $0x104] sm:$0xf] %vm13427, %v13220
      %13494 = vst.msk [vmem:[%s262 + $0x108] sm:$0xf] %vm13427, %v13221
      %13495 = vst.msk [vmem:[%s262 + $0x10c] sm:$0xf] %vm13427, %v13222
      %13496 = vst.msk [vmem:[%s262 + $0x110] sm:$0xf] %vm13427, %v13223
      %13497 = vst.msk [vmem:[%s262 + $0x114] sm:$0xf] %vm13427, %v13224
      %13498 = vst.msk [vmem:[%s262 + $0x118] sm:$0xf] %vm13427, %v13225
      %13499 = vst.msk [vmem:[%s262 + $0x11c] sm:$0xf] %vm13427, %v13226
      %13500 = vst.msk [vmem:[%s262 + $0x120] sm:$0xf] %vm13427, %v13227
      %13501 = vst.msk [vmem:[%s262 + $0x124] sm:$0xf] %vm13427, %v13228
      %13502 = vst.msk [vmem:[%s262 + $0x128] sm:$0xf] %vm13427, %v13229
      %13503 = vst.msk [vmem:[%s262 + $0x12c] sm:$0xf] %vm13427, %v13230
      %13504 = vst.msk [vmem:[%s262 + $0x130] sm:$0xf] %vm13427, %v13231
      %13505 = vst.msk [vmem:[%s262 + $0x134] sm:$0xf] %vm13427, %v13232
      %13506 = vst.msk [vmem:[%s262 + $0x138] sm:$0xf] %vm13427, %v13233
      %13507 = vst.msk [vmem:[%s262 + $0x13c] sm:$0xf] %vm13427, %v13234
      %13508 = vst.msk [vmem:[%s262 + $0x140] sm:$0xf] %vm13427, %v13235
      %13509 = vst.msk [vmem:[%s262 + $0x144] sm:$0xf] %vm13427, %v13236
      %13510 = vst.msk [vmem:[%s262 + $0x148] sm:$0xf] %vm13427, %v13237
      %13511 = vst.msk [vmem:[%s262 + $0x14c] sm:$0xf] %vm13427, %v13238
      %13512 = vst.msk [vmem:[%s262 + $0x150] sm:$0xf] %vm13427, %v13239
      %13513 = vst.msk [vmem:[%s262 + $0x154] sm:$0xf] %vm13427, %v13240
      %13514 = vst.msk [vmem:[%s262 + $0x158] sm:$0xf] %vm13427, %v13241
      %13515 = vst.msk [vmem:[%s262 + $0x15c] sm:$0xf] %vm13427, %v13242
      %13516 = vst.msk [vmem:[%s262 + $0x160] sm:$0xf] %vm13427, %v13243
      %13517 = vst.msk [vmem:[%s262 + $0x164] sm:$0xf] %vm13427, %v13244
      %13518 = vst.msk [vmem:[%s262 + $0x168] sm:$0xf] %vm13427, %v13245
      %13519 = vst.msk [vmem:[%s262 + $0x16c] sm:$0xf] %vm13427, %v13246
      %13520 = vst.msk [vmem:[%s262 + $0x170] sm:$0xf] %vm13427, %v13247
      %13521 = vst.msk [vmem:[%s262 + $0x174] sm:$0xf] %vm13427, %v13248
      %13522 = vst.msk [vmem:[%s262 + $0x178] sm:$0xf] %vm13427, %v13249
      %13523 = vst.msk [vmem:[%s262 + $0x17c] sm:$0xf] %vm13427, %v13250
      %13524 = vst.msk [vmem:[%s262 + $0x180] sm:$0xf] %vm13427, %v13251
      %13525 = vst.msk [vmem:[%s262 + $0x184] sm:$0xf] %vm13427, %v13252
      %13526 = vst.msk [vmem:[%s262 + $0x188] sm:$0xf] %vm13427, %v13253
      %13527 = vst.msk [vmem:[%s262 + $0x18c] sm:$0xf] %vm13427, %v13254
      %13528 = vst.msk [vmem:[%s262 + $0x190] sm:$0xf] %vm13427, %v13255
      %13529 = vst.msk [vmem:[%s262 + $0x194] sm:$0xf] %vm13427, %v13256
      %13530 = vst.msk [vmem:[%s262 + $0x198] sm:$0xf] %vm13427, %v13257
      %13531 = vst.msk [vmem:[%s262 + $0x19c] sm:$0xf] %vm13427, %v13258
      %13532 = vst.msk [vmem:[%s262 + $0x1a0] sm:$0xf] %vm13427, %v13259
      %13533 = vst.msk [vmem:[%s262 + $0x1a4] sm:$0xf] %vm13427, %v13260
      %13534 = vst.msk [vmem:[%s262 + $0x1a8] sm:$0xf] %vm13427, %v13261
      %13535 = vst.msk [vmem:[%s262 + $0x1ac] sm:$0xf] %vm13427, %v13262
      %13536 = vst.msk [vmem:[%s262 + $0x1b0] sm:$0xf] %vm13427, %v13263
      %13537 = vst.msk [vmem:[%s262 + $0x1b4] sm:$0xf] %vm13427, %v13264
      %13538 = vst.msk [vmem:[%s262 + $0x1b8] sm:$0xf] %vm13427, %v13265
      %13539 = vst.msk [vmem:[%s262 + $0x1bc] sm:$0xf] %vm13427, %v13266
      %13540 = vst.msk [vmem:[%s262 + $0x1c0] sm:$0xf] %vm13427, %v13267
      %13541 = vst.msk [vmem:[%s262 + $0x1c4] sm:$0xf] %vm13427, %v13268
      %13542 = vst.msk [vmem:[%s262 + $0x1c8] sm:$0xf] %vm13427, %v13269
      %13543 = vst.msk [vmem:[%s262 + $0x1cc] sm:$0xf] %vm13427, %v13270
      %13544 = vst.msk [vmem:[%s262 + $0x1d0] sm:$0xf] %vm13427, %v13271
      %13545 = vst.msk [vmem:[%s262 + $0x1d4] sm:$0xf] %vm13427, %v13272
      %13546 = vst.msk [vmem:[%s262 + $0x1d8] sm:$0xf] %vm13427, %v13273
      %13547 = vst.msk [vmem:[%s262 + $0x1dc] sm:$0xf] %vm13427, %v13274
      %13548 = vst.msk [vmem:[%s262 + $0x1e0] sm:$0xf] %vm13427, %v13275
      %13549 = vst.msk [vmem:[%s262 + $0x1e4] sm:$0xf] %vm13427, %v13276
      %13550 = vst.msk [vmem:[%s262 + $0x1e8] sm:$0xf] %vm13427, %v13277
      %13551 = vst.msk [vmem:[%s262 + $0x1ec] sm:$0xf] %vm13427, %v13278
      %13552 = vst.msk [vmem:[%s262 + $0x1f0] sm:$0xf] %vm13427, %v13279
      %13553 = vst.msk [vmem:[%s262 + $0x1f4] sm:$0xf] %vm13427, %v13280
      %13554 = vst.msk [vmem:[%s262 + $0x1f8] sm:$0xf] %vm13427, %v13281
      %13555 = vst.msk [vmem:[%s262 + $0x1fc] sm:$0xf] %vm13427, %v13282
      %13556 = vst.msk [vmem:[%s262 + $0x200] sm:$0xf] %vm13427, %v13283
      %13557 = vst.msk [vmem:[%s262 + $0x204] sm:$0xf] %vm13427, %v13284
      %13558 = vst.msk [vmem:[%s262 + $0x208] sm:$0xf] %vm13427, %v13285
      %13559 = vst.msk [vmem:[%s262 + $0x20c] sm:$0xf] %vm13427, %v13286
      %13560 = vst.msk [vmem:[%s262 + $0x210] sm:$0xf] %vm13427, %v13287
      %13561 = vst.msk [vmem:[%s262 + $0x214] sm:$0xf] %vm13427, %v13288
      %13562 = vst.msk [vmem:[%s262 + $0x218] sm:$0xf] %vm13427, %v13289
      %13563 = vst.msk [vmem:[%s262 + $0x21c] sm:$0xf] %vm13427, %v13290
      %p13564 = scmp.lt.s32.totalorder %s20, 1
      %s13565 = scalar_select %p13564, %s20, 1
      %p13566 = scmp.lt.s32.totalorder %s19, 0
      %s13567 = scalar_select %p13566, %s19, 0
      %s13568 = smul.addr %s13565, 136
      %s13569 = sadd.s32 %s13567, %s13568
      %s13570 = smul.addr %s13569, 4
      %s13571 = scalar_lea.vmem %s4, %s13570
      // Predicated region
      $region37: #{tpu_custom_call.1} parent=35 // pred_check
        %p13572 = pneg %p151
      $region38: #{tpu_custom_call.1} parent=35 // pred_check_branch
        %13574 = sbr.rel (%p13572) target = $region40
      $region39: #{tpu_custom_call.1} parent=35 // pred_region
        _
      $region40: #{tpu_custom_call.1} parent=35 // pred_fallthru
        _
    $region36: #{tpu_custom_call.1} parent=5 // pred_fallthru
      _
    %p13575 = scmp.le.s32.totalorder 2, %s10
    // Predicated region
    $region41: #{tpu_custom_call.1} parent=5 // pred_check
      %p13576 = pneg %p13575
    $region42: #{tpu_custom_call.1} parent=5 // pred_check_branch
      %13578 = sbr.rel (%p13576) target = $region44
    $region43: #{tpu_custom_call.1} parent=5 // pred_region
      %s13579 = ssub.s32 %s10, 2
      // Predicated region
      $region45: #{tpu_custom_call.1} parent=43 // pred_check
        %p13580 = pneg %p157
      $region46: #{tpu_custom_call.1} parent=43 // pred_check_branch
        %13582 = sbr.rel (%p13580) target = $region48
      $region47: #{tpu_custom_call.1} parent=43 // pred_region
        %p13583 = scmp.lt.s32.totalorder %s22, 1
        %s13584 = scalar_select %p13583, %s22, 1
        %p13585 = scmp.lt.s32.totalorder %s21, 0
        %s13586 = scalar_select %p13585, %s21, 0
        %s13587 = smul.addr %s13584, 136
        %s13588 = sadd.s32 %s13586, %s13587
        %s13589 = smul.addr %s13588, 4
        %s13590 = scalar_lea.vmem %s4, %s13589
      $region48: #{tpu_custom_call.1} parent=43 // pred_fallthru
        _
    $region44: #{tpu_custom_call.1} parent=5 // pred_fallthru
      _
  $region6: #{tpu_custom_call.1} parent=0 // loop_footer
    %s14 = sadd.s32 1, %s10
  $region7: #{tpu_custom_call.1} parent=0 // loop_footer_branch
    %9 = sbr.rel target = $region3
  $region8: #{tpu_custom_call.1} parent=0 // loop_exit
    _

</llo_original>
